<compile_context>
chip_gen: v7x
topology: tpu7x:2x2x1
jax: 0.10.0
libtpu: 0.0.40
codegen_flags: <defaults>
</compile_context>

<pallas_src>
import jax
import jax.numpy as jnp
from jax import lax
from jax.experimental import pallas as pl
from jax.experimental.pallas import tpu as pltpu


def _vmem_capacity_bytes():
    """Chip VMEM capacity, with a conservative fallback (v7x per-TC)."""
    try:
        cap = int(pltpu.get_tpu_info().vmem_capacity_bytes)
        if cap > 0:
            return cap
    except Exception:
        pass
    return 64 * 2 ** 20


def _per_step_vmem_bytes(H, W, C_in, C_out, tH):
    """Per-grid-step VMEM estimate: pipelined blocks + scratch + f32 temps."""
    R1 = tH + 2
    blocks = (2 * H * W * C_in * 4             # input image block (x2 buffers)
              + 2 * tH * W * C_out * 4         # output band block (x2 buffers)
              + 2 * 9 * C_in * C_out * 2       # w1 bf16 (x2 buffers)
              + 2 * 9 * C_out * C_out * 2      # w2 bf16 (x2 buffers)
              + 2 * 2 * C_out * 4)             # bias (x2 buffers)
    scratch = ((tH + 4) * (W + 2) * C_in * 2   # padded input band (bf16)
               + R1 * W * 9 * C_in * 2         # im2col #1 (bf16)
               + R1 * (W + 2) * C_out * 2      # padded activation band (bf16)
               + tH * W * 9 * C_out * 2)       # im2col #2 (bf16)
    live_f32 = (2 * R1 * W * C_out * 4         # acc1 / act1
                + 2 * tH * W * C_out * 4       # acc2 / out2
                + tH * W * C_in * 4)            # identity residual
    return blocks + scratch + live_f32


def _pick_band(H, W, C_in, C_out, budget_bytes, max_band):
    """Largest divisor of H (<= max_band) whose per-step VMEM fits the budget."""
    best = 1
    for d in range(1, H + 1):
        if H % d != 0 or d > max_band:
            continue
        if _per_step_vmem_bytes(H, W, C_in, C_out, d) <= budget_bytes:
            best = max(best, d)
    return best


def _make_kernel(H, W, C_in, C_out, tH, nb):
    """Kernel body for fixed spatial / channel sizes and band height tH."""
    R1 = tH + 2               # conv1 rows computed per band (1-row halo each side)
    bf16 = jnp.bfloat16

    def kernel(x_ref, w1_ref, w2_ref, bias_ref, out_ref,
               xband_ref, col1_ref, act_ref, col2_ref):
        b = pl.program_id(1)                       # H-band index
        row0 = pl.multiple_of(b * tH, tH)          # first output row of this band

        # ---- stage zero-padded input band (tH+4, W+2, C_in) in bf16 --------
        # Halo columns re-zeroed every step (scratch is per-core under the
        # megacore split, so a one-time init is not safe); interior overwritten.
        xband_ref[:, 0:1, :] = jnp.zeros((tH + 4, 1, C_in), bf16)
        xband_ref[:, W + 1:W + 2, :] = jnp.zeros((tH + 4, 1, C_in), bf16)
        xband_ref[2:tH + 2, 1:W + 1, :] = (
            x_ref[0, pl.ds(row0, tH), :, :].astype(bf16))

        @pl.when(b == 0)
        def _():  # above the image: conv1's zero padding
            xband_ref[0:2, :, :] = jnp.zeros((2, W + 2, C_in), bf16)

        @pl.when(b > 0)
        def _():  # real rows from the neighbouring band
            xband_ref[0:2, 1:W + 1, :] = (
                x_ref[0, pl.ds(row0 - 2, 2), :, :].astype(bf16))

        @pl.when(b == nb - 1)
        def _():  # below the image
            xband_ref[tH + 2:tH + 4, :, :] = jnp.zeros((2, W + 2, C_in), bf16)

        @pl.when(b < nb - 1)
        def _():
            xband_ref[tH + 2:tH + 4, 1:W + 1, :] = (
                x_ref[0, pl.ds(row0 + tH, 2), :, :].astype(bf16))

        # ---- conv1 (+bn1 scale folded into w1) + relu -----------------------
        # Single im2col matmul (R1*W, 9*C_in) @ (9*C_in, C_out); dy hoisted so
        # each dy is one contiguous row-band load.
        for dy in range(3):
            band = xband_ref[dy:dy + R1, :, :]
            for dx in range(3):
                t = dy * 3 + dx
                col1_ref[:, t * C_in:(t + 1) * C_in] = (
                    band[:, dx:dx + W, :].reshape(R1 * W, C_in))
        acc1 = jnp.dot(col1_ref[...], w1_ref[...],
                       preferred_element_type=jnp.float32)
        act1 = jnp.maximum(acc1 + bias_ref[0, :], 0.0)        # bias + relu only

        # ---- stage zero-padded conv1 activation (R1, W+2, C_out) in bf16 ----
        act_ref[:, 1:W + 1, :] = act1.astype(bf16).reshape(R1, W, C_out)
        act_ref[:, 0:1, :] = jnp.zeros((R1, 1, C_out), bf16)
        act_ref[:, W + 1:W + 2, :] = jnp.zeros((R1, 1, C_out), bf16)

        @pl.when(b == 0)
        def _():  # conv2's zero padding above the image overrides the halo row
            act_ref[0:1, :, :] = jnp.zeros((1, W + 2, C_out), bf16)

        @pl.when(b == nb - 1)
        def _():  # conv2's zero padding below the image
            act_ref[tH + 1:tH + 2, :, :] = jnp.zeros((1, W + 2, C_out), bf16)

        # ---- conv2 (+bn2 scale folded into w2) ------------------------------
        for dy in range(3):
            band = act_ref[dy:dy + tH, :, :]
            for dx in range(3):
                t = dy * 3 + dx
                col2_ref[:, t * C_out:(t + 1) * C_out] = (
                    band[:, dx:dx + W, :].reshape(tH * W, C_out))
        acc2 = jnp.dot(col2_ref[...], w2_ref[...],
                       preferred_element_type=jnp.float32)
        out2 = (acc2 + bias_ref[1, :]).reshape(tH, W, C_out)

        # ---- residual add + relu (exact f32 identity path) ------------------
        identity = x_ref[0, pl.ds(row0, tH), :, :]
        out_ref[0] = jnp.maximum(out2 + identity, 0.0).astype(out_ref.dtype)

    return kernel


def basic_block_forward(x_nchw, params, eps=1e-5):
    """Pallas implementation of BasicBlock.forward (stride=1, no downsample)."""
    N, C_in, H, W = x_nchw.shape
    C_out = params["w1"].shape[-1]
    assert C_in == C_out, "residual add requires matching channels (downsample=None)"

    # Chip-aware band height: bigger bands on 128 MiB chips (v5e/v6e), smaller
    # on v7x (64 MiB per TC).  Budget leaves headroom for compiler scratch.
    capacity = _vmem_capacity_bytes()
    max_band = 32 if capacity >= 96 * 2 ** 20 else 16
    if N == 1 and H >= 2:
        max_band = min(max_band, max(H // 2, 1))   # keep >=2 steps for megacore
    budget = int(0.55 * capacity)
    tH = _pick_band(H, W, C_in, C_out, budget, max_band)
    nb = H // tH
    R1 = tH + 2

    # NCHW -> NHWC (channels on the lane axis). No spatial padding here:
    # the kernel builds its own zero-padded band in VMEM.
    x_nhwc = jnp.transpose(x_nchw, (0, 2, 3, 1)).astype(jnp.float32)

    # Fold eval-mode BatchNorm into the conv weights (scale, in f32 before the
    # bf16 cast) and a per-channel bias.  conv(x, w)*s + b == conv(x, w*s) + b.
    s1 = params["bn1_gamma"] / jnp.sqrt(params["bn1_var"] + eps)
    b1 = params["bn1_beta"] - params["bn1_mean"] * s1
    s2 = params["bn2_gamma"] / jnp.sqrt(params["bn2_var"] + eps)
    b2 = params["bn2_beta"] - params["bn2_mean"] * s2
    bias = jnp.stack([b1, b2]).astype(jnp.float32)          # (2, C_out)

    w1_flat = (params["w1"] * s1).reshape(9 * C_in, C_out).astype(jnp.bfloat16)
    w2_flat = (params["w2"] * s2).reshape(9 * C_out, C_out).astype(jnp.bfloat16)

    kernel = _make_kernel(H, W, C_in, C_out, tH, nb)

    # Explicit VMEM budget including the f32 matmul outputs / epilogue temps.
    per_step = _per_step_vmem_bytes(H, W, C_in, C_out, tH)
    vmem_limit = int(min(max(int(1.25 * per_step) + (4 << 20), 32 << 20),
                         capacity - (2 << 20)))

    out_nhwc = pl.pallas_call(
        kernel,
        out_shape=jax.ShapeDtypeStruct((N, H, W, C_out), jnp.float32),
        grid_spec=pltpu.PrefetchScalarGridSpec(
            num_scalar_prefetch=0,
            grid=(N, nb),
            in_specs=[
                pl.BlockSpec((1, H, W, C_in), lambda n, b: (n, 0, 0, 0)),
                pl.BlockSpec((9 * C_in, C_out), lambda n, b: (0, 0)),
                pl.BlockSpec((9 * C_out, C_out), lambda n, b: (0, 0)),
                pl.BlockSpec((2, C_out), lambda n, b: (0, 0)),
            ],
            out_specs=pl.BlockSpec((1, tH, W, C_out),
                                   lambda n, b: (n, b, 0, 0)),
            scratch_shapes=[
                pltpu.VMEM((tH + 4, W + 2, C_in), jnp.bfloat16),   # input band
                pltpu.VMEM((R1 * W, 9 * C_in), jnp.bfloat16),      # im2col #1
                pltpu.VMEM((R1, W + 2, C_out), jnp.bfloat16),      # act band
                pltpu.VMEM((tH * W, 9 * C_out), jnp.bfloat16),     # im2col #2
            ],
        ),
        compiler_params=pltpu.CompilerParams(
            dimension_semantics=("parallel", "parallel"),
            vmem_limit_bytes=vmem_limit),
    )(x_nhwc, w1_flat, w2_flat, bias)

    # NHWC -> NCHW to match PyTorch output convention.
    return jnp.transpose(out_nhwc, (0, 3, 1, 2))


def _reference(x_nchw, params, eps=1e-5):
    """Pure-JAX f32 reference (lax.conv) for correctness checking."""
    def conv(x, w_hwio):
        w_oihw = jnp.transpose(w_hwio, (3, 2, 0, 1))
        return lax.conv_general_dilated(
            x, w_oihw, window_strides=(1, 1), padding=((1, 1), (1, 1)),
            dimension_numbers=("NCHW", "OIHW", "NCHW"))

    def bn(x, g, b, m, v):
        g = g.reshape(1, -1, 1, 1)
        b = b.reshape(1, -1, 1, 1)
        m = m.reshape(1, -1, 1, 1)
        v = v.reshape(1, -1, 1, 1)
        return (x - m) / jnp.sqrt(v + eps) * g + b

    out = jax.nn.relu(bn(conv(x_nchw, params["w1"]),
                         params["bn1_gamma"], params["bn1_beta"],
                         params["bn1_mean"], params["bn1_var"]))
    out = bn(conv(out, params["w2"]),
             params["bn2_gamma"], params["bn2_beta"],
             params["bn2_mean"], params["bn2_var"])
    return jax.nn.relu(out + x_nchw)


def _init_params(key, c_in, c_out):
    ks = jax.random.split(key, 10)
    return {
        # conv weights stored HWIO (kH, kW, in, out)
        "w1": jax.random.normal(ks[0], (3, 3, c_in, c_out), jnp.float32) * 0.1,
        "w2": jax.random.normal(ks[1], (3, 3, c_out, c_out), jnp.float32) * 0.1,
        "bn1_gamma": 1.0 + 0.1 * jax.random.normal(ks[2], (c_out,), jnp.float32),
        "bn1_beta": 0.1 * jax.random.normal(ks[3], (c_out,), jnp.float32),
        "bn1_mean": 0.1 * jax.random.normal(ks[4], (c_out,), jnp.float32),
        "bn1_var": 0.5 + jnp.abs(jax.random.normal(ks[5], (c_out,), jnp.float32)),
        "bn2_gamma": 1.0 + 0.1 * jax.random.normal(ks[6], (c_out,), jnp.float32),
        "bn2_beta": 0.1 * jax.random.normal(ks[7], (c_out,), jnp.float32),
        "bn2_mean": 0.1 * jax.random.normal(ks[8], (c_out,), jnp.float32),
        "bn2_var": 0.5 + jnp.abs(jax.random.normal(ks[9], (c_out,), jnp.float32)),
    }


if __name__ == "__main__":
    N, C, H, W = 2, 4, 16, 16
    key = jax.random.PRNGKey(0)
    kx, kp = jax.random.split(key)
    x = jax.random.normal(kx, (N, C, H, W), jnp.float32)
    params = _init_params(kp, C, C)

    out = jax.block_until_ready(basic_block_forward(x, params))
    ref = jax.block_until_ready(_reference(x, params))

    assert out.shape == (N, C, H, W)
    # Tolerance loosened vs. pure-f32: conv operands are bf16 (MXU-native),
    # accumulation and all elementwise math remain f32.
    max_err = float(jnp.max(jnp.abs(out - ref)))
    assert jnp.allclose(out, ref, atol=5e-2, rtol=5e-2), f"max abs err {max_err}"

    print("KERNEL_OK")
</pallas_src>

<mosaic_0001>
module attributes {stable_mosaic.version = 11 : i64} {
  func.func @kernel(%arg0: i32, %arg1: i32, %arg2: memref<1x16x16x4xf32, #tpu.memory_space<vmem>>, %arg3: memref<36x4xbf16, #tpu.memory_space<vmem>>, %arg4: memref<36x4xbf16, #tpu.memory_space<vmem>>, %arg5: memref<2x4xf32, #tpu.memory_space<vmem>>, %arg6: memref<1x16x16x4xf32, #tpu.memory_space<vmem>>, %arg7: memref<20x18x4xbf16, #tpu.memory_space<vmem>>, %arg8: memref<288x36xbf16, #tpu.memory_space<vmem>>, %arg9: memref<18x18x4xbf16, #tpu.memory_space<vmem>>, %arg10: memref<256x36xbf16, #tpu.memory_space<vmem>>) attributes {dimension_semantics = [#tpu.dimension_semantics<parallel>, #tpu.dimension_semantics<parallel>], iteration_bounds = array<i64: 2, 1>, scalar_prefetch = 0 : i64, scratch_operands = 4 : i64, tpu.core_type = #tpu.core_type<tc>, window_params = [{transform_indices = @transform_0, window_bounds = array<i64: 1, 16, 16, 4>}, {pipeline_mode = #tpu.pipeline_mode<synchronous>, transform_indices = @transform_1, window_bounds = array<i64: 36, 4>}, {pipeline_mode = #tpu.pipeline_mode<synchronous>, transform_indices = @transform_2, window_bounds = array<i64: 36, 4>}, {pipeline_mode = #tpu.pipeline_mode<synchronous>, transform_indices = @transform_3, window_bounds = array<i64: 2, 4>}, {transform_indices = @transform_4, window_bounds = array<i64: 1, 16, 16, 4>}]} {
    %c16_i32 = arith.constant 16 : i32
    %0 = arith.muli %arg1, %c16_i32 : i32
    %1 = tpu.assume_multiple %0, 16 : i32
    %cst = arith.constant 0.000000e+00 : bf16
    %2 = vector.broadcast %cst : bf16 to vector<20x1x4xbf16>
    %c0 = arith.constant 0 : index
    %c0_0 = arith.constant 0 : index
    %c0_1 = arith.constant 0 : index
    %3 = vector.load %arg7[%c0, %c0_0, %c0_1] : memref<20x18x4xbf16, #tpu.memory_space<vmem>>, vector<20x1x4xbf16>
    tpu.vector_store %arg7[%c0, %c0_0, %c0_1], %2 {strides = array<i32>} : memref<20x18x4xbf16, #tpu.memory_space<vmem>>, vector<20x1x4xbf16>,
    %cst_2 = arith.constant 0.000000e+00 : bf16
    %4 = vector.broadcast %cst_2 : bf16 to vector<20x1x4xbf16>
    %c0_3 = arith.constant 0 : index
    %c17 = arith.constant 17 : index
    %c0_4 = arith.constant 0 : index
    %5 = vector.load %arg7[%c0_3, %c17, %c0_4] : memref<20x18x4xbf16, #tpu.memory_space<vmem>>, vector<20x1x4xbf16>
    tpu.vector_store %arg7[%c0_3, %c17, %c0_4], %4 {strides = array<i32>} : memref<20x18x4xbf16, #tpu.memory_space<vmem>>, vector<20x1x4xbf16>,
    %c0_5 = arith.constant 0 : index
    %6 = arith.index_cast %1 : i32 to index
    %c0_6 = arith.constant 0 : index
    %c0_7 = arith.constant 0 : index
    %7 = vector.load %arg2[%c0_5, %6, %c0_6, %c0_7] : memref<1x16x16x4xf32, #tpu.memory_space<vmem>>, vector<1x16x16x4xf32>
    %8 = vector.shape_cast %7 : vector<1x16x16x4xf32> to vector<16x16x4xf32>
    %9 = arith.truncf %8 : vector<16x16x4xf32> to vector<16x16x4xbf16>
    %c2 = arith.constant 2 : index
    %c1 = arith.constant 1 : index
    %c0_8 = arith.constant 0 : index
    %10 = vector.load %arg7[%c2, %c1, %c0_8] : memref<20x18x4xbf16, #tpu.memory_space<vmem>>, vector<16x16x4xbf16>
    tpu.vector_store %arg7[%c2, %c1, %c0_8], %9 {strides = array<i32>} : memref<20x18x4xbf16, #tpu.memory_space<vmem>>, vector<16x16x4xbf16>,
    %c0_i32 = arith.constant 0 : i32
    %11 = arith.cmpi eq, %arg1, %c0_i32 : i32
    %12 = arith.extui %11 : i1 to i32
    %c0_i32_9 = arith.constant 0 : i32
    %13 = arith.cmpi ne, %12, %c0_i32_9 : i32
    scf.if %13 {
      %cst_100 = arith.constant 0.000000e+00 : bf16
      %124 = vector.broadcast %cst_100 : bf16 to vector<2x18x4xbf16>
      %c0_101 = arith.constant 0 : index
      %c0_102 = arith.constant 0 : index
      %c0_103 = arith.constant 0 : index
      %125 = vector.load %arg7[%c0_101, %c0_102, %c0_103] : memref<20x18x4xbf16, #tpu.memory_space<vmem>>, vector<2x18x4xbf16>
      tpu.vector_store %arg7[%c0_101, %c0_102, %c0_103], %124 {strides = array<i32>} : memref<20x18x4xbf16, #tpu.memory_space<vmem>>, vector<2x18x4xbf16>,
    } else {
    }
    %c0_i32_10 = arith.constant 0 : i32
    %14 = arith.cmpi sgt, %arg1, %c0_i32_10 : i32
    %15 = arith.extui %14 : i1 to i32
    %c0_i32_11 = arith.constant 0 : i32
    %16 = arith.cmpi ne, %15, %c0_i32_11 : i32
    scf.if %16 {
      %c2_i32 = arith.constant 2 : i32
      %124 = arith.subi %1, %c2_i32 : i32
      %c0_100 = arith.constant 0 : index
      %125 = arith.index_cast %124 : i32 to index
      %c0_101 = arith.constant 0 : index
      %c0_102 = arith.constant 0 : index
      %126 = vector.load %arg2[%c0_100, %125, %c0_101, %c0_102] : memref<1x16x16x4xf32, #tpu.memory_space<vmem>>, vector<1x2x16x4xf32>
      %127 = vector.shape_cast %126 : vector<1x2x16x4xf32> to vector<2x16x4xf32>
      %128 = arith.truncf %127 : vector<2x16x4xf32> to vector<2x16x4xbf16>
      %c0_103 = arith.constant 0 : index
      %c1_104 = arith.constant 1 : index
      %c0_105 = arith.constant 0 : index
      %129 = vector.load %arg7[%c0_103, %c1_104, %c0_105] : memref<20x18x4xbf16, #tpu.memory_space<vmem>>, vector<2x16x4xbf16>
      tpu.vector_store %arg7[%c0_103, %c1_104, %c0_105], %128 {strides = array<i32>} : memref<20x18x4xbf16, #tpu.memory_space<vmem>>, vector<2x16x4xbf16>,
    } else {
    }
    %c0_i32_12 = arith.constant 0 : i32
    %17 = arith.cmpi eq, %arg1, %c0_i32_12 : i32
    %18 = arith.extui %17 : i1 to i32
    %c0_i32_13 = arith.constant 0 : i32
    %19 = arith.cmpi ne, %18, %c0_i32_13 : i32
    scf.if %19 {
      %cst_100 = arith.constant 0.000000e+00 : bf16
      %124 = vector.broadcast %cst_100 : bf16 to vector<2x18x4xbf16>
      %c18 = arith.constant 18 : index
      %c0_101 = arith.constant 0 : index
      %c0_102 = arith.constant 0 : index
      %125 = vector.load %arg7[%c18, %c0_101, %c0_102] : memref<20x18x4xbf16, #tpu.memory_space<vmem>>, vector<2x18x4xbf16>
      tpu.vector_store %arg7[%c18, %c0_101, %c0_102], %124 {strides = array<i32>} : memref<20x18x4xbf16, #tpu.memory_space<vmem>>, vector<2x18x4xbf16>,
    } else {
    }
    %c0_i32_14 = arith.constant 0 : i32
    %20 = arith.cmpi slt, %arg1, %c0_i32_14 : i32
    %21 = arith.extui %20 : i1 to i32
    %c0_i32_15 = arith.constant 0 : i32
    %22 = arith.cmpi ne, %21, %c0_i32_15 : i32
    scf.if %22 {
      %c16_i32_100 = arith.constant 16 : i32
      %124 = arith.addi %1, %c16_i32_100 : i32
      %c0_101 = arith.constant 0 : index
      %125 = arith.index_cast %124 : i32 to index
      %c0_102 = arith.constant 0 : index
      %c0_103 = arith.constant 0 : index
      %126 = vector.load %arg2[%c0_101, %125, %c0_102, %c0_103] : memref<1x16x16x4xf32, #tpu.memory_space<vmem>>, vector<1x2x16x4xf32>
      %127 = vector.shape_cast %126 : vector<1x2x16x4xf32> to vector<2x16x4xf32>
      %128 = arith.truncf %127 : vector<2x16x4xf32> to vector<2x16x4xbf16>
      %c18 = arith.constant 18 : index
      %c1_104 = arith.constant 1 : index
      %c0_105 = arith.constant 0 : index
      %129 = vector.load %arg7[%c18, %c1_104, %c0_105] : memref<20x18x4xbf16, #tpu.memory_space<vmem>>, vector<2x16x4xbf16>
      tpu.vector_store %arg7[%c18, %c1_104, %c0_105], %128 {strides = array<i32>} : memref<20x18x4xbf16, #tpu.memory_space<vmem>>, vector<2x16x4xbf16>,
    } else {
    }
    %c0_16 = arith.constant 0 : index
    %c0_17 = arith.constant 0 : index
    %c0_18 = arith.constant 0 : index
    %23 = vector.load %arg7[%c0_16, %c0_17, %c0_18] : memref<20x18x4xbf16, #tpu.memory_space<vmem>>, vector<18x18x4xbf16>
    %24 = vector.extract_strided_slice %23 {offsets = [0, 0, 0], sizes = [18, 16, 4], strides = [1, 1, 1]} : vector<18x18x4xbf16> to vector<18x16x4xbf16>
    %25 = vector.shape_cast %24 : vector<18x16x4xbf16> to vector<288x4xbf16>
    %c0_19 = arith.constant 0 : index
    %c0_20 = arith.constant 0 : index
    %26 = vector.load %arg8[%c0_19, %c0_20] : memref<288x36xbf16, #tpu.memory_space<vmem>>, vector<288x4xbf16>
    tpu.vector_store %arg8[%c0_19, %c0_20], %25 {strides = array<i32>} : memref<288x36xbf16, #tpu.memory_space<vmem>>, vector<288x4xbf16>,
    %27 = vector.extract_strided_slice %23 {offsets = [0, 1, 0], sizes = [18, 16, 4], strides = [1, 1, 1]} : vector<18x18x4xbf16> to vector<18x16x4xbf16>
    %28 = vector.shape_cast %27 : vector<18x16x4xbf16> to vector<288x4xbf16>
    %c0_21 = arith.constant 0 : index
    %c4 = arith.constant 4 : index
    %29 = vector.load %arg8[%c0_21, %c4] : memref<288x36xbf16, #tpu.memory_space<vmem>>, vector<288x4xbf16>
    tpu.vector_store %arg8[%c0_21, %c4], %28 {strides = array<i32>} : memref<288x36xbf16, #tpu.memory_space<vmem>>, vector<288x4xbf16>,
    %30 = vector.extract_strided_slice %23 {offsets = [0, 2, 0], sizes = [18, 16, 4], strides = [1, 1, 1]} : vector<18x18x4xbf16> to vector<18x16x4xbf16>
    %31 = vector.shape_cast %30 : vector<18x16x4xbf16> to vector<288x4xbf16>
    %c0_22 = arith.constant 0 : index
    %c8 = arith.constant 8 : index
    %32 = vector.load %arg8[%c0_22, %c8] : memref<288x36xbf16, #tpu.memory_space<vmem>>, vector<288x4xbf16>
    tpu.vector_store %arg8[%c0_22, %c8], %31 {strides = array<i32>} : memref<288x36xbf16, #tpu.memory_space<vmem>>, vector<288x4xbf16>,
    %c1_23 = arith.constant 1 : index
    %c0_24 = arith.constant 0 : index
    %c0_25 = arith.constant 0 : index
    %33 = vector.load %arg7[%c1_23, %c0_24, %c0_25] : memref<20x18x4xbf16, #tpu.memory_space<vmem>>, vector<18x18x4xbf16>
    %34 = vector.extract_strided_slice %33 {offsets = [0, 0, 0], sizes = [18, 16, 4], strides = [1, 1, 1]} : vector<18x18x4xbf16> to vector<18x16x4xbf16>
    %35 = vector.shape_cast %34 : vector<18x16x4xbf16> to vector<288x4xbf16>
    %c0_26 = arith.constant 0 : index
    %c12 = arith.constant 12 : index
    %36 = vector.load %arg8[%c0_26, %c12] : memref<288x36xbf16, #tpu.memory_space<vmem>>, vector<288x4xbf16>
    tpu.vector_store %arg8[%c0_26, %c12], %35 {strides = array<i32>} : memref<288x36xbf16, #tpu.memory_space<vmem>>, vector<288x4xbf16>,
    %37 = vector.extract_strided_slice %33 {offsets = [0, 1, 0], sizes = [18, 16, 4], strides = [1, 1, 1]} : vector<18x18x4xbf16> to vector<18x16x4xbf16>
    %38 = vector.shape_cast %37 : vector<18x16x4xbf16> to vector<288x4xbf16>
    %c0_27 = arith.constant 0 : index
    %c16 = arith.constant 16 : index
    %39 = vector.load %arg8[%c0_27, %c16] : memref<288x36xbf16, #tpu.memory_space<vmem>>, vector<288x4xbf16>
    tpu.vector_store %arg8[%c0_27, %c16], %38 {strides = array<i32>} : memref<288x36xbf16, #tpu.memory_space<vmem>>, vector<288x4xbf16>,
    %40 = vector.extract_strided_slice %33 {offsets = [0, 2, 0], sizes = [18, 16, 4], strides = [1, 1, 1]} : vector<18x18x4xbf16> to vector<18x16x4xbf16>
    %41 = vector.shape_cast %40 : vector<18x16x4xbf16> to vector<288x4xbf16>
    %c0_28 = arith.constant 0 : index
    %c20 = arith.constant 20 : index
    %42 = vector.load %arg8[%c0_28, %c20] : memref<288x36xbf16, #tpu.memory_space<vmem>>, vector<288x4xbf16>
    tpu.vector_store %arg8[%c0_28, %c20], %41 {strides = array<i32>} : memref<288x36xbf16, #tpu.memory_space<vmem>>, vector<288x4xbf16>,
    %c2_29 = arith.constant 2 : index
    %c0_30 = arith.constant 0 : index
    %c0_31 = arith.constant 0 : index
    %43 = vector.load %arg7[%c2_29, %c0_30, %c0_31] : memref<20x18x4xbf16, #tpu.memory_space<vmem>>, vector<18x18x4xbf16>
    %44 = vector.extract_strided_slice %43 {offsets = [0, 0, 0], sizes = [18, 16, 4], strides = [1, 1, 1]} : vector<18x18x4xbf16> to vector<18x16x4xbf16>
    %45 = vector.shape_cast %44 : vector<18x16x4xbf16> to vector<288x4xbf16>
    %c0_32 = arith.constant 0 : index
    %c24 = arith.constant 24 : index
    %46 = vector.load %arg8[%c0_32, %c24] : memref<288x36xbf16, #tpu.memory_space<vmem>>, vector<288x4xbf16>
    tpu.vector_store %arg8[%c0_32, %c24], %45 {strides = array<i32>} : memref<288x36xbf16, #tpu.memory_space<vmem>>, vector<288x4xbf16>,
    %47 = vector.extract_strided_slice %43 {offsets = [0, 1, 0], sizes = [18, 16, 4], strides = [1, 1, 1]} : vector<18x18x4xbf16> to vector<18x16x4xbf16>
    %48 = vector.shape_cast %47 : vector<18x16x4xbf16> to vector<288x4xbf16>
    %c0_33 = arith.constant 0 : index
    %c28 = arith.constant 28 : index
    %49 = vector.load %arg8[%c0_33, %c28] : memref<288x36xbf16, #tpu.memory_space<vmem>>, vector<288x4xbf16>
    tpu.vector_store %arg8[%c0_33, %c28], %48 {strides = array<i32>} : memref<288x36xbf16, #tpu.memory_space<vmem>>, vector<288x4xbf16>,
    %50 = vector.extract_strided_slice %43 {offsets = [0, 2, 0], sizes = [18, 16, 4], strides = [1, 1, 1]} : vector<18x18x4xbf16> to vector<18x16x4xbf16>
    %51 = vector.shape_cast %50 : vector<18x16x4xbf16> to vector<288x4xbf16>
    %c0_34 = arith.constant 0 : index
    %c32 = arith.constant 32 : index
    %52 = vector.load %arg8[%c0_34, %c32] : memref<288x36xbf16, #tpu.memory_space<vmem>>, vector<288x4xbf16>
    tpu.vector_store %arg8[%c0_34, %c32], %51 {strides = array<i32>} : memref<288x36xbf16, #tpu.memory_space<vmem>>, vector<288x4xbf16>,
    %c0_35 = arith.constant 0 : index
    %c0_36 = arith.constant 0 : index
    %53 = vector.load %arg8[%c0_35, %c0_36] : memref<288x36xbf16, #tpu.memory_space<vmem>>, vector<288x36xbf16>
    %c0_37 = arith.constant 0 : index
    %c0_38 = arith.constant 0 : index
    %54 = vector.load %arg3[%c0_37, %c0_38] : memref<36x4xbf16, #tpu.memory_space<vmem>>, vector<36x4xbf16>
    %cst_39 = arith.constant dense<0.000000e+00> : vector<288x4xf32>
    %55 = tpu.matmul %53, %54, %cst_39 {dimension_numbers = #tpu.dot_dimension_numbers<[1], [0], [0], [1], [0, 0, 1, 1], [], []>} : vector<288x36xbf16>, vector<36x4xbf16>, vector<288x4xf32> -> vector<288x4xf32>
    %c0_40 = arith.constant 0 : index
    %c0_41 = arith.constant 0 : index
    %56 = vector.load %arg5[%c0_40, %c0_41] : memref<2x4xf32, #tpu.memory_space<vmem>>, vector<1x4xf32>
    %57 = vector.shape_cast %56 : vector<1x4xf32> to vector<4xf32>
    %58 = vector.shape_cast %57 : vector<4xf32> to vector<1x4xf32>
    %59 = vector.broadcast %58 : vector<1x4xf32> to vector<288x4xf32>
    %60 = arith.addf %55, %59 : vector<288x4xf32>
    %cst_42 = arith.constant 0.000000e+00 : f32
    %61 = vector.broadcast %cst_42 : f32 to vector<288x4xf32>
    %62 = arith.maximumf %60, %61 : vector<288x4xf32>
    %63 = arith.truncf %62 : vector<288x4xf32> to vector<288x4xbf16>
    %64 = vector.shape_cast %63 : vector<288x4xbf16> to vector<18x16x4xbf16>
    %c0_43 = arith.constant 0 : index
    %c1_44 = arith.constant 1 : index
    %c0_45 = arith.constant 0 : index
    %65 = vector.load %arg9[%c0_43, %c1_44, %c0_45] : memref<18x18x4xbf16, #tpu.memory_space<vmem>>, vector<18x16x4xbf16>
    tpu.vector_store %arg9[%c0_43, %c1_44, %c0_45], %64 {strides = array<i32>} : memref<18x18x4xbf16, #tpu.memory_space<vmem>>, vector<18x16x4xbf16>,
    %cst_46 = arith.constant 0.000000e+00 : bf16
    %66 = vector.broadcast %cst_46 : bf16 to vector<18x1x4xbf16>
    %c0_47 = arith.constant 0 : index
    %c0_48 = arith.constant 0 : index
    %c0_49 = arith.constant 0 : index
    %67 = vector.load %arg9[%c0_47, %c0_48, %c0_49] : memref<18x18x4xbf16, #tpu.memory_space<vmem>>, vector<18x1x4xbf16>
    tpu.vector_store %arg9[%c0_47, %c0_48, %c0_49], %66 {strides = array<i32>} : memref<18x18x4xbf16, #tpu.memory_space<vmem>>, vector<18x1x4xbf16>,
    %cst_50 = arith.constant 0.000000e+00 : bf16
    %68 = vector.broadcast %cst_50 : bf16 to vector<18x1x4xbf16>
    %c0_51 = arith.constant 0 : index
    %c17_52 = arith.constant 17 : index
    %c0_53 = arith.constant 0 : index
    %69 = vector.load %arg9[%c0_51, %c17_52, %c0_53] : memref<18x18x4xbf16, #tpu.memory_space<vmem>>, vector<18x1x4xbf16>
    tpu.vector_store %arg9[%c0_51, %c17_52, %c0_53], %68 {strides = array<i32>} : memref<18x18x4xbf16, #tpu.memory_space<vmem>>, vector<18x1x4xbf16>,
    %c0_i32_54 = arith.constant 0 : i32
    %70 = arith.cmpi eq, %arg1, %c0_i32_54 : i32
    %71 = arith.extui %70 : i1 to i32
    %c0_i32_55 = arith.constant 0 : i32
    %72 = arith.cmpi ne, %71, %c0_i32_55 : i32
    scf.if %72 {
      %cst_100 = arith.constant 0.000000e+00 : bf16
      %124 = vector.broadcast %cst_100 : bf16 to vector<1x18x4xbf16>
      %c0_101 = arith.constant 0 : index
      %c0_102 = arith.constant 0 : index
      %c0_103 = arith.constant 0 : index
      %125 = vector.load %arg9[%c0_101, %c0_102, %c0_103] : memref<18x18x4xbf16, #tpu.memory_space<vmem>>, vector<1x18x4xbf16>
      tpu.vector_store %arg9[%c0_101, %c0_102, %c0_103], %124 {strides = array<i32>} : memref<18x18x4xbf16, #tpu.memory_space<vmem>>, vector<1x18x4xbf16>,
    } else {
    }
    %c0_i32_56 = arith.constant 0 : i32
    %73 = arith.cmpi eq, %arg1, %c0_i32_56 : i32
    %74 = arith.extui %73 : i1 to i32
    %c0_i32_57 = arith.constant 0 : i32
    %75 = arith.cmpi ne, %74, %c0_i32_57 : i32
    scf.if %75 {
      %cst_100 = arith.constant 0.000000e+00 : bf16
      %124 = vector.broadcast %cst_100 : bf16 to vector<1x18x4xbf16>
      %c17_101 = arith.constant 17 : index
      %c0_102 = arith.constant 0 : index
      %c0_103 = arith.constant 0 : index
      %125 = vector.load %arg9[%c17_101, %c0_102, %c0_103] : memref<18x18x4xbf16, #tpu.memory_space<vmem>>, vector<1x18x4xbf16>
      tpu.vector_store %arg9[%c17_101, %c0_102, %c0_103], %124 {strides = array<i32>} : memref<18x18x4xbf16, #tpu.memory_space<vmem>>, vector<1x18x4xbf16>,
    } else {
    }
    %c0_58 = arith.constant 0 : index
    %c0_59 = arith.constant 0 : index
    %c0_60 = arith.constant 0 : index
    %76 = vector.load %arg9[%c0_58, %c0_59, %c0_60] : memref<18x18x4xbf16, #tpu.memory_space<vmem>>, vector<16x18x4xbf16>
    %77 = vector.extract_strided_slice %76 {offsets = [0, 0, 0], sizes = [16, 16, 4], strides = [1, 1, 1]} : vector<16x18x4xbf16> to vector<16x16x4xbf16>
    %78 = vector.shape_cast %77 : vector<16x16x4xbf16> to vector<256x4xbf16>
    %c0_61 = arith.constant 0 : index
    %c0_62 = arith.constant 0 : index
    %79 = vector.load %arg10[%c0_61, %c0_62] : memref<256x36xbf16, #tpu.memory_space<vmem>>, vector<256x4xbf16>
    tpu.vector_store %arg10[%c0_61, %c0_62], %78 {strides = array<i32>} : memref<256x36xbf16, #tpu.memory_space<vmem>>, vector<256x4xbf16>,
    %80 = vector.extract_strided_slice %76 {offsets = [0, 1, 0], sizes = [16, 16, 4], strides = [1, 1, 1]} : vector<16x18x4xbf16> to vector<16x16x4xbf16>
    %81 = vector.shape_cast %80 : vector<16x16x4xbf16> to vector<256x4xbf16>
    %c0_63 = arith.constant 0 : index
    %c4_64 = arith.constant 4 : index
    %82 = vector.load %arg10[%c0_63, %c4_64] : memref<256x36xbf16, #tpu.memory_space<vmem>>, vector<256x4xbf16>
    tpu.vector_store %arg10[%c0_63, %c4_64], %81 {strides = array<i32>} : memref<256x36xbf16, #tpu.memory_space<vmem>>, vector<256x4xbf16>,
    %83 = vector.extract_strided_slice %76 {offsets = [0, 2, 0], sizes = [16, 16, 4], strides = [1, 1, 1]} : vector<16x18x4xbf16> to vector<16x16x4xbf16>
    %84 = vector.shape_cast %83 : vector<16x16x4xbf16> to vector<256x4xbf16>
    %c0_65 = arith.constant 0 : index
    %c8_66 = arith.constant 8 : index
    %85 = vector.load %arg10[%c0_65, %c8_66] : memref<256x36xbf16, #tpu.memory_space<vmem>>, vector<256x4xbf16>
    tpu.vector_store %arg10[%c0_65, %c8_66], %84 {strides = array<i32>} : memref<256x36xbf16, #tpu.memory_space<vmem>>, vector<256x4xbf16>,
    %c1_67 = arith.constant 1 : index
    %c0_68 = arith.constant 0 : index
    %c0_69 = arith.constant 0 : index
    %86 = vector.load %arg9[%c1_67, %c0_68, %c0_69] : memref<18x18x4xbf16, #tpu.memory_space<vmem>>, vector<16x18x4xbf16>
    %87 = vector.extract_strided_slice %86 {offsets = [0, 0, 0], sizes = [16, 16, 4], strides = [1, 1, 1]} : vector<16x18x4xbf16> to vector<16x16x4xbf16>
    %88 = vector.shape_cast %87 : vector<16x16x4xbf16> to vector<256x4xbf16>
    %c0_70 = arith.constant 0 : index
    %c12_71 = arith.constant 12 : index
    %89 = vector.load %arg10[%c0_70, %c12_71] : memref<256x36xbf16, #tpu.memory_space<vmem>>, vector<256x4xbf16>
    tpu.vector_store %arg10[%c0_70, %c12_71], %88 {strides = array<i32>} : memref<256x36xbf16, #tpu.memory_space<vmem>>, vector<256x4xbf16>,
    %90 = vector.extract_strided_slice %86 {offsets = [0, 1, 0], sizes = [16, 16, 4], strides = [1, 1, 1]} : vector<16x18x4xbf16> to vector<16x16x4xbf16>
    %91 = vector.shape_cast %90 : vector<16x16x4xbf16> to vector<256x4xbf16>
    %c0_72 = arith.constant 0 : index
    %c16_73 = arith.constant 16 : index
    %92 = vector.load %arg10[%c0_72, %c16_73] : memref<256x36xbf16, #tpu.memory_space<vmem>>, vector<256x4xbf16>
    tpu.vector_store %arg10[%c0_72, %c16_73], %91 {strides = array<i32>} : memref<256x36xbf16, #tpu.memory_space<vmem>>, vector<256x4xbf16>,
    %93 = vector.extract_strided_slice %86 {offsets = [0, 2, 0], sizes = [16, 16, 4], strides = [1, 1, 1]} : vector<16x18x4xbf16> to vector<16x16x4xbf16>
    %94 = vector.shape_cast %93 : vector<16x16x4xbf16> to vector<256x4xbf16>
    %c0_74 = arith.constant 0 : index
    %c20_75 = arith.constant 20 : index
    %95 = vector.load %arg10[%c0_74, %c20_75] : memref<256x36xbf16, #tpu.memory_space<vmem>>, vector<256x4xbf16>
    tpu.vector_store %arg10[%c0_74, %c20_75], %94 {strides = array<i32>} : memref<256x36xbf16, #tpu.memory_space<vmem>>, vector<256x4xbf16>,
    %c2_76 = arith.constant 2 : index
    %c0_77 = arith.constant 0 : index
    %c0_78 = arith.constant 0 : index
    %96 = vector.load %arg9[%c2_76, %c0_77, %c0_78] : memref<18x18x4xbf16, #tpu.memory_space<vmem>>, vector<16x18x4xbf16>
    %97 = vector.extract_strided_slice %96 {offsets = [0, 0, 0], sizes = [16, 16, 4], strides = [1, 1, 1]} : vector<16x18x4xbf16> to vector<16x16x4xbf16>
    %98 = vector.shape_cast %97 : vector<16x16x4xbf16> to vector<256x4xbf16>
    %c0_79 = arith.constant 0 : index
    %c24_80 = arith.constant 24 : index
    %99 = vector.load %arg10[%c0_79, %c24_80] : memref<256x36xbf16, #tpu.memory_space<vmem>>, vector<256x4xbf16>
    tpu.vector_store %arg10[%c0_79, %c24_80], %98 {strides = array<i32>} : memref<256x36xbf16, #tpu.memory_space<vmem>>, vector<256x4xbf16>,
    %100 = vector.extract_strided_slice %96 {offsets = [0, 1, 0], sizes = [16, 16, 4], strides = [1, 1, 1]} : vector<16x18x4xbf16> to vector<16x16x4xbf16>
    %101 = vector.shape_cast %100 : vector<16x16x4xbf16> to vector<256x4xbf16>
    %c0_81 = arith.constant 0 : index
    %c28_82 = arith.constant 28 : index
    %102 = vector.load %arg10[%c0_81, %c28_82] : memref<256x36xbf16, #tpu.memory_space<vmem>>, vector<256x4xbf16>
    tpu.vector_store %arg10[%c0_81, %c28_82], %101 {strides = array<i32>} : memref<256x36xbf16, #tpu.memory_space<vmem>>, vector<256x4xbf16>,
    %103 = vector.extract_strided_slice %96 {offsets = [0, 2, 0], sizes = [16, 16, 4], strides = [1, 1, 1]} : vector<16x18x4xbf16> to vector<16x16x4xbf16>
    %104 = vector.shape_cast %103 : vector<16x16x4xbf16> to vector<256x4xbf16>
    %c0_83 = arith.constant 0 : index
    %c32_84 = arith.constant 32 : index
    %105 = vector.load %arg10[%c0_83, %c32_84] : memref<256x36xbf16, #tpu.memory_space<vmem>>, vector<256x4xbf16>
    tpu.vector_store %arg10[%c0_83, %c32_84], %104 {strides = array<i32>} : memref<256x36xbf16, #tpu.memory_space<vmem>>, vector<256x4xbf16>,
    %c0_85 = arith.constant 0 : index
    %c0_86 = arith.constant 0 : index
    %106 = vector.load %arg10[%c0_85, %c0_86] : memref<256x36xbf16, #tpu.memory_space<vmem>>, vector<256x36xbf16>
    %c0_87 = arith.constant 0 : index
    %c0_88 = arith.constant 0 : index
    %107 = vector.load %arg4[%c0_87, %c0_88] : memref<36x4xbf16, #tpu.memory_space<vmem>>, vector<36x4xbf16>
    %cst_89 = arith.constant dense<0.000000e+00> : vector<256x4xf32>
    %108 = tpu.matmul %106, %107, %cst_89 {dimension_numbers = #tpu.dot_dimension_numbers<[1], [0], [0], [1], [0, 0, 1, 1], [], []>} : vector<256x36xbf16>, vector<36x4xbf16>, vector<256x4xf32> -> vector<256x4xf32>
    %c1_90 = arith.constant 1 : index
    %c0_91 = arith.constant 0 : index
    %109 = vector.load %arg5[%c1_90, %c0_91] : memref<2x4xf32, #tpu.memory_space<vmem>>, vector<1x4xf32>
    %110 = vector.shape_cast %109 : vector<1x4xf32> to vector<4xf32>
    %111 = vector.shape_cast %110 : vector<4xf32> to vector<1x4xf32>
    %112 = vector.broadcast %111 : vector<1x4xf32> to vector<256x4xf32>
    %113 = arith.addf %108, %112 : vector<256x4xf32>
    %114 = vector.shape_cast %113 : vector<256x4xf32> to vector<16x16x4xf32>
    %c0_92 = arith.constant 0 : index
    %115 = arith.index_cast %1 : i32 to index
    %c0_93 = arith.constant 0 : index
    %c0_94 = arith.constant 0 : index
    %116 = vector.load %arg2[%c0_92, %115, %c0_93, %c0_94] : memref<1x16x16x4xf32, #tpu.memory_space<vmem>>, vector<1x16x16x4xf32>
    %117 = vector.shape_cast %116 : vector<1x16x16x4xf32> to vector<16x16x4xf32>
    %118 = arith.addf %114, %117 : vector<16x16x4xf32>
    %cst_95 = arith.constant 0.000000e+00 : f32
    %119 = vector.broadcast %cst_95 : f32 to vector<16x16x4xf32>
    %120 = arith.maximumf %118, %119 : vector<16x16x4xf32>
    %c0_96 = arith.constant 0 : index
    %c0_97 = arith.constant 0 : index
    %c0_98 = arith.constant 0 : index
    %c0_99 = arith.constant 0 : index
    %121 = vector.load %arg6[%c0_96, %c0_97, %c0_98, %c0_99] : memref<1x16x16x4xf32, #tpu.memory_space<vmem>>, vector<1x16x16x4xf32>
    %122 = vector.shape_cast %121 : vector<1x16x16x4xf32> to vector<16x16x4xf32>
    %123 = vector.shape_cast %120 : vector<16x16x4xf32> to vector<1x16x16x4xf32>
    tpu.vector_store %arg6[%c0_96, %c0_97, %c0_98, %c0_99], %123 {strides = array<i32>} : memref<1x16x16x4xf32, #tpu.memory_space<vmem>>, vector<1x16x16x4xf32>,
    return
  }
  func.func @transform_0(%arg0: i32, %arg1: i32) -> (i32, i32, i32, i32) {
    %c0_i32 = arith.constant 0 : i32
    %c0_i32_0 = arith.constant 0 : i32
    %c0_i32_1 = arith.constant 0 : i32
    %c0_i32_2 = arith.constant 0 : i32
    return %arg0, %c0_i32, %c0_i32_0, %c0_i32_1 : i32, i32, i32, i32
  }
  func.func @transform_1(%arg0: i32, %arg1: i32) -> (i32, i32) {
    %c0_i32 = arith.constant 0 : i32
    %c0_i32_0 = arith.constant 0 : i32
    %c0_i32_1 = arith.constant 0 : i32
    return %c0_i32, %c0_i32_0 : i32, i32
  }
  func.func @transform_2(%arg0: i32, %arg1: i32) -> (i32, i32) {
    %c0_i32 = arith.constant 0 : i32
    %c0_i32_0 = arith.constant 0 : i32
    %c0_i32_1 = arith.constant 0 : i32
    return %c0_i32, %c0_i32_0 : i32, i32
  }
  func.func @transform_3(%arg0: i32, %arg1: i32) -> (i32, i32) {
    %c0_i32 = arith.constant 0 : i32
    %c0_i32_0 = arith.constant 0 : i32
    %c0_i32_1 = arith.constant 0 : i32
    return %c0_i32, %c0_i32_0 : i32, i32
  }
  func.func @transform_4(%arg0: i32, %arg1: i32) -> (i32, i32, i32, i32) {
    %c0_i32 = arith.constant 0 : i32
    %c0_i32_0 = arith.constant 0 : i32
    %c0_i32_1 = arith.constant 0 : i32
    return %arg0, %arg1, %c0_i32, %c0_i32_0 : i32, i32, i32, i32
  }
}

</mosaic_0001>

<llo_original>
// kernel: tpu_custom_call.1
$region0: #{tpu_custom_call.1}
  #allocation0 [shape = 'u32[]', space=smem, size = 0x4, offset = 0x4, fixed_abs, tag = 'smem constant byte address 0x4 - core index']
  #allocation1 [shape = 'u32[144,128]{1,0:T(1,128)}', space=vmem, size = 0x12000, scoped, tag = 'internal scratch']
  #allocation2 [shape = 'bf16[20,18,4]{2,1,0:T(8,128)(2,1)}', space=vmem, size = 0x1e000, scoped, tag = 'scratch operand']
  #allocation3 [shape = 'bf16[288,36]{1,0:T(16,128)(2,1)}', space=vmem, size = 0x12000, scoped, tag = 'scratch operand']
  #allocation4 [shape = 'bf16[18,18,4]{2,1,0:T(8,128)(2,1)}', space=vmem, size = 0x1b000, scoped, tag = 'scratch operand']
  #allocation5 [shape = 'bf16[256,36]{1,0:T(16,128)(2,1)}', space=vmem, size = 0x10000, scoped, tag = 'scratch operand']
  %s0 = inlined_call_operand.vmem [shape: f32[2,16,16,4], index: 0, kind: input, shape index: {}]
  %s1 = inlined_call_operand.vmem [shape: bf16[36,4], index: 1, kind: input, shape index: {}]
  %s2 = inlined_call_operand.vmem [shape: bf16[36,4], index: 2, kind: input, shape index: {}]
  %s3 = inlined_call_operand.vmem [shape: f32[2,4], index: 3, kind: input, shape index: {}]
  %s4 = inlined_call_operand.vmem [shape: f32[2,16,16,4], index: 4, kind: output, shape index: {}]
  %s5 = sld [smem:[#allocation0]]
  $region69: #{tpu_custom_call.1} parent=0
    _
  %s7 = ssub.s32 1, %s5
  %s8 = scalar_select 0, %s7, %s5
  loop: start=0, step=1, limit=4
  $region2: #{tpu_custom_call.1} parent=0 // loop_pre_header
    _
  $region3: #{tpu_custom_call.1} parent=0 // loop_header
    %s10 = sphi 0, %s14
    %p11 = scmp.ge.s32.totalorder %s10, 4
    %s17 = sphi 0, %s29
    %s18 = sphi 0, %s25
    %s19 = sphi 0, %s17
    %s20 = sphi 0, %s18
    %s21 = sphi 0, %s19
    %s22 = sphi 0, %s20
    %s32 = sphi 0, %s34
    %s35 = sphi 0, %s32
    %s36 = sphi 0, %s35
    %s52 = sphi 0, %s36
    %s56 = sphi 0, %s56
    %s58 = sphi 0, %s56
    %s59 = sphi 0, %s58
    %s73 = sphi 0, %s59
    %s77 = sphi 0, %s77
    %s79 = sphi 0, %s77
    %s80 = sphi 0, %s79
    %s94 = sphi 0, %s80
    %s98 = sphi 0, %s98
    %s100 = sphi 0, %s98
    %s101 = sphi 0, %s100
    %s115 = sphi 0, %s101
    %s123 = sphi 0, %s125
    %s126 = sphi 0, %s123
    %s127 = sphi 0, %s126
    %s143 = sphi 0, %s127
  $region4: #{tpu_custom_call.1} parent=0 // loop_header_branch
    %13 = sbr.rel (%p11) target = $region8
  $region5: #{tpu_custom_call.1} parent=0 // loop_body
    %s15 = ssub.s32 %s10, 1
    %s16 = ssub.s32 %s10, 2
    %s23 = sadd.s32 1, %s18
    %p24 = scmp.ge.s32.totalorder %s23, 1
    %s25 = scalar_select %p24, 0, %s23
    %s26 = sadd.s32 1, %s17
    %s27 = scalar_select %p24, %s26, %s17
    %p28 = scmp.ge.s32.totalorder %s27, 2
    %s29 = scalar_select %p28, 0, %s27
    %s30 = ssub.s32 %s17, %s29
    %p31 = scmp.eq.s32.totalorder %s30, 0
    %s33 = sadd.s32 %s32, 1
    %s34 = scalar_select %p31, %s32, %s33
    %p37 = pneg %p31
    %p38 = scmp.eq.s32.totalorder %s10, 1
    %p39 = por %p37, %p38
    %p40 = scmp.ne.s32.totalorder %s32, %s35
    %p41 = scmp.eq.s32.totalorder %s10, 0
    %p42 = por %p40, %p41
    %p43 = scmp.ne.s32.totalorder %s32, %s35
    %p44 = scmp.eq.s32.totalorder %s15, 1
    %p45 = por %p43, %p44
    %p46 = scmp.ne.s32.totalorder %s35, %s36
    %p47 = scmp.eq.s32.totalorder %s15, 0
    %p48 = por %p46, %p47
    %p49 = scmp.ne.s32.totalorder %s35, %s36
    %p50 = scmp.eq.s32.totalorder %s16, 1
    %p51 = por %p49, %p50
    %p53 = scmp.ne.s32.totalorder %s36, %s52
    %p54 = scmp.eq.s32.totalorder %s16, 0
    %p55 = por %p53, %p54
    %s57 = sadd.s32 %s56, 1
    %p60 = scmp.eq.s32.totalorder %s10, 1
    %p61 = scmp.ne.s32.totalorder %s56, %s58
    %p62 = scmp.eq.s32.totalorder %s10, 0
    %p63 = por %p61, %p62
    %p64 = scmp.ne.s32.totalorder %s56, %s58
    %p65 = scmp.eq.s32.totalorder %s15, 1
    %p66 = por %p64, %p65
    %p67 = scmp.ne.s32.totalorder %s58, %s59
    %p68 = scmp.eq.s32.totalorder %s15, 0
    %p69 = por %p67, %p68
    %p70 = scmp.ne.s32.totalorder %s58, %s59
    %p71 = scmp.eq.s32.totalorder %s16, 1
    %p72 = por %p70, %p71
    %p74 = scmp.ne.s32.totalorder %s59, %s73
    %p75 = scmp.eq.s32.totalorder %s16, 0
    %p76 = por %p74, %p75
    %s78 = sadd.s32 %s77, 1
    %p81 = scmp.eq.s32.totalorder %s10, 1
    %p82 = scmp.ne.s32.totalorder %s77, %s79
    %p83 = scmp.eq.s32.totalorder %s10, 0
    %p84 = por %p82, %p83
    %p85 = scmp.ne.s32.totalorder %s77, %s79
    %p86 = scmp.eq.s32.totalorder %s15, 1
    %p87 = por %p85, %p86
    %p88 = scmp.ne.s32.totalorder %s79, %s80
    %p89 = scmp.eq.s32.totalorder %s15, 0
    %p90 = por %p88, %p89
    %p91 = scmp.ne.s32.totalorder %s79, %s80
    %p92 = scmp.eq.s32.totalorder %s16, 1
    %p93 = por %p91, %p92
    %p95 = scmp.ne.s32.totalorder %s80, %s94
    %p96 = scmp.eq.s32.totalorder %s16, 0
    %p97 = por %p95, %p96
    %s99 = sadd.s32 %s98, 1
    %p102 = scmp.eq.s32.totalorder %s10, 1
    %p103 = scmp.ne.s32.totalorder %s98, %s100
    %p104 = scmp.eq.s32.totalorder %s10, 0
    %p105 = por %p103, %p104
    %p106 = scmp.ne.s32.totalorder %s98, %s100
    %p107 = scmp.eq.s32.totalorder %s15, 1
    %p108 = por %p106, %p107
    %p109 = scmp.ne.s32.totalorder %s100, %s101
    %p110 = scmp.eq.s32.totalorder %s15, 0
    %p111 = por %p109, %p110
    %p112 = scmp.ne.s32.totalorder %s100, %s101
    %p113 = scmp.eq.s32.totalorder %s16, 1
    %p114 = por %p112, %p113
    %p116 = scmp.ne.s32.totalorder %s101, %s115
    %p117 = scmp.eq.s32.totalorder %s16, 0
    %p118 = por %p116, %p117
    %s119 = ssub.s32 %s17, %s29
    %s120 = ssub.s32 %s18, %s25
    %s121 = sor.u32 %s119, %s120
    %p122 = scmp.eq.s32.totalorder %s121, 0
    %s124 = sadd.s32 %s123, 1
    %s125 = scalar_select %p122, %s123, %s124
    %p128 = pneg %p122
    %p129 = scmp.eq.s32.totalorder %s10, 1
    %p130 = por %p128, %p129
    %p131 = scmp.ne.s32.totalorder %s123, %s126
    %p132 = scmp.eq.s32.totalorder %s10, 0
    %p133 = por %p131, %p132
    %p134 = scmp.ne.s32.totalorder %s123, %s126
    %p135 = scmp.eq.s32.totalorder %s15, 1
    %p136 = por %p134, %p135
    %p137 = scmp.ne.s32.totalorder %s126, %s127
    %p138 = scmp.eq.s32.totalorder %s15, 0
    %p139 = por %p137, %p138
    %p140 = scmp.ne.s32.totalorder %s126, %s127
    %p141 = scmp.eq.s32.totalorder %s16, 1
    %p142 = por %p140, %p141
    %p144 = scmp.ne.s32.totalorder %s127, %s143
    %p145 = scmp.eq.s32.totalorder %s16, 0
    %p146 = por %p144, %p145
    %p147 = scmp.le.s32.totalorder 1, %s10
    %p148 = scmp.lt.s32.totalorder %s10, 3
    %p149 = pnand %p147, %p148
    %p150 = pneg %p149
    // Predicated region
    $region9: #{tpu_custom_call.1} parent=5 // pred_check
      _
    $region10: #{tpu_custom_call.1} parent=5 // pred_check_branch
      %152 = sbr.rel (%p149) target = $region12
    $region11: #{tpu_custom_call.1} parent=5 // pred_region
      %s153 = ssub.s32 %s10, 1
      // Predicated region
      $region13: #{tpu_custom_call.1} parent=11 // pred_check
        %p154 = pneg %p69
      $region14: #{tpu_custom_call.1} parent=11 // pred_check_branch
        %156 = sbr.rel (%p154) target = $region16
      $region15: #{tpu_custom_call.1} parent=11 // pred_region
        _
      $region16: #{tpu_custom_call.1} parent=11 // pred_fallthru
        _
      // Predicated region
      $region17: #{tpu_custom_call.1} parent=11 // pred_check
        %p157 = pneg %p90
      $region18: #{tpu_custom_call.1} parent=11 // pred_check_branch
        %159 = sbr.rel (%p157) target = $region20
      $region19: #{tpu_custom_call.1} parent=11 // pred_region
        _
      $region20: #{tpu_custom_call.1} parent=11 // pred_fallthru
        _
      // Predicated region
      $region21: #{tpu_custom_call.1} parent=11 // pred_check
        %p160 = pneg %p111
      $region22: #{tpu_custom_call.1} parent=11 // pred_check_branch
        %162 = sbr.rel (%p160) target = $region24
      $region23: #{tpu_custom_call.1} parent=11 // pred_region
        _
      $region24: #{tpu_custom_call.1} parent=11 // pred_fallthru
        _
    $region12: #{tpu_custom_call.1} parent=5 // pred_fallthru
      _
    %p163 = scmp.lt.s32.totalorder %s10, 2
    // Predicated region
    $region25: #{tpu_custom_call.1} parent=5 // pred_check
      %p164 = pneg %p163
    $region26: #{tpu_custom_call.1} parent=5 // pred_check_branch
      %166 = sbr.rel (%p164) target = $region28
    $region27: #{tpu_custom_call.1} parent=5 // pred_region
      // Predicated region
      $region29: #{tpu_custom_call.1} parent=27 // pred_check
        %p167 = pneg %p42
      $region30: #{tpu_custom_call.1} parent=27 // pred_check_branch
        %169 = sbr.rel (%p167) target = $region32
      $region31: #{tpu_custom_call.1} parent=27 // pred_region
        %p170 = scmp.lt.s32.totalorder %s17, 1
        %s171 = scalar_select %p170, %s17, 1
        %s172 = smul.addr %s171, 32
        %s173 = smul.addr %s172, 8
        %s174 = scalar_lea.vmem %s0, %s173
      $region32: #{tpu_custom_call.1} parent=27 // pred_fallthru
        _
    $region28: #{tpu_custom_call.1} parent=5 // pred_fallthru
      _
    %p175 = scmp.le.s32.totalorder 1, %s10
    %p176 = scmp.lt.s32.totalorder %s10, 3
    %p177 = pnand %p175, %p176
    %p178 = pneg %p177
    // Predicated region
    $region33: #{tpu_custom_call.1} parent=5 // pred_check
      _
    $region34: #{tpu_custom_call.1} parent=5 // pred_check_branch
      %180 = sbr.rel (%p177) target = $region36
    $region35: #{tpu_custom_call.1} parent=5 // pred_region
      %s181 = ssub.s32 %s10, 1
      %p182 = scmp.lt.s32.totalorder %s19, 1
      %s183 = scalar_select %p182, %s19, 1
      %s184 = smul.addr %s183, 32
      %s185 = smul.addr %s184, 8
      %s186 = scalar_lea.vmem %s0, %s185
      %p187 = pneg %p48
      %p188 = pneg %p45
      %p189 = pneg %p69
      %p190 = pneg %p66
      %p191 = pneg %p90
      %p192 = pneg %p87
      %p193 = pneg %p111
      %p194 = pneg %p108
      %p195 = pneg %p139
      %p196 = pneg %p136
      %s197 = smul.u32 16, %s20
      %p198 = scmp.lt.s32.totalorder %s19, 1
      %s199 = scalar_select %p198, %s19, 1
      %p200 = scmp.lt.s32.totalorder %s197, 15
      %s201 = scalar_select %p200, %s197, 15
      %s202 = smul.addr %s201, 2
      %s203 = smul.addr %s199, 32
      %s204 = sadd.s32 %s202, %s203
      %s205 = smul.addr %s204, 8
      %s206 = scalar_lea.vmem %s4, %s205
      %p207 = scmp.lt.s32.totalorder %s19, 1
      %s208 = scalar_select %p207, %s19, 1
      %s209 = smul.addr %s208, 32
      %s210 = smul.addr %s209, 8
      %s211 = scalar_lea.vmem %s0, %s210
      %s212 = smul.u32 16, %s20
      %p213 = scmp.lt.s32.totalorder %s19, 1
      %s214 = scalar_select %p213, %s19, 1
      %p215 = scmp.lt.s32.totalorder %s212, 15
      %s216 = scalar_select %p215, %s212, 15
      %s217 = smul.addr %s216, 2
      %s218 = smul.addr %s214, 32
      %s219 = sadd.s32 %s217, %s218
      %s220 = smul.addr %s219, 8
      %s221 = scalar_lea.vmem %s4, %s220
      %s222 = smul.u32 16, %s20
      %s224 = smul.u32 %s20, 16
      %vm225 = vcmask 24576
      %vm226 = vsmask.f32 256
      %vm227 = vmand %vm225, %vm226
      %v228 = vld [vmem:[#allocation2] sm:$0x1]
      %v229 = vsel %vm227, 0, %v228
      %230 = vst [vmem:[#allocation2] sm:$0x1] %v229
      %v231 = vld [vmem:[#allocation2 + $0xc] sm:$0x1]
      %v232 = vsel %vm227, 0, %v231
      %233 = vst [vmem:[#allocation2 + $0xc] sm:$0x1] %v232
      %v234 = vld [vmem:[#allocation2 + $0x18] sm:$0x1]
      %v235 = vsel %vm227, 0, %v234
      %236 = vst [vmem:[#allocation2 + $0x18] sm:$0x1] %v235
      %v237 = vld [vmem:[#allocation2 + $0x24] sm:$0x1]
      %v238 = vsel %vm227, 0, %v237
      %239 = vst [vmem:[#allocation2 + $0x24] sm:$0x1] %v238
      %v240 = vld [vmem:[#allocation2 + $0x30] sm:$0x1]
      %v241 = vsel %vm227, 0, %v240
      %242 = vst [vmem:[#allocation2 + $0x30] sm:$0x1] %v241
      %v243 = vld [vmem:[#allocation2 + $0x3c] sm:$0x1]
      %v244 = vsel %vm227, 0, %v243
      %245 = vst [vmem:[#allocation2 + $0x3c] sm:$0x1] %v244
      %v246 = vld [vmem:[#allocation2 + $0x48] sm:$0x1]
      %v247 = vsel %vm227, 0, %v246
      %248 = vst [vmem:[#allocation2 + $0x48] sm:$0x1] %v247
      %v249 = vld [vmem:[#allocation2 + $0x54] sm:$0x1]
      %v250 = vsel %vm227, 0, %v249
      %251 = vst [vmem:[#allocation2 + $0x54] sm:$0x1] %v250
      %v252 = vld [vmem:[#allocation2 + $0x60] sm:$0x1]
      %v253 = vsel %vm227, 0, %v252
      %254 = vst [vmem:[#allocation2 + $0x60] sm:$0x1] %v253
      %v255 = vld [vmem:[#allocation2 + $0x6c] sm:$0x1]
      %v256 = vsel %vm227, 0, %v255
      %257 = vst [vmem:[#allocation2 + $0x6c] sm:$0x1] %v256
      %v258 = vld [vmem:[#allocation2 + $0x78] sm:$0x1]
      %v259 = vsel %vm227, 0, %v258
      %260 = vst [vmem:[#allocation2 + $0x78] sm:$0x1] %v259
      %v261 = vld [vmem:[#allocation2 + $0x84] sm:$0x1]
      %v262 = vsel %vm227, 0, %v261
      %263 = vst [vmem:[#allocation2 + $0x84] sm:$0x1] %v262
      %v264 = vld [vmem:[#allocation2 + $0x90] sm:$0x1]
      %v265 = vsel %vm227, 0, %v264
      %266 = vst [vmem:[#allocation2 + $0x90] sm:$0x1] %v265
      %v267 = vld [vmem:[#allocation2 + $0x9c] sm:$0x1]
      %v268 = vsel %vm227, 0, %v267
      %269 = vst [vmem:[#allocation2 + $0x9c] sm:$0x1] %v268
      %v270 = vld [vmem:[#allocation2 + $0xa8] sm:$0x1]
      %v271 = vsel %vm227, 0, %v270
      %272 = vst [vmem:[#allocation2 + $0xa8] sm:$0x1] %v271
      %v273 = vld [vmem:[#allocation2 + $0xb4] sm:$0x1]
      %v274 = vsel %vm227, 0, %v273
      %275 = vst [vmem:[#allocation2 + $0xb4] sm:$0x1] %v274
      %v276 = vld [vmem:[#allocation2 + $0xc0] sm:$0x1]
      %v277 = vsel %vm227, 0, %v276
      %278 = vst [vmem:[#allocation2 + $0xc0] sm:$0x1] %v277
      %v279 = vld [vmem:[#allocation2 + $0xcc] sm:$0x1]
      %v280 = vsel %vm227, 0, %v279
      %281 = vst [vmem:[#allocation2 + $0xcc] sm:$0x1] %v280
      %v282 = vld [vmem:[#allocation2 + $0xd8] sm:$0x1]
      %v283 = vsel %vm227, 0, %v282
      %284 = vst [vmem:[#allocation2 + $0xd8] sm:$0x1] %v283
      %v285 = vld [vmem:[#allocation2 + $0xe4] sm:$0x1]
      %v286 = vsel %vm227, 0, %v285
      %287 = vst [vmem:[#allocation2 + $0xe4] sm:$0x1] %v286
      %vm288 = vsmask.f32 7938
      %vm289 = vmand %vm225, %vm288
      %v290 = vld [vmem:[#allocation2 + $0x8] sm:$0x1]
      %v291 = vsel %vm289, 0, %v290
      %292 = vst [vmem:[#allocation2 + $0x8] sm:$0x1] %v291
      %v293 = vld [vmem:[#allocation2 + $0x14] sm:$0x1]
      %v294 = vsel %vm289, 0, %v293
      %295 = vst [vmem:[#allocation2 + $0x14] sm:$0x1] %v294
      %v296 = vld [vmem:[#allocation2 + $0x20] sm:$0x1]
      %v297 = vsel %vm289, 0, %v296
      %298 = vst [vmem:[#allocation2 + $0x20] sm:$0x1] %v297
      %v299 = vld [vmem:[#allocation2 + $0x2c] sm:$0x1]
      %v300 = vsel %vm289, 0, %v299
      %301 = vst [vmem:[#allocation2 + $0x2c] sm:$0x1] %v300
      %v302 = vld [vmem:[#allocation2 + $0x38] sm:$0x1]
      %v303 = vsel %vm289, 0, %v302
      %304 = vst [vmem:[#allocation2 + $0x38] sm:$0x1] %v303
      %v305 = vld [vmem:[#allocation2 + $0x44] sm:$0x1]
      %v306 = vsel %vm289, 0, %v305
      %307 = vst [vmem:[#allocation2 + $0x44] sm:$0x1] %v306
      %v308 = vld [vmem:[#allocation2 + $0x50] sm:$0x1]
      %v309 = vsel %vm289, 0, %v308
      %310 = vst [vmem:[#allocation2 + $0x50] sm:$0x1] %v309
      %v311 = vld [vmem:[#allocation2 + $0x5c] sm:$0x1]
      %v312 = vsel %vm289, 0, %v311
      %313 = vst [vmem:[#allocation2 + $0x5c] sm:$0x1] %v312
      %v314 = vld [vmem:[#allocation2 + $0x68] sm:$0x1]
      %v315 = vsel %vm289, 0, %v314
      %316 = vst [vmem:[#allocation2 + $0x68] sm:$0x1] %v315
      %v317 = vld [vmem:[#allocation2 + $0x74] sm:$0x1]
      %v318 = vsel %vm289, 0, %v317
      %319 = vst [vmem:[#allocation2 + $0x74] sm:$0x1] %v318
      %v320 = vld [vmem:[#allocation2 + $0x80] sm:$0x1]
      %v321 = vsel %vm289, 0, %v320
      %322 = vst [vmem:[#allocation2 + $0x80] sm:$0x1] %v321
      %v323 = vld [vmem:[#allocation2 + $0x8c] sm:$0x1]
      %v324 = vsel %vm289, 0, %v323
      %325 = vst [vmem:[#allocation2 + $0x8c] sm:$0x1] %v324
      %v326 = vld [vmem:[#allocation2 + $0x98] sm:$0x1]
      %v327 = vsel %vm289, 0, %v326
      %328 = vst [vmem:[#allocation2 + $0x98] sm:$0x1] %v327
      %v329 = vld [vmem:[#allocation2 + $0xa4] sm:$0x1]
      %v330 = vsel %vm289, 0, %v329
      %331 = vst [vmem:[#allocation2 + $0xa4] sm:$0x1] %v330
      %v332 = vld [vmem:[#allocation2 + $0xb0] sm:$0x1]
      %v333 = vsel %vm289, 0, %v332
      %334 = vst [vmem:[#allocation2 + $0xb0] sm:$0x1] %v333
      %v335 = vld [vmem:[#allocation2 + $0xbc] sm:$0x1]
      %v336 = vsel %vm289, 0, %v335
      %337 = vst [vmem:[#allocation2 + $0xbc] sm:$0x1] %v336
      %v338 = vld [vmem:[#allocation2 + $0xc8] sm:$0x1]
      %v339 = vsel %vm289, 0, %v338
      %340 = vst [vmem:[#allocation2 + $0xc8] sm:$0x1] %v339
      %v341 = vld [vmem:[#allocation2 + $0xd4] sm:$0x1]
      %v342 = vsel %vm289, 0, %v341
      %343 = vst [vmem:[#allocation2 + $0xd4] sm:$0x1] %v342
      %v344 = vld [vmem:[#allocation2 + $0xe0] sm:$0x1]
      %v345 = vsel %vm289, 0, %v344
      %346 = vst [vmem:[#allocation2 + $0xe0] sm:$0x1] %v345
      %v347 = vld [vmem:[#allocation2 + $0xec] sm:$0x1]
      %v348 = vsel %vm289, 0, %v347
      %349 = vst [vmem:[#allocation2 + $0xec] sm:$0x1] %v348
      %s350 = smul.u32 %s224, 16
      %s351 = scalar_lea.vmem %s211, %s350
      %v352 = vld [vmem:[%s351] sm:$0xff]
      %v353 = vld [vmem:[%s351 + $0x8] sm:$0xff]
      %v354 = vld [vmem:[%s351 + $0x10] sm:$0xff]
      %v355 = vld [vmem:[%s351 + $0x18] sm:$0xff]
      %v356 = vld [vmem:[%s351 + $0x20] sm:$0xff]
      %v357 = vld [vmem:[%s351 + $0x28] sm:$0xff]
      %v358 = vld [vmem:[%s351 + $0x30] sm:$0xff]
      %v359 = vld [vmem:[%s351 + $0x38] sm:$0xff]
      %v360 = vld [vmem:[%s351 + $0x40] sm:$0xff]
      %v361 = vld [vmem:[%s351 + $0x48] sm:$0xff]
      %v362 = vld [vmem:[%s351 + $0x50] sm:$0xff]
      %v363 = vld [vmem:[%s351 + $0x58] sm:$0xff]
      %v364 = vld [vmem:[%s351 + $0x60] sm:$0xff]
      %v365 = vld [vmem:[%s351 + $0x68] sm:$0xff]
      %v366 = vld [vmem:[%s351 + $0x70] sm:$0xff]
      %v367 = vld [vmem:[%s351 + $0x78] sm:$0xff]
      %v368 = vld [vmem:[%s351 + $0x80] sm:$0xff]
      %v369 = vld [vmem:[%s351 + $0x88] sm:$0xff]
      %v370 = vld [vmem:[%s351 + $0x90] sm:$0xff]
      %v371 = vld [vmem:[%s351 + $0x98] sm:$0xff]
      %v372 = vld [vmem:[%s351 + $0xa0] sm:$0xff]
      %v373 = vld [vmem:[%s351 + $0xa8] sm:$0xff]
      %v374 = vld [vmem:[%s351 + $0xb0] sm:$0xff]
      %v375 = vld [vmem:[%s351 + $0xb8] sm:$0xff]
      %v376 = vld [vmem:[%s351 + $0xc0] sm:$0xff]
      %v377 = vld [vmem:[%s351 + $0xc8] sm:$0xff]
      %v378 = vld [vmem:[%s351 + $0xd0] sm:$0xff]
      %v379 = vld [vmem:[%s351 + $0xd8] sm:$0xff]
      %v380 = vld [vmem:[%s351 + $0xe0] sm:$0xff]
      %v381 = vld [vmem:[%s351 + $0xe8] sm:$0xff]
      %v382 = vld [vmem:[%s351 + $0xf0] sm:$0xff]
      %v383 = vld [vmem:[%s351 + $0xf8] sm:$0xff]
      %v384 = vpack.c.bf16 %v353, %v352
      %v385 = vpack.c.bf16 %v355, %v354
      %v386 = vpack.c.bf16 %v357, %v356
      %v387 = vpack.c.bf16 %v359, %v358
      %v388 = vpack.c.bf16 %v361, %v360
      %v389 = vpack.c.bf16 %v363, %v362
      %v390 = vpack.c.bf16 %v365, %v364
      %v391 = vpack.c.bf16 %v367, %v366
      %v392 = vpack.c.bf16 %v369, %v368
      %v393 = vpack.c.bf16 %v371, %v370
      %v394 = vpack.c.bf16 %v373, %v372
      %v395 = vpack.c.bf16 %v375, %v374
      %v396 = vpack.c.bf16 %v377, %v376
      %v397 = vpack.c.bf16 %v379, %v378
      %v398 = vpack.c.bf16 %v381, %v380
      %v399 = vpack.c.bf16 %v383, %v382
      %v416 = vunpack.c.l.b16 %v384
      %v417 = vunpack.c.h.b16 %v384
      %v418 = vunpack.c.l.b16 %v385
      %v419 = vunpack.c.h.b16 %v385
      %v420 = vunpack.c.l.b16 %v386
      %v421 = vunpack.c.h.b16 %v386
      %v422 = vunpack.c.l.b16 %v387
      %v423 = vunpack.c.h.b16 %v387
      %v424 = vunpack.c.l.b16 %v388
      %v425 = vunpack.c.h.b16 %v388
      %v426 = vunpack.c.l.b16 %v389
      %v427 = vunpack.c.h.b16 %v389
      %v428 = vunpack.c.l.b16 %v390
      %v429 = vunpack.c.h.b16 %v390
      %v430 = vunpack.c.l.b16 %v391
      %v431 = vunpack.c.h.b16 %v391
      %v432 = vunpack.c.l.b16 %v392
      %v433 = vunpack.c.h.b16 %v392
      %v434 = vunpack.c.l.b16 %v393
      %v435 = vunpack.c.h.b16 %v393
      %v436 = vunpack.c.l.b16 %v394
      %v437 = vunpack.c.h.b16 %v394
      %v438 = vunpack.c.l.b16 %v395
      %v439 = vunpack.c.h.b16 %v395
      %v440 = vunpack.c.l.b16 %v396
      %v441 = vunpack.c.h.b16 %v396
      %v442 = vunpack.c.l.b16 %v397
      %v443 = vunpack.c.h.b16 %v397
      %v444 = vunpack.c.l.b16 %v398
      %v445 = vunpack.c.h.b16 %v398
      %v446 = vunpack.c.l.b16 %v399
      %v447 = vunpack.c.h.b16 %v399
      %v448 = vpack.c.b16 %v416, %v416
      %v449 = vpack.c.b16 %v417, %v417
      %v450 = vpack.c.b16 %v418, %v418
      %v451 = vpack.c.b16 %v419, %v419
      %v452 = vpack.c.b16 %v420, %v420
      %v453 = vpack.c.b16 %v421, %v421
      %v454 = vpack.c.b16 %v422, %v422
      %v455 = vpack.c.b16 %v423, %v423
      %v456 = vpack.c.b16 %v424, %v424
      %v457 = vpack.c.b16 %v425, %v425
      %v458 = vpack.c.b16 %v426, %v426
      %v459 = vpack.c.b16 %v427, %v427
      %v460 = vpack.c.b16 %v428, %v428
      %v461 = vpack.c.b16 %v429, %v429
      %v462 = vpack.c.b16 %v430, %v430
      %v463 = vpack.c.b16 %v431, %v431
      %v464 = vpack.c.b16 %v432, %v432
      %v465 = vpack.c.b16 %v433, %v433
      %v466 = vpack.c.b16 %v434, %v434
      %v467 = vpack.c.b16 %v435, %v435
      %v468 = vpack.c.b16 %v436, %v436
      %v469 = vpack.c.b16 %v437, %v437
      %v470 = vpack.c.b16 %v438, %v438
      %v471 = vpack.c.b16 %v439, %v439
      %v472 = vpack.c.b16 %v440, %v440
      %v473 = vpack.c.b16 %v441, %v441
      %v474 = vpack.c.b16 %v442, %v442
      %v475 = vpack.c.b16 %v443, %v443
      %v476 = vpack.c.b16 %v444, %v444
      %v477 = vpack.c.b16 %v445, %v445
      %v478 = vpack.c.b16 %v446, %v446
      %v479 = vpack.c.b16 %v447, %v447
      %vm480 = vsmask.f32 4368
      %vm481 = vmor %vm226, %vm480
      %v483 = vshrl.u32 %v448, 16
      %v485 = vrot.slane %v483, 7
      %v486 = vshll.u32 %v448, 16
      %v488 = vor.u32 %v485, %v486
      %v489 = vrot.slane %v485, 4
      %v491 = vshrl.u32 %v449, 16
      %v493 = vrot.slane %v491, 7
      %v494 = vshll.u32 %v449, 16
      %v496 = vor.u32 %v493, %v494
      %v497 = vsel %vm481, %v489, %v496
      %v498 = vrot.slane %v493, 4
      %v500 = vshrl.u32 %v450, 16
      %v502 = vrot.slane %v500, 7
      %v503 = vshll.u32 %v450, 16
      %v505 = vor.u32 %v502, %v503
      %v506 = vrot.slane %v502, 4
      %v508 = vshrl.u32 %v451, 16
      %v510 = vrot.slane %v508, 7
      %v511 = vshll.u32 %v451, 16
      %v513 = vor.u32 %v510, %v511
      %v514 = vsel %vm481, %v506, %v513
      %v515 = vrot.slane %v510, 4
      %v517 = vshrl.u32 %v452, 16
      %v519 = vrot.slane %v517, 7
      %v520 = vshll.u32 %v452, 16
      %v522 = vor.u32 %v519, %v520
      %v523 = vrot.slane %v519, 4
      %v525 = vshrl.u32 %v453, 16
      %v527 = vrot.slane %v525, 7
      %v528 = vshll.u32 %v453, 16
      %v530 = vor.u32 %v527, %v528
      %v531 = vsel %vm481, %v523, %v530
      %v532 = vrot.slane %v527, 4
      %v534 = vshrl.u32 %v454, 16
      %v536 = vrot.slane %v534, 7
      %v537 = vshll.u32 %v454, 16
      %v539 = vor.u32 %v536, %v537
      %v540 = vrot.slane %v536, 4
      %v542 = vshrl.u32 %v455, 16
      %v544 = vrot.slane %v542, 7
      %v545 = vshll.u32 %v455, 16
      %v547 = vor.u32 %v544, %v545
      %v548 = vsel %vm481, %v540, %v547
      %v549 = vrot.slane %v544, 4
      %v551 = vshrl.u32 %v456, 16
      %v553 = vrot.slane %v551, 7
      %v554 = vshll.u32 %v456, 16
      %v556 = vor.u32 %v553, %v554
      %v557 = vrot.slane %v553, 4
      %v559 = vshrl.u32 %v457, 16
      %v561 = vrot.slane %v559, 7
      %v562 = vshll.u32 %v457, 16
      %v564 = vor.u32 %v561, %v562
      %v565 = vsel %vm481, %v557, %v564
      %v566 = vrot.slane %v561, 4
      %v568 = vshrl.u32 %v458, 16
      %v570 = vrot.slane %v568, 7
      %v571 = vshll.u32 %v458, 16
      %v573 = vor.u32 %v570, %v571
      %v574 = vrot.slane %v570, 4
      %v576 = vshrl.u32 %v459, 16
      %v578 = vrot.slane %v576, 7
      %v579 = vshll.u32 %v459, 16
      %v581 = vor.u32 %v578, %v579
      %v582 = vsel %vm481, %v574, %v581
      %v583 = vrot.slane %v578, 4
      %v585 = vshrl.u32 %v460, 16
      %v587 = vrot.slane %v585, 7
      %v588 = vshll.u32 %v460, 16
      %v590 = vor.u32 %v587, %v588
      %v591 = vrot.slane %v587, 4
      %v593 = vshrl.u32 %v461, 16
      %v595 = vrot.slane %v593, 7
      %v596 = vshll.u32 %v461, 16
      %v598 = vor.u32 %v595, %v596
      %v599 = vsel %vm481, %v591, %v598
      %v600 = vrot.slane %v595, 4
      %v602 = vshrl.u32 %v462, 16
      %v604 = vrot.slane %v602, 7
      %v605 = vshll.u32 %v462, 16
      %v607 = vor.u32 %v604, %v605
      %v608 = vrot.slane %v604, 4
      %v610 = vshrl.u32 %v463, 16
      %v612 = vrot.slane %v610, 7
      %v613 = vshll.u32 %v463, 16
      %v615 = vor.u32 %v612, %v613
      %v616 = vsel %vm481, %v608, %v615
      %v617 = vrot.slane %v612, 4
      %v619 = vshrl.u32 %v464, 16
      %v621 = vrot.slane %v619, 7
      %v622 = vshll.u32 %v464, 16
      %v624 = vor.u32 %v621, %v622
      %v625 = vrot.slane %v621, 4
      %v627 = vshrl.u32 %v465, 16
      %v629 = vrot.slane %v627, 7
      %v630 = vshll.u32 %v465, 16
      %v632 = vor.u32 %v629, %v630
      %v633 = vsel %vm481, %v625, %v632
      %v634 = vrot.slane %v629, 4
      %v636 = vshrl.u32 %v466, 16
      %v638 = vrot.slane %v636, 7
      %v639 = vshll.u32 %v466, 16
      %v641 = vor.u32 %v638, %v639
      %v642 = vrot.slane %v638, 4
      %v644 = vshrl.u32 %v467, 16
      %v646 = vrot.slane %v644, 7
      %v647 = vshll.u32 %v467, 16
      %v649 = vor.u32 %v646, %v647
      %v650 = vsel %vm481, %v642, %v649
      %v651 = vrot.slane %v646, 4
      %v653 = vshrl.u32 %v468, 16
      %v655 = vrot.slane %v653, 7
      %v656 = vshll.u32 %v468, 16
      %v658 = vor.u32 %v655, %v656
      %v659 = vrot.slane %v655, 4
      %v661 = vshrl.u32 %v469, 16
      %v663 = vrot.slane %v661, 7
      %v664 = vshll.u32 %v469, 16
      %v666 = vor.u32 %v663, %v664
      %v667 = vsel %vm481, %v659, %v666
      %v668 = vrot.slane %v663, 4
      %v670 = vshrl.u32 %v470, 16
      %v672 = vrot.slane %v670, 7
      %v673 = vshll.u32 %v470, 16
      %v675 = vor.u32 %v672, %v673
      %v676 = vrot.slane %v672, 4
      %v678 = vshrl.u32 %v471, 16
      %v680 = vrot.slane %v678, 7
      %v681 = vshll.u32 %v471, 16
      %v683 = vor.u32 %v680, %v681
      %v684 = vsel %vm481, %v676, %v683
      %v685 = vrot.slane %v680, 4
      %v687 = vshrl.u32 %v472, 16
      %v689 = vrot.slane %v687, 7
      %v690 = vshll.u32 %v472, 16
      %v692 = vor.u32 %v689, %v690
      %v693 = vrot.slane %v689, 4
      %v695 = vshrl.u32 %v473, 16
      %v697 = vrot.slane %v695, 7
      %v698 = vshll.u32 %v473, 16
      %v700 = vor.u32 %v697, %v698
      %v701 = vsel %vm481, %v693, %v700
      %v702 = vrot.slane %v697, 4
      %v704 = vshrl.u32 %v474, 16
      %v706 = vrot.slane %v704, 7
      %v707 = vshll.u32 %v474, 16
      %v709 = vor.u32 %v706, %v707
      %v710 = vrot.slane %v706, 4
      %v712 = vshrl.u32 %v475, 16
      %v714 = vrot.slane %v712, 7
      %v715 = vshll.u32 %v475, 16
      %v717 = vor.u32 %v714, %v715
      %v718 = vsel %vm481, %v710, %v717
      %v719 = vrot.slane %v714, 4
      %v721 = vshrl.u32 %v476, 16
      %v723 = vrot.slane %v721, 7
      %v724 = vshll.u32 %v476, 16
      %v726 = vor.u32 %v723, %v724
      %v727 = vrot.slane %v723, 4
      %v729 = vshrl.u32 %v477, 16
      %v731 = vrot.slane %v729, 7
      %v732 = vshll.u32 %v477, 16
      %v734 = vor.u32 %v731, %v732
      %v735 = vsel %vm481, %v727, %v734
      %v736 = vrot.slane %v731, 4
      %v738 = vshrl.u32 %v478, 16
      %v740 = vrot.slane %v738, 7
      %v741 = vshll.u32 %v478, 16
      %v743 = vor.u32 %v740, %v741
      %v744 = vrot.slane %v740, 4
      %v746 = vshrl.u32 %v479, 16
      %v748 = vrot.slane %v746, 7
      %v749 = vshll.u32 %v479, 16
      %v751 = vor.u32 %v748, %v749
      %v752 = vsel %vm481, %v744, %v751
      %v753 = vrot.slane %v748, 4
      %s802 = scalar_lea.vmem [#allocation2], 24
      %vm803 = vcmask 27648
      %vm804 = vmand %vm803, %vm288
      %v805 = vld [vmem:[%s802] sm:$0xf]
      %v806 = vsel %vm804, %v488, %v805
      %807 = vst [vmem:[%s802] sm:$0xf] %v806
      %vm808 = vcmask 27648
      %809 = vst.msk [vmem:[%s802 + $0x4] sm:$0xf] %vm808, %v497
      %v810 = vld [vmem:[%s802 + $0x8] sm:$0x1]
      %v811 = vsel %vm227, %v498, %v810
      %812 = vst [vmem:[%s802 + $0x8] sm:$0x1] %v811
      %v813 = vld [vmem:[%s802 + $0xc] sm:$0xf]
      %v814 = vsel %vm804, %v505, %v813
      %815 = vst [vmem:[%s802 + $0xc] sm:$0xf] %v814
      %816 = vst.msk [vmem:[%s802 + $0x10] sm:$0xf] %vm808, %v514
      %v817 = vld [vmem:[%s802 + $0x14] sm:$0x1]
      %v818 = vsel %vm227, %v515, %v817
      %819 = vst [vmem:[%s802 + $0x14] sm:$0x1] %v818
      %v820 = vld [vmem:[%s802 + $0x18] sm:$0xf]
      %v821 = vsel %vm804, %v522, %v820
      %822 = vst [vmem:[%s802 + $0x18] sm:$0xf] %v821
      %823 = vst.msk [vmem:[%s802 + $0x1c] sm:$0xf] %vm808, %v531
      %v824 = vld [vmem:[%s802 + $0x20] sm:$0x1]
      %v825 = vsel %vm227, %v532, %v824
      %826 = vst [vmem:[%s802 + $0x20] sm:$0x1] %v825
      %v827 = vld [vmem:[%s802 + $0x24] sm:$0xf]
      %v828 = vsel %vm804, %v539, %v827
      %829 = vst [vmem:[%s802 + $0x24] sm:$0xf] %v828
      %830 = vst.msk [vmem:[%s802 + $0x28] sm:$0xf] %vm808, %v548
      %v831 = vld [vmem:[%s802 + $0x2c] sm:$0x1]
      %v832 = vsel %vm227, %v549, %v831
      %833 = vst [vmem:[%s802 + $0x2c] sm:$0x1] %v832
      %v834 = vld [vmem:[%s802 + $0x30] sm:$0xf]
      %v835 = vsel %vm804, %v556, %v834
      %836 = vst [vmem:[%s802 + $0x30] sm:$0xf] %v835
      %837 = vst.msk [vmem:[%s802 + $0x34] sm:$0xf] %vm808, %v565
      %v838 = vld [vmem:[%s802 + $0x38] sm:$0x1]
      %v839 = vsel %vm227, %v566, %v838
      %840 = vst [vmem:[%s802 + $0x38] sm:$0x1] %v839
      %v841 = vld [vmem:[%s802 + $0x3c] sm:$0xf]
      %v842 = vsel %vm804, %v573, %v841
      %843 = vst [vmem:[%s802 + $0x3c] sm:$0xf] %v842
      %844 = vst.msk [vmem:[%s802 + $0x40] sm:$0xf] %vm808, %v582
      %v845 = vld [vmem:[%s802 + $0x44] sm:$0x1]
      %v846 = vsel %vm227, %v583, %v845
      %847 = vst [vmem:[%s802 + $0x44] sm:$0x1] %v846
      %v848 = vld [vmem:[%s802 + $0x48] sm:$0xf]
      %v849 = vsel %vm804, %v590, %v848
      %850 = vst [vmem:[%s802 + $0x48] sm:$0xf] %v849
      %851 = vst.msk [vmem:[%s802 + $0x4c] sm:$0xf] %vm808, %v599
      %v852 = vld [vmem:[%s802 + $0x50] sm:$0x1]
      %v853 = vsel %vm227, %v600, %v852
      %854 = vst [vmem:[%s802 + $0x50] sm:$0x1] %v853
      %v855 = vld [vmem:[%s802 + $0x54] sm:$0xf]
      %v856 = vsel %vm804, %v607, %v855
      %857 = vst [vmem:[%s802 + $0x54] sm:$0xf] %v856
      %858 = vst.msk [vmem:[%s802 + $0x58] sm:$0xf] %vm808, %v616
      %v859 = vld [vmem:[%s802 + $0x5c] sm:$0x1]
      %v860 = vsel %vm227, %v617, %v859
      %861 = vst [vmem:[%s802 + $0x5c] sm:$0x1] %v860
      %v862 = vld [vmem:[%s802 + $0x60] sm:$0xf]
      %v863 = vsel %vm804, %v624, %v862
      %864 = vst [vmem:[%s802 + $0x60] sm:$0xf] %v863
      %865 = vst.msk [vmem:[%s802 + $0x64] sm:$0xf] %vm808, %v633
      %v866 = vld [vmem:[%s802 + $0x68] sm:$0x1]
      %v867 = vsel %vm227, %v634, %v866
      %868 = vst [vmem:[%s802 + $0x68] sm:$0x1] %v867
      %v869 = vld [vmem:[%s802 + $0x6c] sm:$0xf]
      %v870 = vsel %vm804, %v641, %v869
      %871 = vst [vmem:[%s802 + $0x6c] sm:$0xf] %v870
      %872 = vst.msk [vmem:[%s802 + $0x70] sm:$0xf] %vm808, %v650
      %v873 = vld [vmem:[%s802 + $0x74] sm:$0x1]
      %v874 = vsel %vm227, %v651, %v873
      %875 = vst [vmem:[%s802 + $0x74] sm:$0x1] %v874
      %v876 = vld [vmem:[%s802 + $0x78] sm:$0xf]
      %v877 = vsel %vm804, %v658, %v876
      %878 = vst [vmem:[%s802 + $0x78] sm:$0xf] %v877
      %879 = vst.msk [vmem:[%s802 + $0x7c] sm:$0xf] %vm808, %v667
      %v880 = vld [vmem:[%s802 + $0x80] sm:$0x1]
      %v881 = vsel %vm227, %v668, %v880
      %882 = vst [vmem:[%s802 + $0x80] sm:$0x1] %v881
      %v883 = vld [vmem:[%s802 + $0x84] sm:$0xf]
      %v884 = vsel %vm804, %v675, %v883
      %885 = vst [vmem:[%s802 + $0x84] sm:$0xf] %v884
      %886 = vst.msk [vmem:[%s802 + $0x88] sm:$0xf] %vm808, %v684
      %v887 = vld [vmem:[%s802 + $0x8c] sm:$0x1]
      %v888 = vsel %vm227, %v685, %v887
      %889 = vst [vmem:[%s802 + $0x8c] sm:$0x1] %v888
      %v890 = vld [vmem:[%s802 + $0x90] sm:$0xf]
      %v891 = vsel %vm804, %v692, %v890
      %892 = vst [vmem:[%s802 + $0x90] sm:$0xf] %v891
      %893 = vst.msk [vmem:[%s802 + $0x94] sm:$0xf] %vm808, %v701
      %v894 = vld [vmem:[%s802 + $0x98] sm:$0x1]
      %v895 = vsel %vm227, %v702, %v894
      %896 = vst [vmem:[%s802 + $0x98] sm:$0x1] %v895
      %v897 = vld [vmem:[%s802 + $0x9c] sm:$0xf]
      %v898 = vsel %vm804, %v709, %v897
      %899 = vst [vmem:[%s802 + $0x9c] sm:$0xf] %v898
      %900 = vst.msk [vmem:[%s802 + $0xa0] sm:$0xf] %vm808, %v718
      %v901 = vld [vmem:[%s802 + $0xa4] sm:$0x1]
      %v902 = vsel %vm227, %v719, %v901
      %903 = vst [vmem:[%s802 + $0xa4] sm:$0x1] %v902
      %v904 = vld [vmem:[%s802 + $0xa8] sm:$0xf]
      %v905 = vsel %vm804, %v726, %v904
      %906 = vst [vmem:[%s802 + $0xa8] sm:$0xf] %v905
      %907 = vst.msk [vmem:[%s802 + $0xac] sm:$0xf] %vm808, %v735
      %v908 = vld [vmem:[%s802 + $0xb0] sm:$0x1]
      %v909 = vsel %vm227, %v736, %v908
      %910 = vst [vmem:[%s802 + $0xb0] sm:$0x1] %v909
      %v911 = vld [vmem:[%s802 + $0xb4] sm:$0xf]
      %v912 = vsel %vm804, %v743, %v911
      %913 = vst [vmem:[%s802 + $0xb4] sm:$0xf] %v912
      %914 = vst.msk [vmem:[%s802 + $0xb8] sm:$0xf] %vm808, %v752
      %v915 = vld [vmem:[%s802 + $0xbc] sm:$0x1]
      %v916 = vsel %vm227, %v753, %v915
      %917 = vst [vmem:[%s802 + $0xbc] sm:$0x1] %v916
      %p918 = scmp.eq.s32.totalorder %s20, 0
      // Predicated region
      $region37: #{tpu_custom_call.1} parent=35 // pred_check
        %p919 = pneg %p918
      $region38: #{tpu_custom_call.1} parent=35 // pred_check_branch
        %921 = sbr.rel (%p919) target = $region40
      $region39: #{tpu_custom_call.1} parent=35 // pred_region
        %922 = vst.msk [vmem:[#allocation2] sm:$0xf] %vm808, 0
        %923 = vst.msk [vmem:[#allocation2 + $0x4] sm:$0xf] %vm808, 0
        %vm924 = vcmask 24576
        %925 = vst.msk [vmem:[#allocation2 + $0x8] sm:$0x1] %vm924, 0
        %926 = vst.msk [vmem:[#allocation2 + $0xc] sm:$0xf] %vm808, 0
        %927 = vst.msk [vmem:[#allocation2 + $0x10] sm:$0xf] %vm808, 0
        %928 = vst.msk [vmem:[#allocation2 + $0x14] sm:$0x1] %vm924, 0
      $region40: #{tpu_custom_call.1} parent=35 // pred_fallthru
        _
      %p929 = scmp.gt.s32.totalorder %s20, 0
      // Predicated region
      $region41: #{tpu_custom_call.1} parent=35 // pred_check
        %p930 = pneg %p929
      $region42: #{tpu_custom_call.1} parent=35 // pred_check_branch
        %932 = sbr.rel (%p930) target = $region44
      $region43: #{tpu_custom_call.1} parent=35 // pred_region
        %s933 = ssub.s32 %s224, 2
        %s934 = smul.u32 %s933, 16
        %s935 = scalar_lea.vmem %s211, %s934
        %v936 = vld [vmem:[%s935] sm:$0xff]
        %v937 = vld [vmem:[%s935 + $0x8] sm:$0xff]
        %v938 = vld [vmem:[%s935 + $0x10] sm:$0xff]
        %v939 = vld [vmem:[%s935 + $0x18] sm:$0xff]
        %v940 = vpack.c.bf16 %v937, %v936
        %v941 = vpack.c.bf16 %v939, %v938
        %v944 = vunpack.c.l.b16 %v940
        %v945 = vunpack.c.h.b16 %v940
        %v946 = vunpack.c.l.b16 %v941
        %v947 = vunpack.c.h.b16 %v941
        %v948 = vpack.c.b16 %v944, %v944
        %v949 = vpack.c.b16 %v945, %v945
        %v950 = vpack.c.b16 %v946, %v946
        %v951 = vpack.c.b16 %v947, %v947
        %v953 = vshrl.u32 %v948, 16
        %v955 = vrot.slane %v953, 7
        %v956 = vshll.u32 %v948, 16
        %v958 = vor.u32 %v955, %v956
        %v959 = vrot.slane %v955, 4
        %v961 = vshrl.u32 %v949, 16
        %v963 = vrot.slane %v961, 7
        %v964 = vshll.u32 %v949, 16
        %v966 = vor.u32 %v963, %v964
        %v967 = vsel %vm481, %v959, %v966
        %v968 = vrot.slane %v963, 4
        %v970 = vshrl.u32 %v950, 16
        %v972 = vrot.slane %v970, 7
        %v973 = vshll.u32 %v950, 16
        %v975 = vor.u32 %v972, %v973
        %v976 = vrot.slane %v972, 4
        %v978 = vshrl.u32 %v951, 16
        %v980 = vrot.slane %v978, 7
        %v981 = vshll.u32 %v951, 16
        %v983 = vor.u32 %v980, %v981
        %v984 = vsel %vm481, %v976, %v983
        %v985 = vrot.slane %v980, 4
        %v992 = vld [vmem:[#allocation2] sm:$0xf]
        %v993 = vsel %vm804, %v958, %v992
        %994 = vst [vmem:[#allocation2] sm:$0xf] %v993
        %995 = vst.msk [vmem:[#allocation2 + $0x4] sm:$0xf] %vm808, %v967
        %v996 = vld [vmem:[#allocation2 + $0x8] sm:$0x1]
        %v997 = vsel %vm227, %v968, %v996
        %998 = vst [vmem:[#allocation2 + $0x8] sm:$0x1] %v997
        %v999 = vld [vmem:[#allocation2 + $0xc] sm:$0xf]
        %v1000 = vsel %vm804, %v975, %v999
        %1001 = vst [vmem:[#allocation2 + $0xc] sm:$0xf] %v1000
        %1002 = vst.msk [vmem:[#allocation2 + $0x10] sm:$0xf] %vm808, %v984
        %v1003 = vld [vmem:[#allocation2 + $0x14] sm:$0x1]
        %v1004 = vsel %vm227, %v985, %v1003
        %1005 = vst [vmem:[#allocation2 + $0x14] sm:$0x1] %v1004
      $region44: #{tpu_custom_call.1} parent=35 // pred_fallthru
        _
      // Predicated region
      $region45: #{tpu_custom_call.1} parent=35 // pred_check
        %p1006 = pneg %p918
      $region46: #{tpu_custom_call.1} parent=35 // pred_check_branch
        %1008 = sbr.rel (%p1006) target = $region48
      $region47: #{tpu_custom_call.1} parent=35 // pred_region
        %s1009 = scalar_lea.vmem [#allocation2], 216
        %1010 = vst.msk [vmem:[%s1009] sm:$0xf] %vm808, 0
        %1011 = vst.msk [vmem:[%s1009 + $0x4] sm:$0xf] %vm808, 0
        %vm1012 = vcmask 24576
        %1013 = vst.msk [vmem:[%s1009 + $0x8] sm:$0x1] %vm1012, 0
        %1014 = vst.msk [vmem:[%s1009 + $0xc] sm:$0xf] %vm808, 0
        %1015 = vst.msk [vmem:[%s1009 + $0x10] sm:$0xf] %vm808, 0
        %1016 = vst.msk [vmem:[%s1009 + $0x14] sm:$0x1] %vm1012, 0
      $region48: #{tpu_custom_call.1} parent=35 // pred_fallthru
        _
      %p1017 = scmp.lt.s32.totalorder %s20, 0
      // Predicated region
      $region49: #{tpu_custom_call.1} parent=35 // pred_check
        %p1018 = pneg %p1017
      $region50: #{tpu_custom_call.1} parent=35 // pred_check_branch
        %1020 = sbr.rel (%p1018) target = $region52
      $region51: #{tpu_custom_call.1} parent=35 // pred_region
        %s1021 = sadd.s32 %s224, 16
        %s1022 = smul.u32 %s1021, 16
        %s1023 = scalar_lea.vmem %s211, %s1022
        %v1024 = vld [vmem:[%s1023] sm:$0xff]
        %v1025 = vld [vmem:[%s1023 + $0x8] sm:$0xff]
        %v1026 = vld [vmem:[%s1023 + $0x10] sm:$0xff]
        %v1027 = vld [vmem:[%s1023 + $0x18] sm:$0xff]
        %v1028 = vpack.c.bf16 %v1025, %v1024
        %v1029 = vpack.c.bf16 %v1027, %v1026
        %v1032 = vunpack.c.l.b16 %v1028
        %v1033 = vunpack.c.h.b16 %v1028
        %v1034 = vunpack.c.l.b16 %v1029
        %v1035 = vunpack.c.h.b16 %v1029
        %v1036 = vpack.c.b16 %v1032, %v1032
        %v1037 = vpack.c.b16 %v1033, %v1033
        %v1038 = vpack.c.b16 %v1034, %v1034
        %v1039 = vpack.c.b16 %v1035, %v1035
        %v1041 = vshrl.u32 %v1036, 16
        %v1043 = vrot.slane %v1041, 7
        %v1044 = vshll.u32 %v1036, 16
        %v1046 = vor.u32 %v1043, %v1044
        %v1047 = vrot.slane %v1043, 4
        %v1049 = vshrl.u32 %v1037, 16
        %v1051 = vrot.slane %v1049, 7
        %v1052 = vshll.u32 %v1037, 16
        %v1054 = vor.u32 %v1051, %v1052
        %v1055 = vsel %vm481, %v1047, %v1054
        %v1056 = vrot.slane %v1051, 4
        %v1058 = vshrl.u32 %v1038, 16
        %v1060 = vrot.slane %v1058, 7
        %v1061 = vshll.u32 %v1038, 16
        %v1063 = vor.u32 %v1060, %v1061
        %v1064 = vrot.slane %v1060, 4
        %v1066 = vshrl.u32 %v1039, 16
        %v1068 = vrot.slane %v1066, 7
        %v1069 = vshll.u32 %v1039, 16
        %v1071 = vor.u32 %v1068, %v1069
        %v1072 = vsel %vm481, %v1064, %v1071
        %v1073 = vrot.slane %v1068, 4
        %s1080 = scalar_lea.vmem [#allocation2], 216
        %v1081 = vld [vmem:[%s1080] sm:$0xf]
        %v1082 = vsel %vm804, %v1046, %v1081
        %1083 = vst [vmem:[%s1080] sm:$0xf] %v1082
        %1084 = vst.msk [vmem:[%s1080 + $0x4] sm:$0xf] %vm808, %v1055
        %v1085 = vld [vmem:[%s1080 + $0x8] sm:$0x1]
        %v1086 = vsel %vm227, %v1056, %v1085
        %1087 = vst [vmem:[%s1080 + $0x8] sm:$0x1] %v1086
        %v1088 = vld [vmem:[%s1080 + $0xc] sm:$0xf]
        %v1089 = vsel %vm804, %v1063, %v1088
        %1090 = vst [vmem:[%s1080 + $0xc] sm:$0xf] %v1089
        %1091 = vst.msk [vmem:[%s1080 + $0x10] sm:$0xf] %vm808, %v1072
        %v1092 = vld [vmem:[%s1080 + $0x14] sm:$0x1]
        %v1093 = vsel %vm227, %v1073, %v1092
        %1094 = vst [vmem:[%s1080 + $0x14] sm:$0x1] %v1093
      $region52: #{tpu_custom_call.1} parent=35 // pred_fallthru
        _
      %v1095 = vld [vmem:[#allocation2] sm:$0xf]
      %v1096 = vld [vmem:[#allocation2 + $0x4] sm:$0xf]
      %v1097 = vld [vmem:[#allocation2 + $0x8] sm:$0x1]
      %v1098 = vld [vmem:[#allocation2 + $0xc] sm:$0xf]
      %v1099 = vld [vmem:[#allocation2 + $0x10] sm:$0xf]
      %v1100 = vld [vmem:[#allocation2 + $0x14] sm:$0x1]
      %v1101 = vld [vmem:[#allocation2 + $0x18] sm:$0xf]
      %v1102 = vld [vmem:[#allocation2 + $0x1c] sm:$0xf]
      %v1103 = vld [vmem:[#allocation2 + $0x20] sm:$0x1]
      %v1104 = vld [vmem:[#allocation2 + $0x24] sm:$0xf]
      %v1105 = vld [vmem:[#allocation2 + $0x28] sm:$0xf]
      %v1106 = vld [vmem:[#allocation2 + $0x2c] sm:$0x1]
      %v1107 = vld [vmem:[#allocation2 + $0x30] sm:$0xf]
      %v1108 = vld [vmem:[#allocation2 + $0x34] sm:$0xf]
      %v1109 = vld [vmem:[#allocation2 + $0x38] sm:$0x1]
      %v1110 = vld [vmem:[#allocation2 + $0x3c] sm:$0xf]
      %v1111 = vld [vmem:[#allocation2 + $0x40] sm:$0xf]
      %v1112 = vld [vmem:[#allocation2 + $0x44] sm:$0x1]
      %v1113 = vld [vmem:[#allocation2 + $0x48] sm:$0xf]
      %v1114 = vld [vmem:[#allocation2 + $0x4c] sm:$0xf]
      %v1115 = vld [vmem:[#allocation2 + $0x50] sm:$0x1]
      %v1116 = vld [vmem:[#allocation2 + $0x54] sm:$0xf]
      %v1117 = vld [vmem:[#allocation2 + $0x58] sm:$0xf]
      %v1118 = vld [vmem:[#allocation2 + $0x5c] sm:$0x1]
      %v1119 = vld [vmem:[#allocation2 + $0x60] sm:$0xf]
      %v1120 = vld [vmem:[#allocation2 + $0x64] sm:$0xf]
      %v1121 = vld [vmem:[#allocation2 + $0x68] sm:$0x1]
      %v1122 = vld [vmem:[#allocation2 + $0x6c] sm:$0xf]
      %v1123 = vld [vmem:[#allocation2 + $0x70] sm:$0xf]
      %v1124 = vld [vmem:[#allocation2 + $0x74] sm:$0x1]
      %v1125 = vld [vmem:[#allocation2 + $0x78] sm:$0xf]
      %v1126 = vld [vmem:[#allocation2 + $0x7c] sm:$0xf]
      %v1127 = vld [vmem:[#allocation2 + $0x80] sm:$0x1]
      %v1128 = vld [vmem:[#allocation2 + $0x84] sm:$0xf]
      %v1129 = vld [vmem:[#allocation2 + $0x88] sm:$0xf]
      %v1130 = vld [vmem:[#allocation2 + $0x8c] sm:$0x1]
      %v1131 = vld [vmem:[#allocation2 + $0x90] sm:$0xf]
      %v1132 = vld [vmem:[#allocation2 + $0x94] sm:$0xf]
      %v1133 = vld [vmem:[#allocation2 + $0x98] sm:$0x1]
      %v1134 = vld [vmem:[#allocation2 + $0x9c] sm:$0xf]
      %v1135 = vld [vmem:[#allocation2 + $0xa0] sm:$0xf]
      %v1136 = vld [vmem:[#allocation2 + $0xa4] sm:$0x1]
      %v1137 = vld [vmem:[#allocation2 + $0xa8] sm:$0xf]
      %v1138 = vld [vmem:[#allocation2 + $0xac] sm:$0xf]
      %v1139 = vld [vmem:[#allocation2 + $0xb0] sm:$0x1]
      %v1140 = vld [vmem:[#allocation2 + $0xb4] sm:$0xf]
      %v1141 = vld [vmem:[#allocation2 + $0xb8] sm:$0xf]
      %v1142 = vld [vmem:[#allocation2 + $0xbc] sm:$0x1]
      %v1143 = vld [vmem:[#allocation2 + $0xc0] sm:$0xf]
      %v1144 = vld [vmem:[#allocation2 + $0xc4] sm:$0xf]
      %v1145 = vld [vmem:[#allocation2 + $0xc8] sm:$0x1]
      %v1146 = vld [vmem:[#allocation2 + $0xcc] sm:$0xf]
      %v1147 = vld [vmem:[#allocation2 + $0xd0] sm:$0xf]
      %v1148 = vld [vmem:[#allocation2 + $0xd4] sm:$0x1]
      %v1185 = vunpack.c.l.b16 %v1095
      %v1186 = vunpack.c.l.b16 %v1096
      %v1187 = vunpack.c.l.b16 %v1098
      %v1188 = vunpack.c.l.b16 %v1099
      %v1189 = vunpack.c.l.b16 %v1101
      %v1190 = vunpack.c.l.b16 %v1102
      %v1191 = vunpack.c.l.b16 %v1104
      %v1192 = vunpack.c.l.b16 %v1105
      %v1193 = vunpack.c.l.b16 %v1107
      %v1194 = vunpack.c.l.b16 %v1108
      %v1195 = vunpack.c.l.b16 %v1110
      %v1196 = vunpack.c.l.b16 %v1111
      %v1197 = vunpack.c.l.b16 %v1113
      %v1198 = vunpack.c.l.b16 %v1114
      %v1199 = vunpack.c.l.b16 %v1116
      %v1200 = vunpack.c.l.b16 %v1117
      %v1201 = vunpack.c.l.b16 %v1119
      %v1202 = vunpack.c.l.b16 %v1120
      %v1203 = vunpack.c.l.b16 %v1122
      %v1204 = vunpack.c.l.b16 %v1123
      %v1205 = vunpack.c.l.b16 %v1125
      %v1206 = vunpack.c.l.b16 %v1126
      %v1207 = vunpack.c.l.b16 %v1128
      %v1208 = vunpack.c.l.b16 %v1129
      %v1209 = vunpack.c.l.b16 %v1131
      %v1210 = vunpack.c.l.b16 %v1132
      %v1211 = vunpack.c.l.b16 %v1134
      %v1212 = vunpack.c.l.b16 %v1135
      %v1213 = vunpack.c.l.b16 %v1137
      %v1214 = vunpack.c.l.b16 %v1138
      %v1215 = vunpack.c.l.b16 %v1140
      %v1216 = vunpack.c.l.b16 %v1141
      %v1217 = vunpack.c.l.b16 %v1143
      %v1218 = vunpack.c.l.b16 %v1144
      %v1219 = vunpack.c.l.b16 %v1146
      %v1220 = vunpack.c.l.b16 %v1147
      %v1221 = vpack.c.b16 %v1186, %v1185
      %v1222 = vpack.c.b16 %v1188, %v1187
      %v1223 = vpack.c.b16 %v1190, %v1189
      %v1224 = vpack.c.b16 %v1192, %v1191
      %v1225 = vpack.c.b16 %v1194, %v1193
      %v1226 = vpack.c.b16 %v1196, %v1195
      %v1227 = vpack.c.b16 %v1198, %v1197
      %v1228 = vpack.c.b16 %v1200, %v1199
      %v1229 = vpack.c.b16 %v1202, %v1201
      %v1230 = vpack.c.b16 %v1204, %v1203
      %v1231 = vpack.c.b16 %v1206, %v1205
      %v1232 = vpack.c.b16 %v1208, %v1207
      %v1233 = vpack.c.b16 %v1210, %v1209
      %v1234 = vpack.c.b16 %v1212, %v1211
      %v1235 = vpack.c.b16 %v1214, %v1213
      %v1236 = vpack.c.b16 %v1216, %v1215
      %v1237 = vpack.c.b16 %v1218, %v1217
      %v1238 = vpack.c.b16 %v1220, %v1219
      %vm1257 = vcmask 31744
      %1258 = vst.msk [vmem:[#allocation3] sm:$0xff] %vm1257, %v1221
      %1259 = vst.msk [vmem:[#allocation3 + $0x8] sm:$0xff] %vm1257, %v1222
      %1260 = vst.msk [vmem:[#allocation3 + $0x10] sm:$0xff] %vm1257, %v1223
      %1261 = vst.msk [vmem:[#allocation3 + $0x18] sm:$0xff] %vm1257, %v1224
      %1262 = vst.msk [vmem:[#allocation3 + $0x20] sm:$0xff] %vm1257, %v1225
      %1263 = vst.msk [vmem:[#allocation3 + $0x28] sm:$0xff] %vm1257, %v1226
      %1264 = vst.msk [vmem:[#allocation3 + $0x30] sm:$0xff] %vm1257, %v1227
      %1265 = vst.msk [vmem:[#allocation3 + $0x38] sm:$0xff] %vm1257, %v1228
      %1266 = vst.msk [vmem:[#allocation3 + $0x40] sm:$0xff] %vm1257, %v1229
      %1267 = vst.msk [vmem:[#allocation3 + $0x48] sm:$0xff] %vm1257, %v1230
      %1268 = vst.msk [vmem:[#allocation3 + $0x50] sm:$0xff] %vm1257, %v1231
      %1269 = vst.msk [vmem:[#allocation3 + $0x58] sm:$0xff] %vm1257, %v1232
      %1270 = vst.msk [vmem:[#allocation3 + $0x60] sm:$0xff] %vm1257, %v1233
      %1271 = vst.msk [vmem:[#allocation3 + $0x68] sm:$0xff] %vm1257, %v1234
      %1272 = vst.msk [vmem:[#allocation3 + $0x70] sm:$0xff] %vm1257, %v1235
      %1273 = vst.msk [vmem:[#allocation3 + $0x78] sm:$0xff] %vm1257, %v1236
      %1274 = vst.msk [vmem:[#allocation3 + $0x80] sm:$0xff] %vm1257, %v1237
      %1275 = vst.msk [vmem:[#allocation3 + $0x88] sm:$0xff] %vm1257, %v1238
      %vm1276 = vsmask.f32 3328
      %vm1277 = vsmask.f32 7440
      %vm1278 = vmor %vm1276, %vm1277
      %v1280 = vshrl.u32 %v1095, 16
      %v1282 = vrot.slane %v1280, 4
      %v1283 = vshll.u32 %v1095, 16
      %v1285 = vrot.slane %v1283, 5
      %v1286 = vor.u32 %v1282, %v1285
      %v1287 = vrot.slane %v1286, 4
      %v1289 = vshll.u32 %v1096, 16
      %v1291 = vrot.slane %v1289, 5
      %v1292 = vsel %vm1278, %v1287, %v1291
      %v1293 = vshrl.u32 %v1096, 16
      %v1295 = vrot.slane %v1293, 4
      %v1296 = vor.u32 %v1295, %v1291
      %v1297 = vrot.slane %v1296, 4
      %v1299 = vshll.u32 %v1097, 16
      %v1301 = vrot.slane %v1299, 5
      %v1302 = vsel %vm1278, %v1297, %v1301
      %v1304 = vshrl.u32 %v1098, 16
      %v1306 = vrot.slane %v1304, 4
      %v1307 = vshll.u32 %v1098, 16
      %v1309 = vrot.slane %v1307, 5
      %v1310 = vor.u32 %v1306, %v1309
      %v1311 = vrot.slane %v1310, 4
      %v1313 = vshll.u32 %v1099, 16
      %v1315 = vrot.slane %v1313, 5
      %v1316 = vsel %vm1278, %v1311, %v1315
      %v1317 = vshrl.u32 %v1099, 16
      %v1319 = vrot.slane %v1317, 4
      %v1320 = vor.u32 %v1319, %v1315
      %v1321 = vrot.slane %v1320, 4
      %v1323 = vshll.u32 %v1100, 16
      %v1325 = vrot.slane %v1323, 5
      %v1326 = vsel %vm1278, %v1321, %v1325
      %v1328 = vshrl.u32 %v1101, 16
      %v1330 = vrot.slane %v1328, 4
      %v1331 = vshll.u32 %v1101, 16
      %v1333 = vrot.slane %v1331, 5
      %v1334 = vor.u32 %v1330, %v1333
      %v1335 = vrot.slane %v1334, 4
      %v1337 = vshll.u32 %v1102, 16
      %v1339 = vrot.slane %v1337, 5
      %v1340 = vsel %vm1278, %v1335, %v1339
      %v1341 = vshrl.u32 %v1102, 16
      %v1343 = vrot.slane %v1341, 4
      %v1344 = vor.u32 %v1343, %v1339
      %v1345 = vrot.slane %v1344, 4
      %v1347 = vshll.u32 %v1103, 16
      %v1349 = vrot.slane %v1347, 5
      %v1350 = vsel %vm1278, %v1345, %v1349
      %v1352 = vshrl.u32 %v1104, 16
      %v1354 = vrot.slane %v1352, 4
      %v1355 = vshll.u32 %v1104, 16
      %v1357 = vrot.slane %v1355, 5
      %v1358 = vor.u32 %v1354, %v1357
      %v1359 = vrot.slane %v1358, 4
      %v1361 = vshll.u32 %v1105, 16
      %v1363 = vrot.slane %v1361, 5
      %v1364 = vsel %vm1278, %v1359, %v1363
      %v1365 = vshrl.u32 %v1105, 16
      %v1367 = vrot.slane %v1365, 4
      %v1368 = vor.u32 %v1367, %v1363
      %v1369 = vrot.slane %v1368, 4
      %v1371 = vshll.u32 %v1106, 16
      %v1373 = vrot.slane %v1371, 5
      %v1374 = vsel %vm1278, %v1369, %v1373
      %v1376 = vshrl.u32 %v1107, 16
      %v1378 = vrot.slane %v1376, 4
      %v1379 = vshll.u32 %v1107, 16
      %v1381 = vrot.slane %v1379, 5
      %v1382 = vor.u32 %v1378, %v1381
      %v1383 = vrot.slane %v1382, 4
      %v1385 = vshll.u32 %v1108, 16
      %v1387 = vrot.slane %v1385, 5
      %v1388 = vsel %vm1278, %v1383, %v1387
      %v1389 = vshrl.u32 %v1108, 16
      %v1391 = vrot.slane %v1389, 4
      %v1392 = vor.u32 %v1391, %v1387
      %v1393 = vrot.slane %v1392, 4
      %v1395 = vshll.u32 %v1109, 16
      %v1397 = vrot.slane %v1395, 5
      %v1398 = vsel %vm1278, %v1393, %v1397
      %v1400 = vshrl.u32 %v1110, 16
      %v1402 = vrot.slane %v1400, 4
      %v1403 = vshll.u32 %v1110, 16
      %v1405 = vrot.slane %v1403, 5
      %v1406 = vor.u32 %v1402, %v1405
      %v1407 = vrot.slane %v1406, 4
      %v1409 = vshll.u32 %v1111, 16
      %v1411 = vrot.slane %v1409, 5
      %v1412 = vsel %vm1278, %v1407, %v1411
      %v1413 = vshrl.u32 %v1111, 16
      %v1415 = vrot.slane %v1413, 4
      %v1416 = vor.u32 %v1415, %v1411
      %v1417 = vrot.slane %v1416, 4
      %v1419 = vshll.u32 %v1112, 16
      %v1421 = vrot.slane %v1419, 5
      %v1422 = vsel %vm1278, %v1417, %v1421
      %v1424 = vshrl.u32 %v1113, 16
      %v1426 = vrot.slane %v1424, 4
      %v1427 = vshll.u32 %v1113, 16
      %v1429 = vrot.slane %v1427, 5
      %v1430 = vor.u32 %v1426, %v1429
      %v1431 = vrot.slane %v1430, 4
      %v1433 = vshll.u32 %v1114, 16
      %v1435 = vrot.slane %v1433, 5
      %v1436 = vsel %vm1278, %v1431, %v1435
      %v1437 = vshrl.u32 %v1114, 16
      %v1439 = vrot.slane %v1437, 4
      %v1440 = vor.u32 %v1439, %v1435
      %v1441 = vrot.slane %v1440, 4
      %v1443 = vshll.u32 %v1115, 16
      %v1445 = vrot.slane %v1443, 5
      %v1446 = vsel %vm1278, %v1441, %v1445
      %v1448 = vshrl.u32 %v1116, 16
      %v1450 = vrot.slane %v1448, 4
      %v1451 = vshll.u32 %v1116, 16
      %v1453 = vrot.slane %v1451, 5
      %v1454 = vor.u32 %v1450, %v1453
      %v1455 = vrot.slane %v1454, 4
      %v1457 = vshll.u32 %v1117, 16
      %v1459 = vrot.slane %v1457, 5
      %v1460 = vsel %vm1278, %v1455, %v1459
      %v1461 = vshrl.u32 %v1117, 16
      %v1463 = vrot.slane %v1461, 4
      %v1464 = vor.u32 %v1463, %v1459
      %v1465 = vrot.slane %v1464, 4
      %v1467 = vshll.u32 %v1118, 16
      %v1469 = vrot.slane %v1467, 5
      %v1470 = vsel %vm1278, %v1465, %v1469
      %v1472 = vshrl.u32 %v1119, 16
      %v1474 = vrot.slane %v1472, 4
      %v1475 = vshll.u32 %v1119, 16
      %v1477 = vrot.slane %v1475, 5
      %v1478 = vor.u32 %v1474, %v1477
      %v1479 = vrot.slane %v1478, 4
      %v1481 = vshll.u32 %v1120, 16
      %v1483 = vrot.slane %v1481, 5
      %v1484 = vsel %vm1278, %v1479, %v1483
      %v1485 = vshrl.u32 %v1120, 16
      %v1487 = vrot.slane %v1485, 4
      %v1488 = vor.u32 %v1487, %v1483
      %v1489 = vrot.slane %v1488, 4
      %v1491 = vshll.u32 %v1121, 16
      %v1493 = vrot.slane %v1491, 5
      %v1494 = vsel %vm1278, %v1489, %v1493
      %v1496 = vshrl.u32 %v1122, 16
      %v1498 = vrot.slane %v1496, 4
      %v1499 = vshll.u32 %v1122, 16
      %v1501 = vrot.slane %v1499, 5
      %v1502 = vor.u32 %v1498, %v1501
      %v1503 = vrot.slane %v1502, 4
      %v1505 = vshll.u32 %v1123, 16
      %v1507 = vrot.slane %v1505, 5
      %v1508 = vsel %vm1278, %v1503, %v1507
      %v1509 = vshrl.u32 %v1123, 16
      %v1511 = vrot.slane %v1509, 4
      %v1512 = vor.u32 %v1511, %v1507
      %v1513 = vrot.slane %v1512, 4
      %v1515 = vshll.u32 %v1124, 16
      %v1517 = vrot.slane %v1515, 5
      %v1518 = vsel %vm1278, %v1513, %v1517
      %v1520 = vshrl.u32 %v1125, 16
      %v1522 = vrot.slane %v1520, 4
      %v1523 = vshll.u32 %v1125, 16
      %v1525 = vrot.slane %v1523, 5
      %v1526 = vor.u32 %v1522, %v1525
      %v1527 = vrot.slane %v1526, 4
      %v1529 = vshll.u32 %v1126, 16
      %v1531 = vrot.slane %v1529, 5
      %v1532 = vsel %vm1278, %v1527, %v1531
      %v1533 = vshrl.u32 %v1126, 16
      %v1535 = vrot.slane %v1533, 4
      %v1536 = vor.u32 %v1535, %v1531
      %v1537 = vrot.slane %v1536, 4
      %v1539 = vshll.u32 %v1127, 16
      %v1541 = vrot.slane %v1539, 5
      %v1542 = vsel %vm1278, %v1537, %v1541
      %v1544 = vshrl.u32 %v1128, 16
      %v1546 = vrot.slane %v1544, 4
      %v1547 = vshll.u32 %v1128, 16
      %v1549 = vrot.slane %v1547, 5
      %v1550 = vor.u32 %v1546, %v1549
      %v1551 = vrot.slane %v1550, 4
      %v1553 = vshll.u32 %v1129, 16
      %v1555 = vrot.slane %v1553, 5
      %v1556 = vsel %vm1278, %v1551, %v1555
      %v1557 = vshrl.u32 %v1129, 16
      %v1559 = vrot.slane %v1557, 4
      %v1560 = vor.u32 %v1559, %v1555
      %v1561 = vrot.slane %v1560, 4
      %v1563 = vshll.u32 %v1130, 16
      %v1565 = vrot.slane %v1563, 5
      %v1566 = vsel %vm1278, %v1561, %v1565
      %v1568 = vshrl.u32 %v1131, 16
      %v1570 = vrot.slane %v1568, 4
      %v1571 = vshll.u32 %v1131, 16
      %v1573 = vrot.slane %v1571, 5
      %v1574 = vor.u32 %v1570, %v1573
      %v1575 = vrot.slane %v1574, 4
      %v1577 = vshll.u32 %v1132, 16
      %v1579 = vrot.slane %v1577, 5
      %v1580 = vsel %vm1278, %v1575, %v1579
      %v1581 = vshrl.u32 %v1132, 16
      %v1583 = vrot.slane %v1581, 4
      %v1584 = vor.u32 %v1583, %v1579
      %v1585 = vrot.slane %v1584, 4
      %v1587 = vshll.u32 %v1133, 16
      %v1589 = vrot.slane %v1587, 5
      %v1590 = vsel %vm1278, %v1585, %v1589
      %v1592 = vshrl.u32 %v1134, 16
      %v1594 = vrot.slane %v1592, 4
      %v1595 = vshll.u32 %v1134, 16
      %v1597 = vrot.slane %v1595, 5
      %v1598 = vor.u32 %v1594, %v1597
      %v1599 = vrot.slane %v1598, 4
      %v1601 = vshll.u32 %v1135, 16
      %v1603 = vrot.slane %v1601, 5
      %v1604 = vsel %vm1278, %v1599, %v1603
      %v1605 = vshrl.u32 %v1135, 16
      %v1607 = vrot.slane %v1605, 4
      %v1608 = vor.u32 %v1607, %v1603
      %v1609 = vrot.slane %v1608, 4
      %v1611 = vshll.u32 %v1136, 16
      %v1613 = vrot.slane %v1611, 5
      %v1614 = vsel %vm1278, %v1609, %v1613
      %v1616 = vshrl.u32 %v1137, 16
      %v1618 = vrot.slane %v1616, 4
      %v1619 = vshll.u32 %v1137, 16
      %v1621 = vrot.slane %v1619, 5
      %v1622 = vor.u32 %v1618, %v1621
      %v1623 = vrot.slane %v1622, 4
      %v1625 = vshll.u32 %v1138, 16
      %v1627 = vrot.slane %v1625, 5
      %v1628 = vsel %vm1278, %v1623, %v1627
      %v1629 = vshrl.u32 %v1138, 16
      %v1631 = vrot.slane %v1629, 4
      %v1632 = vor.u32 %v1631, %v1627
      %v1633 = vrot.slane %v1632, 4
      %v1635 = vshll.u32 %v1139, 16
      %v1637 = vrot.slane %v1635, 5
      %v1638 = vsel %vm1278, %v1633, %v1637
      %v1640 = vshrl.u32 %v1140, 16
      %v1642 = vrot.slane %v1640, 4
      %v1643 = vshll.u32 %v1140, 16
      %v1645 = vrot.slane %v1643, 5
      %v1646 = vor.u32 %v1642, %v1645
      %v1647 = vrot.slane %v1646, 4
      %v1649 = vshll.u32 %v1141, 16
      %v1651 = vrot.slane %v1649, 5
      %v1652 = vsel %vm1278, %v1647, %v1651
      %v1653 = vshrl.u32 %v1141, 16
      %v1655 = vrot.slane %v1653, 4
      %v1656 = vor.u32 %v1655, %v1651
      %v1657 = vrot.slane %v1656, 4
      %v1659 = vshll.u32 %v1142, 16
      %v1661 = vrot.slane %v1659, 5
      %v1662 = vsel %vm1278, %v1657, %v1661
      %v1664 = vshrl.u32 %v1143, 16
      %v1666 = vrot.slane %v1664, 4
      %v1667 = vshll.u32 %v1143, 16
      %v1669 = vrot.slane %v1667, 5
      %v1670 = vor.u32 %v1666, %v1669
      %v1671 = vrot.slane %v1670, 4
      %v1673 = vshll.u32 %v1144, 16
      %v1675 = vrot.slane %v1673, 5
      %v1676 = vsel %vm1278, %v1671, %v1675
      %v1677 = vshrl.u32 %v1144, 16
      %v1679 = vrot.slane %v1677, 4
      %v1680 = vor.u32 %v1679, %v1675
      %v1681 = vrot.slane %v1680, 4
      %v1683 = vshll.u32 %v1145, 16
      %v1685 = vrot.slane %v1683, 5
      %v1686 = vsel %vm1278, %v1681, %v1685
      %v1688 = vshrl.u32 %v1146, 16
      %v1690 = vrot.slane %v1688, 4
      %v1691 = vshll.u32 %v1146, 16
      %v1693 = vrot.slane %v1691, 5
      %v1694 = vor.u32 %v1690, %v1693
      %v1695 = vrot.slane %v1694, 4
      %v1697 = vshll.u32 %v1147, 16
      %v1699 = vrot.slane %v1697, 5
      %v1700 = vsel %vm1278, %v1695, %v1699
      %v1701 = vshrl.u32 %v1147, 16
      %v1703 = vrot.slane %v1701, 4
      %v1704 = vor.u32 %v1703, %v1699
      %v1705 = vrot.slane %v1704, 4
      %v1707 = vshll.u32 %v1148, 16
      %v1709 = vrot.slane %v1707, 5
      %v1710 = vsel %vm1278, %v1705, %v1709
      %v1711 = vunpack.c.l.b16 %v1292
      %v1712 = vunpack.c.l.b16 %v1302
      %v1713 = vunpack.c.l.b16 %v1316
      %v1714 = vunpack.c.l.b16 %v1326
      %v1715 = vunpack.c.l.b16 %v1340
      %v1716 = vunpack.c.l.b16 %v1350
      %v1717 = vunpack.c.l.b16 %v1364
      %v1718 = vunpack.c.l.b16 %v1374
      %v1719 = vunpack.c.l.b16 %v1388
      %v1720 = vunpack.c.l.b16 %v1398
      %v1721 = vunpack.c.l.b16 %v1412
      %v1722 = vunpack.c.l.b16 %v1422
      %v1723 = vunpack.c.l.b16 %v1436
      %v1724 = vunpack.c.l.b16 %v1446
      %v1725 = vunpack.c.l.b16 %v1460
      %v1726 = vunpack.c.l.b16 %v1470
      %v1727 = vunpack.c.l.b16 %v1484
      %v1728 = vunpack.c.l.b16 %v1494
      %v1729 = vunpack.c.l.b16 %v1508
      %v1730 = vunpack.c.l.b16 %v1518
      %v1731 = vunpack.c.l.b16 %v1532
      %v1732 = vunpack.c.l.b16 %v1542
      %v1733 = vunpack.c.l.b16 %v1556
      %v1734 = vunpack.c.l.b16 %v1566
      %v1735 = vunpack.c.l.b16 %v1580
      %v1736 = vunpack.c.l.b16 %v1590
      %v1737 = vunpack.c.l.b16 %v1604
      %v1738 = vunpack.c.l.b16 %v1614
      %v1739 = vunpack.c.l.b16 %v1628
      %v1740 = vunpack.c.l.b16 %v1638
      %v1741 = vunpack.c.l.b16 %v1652
      %v1742 = vunpack.c.l.b16 %v1662
      %v1743 = vunpack.c.l.b16 %v1676
      %v1744 = vunpack.c.l.b16 %v1686
      %v1745 = vunpack.c.l.b16 %v1700
      %v1746 = vunpack.c.l.b16 %v1710
      %v1747 = vpack.c.b16 %v1712, %v1711
      %v1748 = vpack.c.b16 %v1714, %v1713
      %v1749 = vpack.c.b16 %v1716, %v1715
      %v1750 = vpack.c.b16 %v1718, %v1717
      %v1751 = vpack.c.b16 %v1720, %v1719
      %v1752 = vpack.c.b16 %v1722, %v1721
      %v1753 = vpack.c.b16 %v1724, %v1723
      %v1754 = vpack.c.b16 %v1726, %v1725
      %v1755 = vpack.c.b16 %v1728, %v1727
      %v1756 = vpack.c.b16 %v1730, %v1729
      %v1757 = vpack.c.b16 %v1732, %v1731
      %v1758 = vpack.c.b16 %v1734, %v1733
      %v1759 = vpack.c.b16 %v1736, %v1735
      %v1760 = vpack.c.b16 %v1738, %v1737
      %v1761 = vpack.c.b16 %v1740, %v1739
      %v1762 = vpack.c.b16 %v1742, %v1741
      %v1763 = vpack.c.b16 %v1744, %v1743
      %v1764 = vpack.c.b16 %v1746, %v1745
      %1765 = vrot.lane.b32.xlu0 %v1747, 4
      %v1766 = vpop.permute.xlu0 %1765
      %1767 = vrot.lane.b32.xlu0 %v1748, 4
      %v1768 = vpop.permute.xlu0 %1767
      %1769 = vrot.lane.b32.xlu0 %v1749, 4
      %v1770 = vpop.permute.xlu0 %1769
      %1771 = vrot.lane.b32.xlu0 %v1750, 4
      %v1772 = vpop.permute.xlu0 %1771
      %1773 = vrot.lane.b32.xlu0 %v1751, 4
      %v1774 = vpop.permute.xlu0 %1773
      %1775 = vrot.lane.b32.xlu0 %v1752, 4
      %v1776 = vpop.permute.xlu0 %1775
      %1777 = vrot.lane.b32.xlu0 %v1753, 4
      %v1778 = vpop.permute.xlu0 %1777
      %1779 = vrot.lane.b32.xlu0 %v1754, 4
      %v1780 = vpop.permute.xlu0 %1779
      %1781 = vrot.lane.b32.xlu0 %v1755, 4
      %v1782 = vpop.permute.xlu0 %1781
      %1783 = vrot.lane.b32.xlu0 %v1756, 4
      %v1784 = vpop.permute.xlu0 %1783
      %1785 = vrot.lane.b32.xlu0 %v1757, 4
      %v1786 = vpop.permute.xlu0 %1785
      %1787 = vrot.lane.b32.xlu0 %v1758, 4
      %v1788 = vpop.permute.xlu0 %1787
      %1789 = vrot.lane.b32.xlu0 %v1759, 4
      %v1790 = vpop.permute.xlu0 %1789
      %1791 = vrot.lane.b32.xlu0 %v1760, 4
      %v1792 = vpop.permute.xlu0 %1791
      %1793 = vrot.lane.b32.xlu0 %v1761, 4
      %v1794 = vpop.permute.xlu0 %1793
      %1795 = vrot.lane.b32.xlu0 %v1762, 4
      %v1796 = vpop.permute.xlu0 %1795
      %1797 = vrot.lane.b32.xlu0 %v1763, 4
      %v1798 = vpop.permute.xlu0 %1797
      %1799 = vrot.lane.b32.xlu0 %v1764, 4
      %v1800 = vpop.permute.xlu0 %1799
      %vm1819 = vcmask 64544
      %1820 = vst.msk [vmem:[#allocation3] sm:$0xff] %vm1819, %v1766
      %1821 = vst.msk [vmem:[#allocation3 + $0x8] sm:$0xff] %vm1819, %v1768
      %1822 = vst.msk [vmem:[#allocation3 + $0x10] sm:$0xff] %vm1819, %v1770
      %1823 = vst.msk [vmem:[#allocation3 + $0x18] sm:$0xff] %vm1819, %v1772
      %1824 = vst.msk [vmem:[#allocation3 + $0x20] sm:$0xff] %vm1819, %v1774
      %1825 = vst.msk [vmem:[#allocation3 + $0x28] sm:$0xff] %vm1819, %v1776
      %1826 = vst.msk [vmem:[#allocation3 + $0x30] sm:$0xff] %vm1819, %v1778
      %1827 = vst.msk [vmem:[#allocation3 + $0x38] sm:$0xff] %vm1819, %v1780
      %1828 = vst.msk [vmem:[#allocation3 + $0x40] sm:$0xff] %vm1819, %v1782
      %1829 = vst.msk [vmem:[#allocation3 + $0x48] sm:$0xff] %vm1819, %v1784
      %1830 = vst.msk [vmem:[#allocation3 + $0x50] sm:$0xff] %vm1819, %v1786
      %1831 = vst.msk [vmem:[#allocation3 + $0x58] sm:$0xff] %vm1819, %v1788
      %1832 = vst.msk [vmem:[#allocation3 + $0x60] sm:$0xff] %vm1819, %v1790
      %1833 = vst.msk [vmem:[#allocation3 + $0x68] sm:$0xff] %vm1819, %v1792
      %1834 = vst.msk [vmem:[#allocation3 + $0x70] sm:$0xff] %vm1819, %v1794
      %1835 = vst.msk [vmem:[#allocation3 + $0x78] sm:$0xff] %vm1819, %v1796
      %1836 = vst.msk [vmem:[#allocation3 + $0x80] sm:$0xff] %vm1819, %v1798
      %1837 = vst.msk [vmem:[#allocation3 + $0x88] sm:$0xff] %vm1819, %v1800
      %vm1856 = vcmask 1042432
      %vm1857 = vcmask 1046532
      %vm1858 = vmor %vm1856, %vm1857
      %v1859 = vrot.slane %v1095, 5
      %v1860 = vrot.slane %v1859, 4
      %v1861 = vrot.slane %v1096, 5
      %v1862 = vsel %vm1858, %v1860, %v1861
      %v1863 = vrot.slane %v1861, 4
      %v1864 = vrot.slane %v1097, 5
      %v1865 = vsel %vm1858, %v1863, %v1864
      %v1866 = vrot.slane %v1098, 5
      %v1867 = vrot.slane %v1866, 4
      %v1868 = vrot.slane %v1099, 5
      %v1869 = vsel %vm1858, %v1867, %v1868
      %v1870 = vrot.slane %v1868, 4
      %v1871 = vrot.slane %v1100, 5
      %v1872 = vsel %vm1858, %v1870, %v1871
      %v1873 = vrot.slane %v1101, 5
      %v1874 = vrot.slane %v1873, 4
      %v1875 = vrot.slane %v1102, 5
      %v1876 = vsel %vm1858, %v1874, %v1875
      %v1877 = vrot.slane %v1875, 4
      %v1878 = vrot.slane %v1103, 5
      %v1879 = vsel %vm1858, %v1877, %v1878
      %v1880 = vrot.slane %v1104, 5
      %v1881 = vrot.slane %v1880, 4
      %v1882 = vrot.slane %v1105, 5
      %v1883 = vsel %vm1858, %v1881, %v1882
      %v1884 = vrot.slane %v1882, 4
      %v1885 = vrot.slane %v1106, 5
      %v1886 = vsel %vm1858, %v1884, %v1885
      %v1887 = vrot.slane %v1107, 5
      %v1888 = vrot.slane %v1887, 4
      %v1889 = vrot.slane %v1108, 5
      %v1890 = vsel %vm1858, %v1888, %v1889
      %v1891 = vrot.slane %v1889, 4
      %v1892 = vrot.slane %v1109, 5
      %v1893 = vsel %vm1858, %v1891, %v1892
      %v1894 = vrot.slane %v1110, 5
      %v1895 = vrot.slane %v1894, 4
      %v1896 = vrot.slane %v1111, 5
      %v1897 = vsel %vm1858, %v1895, %v1896
      %v1898 = vrot.slane %v1896, 4
      %v1899 = vrot.slane %v1112, 5
      %v1900 = vsel %vm1858, %v1898, %v1899
      %v1901 = vrot.slane %v1113, 5
      %v1902 = vrot.slane %v1901, 4
      %v1903 = vrot.slane %v1114, 5
      %v1904 = vsel %vm1858, %v1902, %v1903
      %v1905 = vrot.slane %v1903, 4
      %v1906 = vrot.slane %v1115, 5
      %v1907 = vsel %vm1858, %v1905, %v1906
      %v1908 = vrot.slane %v1116, 5
      %v1909 = vrot.slane %v1908, 4
      %v1910 = vrot.slane %v1117, 5
      %v1911 = vsel %vm1858, %v1909, %v1910
      %v1912 = vrot.slane %v1910, 4
      %v1913 = vrot.slane %v1118, 5
      %v1914 = vsel %vm1858, %v1912, %v1913
      %v1915 = vrot.slane %v1119, 5
      %v1916 = vrot.slane %v1915, 4
      %v1917 = vrot.slane %v1120, 5
      %v1918 = vsel %vm1858, %v1916, %v1917
      %v1919 = vrot.slane %v1917, 4
      %v1920 = vrot.slane %v1121, 5
      %v1921 = vsel %vm1858, %v1919, %v1920
      %v1922 = vrot.slane %v1122, 5
      %v1923 = vrot.slane %v1922, 4
      %v1924 = vrot.slane %v1123, 5
      %v1925 = vsel %vm1858, %v1923, %v1924
      %v1926 = vrot.slane %v1924, 4
      %v1927 = vrot.slane %v1124, 5
      %v1928 = vsel %vm1858, %v1926, %v1927
      %v1929 = vrot.slane %v1125, 5
      %v1930 = vrot.slane %v1929, 4
      %v1931 = vrot.slane %v1126, 5
      %v1932 = vsel %vm1858, %v1930, %v1931
      %v1933 = vrot.slane %v1931, 4
      %v1934 = vrot.slane %v1127, 5
      %v1935 = vsel %vm1858, %v1933, %v1934
      %v1936 = vrot.slane %v1128, 5
      %v1937 = vrot.slane %v1936, 4
      %v1938 = vrot.slane %v1129, 5
      %v1939 = vsel %vm1858, %v1937, %v1938
      %v1940 = vrot.slane %v1938, 4
      %v1941 = vrot.slane %v1130, 5
      %v1942 = vsel %vm1858, %v1940, %v1941
      %v1943 = vrot.slane %v1131, 5
      %v1944 = vrot.slane %v1943, 4
      %v1945 = vrot.slane %v1132, 5
      %v1946 = vsel %vm1858, %v1944, %v1945
      %v1947 = vrot.slane %v1945, 4
      %v1948 = vrot.slane %v1133, 5
      %v1949 = vsel %vm1858, %v1947, %v1948
      %v1950 = vrot.slane %v1134, 5
      %v1951 = vrot.slane %v1950, 4
      %v1952 = vrot.slane %v1135, 5
      %v1953 = vsel %vm1858, %v1951, %v1952
      %v1954 = vrot.slane %v1952, 4
      %v1955 = vrot.slane %v1136, 5
      %v1956 = vsel %vm1858, %v1954, %v1955
      %v1957 = vrot.slane %v1137, 5
      %v1958 = vrot.slane %v1957, 4
      %v1959 = vrot.slane %v1138, 5
      %v1960 = vsel %vm1858, %v1958, %v1959
      %v1961 = vrot.slane %v1959, 4
      %v1962 = vrot.slane %v1139, 5
      %v1963 = vsel %vm1858, %v1961, %v1962
      %v1964 = vrot.slane %v1140, 5
      %v1965 = vrot.slane %v1964, 4
      %v1966 = vrot.slane %v1141, 5
      %v1967 = vsel %vm1858, %v1965, %v1966
      %v1968 = vrot.slane %v1966, 4
      %v1969 = vrot.slane %v1142, 5
      %v1970 = vsel %vm1858, %v1968, %v1969
      %v1971 = vrot.slane %v1143, 5
      %v1972 = vrot.slane %v1971, 4
      %v1973 = vrot.slane %v1144, 5
      %v1974 = vsel %vm1858, %v1972, %v1973
      %v1975 = vrot.slane %v1973, 4
      %v1976 = vrot.slane %v1145, 5
      %v1977 = vsel %vm1858, %v1975, %v1976
      %v1978 = vrot.slane %v1146, 5
      %v1979 = vrot.slane %v1978, 4
      %v1980 = vrot.slane %v1147, 5
      %v1981 = vsel %vm1858, %v1979, %v1980
      %v1982 = vrot.slane %v1980, 4
      %v1983 = vrot.slane %v1148, 5
      %v1984 = vsel %vm1858, %v1982, %v1983
      %v1985 = vunpack.c.l.b16 %v1862
      %v1986 = vunpack.c.l.b16 %v1865
      %v1987 = vunpack.c.l.b16 %v1869
      %v1988 = vunpack.c.l.b16 %v1872
      %v1989 = vunpack.c.l.b16 %v1876
      %v1990 = vunpack.c.l.b16 %v1879
      %v1991 = vunpack.c.l.b16 %v1883
      %v1992 = vunpack.c.l.b16 %v1886
      %v1993 = vunpack.c.l.b16 %v1890
      %v1994 = vunpack.c.l.b16 %v1893
      %v1995 = vunpack.c.l.b16 %v1897
      %v1996 = vunpack.c.l.b16 %v1900
      %v1997 = vunpack.c.l.b16 %v1904
      %v1998 = vunpack.c.l.b16 %v1907
      %v1999 = vunpack.c.l.b16 %v1911
      %v2000 = vunpack.c.l.b16 %v1914
      %v2001 = vunpack.c.l.b16 %v1918
      %v2002 = vunpack.c.l.b16 %v1921
      %v2003 = vunpack.c.l.b16 %v1925
      %v2004 = vunpack.c.l.b16 %v1928
      %v2005 = vunpack.c.l.b16 %v1932
      %v2006 = vunpack.c.l.b16 %v1935
      %v2007 = vunpack.c.l.b16 %v1939
      %v2008 = vunpack.c.l.b16 %v1942
      %v2009 = vunpack.c.l.b16 %v1946
      %v2010 = vunpack.c.l.b16 %v1949
      %v2011 = vunpack.c.l.b16 %v1953
      %v2012 = vunpack.c.l.b16 %v1956
      %v2013 = vunpack.c.l.b16 %v1960
      %v2014 = vunpack.c.l.b16 %v1963
      %v2015 = vunpack.c.l.b16 %v1967
      %v2016 = vunpack.c.l.b16 %v1970
      %v2017 = vunpack.c.l.b16 %v1974
      %v2018 = vunpack.c.l.b16 %v1977
      %v2019 = vunpack.c.l.b16 %v1981
      %v2020 = vunpack.c.l.b16 %v1984
      %v2021 = vpack.c.b16 %v1986, %v1985
      %v2022 = vpack.c.b16 %v1988, %v1987
      %v2023 = vpack.c.b16 %v1990, %v1989
      %v2024 = vpack.c.b16 %v1992, %v1991
      %v2025 = vpack.c.b16 %v1994, %v1993
      %v2026 = vpack.c.b16 %v1996, %v1995
      %v2027 = vpack.c.b16 %v1998, %v1997
      %v2028 = vpack.c.b16 %v2000, %v1999
      %v2029 = vpack.c.b16 %v2002, %v2001
      %v2030 = vpack.c.b16 %v2004, %v2003
      %v2031 = vpack.c.b16 %v2006, %v2005
      %v2032 = vpack.c.b16 %v2008, %v2007
      %v2033 = vpack.c.b16 %v2010, %v2009
      %v2034 = vpack.c.b16 %v2012, %v2011
      %v2035 = vpack.c.b16 %v2014, %v2013
      %v2036 = vpack.c.b16 %v2016, %v2015
      %v2037 = vpack.c.b16 %v2018, %v2017
      %v2038 = vpack.c.b16 %v2020, %v2019
      %2039 = vrot.lane.b32.xlu0 %v2021, 8
      %v2040 = vpop.permute.xlu0 %2039
      %2041 = vrot.lane.b32.xlu0 %v2022, 8
      %v2042 = vpop.permute.xlu0 %2041
      %2043 = vrot.lane.b32.xlu0 %v2023, 8
      %v2044 = vpop.permute.xlu0 %2043
      %2045 = vrot.lane.b32.xlu0 %v2024, 8
      %v2046 = vpop.permute.xlu0 %2045
      %2047 = vrot.lane.b32.xlu0 %v2025, 8
      %v2048 = vpop.permute.xlu0 %2047
      %2049 = vrot.lane.b32.xlu0 %v2026, 8
      %v2050 = vpop.permute.xlu0 %2049
      %2051 = vrot.lane.b32.xlu0 %v2027, 8
      %v2052 = vpop.permute.xlu0 %2051
      %2053 = vrot.lane.b32.xlu0 %v2028, 8
      %v2054 = vpop.permute.xlu0 %2053
      %2055 = vrot.lane.b32.xlu0 %v2029, 8
      %v2056 = vpop.permute.xlu0 %2055
      %2057 = vrot.lane.b32.xlu0 %v2030, 8
      %v2058 = vpop.permute.xlu0 %2057
      %2059 = vrot.lane.b32.xlu0 %v2031, 8
      %v2060 = vpop.permute.xlu0 %2059
      %2061 = vrot.lane.b32.xlu0 %v2032, 8
      %v2062 = vpop.permute.xlu0 %2061
      %2063 = vrot.lane.b32.xlu0 %v2033, 8
      %v2064 = vpop.permute.xlu0 %2063
      %2065 = vrot.lane.b32.xlu0 %v2034, 8
      %v2066 = vpop.permute.xlu0 %2065
      %2067 = vrot.lane.b32.xlu0 %v2035, 8
      %v2068 = vpop.permute.xlu0 %2067
      %2069 = vrot.lane.b32.xlu0 %v2036, 8
      %v2070 = vpop.permute.xlu0 %2069
      %2071 = vrot.lane.b32.xlu0 %v2037, 8
      %v2072 = vpop.permute.xlu0 %2071
      %2073 = vrot.lane.b32.xlu0 %v2038, 8
      %v2074 = vpop.permute.xlu0 %2073
      %vm2093 = vcmask 97344
      %2094 = vst.msk [vmem:[#allocation3] sm:$0xff] %vm2093, %v2040
      %2095 = vst.msk [vmem:[#allocation3 + $0x8] sm:$0xff] %vm2093, %v2042
      %2096 = vst.msk [vmem:[#allocation3 + $0x10] sm:$0xff] %vm2093, %v2044
      %2097 = vst.msk [vmem:[#allocation3 + $0x18] sm:$0xff] %vm2093, %v2046
      %2098 = vst.msk [vmem:[#allocation3 + $0x20] sm:$0xff] %vm2093, %v2048
      %2099 = vst.msk [vmem:[#allocation3 + $0x28] sm:$0xff] %vm2093, %v2050
      %2100 = vst.msk [vmem:[#allocation3 + $0x30] sm:$0xff] %vm2093, %v2052
      %2101 = vst.msk [vmem:[#allocation3 + $0x38] sm:$0xff] %vm2093, %v2054
      %2102 = vst.msk [vmem:[#allocation3 + $0x40] sm:$0xff] %vm2093, %v2056
      %2103 = vst.msk [vmem:[#allocation3 + $0x48] sm:$0xff] %vm2093, %v2058
      %2104 = vst.msk [vmem:[#allocation3 + $0x50] sm:$0xff] %vm2093, %v2060
      %2105 = vst.msk [vmem:[#allocation3 + $0x58] sm:$0xff] %vm2093, %v2062
      %2106 = vst.msk [vmem:[#allocation3 + $0x60] sm:$0xff] %vm2093, %v2064
      %2107 = vst.msk [vmem:[#allocation3 + $0x68] sm:$0xff] %vm2093, %v2066
      %2108 = vst.msk [vmem:[#allocation3 + $0x70] sm:$0xff] %vm2093, %v2068
      %2109 = vst.msk [vmem:[#allocation3 + $0x78] sm:$0xff] %vm2093, %v2070
      %2110 = vst.msk [vmem:[#allocation3 + $0x80] sm:$0xff] %vm2093, %v2072
      %2111 = vst.msk [vmem:[#allocation3 + $0x88] sm:$0xff] %vm2093, %v2074
      %s2112 = scalar_lea.vmem [#allocation2], 12
      %v2113 = vld [vmem:[%s2112] sm:$0xf]
      %v2114 = vld [vmem:[%s2112 + $0x4] sm:$0xf]
      %v2115 = vld [vmem:[%s2112 + $0x8] sm:$0x1]
      %v2116 = vld [vmem:[%s2112 + $0xc] sm:$0xf]
      %v2117 = vld [vmem:[%s2112 + $0x10] sm:$0xf]
      %v2118 = vld [vmem:[%s2112 + $0x14] sm:$0x1]
      %v2119 = vld [vmem:[%s2112 + $0x18] sm:$0xf]
      %v2120 = vld [vmem:[%s2112 + $0x1c] sm:$0xf]
      %v2121 = vld [vmem:[%s2112 + $0x20] sm:$0x1]
      %v2122 = vld [vmem:[%s2112 + $0x24] sm:$0xf]
      %v2123 = vld [vmem:[%s2112 + $0x28] sm:$0xf]
      %v2124 = vld [vmem:[%s2112 + $0x2c] sm:$0x1]
      %v2125 = vld [vmem:[%s2112 + $0x30] sm:$0xf]
      %v2126 = vld [vmem:[%s2112 + $0x34] sm:$0xf]
      %v2127 = vld [vmem:[%s2112 + $0x38] sm:$0x1]
      %v2128 = vld [vmem:[%s2112 + $0x3c] sm:$0xf]
      %v2129 = vld [vmem:[%s2112 + $0x40] sm:$0xf]
      %v2130 = vld [vmem:[%s2112 + $0x44] sm:$0x1]
      %v2131 = vld [vmem:[%s2112 + $0x48] sm:$0xf]
      %v2132 = vld [vmem:[%s2112 + $0x4c] sm:$0xf]
      %v2133 = vld [vmem:[%s2112 + $0x50] sm:$0x1]
      %v2134 = vld [vmem:[%s2112 + $0x54] sm:$0xf]
      %v2135 = vld [vmem:[%s2112 + $0x58] sm:$0xf]
      %v2136 = vld [vmem:[%s2112 + $0x5c] sm:$0x1]
      %v2137 = vld [vmem:[%s2112 + $0x60] sm:$0xf]
      %v2138 = vld [vmem:[%s2112 + $0x64] sm:$0xf]
      %v2139 = vld [vmem:[%s2112 + $0x68] sm:$0x1]
      %v2140 = vld [vmem:[%s2112 + $0x6c] sm:$0xf]
      %v2141 = vld [vmem:[%s2112 + $0x70] sm:$0xf]
      %v2142 = vld [vmem:[%s2112 + $0x74] sm:$0x1]
      %v2143 = vld [vmem:[%s2112 + $0x78] sm:$0xf]
      %v2144 = vld [vmem:[%s2112 + $0x7c] sm:$0xf]
      %v2145 = vld [vmem:[%s2112 + $0x80] sm:$0x1]
      %v2146 = vld [vmem:[%s2112 + $0x84] sm:$0xf]
      %v2147 = vld [vmem:[%s2112 + $0x88] sm:$0xf]
      %v2148 = vld [vmem:[%s2112 + $0x8c] sm:$0x1]
      %v2149 = vld [vmem:[%s2112 + $0x90] sm:$0xf]
      %v2150 = vld [vmem:[%s2112 + $0x94] sm:$0xf]
      %v2151 = vld [vmem:[%s2112 + $0x98] sm:$0x1]
      %v2152 = vld [vmem:[%s2112 + $0x9c] sm:$0xf]
      %v2153 = vld [vmem:[%s2112 + $0xa0] sm:$0xf]
      %v2154 = vld [vmem:[%s2112 + $0xa4] sm:$0x1]
      %v2155 = vld [vmem:[%s2112 + $0xa8] sm:$0xf]
      %v2156 = vld [vmem:[%s2112 + $0xac] sm:$0xf]
      %v2157 = vld [vmem:[%s2112 + $0xb0] sm:$0x1]
      %v2158 = vld [vmem:[%s2112 + $0xb4] sm:$0xf]
      %v2159 = vld [vmem:[%s2112 + $0xb8] sm:$0xf]
      %v2160 = vld [vmem:[%s2112 + $0xbc] sm:$0x1]
      %v2161 = vld [vmem:[%s2112 + $0xc0] sm:$0xf]
      %v2162 = vld [vmem:[%s2112 + $0xc4] sm:$0xf]
      %v2163 = vld [vmem:[%s2112 + $0xc8] sm:$0x1]
      %v2164 = vld [vmem:[%s2112 + $0xcc] sm:$0xf]
      %v2165 = vld [vmem:[%s2112 + $0xd0] sm:$0xf]
      %v2166 = vld [vmem:[%s2112 + $0xd4] sm:$0x1]
      %v2203 = vunpack.c.l.b16 %v2113
      %v2204 = vunpack.c.l.b16 %v2114
      %v2205 = vunpack.c.l.b16 %v2116
      %v2206 = vunpack.c.l.b16 %v2117
      %v2207 = vunpack.c.l.b16 %v2119
      %v2208 = vunpack.c.l.b16 %v2120
      %v2209 = vunpack.c.l.b16 %v2122
      %v2210 = vunpack.c.l.b16 %v2123
      %v2211 = vunpack.c.l.b16 %v2125
      %v2212 = vunpack.c.l.b16 %v2126
      %v2213 = vunpack.c.l.b16 %v2128
      %v2214 = vunpack.c.l.b16 %v2129
      %v2215 = vunpack.c.l.b16 %v2131
      %v2216 = vunpack.c.l.b16 %v2132
      %v2217 = vunpack.c.l.b16 %v2134
      %v2218 = vunpack.c.l.b16 %v2135
      %v2219 = vunpack.c.l.b16 %v2137
      %v2220 = vunpack.c.l.b16 %v2138
      %v2221 = vunpack.c.l.b16 %v2140
      %v2222 = vunpack.c.l.b16 %v2141
      %v2223 = vunpack.c.l.b16 %v2143
      %v2224 = vunpack.c.l.b16 %v2144
      %v2225 = vunpack.c.l.b16 %v2146
      %v2226 = vunpack.c.l.b16 %v2147
      %v2227 = vunpack.c.l.b16 %v2149
      %v2228 = vunpack.c.l.b16 %v2150
      %v2229 = vunpack.c.l.b16 %v2152
      %v2230 = vunpack.c.l.b16 %v2153
      %v2231 = vunpack.c.l.b16 %v2155
      %v2232 = vunpack.c.l.b16 %v2156
      %v2233 = vunpack.c.l.b16 %v2158
      %v2234 = vunpack.c.l.b16 %v2159
      %v2235 = vunpack.c.l.b16 %v2161
      %v2236 = vunpack.c.l.b16 %v2162
      %v2237 = vunpack.c.l.b16 %v2164
      %v2238 = vunpack.c.l.b16 %v2165
      %v2239 = vpack.c.b16 %v2204, %v2203
      %v2240 = vpack.c.b16 %v2206, %v2205
      %v2241 = vpack.c.b16 %v2208, %v2207
      %v2242 = vpack.c.b16 %v2210, %v2209
      %v2243 = vpack.c.b16 %v2212, %v2211
      %v2244 = vpack.c.b16 %v2214, %v2213
      %v2245 = vpack.c.b16 %v2216, %v2215
      %v2246 = vpack.c.b16 %v2218, %v2217
      %v2247 = vpack.c.b16 %v2220, %v2219
      %v2248 = vpack.c.b16 %v2222, %v2221
      %v2249 = vpack.c.b16 %v2224, %v2223
      %v2250 = vpack.c.b16 %v2226, %v2225
      %v2251 = vpack.c.b16 %v2228, %v2227
      %v2252 = vpack.c.b16 %v2230, %v2229
      %v2253 = vpack.c.b16 %v2232, %v2231
      %v2254 = vpack.c.b16 %v2234, %v2233
      %v2255 = vpack.c.b16 %v2236, %v2235
      %v2256 = vpack.c.b16 %v2238, %v2237
      %2257 = vrot.lane.b32.xlu0 %v2239, 12
      %v2258 = vpop.permute.xlu0 %2257
      %2259 = vrot.lane.b32.xlu0 %v2240, 12
      %v2260 = vpop.permute.xlu0 %2259
      %2261 = vrot.lane.b32.xlu0 %v2241, 12
      %v2262 = vpop.permute.xlu0 %2261
      %2263 = vrot.lane.b32.xlu0 %v2242, 12
      %v2264 = vpop.permute.xlu0 %2263
      %2265 = vrot.lane.b32.xlu0 %v2243, 12
      %v2266 = vpop.permute.xlu0 %2265
      %2267 = vrot.lane.b32.xlu0 %v2244, 12
      %v2268 = vpop.permute.xlu0 %2267
      %2269 = vrot.lane.b32.xlu0 %v2245, 12
      %v2270 = vpop.permute.xlu0 %2269
      %2271 = vrot.lane.b32.xlu0 %v2246, 12
      %v2272 = vpop.permute.xlu0 %2271
      %2273 = vrot.lane.b32.xlu0 %v2247, 12
      %v2274 = vpop.permute.xlu0 %2273
      %2275 = vrot.lane.b32.xlu0 %v2248, 12
      %v2276 = vpop.permute.xlu0 %2275
      %2277 = vrot.lane.b32.xlu0 %v2249, 12
      %v2278 = vpop.permute.xlu0 %2277
      %2279 = vrot.lane.b32.xlu0 %v2250, 12
      %v2280 = vpop.permute.xlu0 %2279
      %2281 = vrot.lane.b32.xlu0 %v2251, 12
      %v2282 = vpop.permute.xlu0 %2281
      %2283 = vrot.lane.b32.xlu0 %v2252, 12
      %v2284 = vpop.permute.xlu0 %2283
      %2285 = vrot.lane.b32.xlu0 %v2253, 12
      %v2286 = vpop.permute.xlu0 %2285
      %2287 = vrot.lane.b32.xlu0 %v2254, 12
      %v2288 = vpop.permute.xlu0 %2287
      %2289 = vrot.lane.b32.xlu0 %v2255, 12
      %v2290 = vpop.permute.xlu0 %2289
      %2291 = vrot.lane.b32.xlu0 %v2256, 12
      %v2292 = vpop.permute.xlu0 %2291
      %vm2311 = vcmask 130144
      %2312 = vst.msk [vmem:[#allocation3] sm:$0xff] %vm2311, %v2258
      %2313 = vst.msk [vmem:[#allocation3 + $0x8] sm:$0xff] %vm2311, %v2260
      %2314 = vst.msk [vmem:[#allocation3 + $0x10] sm:$0xff] %vm2311, %v2262
      %2315 = vst.msk [vmem:[#allocation3 + $0x18] sm:$0xff] %vm2311, %v2264
      %2316 = vst.msk [vmem:[#allocation3 + $0x20] sm:$0xff] %vm2311, %v2266
      %2317 = vst.msk [vmem:[#allocation3 + $0x28] sm:$0xff] %vm2311, %v2268
      %2318 = vst.msk [vmem:[#allocation3 + $0x30] sm:$0xff] %vm2311, %v2270
      %2319 = vst.msk [vmem:[#allocation3 + $0x38] sm:$0xff] %vm2311, %v2272
      %2320 = vst.msk [vmem:[#allocation3 + $0x40] sm:$0xff] %vm2311, %v2274
      %2321 = vst.msk [vmem:[#allocation3 + $0x48] sm:$0xff] %vm2311, %v2276
      %2322 = vst.msk [vmem:[#allocation3 + $0x50] sm:$0xff] %vm2311, %v2278
      %2323 = vst.msk [vmem:[#allocation3 + $0x58] sm:$0xff] %vm2311, %v2280
      %2324 = vst.msk [vmem:[#allocation3 + $0x60] sm:$0xff] %vm2311, %v2282
      %2325 = vst.msk [vmem:[#allocation3 + $0x68] sm:$0xff] %vm2311, %v2284
      %2326 = vst.msk [vmem:[#allocation3 + $0x70] sm:$0xff] %vm2311, %v2286
      %2327 = vst.msk [vmem:[#allocation3 + $0x78] sm:$0xff] %vm2311, %v2288
      %2328 = vst.msk [vmem:[#allocation3 + $0x80] sm:$0xff] %vm2311, %v2290
      %2329 = vst.msk [vmem:[#allocation3 + $0x88] sm:$0xff] %vm2311, %v2292
      %v2331 = vshrl.u32 %v2113, 16
      %v2333 = vrot.slane %v2331, 4
      %v2334 = vshll.u32 %v2113, 16
      %v2336 = vrot.slane %v2334, 5
      %v2337 = vor.u32 %v2333, %v2336
      %v2338 = vrot.slane %v2337, 4
      %v2340 = vshll.u32 %v2114, 16
      %v2342 = vrot.slane %v2340, 5
      %v2343 = vsel %vm1278, %v2338, %v2342
      %v2344 = vshrl.u32 %v2114, 16
      %v2346 = vrot.slane %v2344, 4
      %v2347 = vor.u32 %v2346, %v2342
      %v2348 = vrot.slane %v2347, 4
      %v2350 = vshll.u32 %v2115, 16
      %v2352 = vrot.slane %v2350, 5
      %v2353 = vsel %vm1278, %v2348, %v2352
      %v2355 = vshrl.u32 %v2116, 16
      %v2357 = vrot.slane %v2355, 4
      %v2358 = vshll.u32 %v2116, 16
      %v2360 = vrot.slane %v2358, 5
      %v2361 = vor.u32 %v2357, %v2360
      %v2362 = vrot.slane %v2361, 4
      %v2364 = vshll.u32 %v2117, 16
      %v2366 = vrot.slane %v2364, 5
      %v2367 = vsel %vm1278, %v2362, %v2366
      %v2368 = vshrl.u32 %v2117, 16
      %v2370 = vrot.slane %v2368, 4
      %v2371 = vor.u32 %v2370, %v2366
      %v2372 = vrot.slane %v2371, 4
      %v2374 = vshll.u32 %v2118, 16
      %v2376 = vrot.slane %v2374, 5
      %v2377 = vsel %vm1278, %v2372, %v2376
      %v2379 = vshrl.u32 %v2119, 16
      %v2381 = vrot.slane %v2379, 4
      %v2382 = vshll.u32 %v2119, 16
      %v2384 = vrot.slane %v2382, 5
      %v2385 = vor.u32 %v2381, %v2384
      %v2386 = vrot.slane %v2385, 4
      %v2388 = vshll.u32 %v2120, 16
      %v2390 = vrot.slane %v2388, 5
      %v2391 = vsel %vm1278, %v2386, %v2390
      %v2392 = vshrl.u32 %v2120, 16
      %v2394 = vrot.slane %v2392, 4
      %v2395 = vor.u32 %v2394, %v2390
      %v2396 = vrot.slane %v2395, 4
      %v2398 = vshll.u32 %v2121, 16
      %v2400 = vrot.slane %v2398, 5
      %v2401 = vsel %vm1278, %v2396, %v2400
      %v2403 = vshrl.u32 %v2122, 16
      %v2405 = vrot.slane %v2403, 4
      %v2406 = vshll.u32 %v2122, 16
      %v2408 = vrot.slane %v2406, 5
      %v2409 = vor.u32 %v2405, %v2408
      %v2410 = vrot.slane %v2409, 4
      %v2412 = vshll.u32 %v2123, 16
      %v2414 = vrot.slane %v2412, 5
      %v2415 = vsel %vm1278, %v2410, %v2414
      %v2416 = vshrl.u32 %v2123, 16
      %v2418 = vrot.slane %v2416, 4
      %v2419 = vor.u32 %v2418, %v2414
      %v2420 = vrot.slane %v2419, 4
      %v2422 = vshll.u32 %v2124, 16
      %v2424 = vrot.slane %v2422, 5
      %v2425 = vsel %vm1278, %v2420, %v2424
      %v2427 = vshrl.u32 %v2125, 16
      %v2429 = vrot.slane %v2427, 4
      %v2430 = vshll.u32 %v2125, 16
      %v2432 = vrot.slane %v2430, 5
      %v2433 = vor.u32 %v2429, %v2432
      %v2434 = vrot.slane %v2433, 4
      %v2436 = vshll.u32 %v2126, 16
      %v2438 = vrot.slane %v2436, 5
      %v2439 = vsel %vm1278, %v2434, %v2438
      %v2440 = vshrl.u32 %v2126, 16
      %v2442 = vrot.slane %v2440, 4
      %v2443 = vor.u32 %v2442, %v2438
      %v2444 = vrot.slane %v2443, 4
      %v2446 = vshll.u32 %v2127, 16
      %v2448 = vrot.slane %v2446, 5
      %v2449 = vsel %vm1278, %v2444, %v2448
      %v2451 = vshrl.u32 %v2128, 16
      %v2453 = vrot.slane %v2451, 4
      %v2454 = vshll.u32 %v2128, 16
      %v2456 = vrot.slane %v2454, 5
      %v2457 = vor.u32 %v2453, %v2456
      %v2458 = vrot.slane %v2457, 4
      %v2460 = vshll.u32 %v2129, 16
      %v2462 = vrot.slane %v2460, 5
      %v2463 = vsel %vm1278, %v2458, %v2462
      %v2464 = vshrl.u32 %v2129, 16
      %v2466 = vrot.slane %v2464, 4
      %v2467 = vor.u32 %v2466, %v2462
      %v2468 = vrot.slane %v2467, 4
      %v2470 = vshll.u32 %v2130, 16
      %v2472 = vrot.slane %v2470, 5
      %v2473 = vsel %vm1278, %v2468, %v2472
      %v2475 = vshrl.u32 %v2131, 16
      %v2477 = vrot.slane %v2475, 4
      %v2478 = vshll.u32 %v2131, 16
      %v2480 = vrot.slane %v2478, 5
      %v2481 = vor.u32 %v2477, %v2480
      %v2482 = vrot.slane %v2481, 4
      %v2484 = vshll.u32 %v2132, 16
      %v2486 = vrot.slane %v2484, 5
      %v2487 = vsel %vm1278, %v2482, %v2486
      %v2488 = vshrl.u32 %v2132, 16
      %v2490 = vrot.slane %v2488, 4
      %v2491 = vor.u32 %v2490, %v2486
      %v2492 = vrot.slane %v2491, 4
      %v2494 = vshll.u32 %v2133, 16
      %v2496 = vrot.slane %v2494, 5
      %v2497 = vsel %vm1278, %v2492, %v2496
      %v2499 = vshrl.u32 %v2134, 16
      %v2501 = vrot.slane %v2499, 4
      %v2502 = vshll.u32 %v2134, 16
      %v2504 = vrot.slane %v2502, 5
      %v2505 = vor.u32 %v2501, %v2504
      %v2506 = vrot.slane %v2505, 4
      %v2508 = vshll.u32 %v2135, 16
      %v2510 = vrot.slane %v2508, 5
      %v2511 = vsel %vm1278, %v2506, %v2510
      %v2512 = vshrl.u32 %v2135, 16
      %v2514 = vrot.slane %v2512, 4
      %v2515 = vor.u32 %v2514, %v2510
      %v2516 = vrot.slane %v2515, 4
      %v2518 = vshll.u32 %v2136, 16
      %v2520 = vrot.slane %v2518, 5
      %v2521 = vsel %vm1278, %v2516, %v2520
      %v2523 = vshrl.u32 %v2137, 16
      %v2525 = vrot.slane %v2523, 4
      %v2526 = vshll.u32 %v2137, 16
      %v2528 = vrot.slane %v2526, 5
      %v2529 = vor.u32 %v2525, %v2528
      %v2530 = vrot.slane %v2529, 4
      %v2532 = vshll.u32 %v2138, 16
      %v2534 = vrot.slane %v2532, 5
      %v2535 = vsel %vm1278, %v2530, %v2534
      %v2536 = vshrl.u32 %v2138, 16
      %v2538 = vrot.slane %v2536, 4
      %v2539 = vor.u32 %v2538, %v2534
      %v2540 = vrot.slane %v2539, 4
      %v2542 = vshll.u32 %v2139, 16
      %v2544 = vrot.slane %v2542, 5
      %v2545 = vsel %vm1278, %v2540, %v2544
      %v2547 = vshrl.u32 %v2140, 16
      %v2549 = vrot.slane %v2547, 4
      %v2550 = vshll.u32 %v2140, 16
      %v2552 = vrot.slane %v2550, 5
      %v2553 = vor.u32 %v2549, %v2552
      %v2554 = vrot.slane %v2553, 4
      %v2556 = vshll.u32 %v2141, 16
      %v2558 = vrot.slane %v2556, 5
      %v2559 = vsel %vm1278, %v2554, %v2558
      %v2560 = vshrl.u32 %v2141, 16
      %v2562 = vrot.slane %v2560, 4
      %v2563 = vor.u32 %v2562, %v2558
      %v2564 = vrot.slane %v2563, 4
      %v2566 = vshll.u32 %v2142, 16
      %v2568 = vrot.slane %v2566, 5
      %v2569 = vsel %vm1278, %v2564, %v2568
      %v2571 = vshrl.u32 %v2143, 16
      %v2573 = vrot.slane %v2571, 4
      %v2574 = vshll.u32 %v2143, 16
      %v2576 = vrot.slane %v2574, 5
      %v2577 = vor.u32 %v2573, %v2576
      %v2578 = vrot.slane %v2577, 4
      %v2580 = vshll.u32 %v2144, 16
      %v2582 = vrot.slane %v2580, 5
      %v2583 = vsel %vm1278, %v2578, %v2582
      %v2584 = vshrl.u32 %v2144, 16
      %v2586 = vrot.slane %v2584, 4
      %v2587 = vor.u32 %v2586, %v2582
      %v2588 = vrot.slane %v2587, 4
      %v2590 = vshll.u32 %v2145, 16
      %v2592 = vrot.slane %v2590, 5
      %v2593 = vsel %vm1278, %v2588, %v2592
      %v2595 = vshrl.u32 %v2146, 16
      %v2597 = vrot.slane %v2595, 4
      %v2598 = vshll.u32 %v2146, 16
      %v2600 = vrot.slane %v2598, 5
      %v2601 = vor.u32 %v2597, %v2600
      %v2602 = vrot.slane %v2601, 4
      %v2604 = vshll.u32 %v2147, 16
      %v2606 = vrot.slane %v2604, 5
      %v2607 = vsel %vm1278, %v2602, %v2606
      %v2608 = vshrl.u32 %v2147, 16
      %v2610 = vrot.slane %v2608, 4
      %v2611 = vor.u32 %v2610, %v2606
      %v2612 = vrot.slane %v2611, 4
      %v2614 = vshll.u32 %v2148, 16
      %v2616 = vrot.slane %v2614, 5
      %v2617 = vsel %vm1278, %v2612, %v2616
      %v2619 = vshrl.u32 %v2149, 16
      %v2621 = vrot.slane %v2619, 4
      %v2622 = vshll.u32 %v2149, 16
      %v2624 = vrot.slane %v2622, 5
      %v2625 = vor.u32 %v2621, %v2624
      %v2626 = vrot.slane %v2625, 4
      %v2628 = vshll.u32 %v2150, 16
      %v2630 = vrot.slane %v2628, 5
      %v2631 = vsel %vm1278, %v2626, %v2630
      %v2632 = vshrl.u32 %v2150, 16
      %v2634 = vrot.slane %v2632, 4
      %v2635 = vor.u32 %v2634, %v2630
      %v2636 = vrot.slane %v2635, 4
      %v2638 = vshll.u32 %v2151, 16
      %v2640 = vrot.slane %v2638, 5
      %v2641 = vsel %vm1278, %v2636, %v2640
      %v2643 = vshrl.u32 %v2152, 16
      %v2645 = vrot.slane %v2643, 4
      %v2646 = vshll.u32 %v2152, 16
      %v2648 = vrot.slane %v2646, 5
      %v2649 = vor.u32 %v2645, %v2648
      %v2650 = vrot.slane %v2649, 4
      %v2652 = vshll.u32 %v2153, 16
      %v2654 = vrot.slane %v2652, 5
      %v2655 = vsel %vm1278, %v2650, %v2654
      %v2656 = vshrl.u32 %v2153, 16
      %v2658 = vrot.slane %v2656, 4
      %v2659 = vor.u32 %v2658, %v2654
      %v2660 = vrot.slane %v2659, 4
      %v2662 = vshll.u32 %v2154, 16
      %v2664 = vrot.slane %v2662, 5
      %v2665 = vsel %vm1278, %v2660, %v2664
      %v2667 = vshrl.u32 %v2155, 16
      %v2669 = vrot.slane %v2667, 4
      %v2670 = vshll.u32 %v2155, 16
      %v2672 = vrot.slane %v2670, 5
      %v2673 = vor.u32 %v2669, %v2672
      %v2674 = vrot.slane %v2673, 4
      %v2676 = vshll.u32 %v2156, 16
      %v2678 = vrot.slane %v2676, 5
      %v2679 = vsel %vm1278, %v2674, %v2678
      %v2680 = vshrl.u32 %v2156, 16
      %v2682 = vrot.slane %v2680, 4
      %v2683 = vor.u32 %v2682, %v2678
      %v2684 = vrot.slane %v2683, 4
      %v2686 = vshll.u32 %v2157, 16
      %v2688 = vrot.slane %v2686, 5
      %v2689 = vsel %vm1278, %v2684, %v2688
      %v2691 = vshrl.u32 %v2158, 16
      %v2693 = vrot.slane %v2691, 4
      %v2694 = vshll.u32 %v2158, 16
      %v2696 = vrot.slane %v2694, 5
      %v2697 = vor.u32 %v2693, %v2696
      %v2698 = vrot.slane %v2697, 4
      %v2700 = vshll.u32 %v2159, 16
      %v2702 = vrot.slane %v2700, 5
      %v2703 = vsel %vm1278, %v2698, %v2702
      %v2704 = vshrl.u32 %v2159, 16
      %v2706 = vrot.slane %v2704, 4
      %v2707 = vor.u32 %v2706, %v2702
      %v2708 = vrot.slane %v2707, 4
      %v2710 = vshll.u32 %v2160, 16
      %v2712 = vrot.slane %v2710, 5
      %v2713 = vsel %vm1278, %v2708, %v2712
      %v2715 = vshrl.u32 %v2161, 16
      %v2717 = vrot.slane %v2715, 4
      %v2718 = vshll.u32 %v2161, 16
      %v2720 = vrot.slane %v2718, 5
      %v2721 = vor.u32 %v2717, %v2720
      %v2722 = vrot.slane %v2721, 4
      %v2724 = vshll.u32 %v2162, 16
      %v2726 = vrot.slane %v2724, 5
      %v2727 = vsel %vm1278, %v2722, %v2726
      %v2728 = vshrl.u32 %v2162, 16
      %v2730 = vrot.slane %v2728, 4
      %v2731 = vor.u32 %v2730, %v2726
      %v2732 = vrot.slane %v2731, 4
      %v2734 = vshll.u32 %v2163, 16
      %v2736 = vrot.slane %v2734, 5
      %v2737 = vsel %vm1278, %v2732, %v2736
      %v2739 = vshrl.u32 %v2164, 16
      %v2741 = vrot.slane %v2739, 4
      %v2742 = vshll.u32 %v2164, 16
      %v2744 = vrot.slane %v2742, 5
      %v2745 = vor.u32 %v2741, %v2744
      %v2746 = vrot.slane %v2745, 4
      %v2748 = vshll.u32 %v2165, 16
      %v2750 = vrot.slane %v2748, 5
      %v2751 = vsel %vm1278, %v2746, %v2750
      %v2752 = vshrl.u32 %v2165, 16
      %v2754 = vrot.slane %v2752, 4
      %v2755 = vor.u32 %v2754, %v2750
      %v2756 = vrot.slane %v2755, 4
      %v2758 = vshll.u32 %v2166, 16
      %v2760 = vrot.slane %v2758, 5
      %v2761 = vsel %vm1278, %v2756, %v2760
      %v2762 = vunpack.c.l.b16 %v2343
      %v2763 = vunpack.c.l.b16 %v2353
      %v2764 = vunpack.c.l.b16 %v2367
      %v2765 = vunpack.c.l.b16 %v2377
      %v2766 = vunpack.c.l.b16 %v2391
      %v2767 = vunpack.c.l.b16 %v2401
      %v2768 = vunpack.c.l.b16 %v2415
      %v2769 = vunpack.c.l.b16 %v2425
      %v2770 = vunpack.c.l.b16 %v2439
      %v2771 = vunpack.c.l.b16 %v2449
      %v2772 = vunpack.c.l.b16 %v2463
      %v2773 = vunpack.c.l.b16 %v2473
      %v2774 = vunpack.c.l.b16 %v2487
      %v2775 = vunpack.c.l.b16 %v2497
      %v2776 = vunpack.c.l.b16 %v2511
      %v2777 = vunpack.c.l.b16 %v2521
      %v2778 = vunpack.c.l.b16 %v2535
      %v2779 = vunpack.c.l.b16 %v2545
      %v2780 = vunpack.c.l.b16 %v2559
      %v2781 = vunpack.c.l.b16 %v2569
      %v2782 = vunpack.c.l.b16 %v2583
      %v2783 = vunpack.c.l.b16 %v2593
      %v2784 = vunpack.c.l.b16 %v2607
      %v2785 = vunpack.c.l.b16 %v2617
      %v2786 = vunpack.c.l.b16 %v2631
      %v2787 = vunpack.c.l.b16 %v2641
      %v2788 = vunpack.c.l.b16 %v2655
      %v2789 = vunpack.c.l.b16 %v2665
      %v2790 = vunpack.c.l.b16 %v2679
      %v2791 = vunpack.c.l.b16 %v2689
      %v2792 = vunpack.c.l.b16 %v2703
      %v2793 = vunpack.c.l.b16 %v2713
      %v2794 = vunpack.c.l.b16 %v2727
      %v2795 = vunpack.c.l.b16 %v2737
      %v2796 = vunpack.c.l.b16 %v2751
      %v2797 = vunpack.c.l.b16 %v2761
      %v2798 = vpack.c.b16 %v2763, %v2762
      %v2799 = vpack.c.b16 %v2765, %v2764
      %v2800 = vpack.c.b16 %v2767, %v2766
      %v2801 = vpack.c.b16 %v2769, %v2768
      %v2802 = vpack.c.b16 %v2771, %v2770
      %v2803 = vpack.c.b16 %v2773, %v2772
      %v2804 = vpack.c.b16 %v2775, %v2774
      %v2805 = vpack.c.b16 %v2777, %v2776
      %v2806 = vpack.c.b16 %v2779, %v2778
      %v2807 = vpack.c.b16 %v2781, %v2780
      %v2808 = vpack.c.b16 %v2783, %v2782
      %v2809 = vpack.c.b16 %v2785, %v2784
      %v2810 = vpack.c.b16 %v2787, %v2786
      %v2811 = vpack.c.b16 %v2789, %v2788
      %v2812 = vpack.c.b16 %v2791, %v2790
      %v2813 = vpack.c.b16 %v2793, %v2792
      %v2814 = vpack.c.b16 %v2795, %v2794
      %v2815 = vpack.c.b16 %v2797, %v2796
      %2816 = vrot.lane.b32.xlu0 %v2798, 16
      %v2817 = vpop.permute.xlu0 %2816
      %2818 = vrot.lane.b32.xlu0 %v2799, 16
      %v2819 = vpop.permute.xlu0 %2818
      %2820 = vrot.lane.b32.xlu0 %v2800, 16
      %v2821 = vpop.permute.xlu0 %2820
      %2822 = vrot.lane.b32.xlu0 %v2801, 16
      %v2823 = vpop.permute.xlu0 %2822
      %2824 = vrot.lane.b32.xlu0 %v2802, 16
      %v2825 = vpop.permute.xlu0 %2824
      %2826 = vrot.lane.b32.xlu0 %v2803, 16
      %v2827 = vpop.permute.xlu0 %2826
      %2828 = vrot.lane.b32.xlu0 %v2804, 16
      %v2829 = vpop.permute.xlu0 %2828
      %2830 = vrot.lane.b32.xlu0 %v2805, 16
      %v2831 = vpop.permute.xlu0 %2830
      %2832 = vrot.lane.b32.xlu0 %v2806, 16
      %v2833 = vpop.permute.xlu0 %2832
      %2834 = vrot.lane.b32.xlu0 %v2807, 16
      %v2835 = vpop.permute.xlu0 %2834
      %2836 = vrot.lane.b32.xlu0 %v2808, 16
      %v2837 = vpop.permute.xlu0 %2836
      %2838 = vrot.lane.b32.xlu0 %v2809, 16
      %v2839 = vpop.permute.xlu0 %2838
      %2840 = vrot.lane.b32.xlu0 %v2810, 16
      %v2841 = vpop.permute.xlu0 %2840
      %2842 = vrot.lane.b32.xlu0 %v2811, 16
      %v2843 = vpop.permute.xlu0 %2842
      %2844 = vrot.lane.b32.xlu0 %v2812, 16
      %v2845 = vpop.permute.xlu0 %2844
      %2846 = vrot.lane.b32.xlu0 %v2813, 16
      %v2847 = vpop.permute.xlu0 %2846
      %2848 = vrot.lane.b32.xlu0 %v2814, 16
      %v2849 = vpop.permute.xlu0 %2848
      %2850 = vrot.lane.b32.xlu0 %v2815, 16
      %v2851 = vpop.permute.xlu0 %2850
      %vm2870 = vcmask 162944
      %2871 = vst.msk [vmem:[#allocation3] sm:$0xff] %vm2870, %v2817
      %2872 = vst.msk [vmem:[#allocation3 + $0x8] sm:$0xff] %vm2870, %v2819
      %2873 = vst.msk [vmem:[#allocation3 + $0x10] sm:$0xff] %vm2870, %v2821
      %2874 = vst.msk [vmem:[#allocation3 + $0x18] sm:$0xff] %vm2870, %v2823
      %2875 = vst.msk [vmem:[#allocation3 + $0x20] sm:$0xff] %vm2870, %v2825
      %2876 = vst.msk [vmem:[#allocation3 + $0x28] sm:$0xff] %vm2870, %v2827
      %2877 = vst.msk [vmem:[#allocation3 + $0x30] sm:$0xff] %vm2870, %v2829
      %2878 = vst.msk [vmem:[#allocation3 + $0x38] sm:$0xff] %vm2870, %v2831
      %2879 = vst.msk [vmem:[#allocation3 + $0x40] sm:$0xff] %vm2870, %v2833
      %2880 = vst.msk [vmem:[#allocation3 + $0x48] sm:$0xff] %vm2870, %v2835
      %2881 = vst.msk [vmem:[#allocation3 + $0x50] sm:$0xff] %vm2870, %v2837
      %2882 = vst.msk [vmem:[#allocation3 + $0x58] sm:$0xff] %vm2870, %v2839
      %2883 = vst.msk [vmem:[#allocation3 + $0x60] sm:$0xff] %vm2870, %v2841
      %2884 = vst.msk [vmem:[#allocation3 + $0x68] sm:$0xff] %vm2870, %v2843
      %2885 = vst.msk [vmem:[#allocation3 + $0x70] sm:$0xff] %vm2870, %v2845
      %2886 = vst.msk [vmem:[#allocation3 + $0x78] sm:$0xff] %vm2870, %v2847
      %2887 = vst.msk [vmem:[#allocation3 + $0x80] sm:$0xff] %vm2870, %v2849
      %2888 = vst.msk [vmem:[#allocation3 + $0x88] sm:$0xff] %vm2870, %v2851
      %v2907 = vrot.slane %v2113, 5
      %v2908 = vrot.slane %v2907, 4
      %v2909 = vrot.slane %v2114, 5
      %v2910 = vsel %vm1858, %v2908, %v2909
      %v2911 = vrot.slane %v2909, 4
      %v2912 = vrot.slane %v2115, 5
      %v2913 = vsel %vm1858, %v2911, %v2912
      %v2914 = vrot.slane %v2116, 5
      %v2915 = vrot.slane %v2914, 4
      %v2916 = vrot.slane %v2117, 5
      %v2917 = vsel %vm1858, %v2915, %v2916
      %v2918 = vrot.slane %v2916, 4
      %v2919 = vrot.slane %v2118, 5
      %v2920 = vsel %vm1858, %v2918, %v2919
      %v2921 = vrot.slane %v2119, 5
      %v2922 = vrot.slane %v2921, 4
      %v2923 = vrot.slane %v2120, 5
      %v2924 = vsel %vm1858, %v2922, %v2923
      %v2925 = vrot.slane %v2923, 4
      %v2926 = vrot.slane %v2121, 5
      %v2927 = vsel %vm1858, %v2925, %v2926
      %v2928 = vrot.slane %v2122, 5
      %v2929 = vrot.slane %v2928, 4
      %v2930 = vrot.slane %v2123, 5
      %v2931 = vsel %vm1858, %v2929, %v2930
      %v2932 = vrot.slane %v2930, 4
      %v2933 = vrot.slane %v2124, 5
      %v2934 = vsel %vm1858, %v2932, %v2933
      %v2935 = vrot.slane %v2125, 5
      %v2936 = vrot.slane %v2935, 4
      %v2937 = vrot.slane %v2126, 5
      %v2938 = vsel %vm1858, %v2936, %v2937
      %v2939 = vrot.slane %v2937, 4
      %v2940 = vrot.slane %v2127, 5
      %v2941 = vsel %vm1858, %v2939, %v2940
      %v2942 = vrot.slane %v2128, 5
      %v2943 = vrot.slane %v2942, 4
      %v2944 = vrot.slane %v2129, 5
      %v2945 = vsel %vm1858, %v2943, %v2944
      %v2946 = vrot.slane %v2944, 4
      %v2947 = vrot.slane %v2130, 5
      %v2948 = vsel %vm1858, %v2946, %v2947
      %v2949 = vrot.slane %v2131, 5
      %v2950 = vrot.slane %v2949, 4
      %v2951 = vrot.slane %v2132, 5
      %v2952 = vsel %vm1858, %v2950, %v2951
      %v2953 = vrot.slane %v2951, 4
      %v2954 = vrot.slane %v2133, 5
      %v2955 = vsel %vm1858, %v2953, %v2954
      %v2956 = vrot.slane %v2134, 5
      %v2957 = vrot.slane %v2956, 4
      %v2958 = vrot.slane %v2135, 5
      %v2959 = vsel %vm1858, %v2957, %v2958
      %v2960 = vrot.slane %v2958, 4
      %v2961 = vrot.slane %v2136, 5
      %v2962 = vsel %vm1858, %v2960, %v2961
      %v2963 = vrot.slane %v2137, 5
      %v2964 = vrot.slane %v2963, 4
      %v2965 = vrot.slane %v2138, 5
      %v2966 = vsel %vm1858, %v2964, %v2965
      %v2967 = vrot.slane %v2965, 4
      %v2968 = vrot.slane %v2139, 5
      %v2969 = vsel %vm1858, %v2967, %v2968
      %v2970 = vrot.slane %v2140, 5
      %v2971 = vrot.slane %v2970, 4
      %v2972 = vrot.slane %v2141, 5
      %v2973 = vsel %vm1858, %v2971, %v2972
      %v2974 = vrot.slane %v2972, 4
      %v2975 = vrot.slane %v2142, 5
      %v2976 = vsel %vm1858, %v2974, %v2975
      %v2977 = vrot.slane %v2143, 5
      %v2978 = vrot.slane %v2977, 4
      %v2979 = vrot.slane %v2144, 5
      %v2980 = vsel %vm1858, %v2978, %v2979
      %v2981 = vrot.slane %v2979, 4
      %v2982 = vrot.slane %v2145, 5
      %v2983 = vsel %vm1858, %v2981, %v2982
      %v2984 = vrot.slane %v2146, 5
      %v2985 = vrot.slane %v2984, 4
      %v2986 = vrot.slane %v2147, 5
      %v2987 = vsel %vm1858, %v2985, %v2986
      %v2988 = vrot.slane %v2986, 4
      %v2989 = vrot.slane %v2148, 5
      %v2990 = vsel %vm1858, %v2988, %v2989
      %v2991 = vrot.slane %v2149, 5
      %v2992 = vrot.slane %v2991, 4
      %v2993 = vrot.slane %v2150, 5
      %v2994 = vsel %vm1858, %v2992, %v2993
      %v2995 = vrot.slane %v2993, 4
      %v2996 = vrot.slane %v2151, 5
      %v2997 = vsel %vm1858, %v2995, %v2996
      %v2998 = vrot.slane %v2152, 5
      %v2999 = vrot.slane %v2998, 4
      %v3000 = vrot.slane %v2153, 5
      %v3001 = vsel %vm1858, %v2999, %v3000
      %v3002 = vrot.slane %v3000, 4
      %v3003 = vrot.slane %v2154, 5
      %v3004 = vsel %vm1858, %v3002, %v3003
      %v3005 = vrot.slane %v2155, 5
      %v3006 = vrot.slane %v3005, 4
      %v3007 = vrot.slane %v2156, 5
      %v3008 = vsel %vm1858, %v3006, %v3007
      %v3009 = vrot.slane %v3007, 4
      %v3010 = vrot.slane %v2157, 5
      %v3011 = vsel %vm1858, %v3009, %v3010
      %v3012 = vrot.slane %v2158, 5
      %v3013 = vrot.slane %v3012, 4
      %v3014 = vrot.slane %v2159, 5
      %v3015 = vsel %vm1858, %v3013, %v3014
      %v3016 = vrot.slane %v3014, 4
      %v3017 = vrot.slane %v2160, 5
      %v3018 = vsel %vm1858, %v3016, %v3017
      %v3019 = vrot.slane %v2161, 5
      %v3020 = vrot.slane %v3019, 4
      %v3021 = vrot.slane %v2162, 5
      %v3022 = vsel %vm1858, %v3020, %v3021
      %v3023 = vrot.slane %v3021, 4
      %v3024 = vrot.slane %v2163, 5
      %v3025 = vsel %vm1858, %v3023, %v3024
      %v3026 = vrot.slane %v2164, 5
      %v3027 = vrot.slane %v3026, 4
      %v3028 = vrot.slane %v2165, 5
      %v3029 = vsel %vm1858, %v3027, %v3028
      %v3030 = vrot.slane %v3028, 4
      %v3031 = vrot.slane %v2166, 5
      %v3032 = vsel %vm1858, %v3030, %v3031
      %v3033 = vunpack.c.l.b16 %v2910
      %v3034 = vunpack.c.l.b16 %v2913
      %v3035 = vunpack.c.l.b16 %v2917
      %v3036 = vunpack.c.l.b16 %v2920
      %v3037 = vunpack.c.l.b16 %v2924
      %v3038 = vunpack.c.l.b16 %v2927
      %v3039 = vunpack.c.l.b16 %v2931
      %v3040 = vunpack.c.l.b16 %v2934
      %v3041 = vunpack.c.l.b16 %v2938
      %v3042 = vunpack.c.l.b16 %v2941
      %v3043 = vunpack.c.l.b16 %v2945
      %v3044 = vunpack.c.l.b16 %v2948
      %v3045 = vunpack.c.l.b16 %v2952
      %v3046 = vunpack.c.l.b16 %v2955
      %v3047 = vunpack.c.l.b16 %v2959
      %v3048 = vunpack.c.l.b16 %v2962
      %v3049 = vunpack.c.l.b16 %v2966
      %v3050 = vunpack.c.l.b16 %v2969
      %v3051 = vunpack.c.l.b16 %v2973
      %v3052 = vunpack.c.l.b16 %v2976
      %v3053 = vunpack.c.l.b16 %v2980
      %v3054 = vunpack.c.l.b16 %v2983
      %v3055 = vunpack.c.l.b16 %v2987
      %v3056 = vunpack.c.l.b16 %v2990
      %v3057 = vunpack.c.l.b16 %v2994
      %v3058 = vunpack.c.l.b16 %v2997
      %v3059 = vunpack.c.l.b16 %v3001
      %v3060 = vunpack.c.l.b16 %v3004
      %v3061 = vunpack.c.l.b16 %v3008
      %v3062 = vunpack.c.l.b16 %v3011
      %v3063 = vunpack.c.l.b16 %v3015
      %v3064 = vunpack.c.l.b16 %v3018
      %v3065 = vunpack.c.l.b16 %v3022
      %v3066 = vunpack.c.l.b16 %v3025
      %v3067 = vunpack.c.l.b16 %v3029
      %v3068 = vunpack.c.l.b16 %v3032
      %v3069 = vpack.c.b16 %v3034, %v3033
      %v3070 = vpack.c.b16 %v3036, %v3035
      %v3071 = vpack.c.b16 %v3038, %v3037
      %v3072 = vpack.c.b16 %v3040, %v3039
      %v3073 = vpack.c.b16 %v3042, %v3041
      %v3074 = vpack.c.b16 %v3044, %v3043
      %v3075 = vpack.c.b16 %v3046, %v3045
      %v3076 = vpack.c.b16 %v3048, %v3047
      %v3077 = vpack.c.b16 %v3050, %v3049
      %v3078 = vpack.c.b16 %v3052, %v3051
      %v3079 = vpack.c.b16 %v3054, %v3053
      %v3080 = vpack.c.b16 %v3056, %v3055
      %v3081 = vpack.c.b16 %v3058, %v3057
      %v3082 = vpack.c.b16 %v3060, %v3059
      %v3083 = vpack.c.b16 %v3062, %v3061
      %v3084 = vpack.c.b16 %v3064, %v3063
      %v3085 = vpack.c.b16 %v3066, %v3065
      %v3086 = vpack.c.b16 %v3068, %v3067
      %3087 = vrot.lane.b32.xlu0 %v3069, 20
      %v3088 = vpop.permute.xlu0 %3087
      %3089 = vrot.lane.b32.xlu0 %v3070, 20
      %v3090 = vpop.permute.xlu0 %3089
      %3091 = vrot.lane.b32.xlu0 %v3071, 20
      %v3092 = vpop.permute.xlu0 %3091
      %3093 = vrot.lane.b32.xlu0 %v3072, 20
      %v3094 = vpop.permute.xlu0 %3093
      %3095 = vrot.lane.b32.xlu0 %v3073, 20
      %v3096 = vpop.permute.xlu0 %3095
      %3097 = vrot.lane.b32.xlu0 %v3074, 20
      %v3098 = vpop.permute.xlu0 %3097
      %3099 = vrot.lane.b32.xlu0 %v3075, 20
      %v3100 = vpop.permute.xlu0 %3099
      %3101 = vrot.lane.b32.xlu0 %v3076, 20
      %v3102 = vpop.permute.xlu0 %3101
      %3103 = vrot.lane.b32.xlu0 %v3077, 20
      %v3104 = vpop.permute.xlu0 %3103
      %3105 = vrot.lane.b32.xlu0 %v3078, 20
      %v3106 = vpop.permute.xlu0 %3105
      %3107 = vrot.lane.b32.xlu0 %v3079, 20
      %v3108 = vpop.permute.xlu0 %3107
      %3109 = vrot.lane.b32.xlu0 %v3080, 20
      %v3110 = vpop.permute.xlu0 %3109
      %3111 = vrot.lane.b32.xlu0 %v3081, 20
      %v3112 = vpop.permute.xlu0 %3111
      %3113 = vrot.lane.b32.xlu0 %v3082, 20
      %v3114 = vpop.permute.xlu0 %3113
      %3115 = vrot.lane.b32.xlu0 %v3083, 20
      %v3116 = vpop.permute.xlu0 %3115
      %3117 = vrot.lane.b32.xlu0 %v3084, 20
      %v3118 = vpop.permute.xlu0 %3117
      %3119 = vrot.lane.b32.xlu0 %v3085, 20
      %v3120 = vpop.permute.xlu0 %3119
      %3121 = vrot.lane.b32.xlu0 %v3086, 20
      %v3122 = vpop.permute.xlu0 %3121
      %vm3141 = vcmask 195744
      %3142 = vst.msk [vmem:[#allocation3] sm:$0xff] %vm3141, %v3088
      %3143 = vst.msk [vmem:[#allocation3 + $0x8] sm:$0xff] %vm3141, %v3090
      %3144 = vst.msk [vmem:[#allocation3 + $0x10] sm:$0xff] %vm3141, %v3092
      %3145 = vst.msk [vmem:[#allocation3 + $0x18] sm:$0xff] %vm3141, %v3094
      %3146 = vst.msk [vmem:[#allocation3 + $0x20] sm:$0xff] %vm3141, %v3096
      %3147 = vst.msk [vmem:[#allocation3 + $0x28] sm:$0xff] %vm3141, %v3098
      %3148 = vst.msk [vmem:[#allocation3 + $0x30] sm:$0xff] %vm3141, %v3100
      %3149 = vst.msk [vmem:[#allocation3 + $0x38] sm:$0xff] %vm3141, %v3102
      %3150 = vst.msk [vmem:[#allocation3 + $0x40] sm:$0xff] %vm3141, %v3104
      %3151 = vst.msk [vmem:[#allocation3 + $0x48] sm:$0xff] %vm3141, %v3106
      %3152 = vst.msk [vmem:[#allocation3 + $0x50] sm:$0xff] %vm3141, %v3108
      %3153 = vst.msk [vmem:[#allocation3 + $0x58] sm:$0xff] %vm3141, %v3110
      %3154 = vst.msk [vmem:[#allocation3 + $0x60] sm:$0xff] %vm3141, %v3112
      %3155 = vst.msk [vmem:[#allocation3 + $0x68] sm:$0xff] %vm3141, %v3114
      %3156 = vst.msk [vmem:[#allocation3 + $0x70] sm:$0xff] %vm3141, %v3116
      %3157 = vst.msk [vmem:[#allocation3 + $0x78] sm:$0xff] %vm3141, %v3118
      %3158 = vst.msk [vmem:[#allocation3 + $0x80] sm:$0xff] %vm3141, %v3120
      %3159 = vst.msk [vmem:[#allocation3 + $0x88] sm:$0xff] %vm3141, %v3122
      %v3160 = vld [vmem:[%s802] sm:$0xf]
      %v3161 = vld [vmem:[%s802 + $0x4] sm:$0xf]
      %v3162 = vld [vmem:[%s802 + $0x8] sm:$0x1]
      %v3163 = vld [vmem:[%s802 + $0xc] sm:$0xf]
      %v3164 = vld [vmem:[%s802 + $0x10] sm:$0xf]
      %v3165 = vld [vmem:[%s802 + $0x14] sm:$0x1]
      %v3166 = vld [vmem:[%s802 + $0x18] sm:$0xf]
      %v3167 = vld [vmem:[%s802 + $0x1c] sm:$0xf]
      %v3168 = vld [vmem:[%s802 + $0x20] sm:$0x1]
      %v3169 = vld [vmem:[%s802 + $0x24] sm:$0xf]
      %v3170 = vld [vmem:[%s802 + $0x28] sm:$0xf]
      %v3171 = vld [vmem:[%s802 + $0x2c] sm:$0x1]
      %v3172 = vld [vmem:[%s802 + $0x30] sm:$0xf]
      %v3173 = vld [vmem:[%s802 + $0x34] sm:$0xf]
      %v3174 = vld [vmem:[%s802 + $0x38] sm:$0x1]
      %v3175 = vld [vmem:[%s802 + $0x3c] sm:$0xf]
      %v3176 = vld [vmem:[%s802 + $0x40] sm:$0xf]
      %v3177 = vld [vmem:[%s802 + $0x44] sm:$0x1]
      %v3178 = vld [vmem:[%s802 + $0x48] sm:$0xf]
      %v3179 = vld [vmem:[%s802 + $0x4c] sm:$0xf]
      %v3180 = vld [vmem:[%s802 + $0x50] sm:$0x1]
      %v3181 = vld [vmem:[%s802 + $0x54] sm:$0xf]
      %v3182 = vld [vmem:[%s802 + $0x58] sm:$0xf]
      %v3183 = vld [vmem:[%s802 + $0x5c] sm:$0x1]
      %v3184 = vld [vmem:[%s802 + $0x60] sm:$0xf]
      %v3185 = vld [vmem:[%s802 + $0x64] sm:$0xf]
      %v3186 = vld [vmem:[%s802 + $0x68] sm:$0x1]
      %v3187 = vld [vmem:[%s802 + $0x6c] sm:$0xf]
      %v3188 = vld [vmem:[%s802 + $0x70] sm:$0xf]
      %v3189 = vld [vmem:[%s802 + $0x74] sm:$0x1]
      %v3190 = vld [vmem:[%s802 + $0x78] sm:$0xf]
      %v3191 = vld [vmem:[%s802 + $0x7c] sm:$0xf]
      %v3192 = vld [vmem:[%s802 + $0x80] sm:$0x1]
      %v3193 = vld [vmem:[%s802 + $0x84] sm:$0xf]
      %v3194 = vld [vmem:[%s802 + $0x88] sm:$0xf]
      %v3195 = vld [vmem:[%s802 + $0x8c] sm:$0x1]
      %v3196 = vld [vmem:[%s802 + $0x90] sm:$0xf]
      %v3197 = vld [vmem:[%s802 + $0x94] sm:$0xf]
      %v3198 = vld [vmem:[%s802 + $0x98] sm:$0x1]
      %v3199 = vld [vmem:[%s802 + $0x9c] sm:$0xf]
      %v3200 = vld [vmem:[%s802 + $0xa0] sm:$0xf]
      %v3201 = vld [vmem:[%s802 + $0xa4] sm:$0x1]
      %v3202 = vld [vmem:[%s802 + $0xa8] sm:$0xf]
      %v3203 = vld [vmem:[%s802 + $0xac] sm:$0xf]
      %v3204 = vld [vmem:[%s802 + $0xb0] sm:$0x1]
      %v3205 = vld [vmem:[%s802 + $0xb4] sm:$0xf]
      %v3206 = vld [vmem:[%s802 + $0xb8] sm:$0xf]
      %v3207 = vld [vmem:[%s802 + $0xbc] sm:$0x1]
      %v3208 = vld [vmem:[%s802 + $0xc0] sm:$0xf]
      %v3209 = vld [vmem:[%s802 + $0xc4] sm:$0xf]
      %v3210 = vld [vmem:[%s802 + $0xc8] sm:$0x1]
      %v3211 = vld [vmem:[%s802 + $0xcc] sm:$0xf]
      %v3212 = vld [vmem:[%s802 + $0xd0] sm:$0xf]
      %v3213 = vld [vmem:[%s802 + $0xd4] sm:$0x1]
      %v3250 = vunpack.c.l.b16 %v3160
      %v3251 = vunpack.c.l.b16 %v3161
      %v3252 = vunpack.c.l.b16 %v3163
      %v3253 = vunpack.c.l.b16 %v3164
      %v3254 = vunpack.c.l.b16 %v3166
      %v3255 = vunpack.c.l.b16 %v3167
      %v3256 = vunpack.c.l.b16 %v3169
      %v3257 = vunpack.c.l.b16 %v3170
      %v3258 = vunpack.c.l.b16 %v3172
      %v3259 = vunpack.c.l.b16 %v3173
      %v3260 = vunpack.c.l.b16 %v3175
      %v3261 = vunpack.c.l.b16 %v3176
      %v3262 = vunpack.c.l.b16 %v3178
      %v3263 = vunpack.c.l.b16 %v3179
      %v3264 = vunpack.c.l.b16 %v3181
      %v3265 = vunpack.c.l.b16 %v3182
      %v3266 = vunpack.c.l.b16 %v3184
      %v3267 = vunpack.c.l.b16 %v3185
      %v3268 = vunpack.c.l.b16 %v3187
      %v3269 = vunpack.c.l.b16 %v3188
      %v3270 = vunpack.c.l.b16 %v3190
      %v3271 = vunpack.c.l.b16 %v3191
      %v3272 = vunpack.c.l.b16 %v3193
      %v3273 = vunpack.c.l.b16 %v3194
      %v3274 = vunpack.c.l.b16 %v3196
      %v3275 = vunpack.c.l.b16 %v3197
      %v3276 = vunpack.c.l.b16 %v3199
      %v3277 = vunpack.c.l.b16 %v3200
      %v3278 = vunpack.c.l.b16 %v3202
      %v3279 = vunpack.c.l.b16 %v3203
      %v3280 = vunpack.c.l.b16 %v3205
      %v3281 = vunpack.c.l.b16 %v3206
      %v3282 = vunpack.c.l.b16 %v3208
      %v3283 = vunpack.c.l.b16 %v3209
      %v3284 = vunpack.c.l.b16 %v3211
      %v3285 = vunpack.c.l.b16 %v3212
      %v3286 = vpack.c.b16 %v3251, %v3250
      %v3287 = vpack.c.b16 %v3253, %v3252
      %v3288 = vpack.c.b16 %v3255, %v3254
      %v3289 = vpack.c.b16 %v3257, %v3256
      %v3290 = vpack.c.b16 %v3259, %v3258
      %v3291 = vpack.c.b16 %v3261, %v3260
      %v3292 = vpack.c.b16 %v3263, %v3262
      %v3293 = vpack.c.b16 %v3265, %v3264
      %v3294 = vpack.c.b16 %v3267, %v3266
      %v3295 = vpack.c.b16 %v3269, %v3268
      %v3296 = vpack.c.b16 %v3271, %v3270
      %v3297 = vpack.c.b16 %v3273, %v3272
      %v3298 = vpack.c.b16 %v3275, %v3274
      %v3299 = vpack.c.b16 %v3277, %v3276
      %v3300 = vpack.c.b16 %v3279, %v3278
      %v3301 = vpack.c.b16 %v3281, %v3280
      %v3302 = vpack.c.b16 %v3283, %v3282
      %v3303 = vpack.c.b16 %v3285, %v3284
      %3304 = vrot.lane.b32.xlu0 %v3286, 24
      %v3305 = vpop.permute.xlu0 %3304
      %3306 = vrot.lane.b32.xlu0 %v3287, 24
      %v3307 = vpop.permute.xlu0 %3306
      %3308 = vrot.lane.b32.xlu0 %v3288, 24
      %v3309 = vpop.permute.xlu0 %3308
      %3310 = vrot.lane.b32.xlu0 %v3289, 24
      %v3311 = vpop.permute.xlu0 %3310
      %3312 = vrot.lane.b32.xlu0 %v3290, 24
      %v3313 = vpop.permute.xlu0 %3312
      %3314 = vrot.lane.b32.xlu0 %v3291, 24
      %v3315 = vpop.permute.xlu0 %3314
      %3316 = vrot.lane.b32.xlu0 %v3292, 24
      %v3317 = vpop.permute.xlu0 %3316
      %3318 = vrot.lane.b32.xlu0 %v3293, 24
      %v3319 = vpop.permute.xlu0 %3318
      %3320 = vrot.lane.b32.xlu0 %v3294, 24
      %v3321 = vpop.permute.xlu0 %3320
      %3322 = vrot.lane.b32.xlu0 %v3295, 24
      %v3323 = vpop.permute.xlu0 %3322
      %3324 = vrot.lane.b32.xlu0 %v3296, 24
      %v3325 = vpop.permute.xlu0 %3324
      %3326 = vrot.lane.b32.xlu0 %v3297, 24
      %v3327 = vpop.permute.xlu0 %3326
      %3328 = vrot.lane.b32.xlu0 %v3298, 24
      %v3329 = vpop.permute.xlu0 %3328
      %3330 = vrot.lane.b32.xlu0 %v3299, 24
      %v3331 = vpop.permute.xlu0 %3330
      %3332 = vrot.lane.b32.xlu0 %v3300, 24
      %v3333 = vpop.permute.xlu0 %3332
      %3334 = vrot.lane.b32.xlu0 %v3301, 24
      %v3335 = vpop.permute.xlu0 %3334
      %3336 = vrot.lane.b32.xlu0 %v3302, 24
      %v3337 = vpop.permute.xlu0 %3336
      %3338 = vrot.lane.b32.xlu0 %v3303, 24
      %v3339 = vpop.permute.xlu0 %3338
      %vm3358 = vcmask 228544
      %3359 = vst.msk [vmem:[#allocation3] sm:$0xff] %vm3358, %v3305
      %3360 = vst.msk [vmem:[#allocation3 + $0x8] sm:$0xff] %vm3358, %v3307
      %3361 = vst.msk [vmem:[#allocation3 + $0x10] sm:$0xff] %vm3358, %v3309
      %3362 = vst.msk [vmem:[#allocation3 + $0x18] sm:$0xff] %vm3358, %v3311
      %3363 = vst.msk [vmem:[#allocation3 + $0x20] sm:$0xff] %vm3358, %v3313
      %3364 = vst.msk [vmem:[#allocation3 + $0x28] sm:$0xff] %vm3358, %v3315
      %3365 = vst.msk [vmem:[#allocation3 + $0x30] sm:$0xff] %vm3358, %v3317
      %3366 = vst.msk [vmem:[#allocation3 + $0x38] sm:$0xff] %vm3358, %v3319
      %3367 = vst.msk [vmem:[#allocation3 + $0x40] sm:$0xff] %vm3358, %v3321
      %3368 = vst.msk [vmem:[#allocation3 + $0x48] sm:$0xff] %vm3358, %v3323
      %3369 = vst.msk [vmem:[#allocation3 + $0x50] sm:$0xff] %vm3358, %v3325
      %3370 = vst.msk [vmem:[#allocation3 + $0x58] sm:$0xff] %vm3358, %v3327
      %3371 = vst.msk [vmem:[#allocation3 + $0x60] sm:$0xff] %vm3358, %v3329
      %3372 = vst.msk [vmem:[#allocation3 + $0x68] sm:$0xff] %vm3358, %v3331
      %3373 = vst.msk [vmem:[#allocation3 + $0x70] sm:$0xff] %vm3358, %v3333
      %3374 = vst.msk [vmem:[#allocation3 + $0x78] sm:$0xff] %vm3358, %v3335
      %3375 = vst.msk [vmem:[#allocation3 + $0x80] sm:$0xff] %vm3358, %v3337
      %3376 = vst.msk [vmem:[#allocation3 + $0x88] sm:$0xff] %vm3358, %v3339
      %v3378 = vshrl.u32 %v3160, 16
      %v3380 = vrot.slane %v3378, 4
      %v3381 = vshll.u32 %v3160, 16
      %v3383 = vrot.slane %v3381, 5
      %v3384 = vor.u32 %v3380, %v3383
      %v3385 = vrot.slane %v3384, 4
      %v3387 = vshll.u32 %v3161, 16
      %v3389 = vrot.slane %v3387, 5
      %v3390 = vsel %vm1278, %v3385, %v3389
      %v3391 = vshrl.u32 %v3161, 16
      %v3393 = vrot.slane %v3391, 4
      %v3394 = vor.u32 %v3393, %v3389
      %v3395 = vrot.slane %v3394, 4
      %v3397 = vshll.u32 %v3162, 16
      %v3399 = vrot.slane %v3397, 5
      %v3400 = vsel %vm1278, %v3395, %v3399
      %v3402 = vshrl.u32 %v3163, 16
      %v3404 = vrot.slane %v3402, 4
      %v3405 = vshll.u32 %v3163, 16
      %v3407 = vrot.slane %v3405, 5
      %v3408 = vor.u32 %v3404, %v3407
      %v3409 = vrot.slane %v3408, 4
      %v3411 = vshll.u32 %v3164, 16
      %v3413 = vrot.slane %v3411, 5
      %v3414 = vsel %vm1278, %v3409, %v3413
      %v3415 = vshrl.u32 %v3164, 16
      %v3417 = vrot.slane %v3415, 4
      %v3418 = vor.u32 %v3417, %v3413
      %v3419 = vrot.slane %v3418, 4
      %v3421 = vshll.u32 %v3165, 16
      %v3423 = vrot.slane %v3421, 5
      %v3424 = vsel %vm1278, %v3419, %v3423
      %v3426 = vshrl.u32 %v3166, 16
      %v3428 = vrot.slane %v3426, 4
      %v3429 = vshll.u32 %v3166, 16
      %v3431 = vrot.slane %v3429, 5
      %v3432 = vor.u32 %v3428, %v3431
      %v3433 = vrot.slane %v3432, 4
      %v3435 = vshll.u32 %v3167, 16
      %v3437 = vrot.slane %v3435, 5
      %v3438 = vsel %vm1278, %v3433, %v3437
      %v3439 = vshrl.u32 %v3167, 16
      %v3441 = vrot.slane %v3439, 4
      %v3442 = vor.u32 %v3441, %v3437
      %v3443 = vrot.slane %v3442, 4
      %v3445 = vshll.u32 %v3168, 16
      %v3447 = vrot.slane %v3445, 5
      %v3448 = vsel %vm1278, %v3443, %v3447
      %v3450 = vshrl.u32 %v3169, 16
      %v3452 = vrot.slane %v3450, 4
      %v3453 = vshll.u32 %v3169, 16
      %v3455 = vrot.slane %v3453, 5
      %v3456 = vor.u32 %v3452, %v3455
      %v3457 = vrot.slane %v3456, 4
      %v3459 = vshll.u32 %v3170, 16
      %v3461 = vrot.slane %v3459, 5
      %v3462 = vsel %vm1278, %v3457, %v3461
      %v3463 = vshrl.u32 %v3170, 16
      %v3465 = vrot.slane %v3463, 4
      %v3466 = vor.u32 %v3465, %v3461
      %v3467 = vrot.slane %v3466, 4
      %v3469 = vshll.u32 %v3171, 16
      %v3471 = vrot.slane %v3469, 5
      %v3472 = vsel %vm1278, %v3467, %v3471
      %v3474 = vshrl.u32 %v3172, 16
      %v3476 = vrot.slane %v3474, 4
      %v3477 = vshll.u32 %v3172, 16
      %v3479 = vrot.slane %v3477, 5
      %v3480 = vor.u32 %v3476, %v3479
      %v3481 = vrot.slane %v3480, 4
      %v3483 = vshll.u32 %v3173, 16
      %v3485 = vrot.slane %v3483, 5
      %v3486 = vsel %vm1278, %v3481, %v3485
      %v3487 = vshrl.u32 %v3173, 16
      %v3489 = vrot.slane %v3487, 4
      %v3490 = vor.u32 %v3489, %v3485
      %v3491 = vrot.slane %v3490, 4
      %v3493 = vshll.u32 %v3174, 16
      %v3495 = vrot.slane %v3493, 5
      %v3496 = vsel %vm1278, %v3491, %v3495
      %v3498 = vshrl.u32 %v3175, 16
      %v3500 = vrot.slane %v3498, 4
      %v3501 = vshll.u32 %v3175, 16
      %v3503 = vrot.slane %v3501, 5
      %v3504 = vor.u32 %v3500, %v3503
      %v3505 = vrot.slane %v3504, 4
      %v3507 = vshll.u32 %v3176, 16
      %v3509 = vrot.slane %v3507, 5
      %v3510 = vsel %vm1278, %v3505, %v3509
      %v3511 = vshrl.u32 %v3176, 16
      %v3513 = vrot.slane %v3511, 4
      %v3514 = vor.u32 %v3513, %v3509
      %v3515 = vrot.slane %v3514, 4
      %v3517 = vshll.u32 %v3177, 16
      %v3519 = vrot.slane %v3517, 5
      %v3520 = vsel %vm1278, %v3515, %v3519
      %v3522 = vshrl.u32 %v3178, 16
      %v3524 = vrot.slane %v3522, 4
      %v3525 = vshll.u32 %v3178, 16
      %v3527 = vrot.slane %v3525, 5
      %v3528 = vor.u32 %v3524, %v3527
      %v3529 = vrot.slane %v3528, 4
      %v3531 = vshll.u32 %v3179, 16
      %v3533 = vrot.slane %v3531, 5
      %v3534 = vsel %vm1278, %v3529, %v3533
      %v3535 = vshrl.u32 %v3179, 16
      %v3537 = vrot.slane %v3535, 4
      %v3538 = vor.u32 %v3537, %v3533
      %v3539 = vrot.slane %v3538, 4
      %v3541 = vshll.u32 %v3180, 16
      %v3543 = vrot.slane %v3541, 5
      %v3544 = vsel %vm1278, %v3539, %v3543
      %v3546 = vshrl.u32 %v3181, 16
      %v3548 = vrot.slane %v3546, 4
      %v3549 = vshll.u32 %v3181, 16
      %v3551 = vrot.slane %v3549, 5
      %v3552 = vor.u32 %v3548, %v3551
      %v3553 = vrot.slane %v3552, 4
      %v3555 = vshll.u32 %v3182, 16
      %v3557 = vrot.slane %v3555, 5
      %v3558 = vsel %vm1278, %v3553, %v3557
      %v3559 = vshrl.u32 %v3182, 16
      %v3561 = vrot.slane %v3559, 4
      %v3562 = vor.u32 %v3561, %v3557
      %v3563 = vrot.slane %v3562, 4
      %v3565 = vshll.u32 %v3183, 16
      %v3567 = vrot.slane %v3565, 5
      %v3568 = vsel %vm1278, %v3563, %v3567
      %v3570 = vshrl.u32 %v3184, 16
      %v3572 = vrot.slane %v3570, 4
      %v3573 = vshll.u32 %v3184, 16
      %v3575 = vrot.slane %v3573, 5
      %v3576 = vor.u32 %v3572, %v3575
      %v3577 = vrot.slane %v3576, 4
      %v3579 = vshll.u32 %v3185, 16
      %v3581 = vrot.slane %v3579, 5
      %v3582 = vsel %vm1278, %v3577, %v3581
      %v3583 = vshrl.u32 %v3185, 16
      %v3585 = vrot.slane %v3583, 4
      %v3586 = vor.u32 %v3585, %v3581
      %v3587 = vrot.slane %v3586, 4
      %v3589 = vshll.u32 %v3186, 16
      %v3591 = vrot.slane %v3589, 5
      %v3592 = vsel %vm1278, %v3587, %v3591
      %v3594 = vshrl.u32 %v3187, 16
      %v3596 = vrot.slane %v3594, 4
      %v3597 = vshll.u32 %v3187, 16
      %v3599 = vrot.slane %v3597, 5
      %v3600 = vor.u32 %v3596, %v3599
      %v3601 = vrot.slane %v3600, 4
      %v3603 = vshll.u32 %v3188, 16
      %v3605 = vrot.slane %v3603, 5
      %v3606 = vsel %vm1278, %v3601, %v3605
      %v3607 = vshrl.u32 %v3188, 16
      %v3609 = vrot.slane %v3607, 4
      %v3610 = vor.u32 %v3609, %v3605
      %v3611 = vrot.slane %v3610, 4
      %v3613 = vshll.u32 %v3189, 16
      %v3615 = vrot.slane %v3613, 5
      %v3616 = vsel %vm1278, %v3611, %v3615
      %v3618 = vshrl.u32 %v3190, 16
      %v3620 = vrot.slane %v3618, 4
      %v3621 = vshll.u32 %v3190, 16
      %v3623 = vrot.slane %v3621, 5
      %v3624 = vor.u32 %v3620, %v3623
      %v3625 = vrot.slane %v3624, 4
      %v3627 = vshll.u32 %v3191, 16
      %v3629 = vrot.slane %v3627, 5
      %v3630 = vsel %vm1278, %v3625, %v3629
      %v3631 = vshrl.u32 %v3191, 16
      %v3633 = vrot.slane %v3631, 4
      %v3634 = vor.u32 %v3633, %v3629
      %v3635 = vrot.slane %v3634, 4
      %v3637 = vshll.u32 %v3192, 16
      %v3639 = vrot.slane %v3637, 5
      %v3640 = vsel %vm1278, %v3635, %v3639
      %v3642 = vshrl.u32 %v3193, 16
      %v3644 = vrot.slane %v3642, 4
      %v3645 = vshll.u32 %v3193, 16
      %v3647 = vrot.slane %v3645, 5
      %v3648 = vor.u32 %v3644, %v3647
      %v3649 = vrot.slane %v3648, 4
      %v3651 = vshll.u32 %v3194, 16
      %v3653 = vrot.slane %v3651, 5
      %v3654 = vsel %vm1278, %v3649, %v3653
      %v3655 = vshrl.u32 %v3194, 16
      %v3657 = vrot.slane %v3655, 4
      %v3658 = vor.u32 %v3657, %v3653
      %v3659 = vrot.slane %v3658, 4
      %v3661 = vshll.u32 %v3195, 16
      %v3663 = vrot.slane %v3661, 5
      %v3664 = vsel %vm1278, %v3659, %v3663
      %v3666 = vshrl.u32 %v3196, 16
      %v3668 = vrot.slane %v3666, 4
      %v3669 = vshll.u32 %v3196, 16
      %v3671 = vrot.slane %v3669, 5
      %v3672 = vor.u32 %v3668, %v3671
      %v3673 = vrot.slane %v3672, 4
      %v3675 = vshll.u32 %v3197, 16
      %v3677 = vrot.slane %v3675, 5
      %v3678 = vsel %vm1278, %v3673, %v3677
      %v3679 = vshrl.u32 %v3197, 16
      %v3681 = vrot.slane %v3679, 4
      %v3682 = vor.u32 %v3681, %v3677
      %v3683 = vrot.slane %v3682, 4
      %v3685 = vshll.u32 %v3198, 16
      %v3687 = vrot.slane %v3685, 5
      %v3688 = vsel %vm1278, %v3683, %v3687
      %v3690 = vshrl.u32 %v3199, 16
      %v3692 = vrot.slane %v3690, 4
      %v3693 = vshll.u32 %v3199, 16
      %v3695 = vrot.slane %v3693, 5
      %v3696 = vor.u32 %v3692, %v3695
      %v3697 = vrot.slane %v3696, 4
      %v3699 = vshll.u32 %v3200, 16
      %v3701 = vrot.slane %v3699, 5
      %v3702 = vsel %vm1278, %v3697, %v3701
      %v3703 = vshrl.u32 %v3200, 16
      %v3705 = vrot.slane %v3703, 4
      %v3706 = vor.u32 %v3705, %v3701
      %v3707 = vrot.slane %v3706, 4
      %v3709 = vshll.u32 %v3201, 16
      %v3711 = vrot.slane %v3709, 5
      %v3712 = vsel %vm1278, %v3707, %v3711
      %v3714 = vshrl.u32 %v3202, 16
      %v3716 = vrot.slane %v3714, 4
      %v3717 = vshll.u32 %v3202, 16
      %v3719 = vrot.slane %v3717, 5
      %v3720 = vor.u32 %v3716, %v3719
      %v3721 = vrot.slane %v3720, 4
      %v3723 = vshll.u32 %v3203, 16
      %v3725 = vrot.slane %v3723, 5
      %v3726 = vsel %vm1278, %v3721, %v3725
      %v3727 = vshrl.u32 %v3203, 16
      %v3729 = vrot.slane %v3727, 4
      %v3730 = vor.u32 %v3729, %v3725
      %v3731 = vrot.slane %v3730, 4
      %v3733 = vshll.u32 %v3204, 16
      %v3735 = vrot.slane %v3733, 5
      %v3736 = vsel %vm1278, %v3731, %v3735
      %v3738 = vshrl.u32 %v3205, 16
      %v3740 = vrot.slane %v3738, 4
      %v3741 = vshll.u32 %v3205, 16
      %v3743 = vrot.slane %v3741, 5
      %v3744 = vor.u32 %v3740, %v3743
      %v3745 = vrot.slane %v3744, 4
      %v3747 = vshll.u32 %v3206, 16
      %v3749 = vrot.slane %v3747, 5
      %v3750 = vsel %vm1278, %v3745, %v3749
      %v3751 = vshrl.u32 %v3206, 16
      %v3753 = vrot.slane %v3751, 4
      %v3754 = vor.u32 %v3753, %v3749
      %v3755 = vrot.slane %v3754, 4
      %v3757 = vshll.u32 %v3207, 16
      %v3759 = vrot.slane %v3757, 5
      %v3760 = vsel %vm1278, %v3755, %v3759
      %v3762 = vshrl.u32 %v3208, 16
      %v3764 = vrot.slane %v3762, 4
      %v3765 = vshll.u32 %v3208, 16
      %v3767 = vrot.slane %v3765, 5
      %v3768 = vor.u32 %v3764, %v3767
      %v3769 = vrot.slane %v3768, 4
      %v3771 = vshll.u32 %v3209, 16
      %v3773 = vrot.slane %v3771, 5
      %v3774 = vsel %vm1278, %v3769, %v3773
      %v3775 = vshrl.u32 %v3209, 16
      %v3777 = vrot.slane %v3775, 4
      %v3778 = vor.u32 %v3777, %v3773
      %v3779 = vrot.slane %v3778, 4
      %v3781 = vshll.u32 %v3210, 16
      %v3783 = vrot.slane %v3781, 5
      %v3784 = vsel %vm1278, %v3779, %v3783
      %v3786 = vshrl.u32 %v3211, 16
      %v3788 = vrot.slane %v3786, 4
      %v3789 = vshll.u32 %v3211, 16
      %v3791 = vrot.slane %v3789, 5
      %v3792 = vor.u32 %v3788, %v3791
      %v3793 = vrot.slane %v3792, 4
      %v3795 = vshll.u32 %v3212, 16
      %v3797 = vrot.slane %v3795, 5
      %v3798 = vsel %vm1278, %v3793, %v3797
      %v3799 = vshrl.u32 %v3212, 16
      %v3801 = vrot.slane %v3799, 4
      %v3802 = vor.u32 %v3801, %v3797
      %v3803 = vrot.slane %v3802, 4
      %v3805 = vshll.u32 %v3213, 16
      %v3807 = vrot.slane %v3805, 5
      %v3808 = vsel %vm1278, %v3803, %v3807
      %v3809 = vunpack.c.l.b16 %v3390
      %v3810 = vunpack.c.l.b16 %v3400
      %v3811 = vunpack.c.l.b16 %v3414
      %v3812 = vunpack.c.l.b16 %v3424
      %v3813 = vunpack.c.l.b16 %v3438
      %v3814 = vunpack.c.l.b16 %v3448
      %v3815 = vunpack.c.l.b16 %v3462
      %v3816 = vunpack.c.l.b16 %v3472
      %v3817 = vunpack.c.l.b16 %v3486
      %v3818 = vunpack.c.l.b16 %v3496
      %v3819 = vunpack.c.l.b16 %v3510
      %v3820 = vunpack.c.l.b16 %v3520
      %v3821 = vunpack.c.l.b16 %v3534
      %v3822 = vunpack.c.l.b16 %v3544
      %v3823 = vunpack.c.l.b16 %v3558
      %v3824 = vunpack.c.l.b16 %v3568
      %v3825 = vunpack.c.l.b16 %v3582
      %v3826 = vunpack.c.l.b16 %v3592
      %v3827 = vunpack.c.l.b16 %v3606
      %v3828 = vunpack.c.l.b16 %v3616
      %v3829 = vunpack.c.l.b16 %v3630
      %v3830 = vunpack.c.l.b16 %v3640
      %v3831 = vunpack.c.l.b16 %v3654
      %v3832 = vunpack.c.l.b16 %v3664
      %v3833 = vunpack.c.l.b16 %v3678
      %v3834 = vunpack.c.l.b16 %v3688
      %v3835 = vunpack.c.l.b16 %v3702
      %v3836 = vunpack.c.l.b16 %v3712
      %v3837 = vunpack.c.l.b16 %v3726
      %v3838 = vunpack.c.l.b16 %v3736
      %v3839 = vunpack.c.l.b16 %v3750
      %v3840 = vunpack.c.l.b16 %v3760
      %v3841 = vunpack.c.l.b16 %v3774
      %v3842 = vunpack.c.l.b16 %v3784
      %v3843 = vunpack.c.l.b16 %v3798
      %v3844 = vunpack.c.l.b16 %v3808
      %v3845 = vpack.c.b16 %v3810, %v3809
      %v3846 = vpack.c.b16 %v3812, %v3811
      %v3847 = vpack.c.b16 %v3814, %v3813
      %v3848 = vpack.c.b16 %v3816, %v3815
      %v3849 = vpack.c.b16 %v3818, %v3817
      %v3850 = vpack.c.b16 %v3820, %v3819
      %v3851 = vpack.c.b16 %v3822, %v3821
      %v3852 = vpack.c.b16 %v3824, %v3823
      %v3853 = vpack.c.b16 %v3826, %v3825
      %v3854 = vpack.c.b16 %v3828, %v3827
      %v3855 = vpack.c.b16 %v3830, %v3829
      %v3856 = vpack.c.b16 %v3832, %v3831
      %v3857 = vpack.c.b16 %v3834, %v3833
      %v3858 = vpack.c.b16 %v3836, %v3835
      %v3859 = vpack.c.b16 %v3838, %v3837
      %v3860 = vpack.c.b16 %v3840, %v3839
      %v3861 = vpack.c.b16 %v3842, %v3841
      %v3862 = vpack.c.b16 %v3844, %v3843
      %3863 = vrot.lane.b32.xlu0 %v3845, 28
      %v3864 = vpop.permute.xlu0 %3863
      %3865 = vrot.lane.b32.xlu0 %v3846, 28
      %v3866 = vpop.permute.xlu0 %3865
      %3867 = vrot.lane.b32.xlu0 %v3847, 28
      %v3868 = vpop.permute.xlu0 %3867
      %3869 = vrot.lane.b32.xlu0 %v3848, 28
      %v3870 = vpop.permute.xlu0 %3869
      %3871 = vrot.lane.b32.xlu0 %v3849, 28
      %v3872 = vpop.permute.xlu0 %3871
      %3873 = vrot.lane.b32.xlu0 %v3850, 28
      %v3874 = vpop.permute.xlu0 %3873
      %3875 = vrot.lane.b32.xlu0 %v3851, 28
      %v3876 = vpop.permute.xlu0 %3875
      %3877 = vrot.lane.b32.xlu0 %v3852, 28
      %v3878 = vpop.permute.xlu0 %3877
      %3879 = vrot.lane.b32.xlu0 %v3853, 28
      %v3880 = vpop.permute.xlu0 %3879
      %3881 = vrot.lane.b32.xlu0 %v3854, 28
      %v3882 = vpop.permute.xlu0 %3881
      %3883 = vrot.lane.b32.xlu0 %v3855, 28
      %v3884 = vpop.permute.xlu0 %3883
      %3885 = vrot.lane.b32.xlu0 %v3856, 28
      %v3886 = vpop.permute.xlu0 %3885
      %3887 = vrot.lane.b32.xlu0 %v3857, 28
      %v3888 = vpop.permute.xlu0 %3887
      %3889 = vrot.lane.b32.xlu0 %v3858, 28
      %v3890 = vpop.permute.xlu0 %3889
      %3891 = vrot.lane.b32.xlu0 %v3859, 28
      %v3892 = vpop.permute.xlu0 %3891
      %3893 = vrot.lane.b32.xlu0 %v3860, 28
      %v3894 = vpop.permute.xlu0 %3893
      %3895 = vrot.lane.b32.xlu0 %v3861, 28
      %v3896 = vpop.permute.xlu0 %3895
      %3897 = vrot.lane.b32.xlu0 %v3862, 28
      %v3898 = vpop.permute.xlu0 %3897
      %vm3917 = vcmask 261344
      %3918 = vst.msk [vmem:[#allocation3] sm:$0xff] %vm3917, %v3864
      %3919 = vst.msk [vmem:[#allocation3 + $0x8] sm:$0xff] %vm3917, %v3866
      %3920 = vst.msk [vmem:[#allocation3 + $0x10] sm:$0xff] %vm3917, %v3868
      %3921 = vst.msk [vmem:[#allocation3 + $0x18] sm:$0xff] %vm3917, %v3870
      %3922 = vst.msk [vmem:[#allocation3 + $0x20] sm:$0xff] %vm3917, %v3872
      %3923 = vst.msk [vmem:[#allocation3 + $0x28] sm:$0xff] %vm3917, %v3874
      %3924 = vst.msk [vmem:[#allocation3 + $0x30] sm:$0xff] %vm3917, %v3876
      %3925 = vst.msk [vmem:[#allocation3 + $0x38] sm:$0xff] %vm3917, %v3878
      %3926 = vst.msk [vmem:[#allocation3 + $0x40] sm:$0xff] %vm3917, %v3880
      %3927 = vst.msk [vmem:[#allocation3 + $0x48] sm:$0xff] %vm3917, %v3882
      %3928 = vst.msk [vmem:[#allocation3 + $0x50] sm:$0xff] %vm3917, %v3884
      %3929 = vst.msk [vmem:[#allocation3 + $0x58] sm:$0xff] %vm3917, %v3886
      %3930 = vst.msk [vmem:[#allocation3 + $0x60] sm:$0xff] %vm3917, %v3888
      %3931 = vst.msk [vmem:[#allocation3 + $0x68] sm:$0xff] %vm3917, %v3890
      %3932 = vst.msk [vmem:[#allocation3 + $0x70] sm:$0xff] %vm3917, %v3892
      %3933 = vst.msk [vmem:[#allocation3 + $0x78] sm:$0xff] %vm3917, %v3894
      %3934 = vst.msk [vmem:[#allocation3 + $0x80] sm:$0xff] %vm3917, %v3896
      %3935 = vst.msk [vmem:[#allocation3 + $0x88] sm:$0xff] %vm3917, %v3898
      %v3954 = vrot.slane %v3160, 5
      %v3955 = vrot.slane %v3954, 4
      %v3956 = vrot.slane %v3161, 5
      %v3957 = vsel %vm1858, %v3955, %v3956
      %v3958 = vrot.slane %v3956, 4
      %v3959 = vrot.slane %v3162, 5
      %v3960 = vsel %vm1858, %v3958, %v3959
      %v3961 = vrot.slane %v3163, 5
      %v3962 = vrot.slane %v3961, 4
      %v3963 = vrot.slane %v3164, 5
      %v3964 = vsel %vm1858, %v3962, %v3963
      %v3965 = vrot.slane %v3963, 4
      %v3966 = vrot.slane %v3165, 5
      %v3967 = vsel %vm1858, %v3965, %v3966
      %v3968 = vrot.slane %v3166, 5
      %v3969 = vrot.slane %v3968, 4
      %v3970 = vrot.slane %v3167, 5
      %v3971 = vsel %vm1858, %v3969, %v3970
      %v3972 = vrot.slane %v3970, 4
      %v3973 = vrot.slane %v3168, 5
      %v3974 = vsel %vm1858, %v3972, %v3973
      %v3975 = vrot.slane %v3169, 5
      %v3976 = vrot.slane %v3975, 4
      %v3977 = vrot.slane %v3170, 5
      %v3978 = vsel %vm1858, %v3976, %v3977
      %v3979 = vrot.slane %v3977, 4
      %v3980 = vrot.slane %v3171, 5
      %v3981 = vsel %vm1858, %v3979, %v3980
      %v3982 = vrot.slane %v3172, 5
      %v3983 = vrot.slane %v3982, 4
      %v3984 = vrot.slane %v3173, 5
      %v3985 = vsel %vm1858, %v3983, %v3984
      %v3986 = vrot.slane %v3984, 4
      %v3987 = vrot.slane %v3174, 5
      %v3988 = vsel %vm1858, %v3986, %v3987
      %v3989 = vrot.slane %v3175, 5
      %v3990 = vrot.slane %v3989, 4
      %v3991 = vrot.slane %v3176, 5
      %v3992 = vsel %vm1858, %v3990, %v3991
      %v3993 = vrot.slane %v3991, 4
      %v3994 = vrot.slane %v3177, 5
      %v3995 = vsel %vm1858, %v3993, %v3994
      %v3996 = vrot.slane %v3178, 5
      %v3997 = vrot.slane %v3996, 4
      %v3998 = vrot.slane %v3179, 5
      %v3999 = vsel %vm1858, %v3997, %v3998
      %v4000 = vrot.slane %v3998, 4
      %v4001 = vrot.slane %v3180, 5
      %v4002 = vsel %vm1858, %v4000, %v4001
      %v4003 = vrot.slane %v3181, 5
      %v4004 = vrot.slane %v4003, 4
      %v4005 = vrot.slane %v3182, 5
      %v4006 = vsel %vm1858, %v4004, %v4005
      %v4007 = vrot.slane %v4005, 4
      %v4008 = vrot.slane %v3183, 5
      %v4009 = vsel %vm1858, %v4007, %v4008
      %v4010 = vrot.slane %v3184, 5
      %v4011 = vrot.slane %v4010, 4
      %v4012 = vrot.slane %v3185, 5
      %v4013 = vsel %vm1858, %v4011, %v4012
      %v4014 = vrot.slane %v4012, 4
      %v4015 = vrot.slane %v3186, 5
      %v4016 = vsel %vm1858, %v4014, %v4015
      %v4017 = vrot.slane %v3187, 5
      %v4018 = vrot.slane %v4017, 4
      %v4019 = vrot.slane %v3188, 5
      %v4020 = vsel %vm1858, %v4018, %v4019
      %v4021 = vrot.slane %v4019, 4
      %v4022 = vrot.slane %v3189, 5
      %v4023 = vsel %vm1858, %v4021, %v4022
      %v4024 = vrot.slane %v3190, 5
      %v4025 = vrot.slane %v4024, 4
      %v4026 = vrot.slane %v3191, 5
      %v4027 = vsel %vm1858, %v4025, %v4026
      %v4028 = vrot.slane %v4026, 4
      %v4029 = vrot.slane %v3192, 5
      %v4030 = vsel %vm1858, %v4028, %v4029
      %v4031 = vrot.slane %v3193, 5
      %v4032 = vrot.slane %v4031, 4
      %v4033 = vrot.slane %v3194, 5
      %v4034 = vsel %vm1858, %v4032, %v4033
      %v4035 = vrot.slane %v4033, 4
      %v4036 = vrot.slane %v3195, 5
      %v4037 = vsel %vm1858, %v4035, %v4036
      %v4038 = vrot.slane %v3196, 5
      %v4039 = vrot.slane %v4038, 4
      %v4040 = vrot.slane %v3197, 5
      %v4041 = vsel %vm1858, %v4039, %v4040
      %v4042 = vrot.slane %v4040, 4
      %v4043 = vrot.slane %v3198, 5
      %v4044 = vsel %vm1858, %v4042, %v4043
      %v4045 = vrot.slane %v3199, 5
      %v4046 = vrot.slane %v4045, 4
      %v4047 = vrot.slane %v3200, 5
      %v4048 = vsel %vm1858, %v4046, %v4047
      %v4049 = vrot.slane %v4047, 4
      %v4050 = vrot.slane %v3201, 5
      %v4051 = vsel %vm1858, %v4049, %v4050
      %v4052 = vrot.slane %v3202, 5
      %v4053 = vrot.slane %v4052, 4
      %v4054 = vrot.slane %v3203, 5
      %v4055 = vsel %vm1858, %v4053, %v4054
      %v4056 = vrot.slane %v4054, 4
      %v4057 = vrot.slane %v3204, 5
      %v4058 = vsel %vm1858, %v4056, %v4057
      %v4059 = vrot.slane %v3205, 5
      %v4060 = vrot.slane %v4059, 4
      %v4061 = vrot.slane %v3206, 5
      %v4062 = vsel %vm1858, %v4060, %v4061
      %v4063 = vrot.slane %v4061, 4
      %v4064 = vrot.slane %v3207, 5
      %v4065 = vsel %vm1858, %v4063, %v4064
      %v4066 = vrot.slane %v3208, 5
      %v4067 = vrot.slane %v4066, 4
      %v4068 = vrot.slane %v3209, 5
      %v4069 = vsel %vm1858, %v4067, %v4068
      %v4070 = vrot.slane %v4068, 4
      %v4071 = vrot.slane %v3210, 5
      %v4072 = vsel %vm1858, %v4070, %v4071
      %v4073 = vrot.slane %v3211, 5
      %v4074 = vrot.slane %v4073, 4
      %v4075 = vrot.slane %v3212, 5
      %v4076 = vsel %vm1858, %v4074, %v4075
      %v4077 = vrot.slane %v4075, 4
      %v4078 = vrot.slane %v3213, 5
      %v4079 = vsel %vm1858, %v4077, %v4078
      %v4080 = vunpack.c.l.b16 %v3957
      %v4081 = vunpack.c.l.b16 %v3960
      %v4082 = vunpack.c.l.b16 %v3964
      %v4083 = vunpack.c.l.b16 %v3967
      %v4084 = vunpack.c.l.b16 %v3971
      %v4085 = vunpack.c.l.b16 %v3974
      %v4086 = vunpack.c.l.b16 %v3978
      %v4087 = vunpack.c.l.b16 %v3981
      %v4088 = vunpack.c.l.b16 %v3985
      %v4089 = vunpack.c.l.b16 %v3988
      %v4090 = vunpack.c.l.b16 %v3992
      %v4091 = vunpack.c.l.b16 %v3995
      %v4092 = vunpack.c.l.b16 %v3999
      %v4093 = vunpack.c.l.b16 %v4002
      %v4094 = vunpack.c.l.b16 %v4006
      %v4095 = vunpack.c.l.b16 %v4009
      %v4096 = vunpack.c.l.b16 %v4013
      %v4097 = vunpack.c.l.b16 %v4016
      %v4098 = vunpack.c.l.b16 %v4020
      %v4099 = vunpack.c.l.b16 %v4023
      %v4100 = vunpack.c.l.b16 %v4027
      %v4101 = vunpack.c.l.b16 %v4030
      %v4102 = vunpack.c.l.b16 %v4034
      %v4103 = vunpack.c.l.b16 %v4037
      %v4104 = vunpack.c.l.b16 %v4041
      %v4105 = vunpack.c.l.b16 %v4044
      %v4106 = vunpack.c.l.b16 %v4048
      %v4107 = vunpack.c.l.b16 %v4051
      %v4108 = vunpack.c.l.b16 %v4055
      %v4109 = vunpack.c.l.b16 %v4058
      %v4110 = vunpack.c.l.b16 %v4062
      %v4111 = vunpack.c.l.b16 %v4065
      %v4112 = vunpack.c.l.b16 %v4069
      %v4113 = vunpack.c.l.b16 %v4072
      %v4114 = vunpack.c.l.b16 %v4076
      %v4115 = vunpack.c.l.b16 %v4079
      %v4116 = vpack.c.b16 %v4081, %v4080
      %v4117 = vpack.c.b16 %v4083, %v4082
      %v4118 = vpack.c.b16 %v4085, %v4084
      %v4119 = vpack.c.b16 %v4087, %v4086
      %v4120 = vpack.c.b16 %v4089, %v4088
      %v4121 = vpack.c.b16 %v4091, %v4090
      %v4122 = vpack.c.b16 %v4093, %v4092
      %v4123 = vpack.c.b16 %v4095, %v4094
      %v4124 = vpack.c.b16 %v4097, %v4096
      %v4125 = vpack.c.b16 %v4099, %v4098
      %v4126 = vpack.c.b16 %v4101, %v4100
      %v4127 = vpack.c.b16 %v4103, %v4102
      %v4128 = vpack.c.b16 %v4105, %v4104
      %v4129 = vpack.c.b16 %v4107, %v4106
      %v4130 = vpack.c.b16 %v4109, %v4108
      %v4131 = vpack.c.b16 %v4111, %v4110
      %v4132 = vpack.c.b16 %v4113, %v4112
      %v4133 = vpack.c.b16 %v4115, %v4114
      %4134 = vrot.lane.b32.xlu0 %v4116, 32
      %v4135 = vpop.permute.xlu0 %4134
      %4136 = vrot.lane.b32.xlu0 %v4117, 32
      %v4137 = vpop.permute.xlu0 %4136
      %4138 = vrot.lane.b32.xlu0 %v4118, 32
      %v4139 = vpop.permute.xlu0 %4138
      %4140 = vrot.lane.b32.xlu0 %v4119, 32
      %v4141 = vpop.permute.xlu0 %4140
      %4142 = vrot.lane.b32.xlu0 %v4120, 32
      %v4143 = vpop.permute.xlu0 %4142
      %4144 = vrot.lane.b32.xlu0 %v4121, 32
      %v4145 = vpop.permute.xlu0 %4144
      %4146 = vrot.lane.b32.xlu0 %v4122, 32
      %v4147 = vpop.permute.xlu0 %4146
      %4148 = vrot.lane.b32.xlu0 %v4123, 32
      %v4149 = vpop.permute.xlu0 %4148
      %4150 = vrot.lane.b32.xlu0 %v4124, 32
      %v4151 = vpop.permute.xlu0 %4150
      %4152 = vrot.lane.b32.xlu0 %v4125, 32
      %v4153 = vpop.permute.xlu0 %4152
      %4154 = vrot.lane.b32.xlu0 %v4126, 32
      %v4155 = vpop.permute.xlu0 %4154
      %4156 = vrot.lane.b32.xlu0 %v4127, 32
      %v4157 = vpop.permute.xlu0 %4156
      %4158 = vrot.lane.b32.xlu0 %v4128, 32
      %v4159 = vpop.permute.xlu0 %4158
      %4160 = vrot.lane.b32.xlu0 %v4129, 32
      %v4161 = vpop.permute.xlu0 %4160
      %4162 = vrot.lane.b32.xlu0 %v4130, 32
      %v4163 = vpop.permute.xlu0 %4162
      %4164 = vrot.lane.b32.xlu0 %v4131, 32
      %v4165 = vpop.permute.xlu0 %4164
      %4166 = vrot.lane.b32.xlu0 %v4132, 32
      %v4167 = vpop.permute.xlu0 %4166
      %4168 = vrot.lane.b32.xlu0 %v4133, 32
      %v4169 = vpop.permute.xlu0 %4168
      %vm4188 = vcmask 294144
      %4189 = vst.msk [vmem:[#allocation3] sm:$0xff] %vm4188, %v4135
      %4190 = vst.msk [vmem:[#allocation3 + $0x8] sm:$0xff] %vm4188, %v4137
      %4191 = vst.msk [vmem:[#allocation3 + $0x10] sm:$0xff] %vm4188, %v4139
      %4192 = vst.msk [vmem:[#allocation3 + $0x18] sm:$0xff] %vm4188, %v4141
      %4193 = vst.msk [vmem:[#allocation3 + $0x20] sm:$0xff] %vm4188, %v4143
      %4194 = vst.msk [vmem:[#allocation3 + $0x28] sm:$0xff] %vm4188, %v4145
      %4195 = vst.msk [vmem:[#allocation3 + $0x30] sm:$0xff] %vm4188, %v4147
      %4196 = vst.msk [vmem:[#allocation3 + $0x38] sm:$0xff] %vm4188, %v4149
      %4197 = vst.msk [vmem:[#allocation3 + $0x40] sm:$0xff] %vm4188, %v4151
      %4198 = vst.msk [vmem:[#allocation3 + $0x48] sm:$0xff] %vm4188, %v4153
      %4199 = vst.msk [vmem:[#allocation3 + $0x50] sm:$0xff] %vm4188, %v4155
      %4200 = vst.msk [vmem:[#allocation3 + $0x58] sm:$0xff] %vm4188, %v4157
      %4201 = vst.msk [vmem:[#allocation3 + $0x60] sm:$0xff] %vm4188, %v4159
      %4202 = vst.msk [vmem:[#allocation3 + $0x68] sm:$0xff] %vm4188, %v4161
      %4203 = vst.msk [vmem:[#allocation3 + $0x70] sm:$0xff] %vm4188, %v4163
      %4204 = vst.msk [vmem:[#allocation3 + $0x78] sm:$0xff] %vm4188, %v4165
      %4205 = vst.msk [vmem:[#allocation3 + $0x80] sm:$0xff] %vm4188, %v4167
      %4206 = vst.msk [vmem:[#allocation3 + $0x88] sm:$0xff] %vm4188, %v4169
      %v4207 = vld [vmem:[#allocation3] sm:$0xff]
      %v4208 = vld [vmem:[#allocation3 + $0x8] sm:$0xff]
      %v4209 = vld [vmem:[#allocation3 + $0x10] sm:$0xff]
      %v4210 = vld [vmem:[#allocation3 + $0x18] sm:$0xff]
      %v4211 = vld [vmem:[#allocation3 + $0x20] sm:$0xff]
      %v4212 = vld [vmem:[#allocation3 + $0x28] sm:$0xff]
      %v4213 = vld [vmem:[#allocation3 + $0x30] sm:$0xff]
      %v4214 = vld [vmem:[#allocation3 + $0x38] sm:$0xff]
      %v4215 = vld [vmem:[#allocation3 + $0x40] sm:$0xff]
      %v4216 = vld [vmem:[#allocation3 + $0x48] sm:$0xff]
      %v4217 = vld [vmem:[#allocation3 + $0x50] sm:$0xff]
      %v4218 = vld [vmem:[#allocation3 + $0x58] sm:$0xff]
      %v4219 = vld [vmem:[#allocation3 + $0x60] sm:$0xff]
      %v4220 = vld [vmem:[#allocation3 + $0x68] sm:$0xff]
      %v4221 = vld [vmem:[#allocation3 + $0x70] sm:$0xff]
      %v4222 = vld [vmem:[#allocation3 + $0x78] sm:$0xff]
      %v4223 = vld [vmem:[#allocation3 + $0x80] sm:$0xff]
      %v4224 = vld [vmem:[#allocation3 + $0x88] sm:$0xff]
      %v4225 = vld [vmem:[%s1] sm:$0xf]
      %v4226 = vld [vmem:[%s1 + $0x4] sm:$0xf]
      %v4227 = vld [vmem:[%s1 + $0x8] sm:$0xf]
      %v4228 = vld [vmem:[%s1 + $0xc] sm:$0xf]
      %v4229 = vld [vmem:[%s1 + $0x10] sm:$0x3]
      %v4230 = vld [vmem:[%s3] sm:$0x1]
      %v4231 = vlaneseq
      %v4232 = vshrl.u32 %v4231, 7
      %v4233 = vsub.s32 0, %v4232
      %v4234 = vrot.slane %v4230, %v4233
      %v4240 = vunpack.c.l.b16 %v4225
      %v4241 = vunpack.c.l.b16 %v4226
      %v4242 = vunpack.c.l.b16 %v4227
      %v4243 = vunpack.c.l.b16 %v4228
      %v4244 = vunpack.c.l.b16 %v4229
      %v4245 = vpack.c.b16 %v4241, %v4240
      %v4246 = vpack.c.b16 %v4243, %v4242
      %v4247 = vpack.c.b16 %v4244, %v4244
      %vm4250 = vcmask 293888
      %v4252 = vsel %vm4250, %v4207, 0
      %v4255 = vsel %vm4250, %v4208, 0
      %v4258 = vsel %vm4250, %v4209, 0
      %v4261 = vsel %vm4250, %v4210, 0
      %v4264 = vsel %vm4250, %v4211, 0
      %v4267 = vsel %vm4250, %v4212, 0
      %v4270 = vsel %vm4250, %v4213, 0
      %v4273 = vsel %vm4250, %v4214, 0
      %v4276 = vsel %vm4250, %v4215, 0
      %v4279 = vsel %vm4250, %v4216, 0
      %v4282 = vsel %vm4250, %v4217, 0
      %v4285 = vsel %vm4250, %v4218, 0
      %v4288 = vsel %vm4250, %v4219, 0
      %v4291 = vsel %vm4250, %v4220, 0
      %v4294 = vsel %vm4250, %v4221, 0
      %v4297 = vsel %vm4250, %v4222, 0
      %v4300 = vsel %vm4250, %v4223, 0
      %v4303 = vsel %vm4250, %v4224, 0
      %vm4305 = vcmask 1041408
      %v4307 = vsel %vm4305, %v4247, 0
      %4309 = vmatprep.subr.bf16.mxu0 0
      %4310 = vmatpush1.bf16.msra.mxu0 %v4245
      %4311 = vmatprep.subr.bf16.mxu0 0
      %4312 = vmatpush1.bf16.msra.mxu0 %v4246
      %4313 = vmatprep.subr.bf16.mxu0 0
      %4314 = vmatpush1.bf16.msra.mxu0 %v4307
      %4315 = vmatprep.subr.bf16.mxu0 0
      %4316 = vmatpush1.bf16.msra.mxu0 0
      %4317 = vmatprep.subr.bf16.mxu0 0
      %4318 = vmatpush1.bf16.msra.mxu0 0
      %4319 = vmatprep.subr.bf16.mxu0 0
      %4320 = vmatpush1.bf16.msra.mxu0 0
      %4321 = vmatprep.subr.bf16.mxu0 0
      %4322 = vmatpush1.bf16.msra.mxu0 0
      %4323 = vmatprep.subr.bf16.mxu0 0
      %4324 = vmatpush1.bf16.msra.mxu0 0
      %4325 = vmatprep.subr.bf16.mxu0 0
      %4326 = vmatpush1.bf16.msra.mxu0 0
      %4327 = vmatprep.subr.bf16.mxu0 0
      %4328 = vmatpush1.bf16.msra.mxu0 0
      %4329 = vmatprep.subr.bf16.mxu0 0
      %4330 = vmatpush1.bf16.msra.mxu0 0
      %4331 = vmatprep.subr.bf16.mxu0 0
      %4332 = vmatpush1.bf16.msra.mxu0 0
      %4333 = vmatprep.subr.bf16.mxu0 0
      %4334 = vmatpush1.bf16.msra.mxu0 0
      %4335 = vmatprep.subr.bf16.mxu0 0
      %4336 = vmatpush1.bf16.msra.mxu0 0
      %4337 = vmatprep.subr.bf16.mxu0 0
      %4338 = vmatpush1.bf16.msra.mxu0 0
      %4339 = vmatprep.subr.bf16.mxu0 0
      %4340 = vmatpush1.bf16.msra.mxu0 0
      %4341 = vmatprep.mubr.bf16.mxu0 0
      %4342 = vmatmul.mubr.bf16.gmra.mrb[0].mxu0 %v4252
      %v4343 = vpop.f32.mrb[0].mxu0
      %v4344 = vadd.f32 %v4234, %v4343
      %v4345 = vpop.f32.mrb[0].mxu0
      %v4346 = vpop.f32.mrb[0].mxu0
      %v4347 = vadd.f32 %v4234, %v4346
      %v4348 = vpop.f32.mrb[0].mxu0
      %4349 = vmatprep.mubr.bf16.mxu0 0
      %4350 = vmatmul.mubr.bf16.gmra.mrb[0].mxu0 %v4255
      %v4351 = vpop.f32.mrb[0].mxu0
      %v4352 = vadd.f32 %v4234, %v4351
      %v4353 = vpop.f32.mrb[0].mxu0
      %v4354 = vpop.f32.mrb[0].mxu0
      %v4355 = vadd.f32 %v4234, %v4354
      %v4356 = vpop.f32.mrb[0].mxu0
      %4357 = vmatprep.mubr.bf16.mxu0 0
      %4358 = vmatmul.mubr.bf16.gmra.mrb[0].mxu0 %v4258
      %v4359 = vpop.f32.mrb[0].mxu0
      %v4360 = vadd.f32 %v4234, %v4359
      %v4361 = vpop.f32.mrb[0].mxu0
      %v4362 = vpop.f32.mrb[0].mxu0
      %v4363 = vadd.f32 %v4234, %v4362
      %v4364 = vpop.f32.mrb[0].mxu0
      %4365 = vmatprep.mubr.bf16.mxu0 0
      %4366 = vmatmul.mubr.bf16.gmra.mrb[0].mxu0 %v4261
      %v4367 = vpop.f32.mrb[0].mxu0
      %v4368 = vadd.f32 %v4234, %v4367
      %v4369 = vpop.f32.mrb[0].mxu0
      %v4370 = vpop.f32.mrb[0].mxu0
      %v4371 = vadd.f32 %v4234, %v4370
      %v4372 = vpop.f32.mrb[0].mxu0
      %4373 = vmatprep.mubr.bf16.mxu0 0
      %4374 = vmatmul.mubr.bf16.gmra.mrb[0].mxu0 %v4264
      %v4375 = vpop.f32.mrb[0].mxu0
      %v4376 = vadd.f32 %v4234, %v4375
      %v4377 = vpop.f32.mrb[0].mxu0
      %v4378 = vpop.f32.mrb[0].mxu0
      %v4379 = vadd.f32 %v4234, %v4378
      %v4380 = vpop.f32.mrb[0].mxu0
      %4381 = vmatprep.mubr.bf16.mxu0 0
      %4382 = vmatmul.mubr.bf16.gmra.mrb[0].mxu0 %v4267
      %v4383 = vpop.f32.mrb[0].mxu0
      %v4384 = vadd.f32 %v4234, %v4383
      %v4385 = vpop.f32.mrb[0].mxu0
      %v4386 = vpop.f32.mrb[0].mxu0
      %v4387 = vadd.f32 %v4234, %v4386
      %v4388 = vpop.f32.mrb[0].mxu0
      %4389 = vmatprep.mubr.bf16.mxu0 0
      %4390 = vmatmul.mubr.bf16.gmra.mrb[0].mxu0 %v4270
      %v4391 = vpop.f32.mrb[0].mxu0
      %v4392 = vadd.f32 %v4234, %v4391
      %v4393 = vpop.f32.mrb[0].mxu0
      %v4394 = vpop.f32.mrb[0].mxu0
      %v4395 = vadd.f32 %v4234, %v4394
      %v4396 = vpop.f32.mrb[0].mxu0
      %4397 = vmatprep.mubr.bf16.mxu0 0
      %4398 = vmatmul.mubr.bf16.gmra.mrb[0].mxu0 %v4273
      %v4399 = vpop.f32.mrb[0].mxu0
      %v4400 = vadd.f32 %v4234, %v4399
      %v4401 = vpop.f32.mrb[0].mxu0
      %v4402 = vpop.f32.mrb[0].mxu0
      %v4403 = vadd.f32 %v4234, %v4402
      %v4404 = vpop.f32.mrb[0].mxu0
      %4405 = vmatprep.mubr.bf16.mxu0 0
      %4406 = vmatmul.mubr.bf16.gmra.mrb[0].mxu0 %v4276
      %v4407 = vpop.f32.mrb[0].mxu0
      %v4408 = vadd.f32 %v4234, %v4407
      %v4409 = vpop.f32.mrb[0].mxu0
      %v4410 = vpop.f32.mrb[0].mxu0
      %v4411 = vadd.f32 %v4234, %v4410
      %v4412 = vpop.f32.mrb[0].mxu0
      %4413 = vmatprep.mubr.bf16.mxu0 0
      %4414 = vmatmul.mubr.bf16.gmra.mrb[0].mxu0 %v4279
      %v4415 = vpop.f32.mrb[0].mxu0
      %v4416 = vadd.f32 %v4234, %v4415
      %v4417 = vpop.f32.mrb[0].mxu0
      %v4418 = vpop.f32.mrb[0].mxu0
      %v4419 = vadd.f32 %v4234, %v4418
      %v4420 = vpop.f32.mrb[0].mxu0
      %4421 = vmatprep.mubr.bf16.mxu0 0
      %4422 = vmatmul.mubr.bf16.gmra.mrb[0].mxu0 %v4282
      %v4423 = vpop.f32.mrb[0].mxu0
      %v4424 = vadd.f32 %v4234, %v4423
      %v4425 = vpop.f32.mrb[0].mxu0
      %v4426 = vpop.f32.mrb[0].mxu0
      %v4427 = vadd.f32 %v4234, %v4426
      %v4428 = vpop.f32.mrb[0].mxu0
      %4429 = vmatprep.mubr.bf16.mxu0 0
      %4430 = vmatmul.mubr.bf16.gmra.mrb[0].mxu0 %v4285
      %v4431 = vpop.f32.mrb[0].mxu0
      %v4432 = vadd.f32 %v4234, %v4431
      %v4433 = vpop.f32.mrb[0].mxu0
      %v4434 = vpop.f32.mrb[0].mxu0
      %v4435 = vadd.f32 %v4234, %v4434
      %v4436 = vpop.f32.mrb[0].mxu0
      %4437 = vmatprep.mubr.bf16.mxu0 0
      %4438 = vmatmul.mubr.bf16.gmra.mrb[0].mxu0 %v4288
      %v4439 = vpop.f32.mrb[0].mxu0
      %v4440 = vadd.f32 %v4234, %v4439
      %v4441 = vpop.f32.mrb[0].mxu0
      %v4442 = vpop.f32.mrb[0].mxu0
      %v4443 = vadd.f32 %v4234, %v4442
      %v4444 = vpop.f32.mrb[0].mxu0
      %4445 = vmatprep.mubr.bf16.mxu0 0
      %4446 = vmatmul.mubr.bf16.gmra.mrb[0].mxu0 %v4291
      %v4447 = vpop.f32.mrb[0].mxu0
      %v4448 = vadd.f32 %v4234, %v4447
      %v4449 = vpop.f32.mrb[0].mxu0
      %v4450 = vpop.f32.mrb[0].mxu0
      %v4451 = vadd.f32 %v4234, %v4450
      %v4452 = vpop.f32.mrb[0].mxu0
      %4453 = vmatprep.mubr.bf16.mxu0 0
      %4454 = vmatmul.mubr.bf16.gmra.mrb[0].mxu0 %v4294
      %v4455 = vpop.f32.mrb[0].mxu0
      %v4456 = vadd.f32 %v4234, %v4455
      %v4457 = vpop.f32.mrb[0].mxu0
      %v4458 = vpop.f32.mrb[0].mxu0
      %v4459 = vadd.f32 %v4234, %v4458
      %v4460 = vpop.f32.mrb[0].mxu0
      %4461 = vmatprep.mubr.bf16.mxu0 0
      %4462 = vmatmul.mubr.bf16.gmra.mrb[0].mxu0 %v4297
      %v4463 = vpop.f32.mrb[0].mxu0
      %v4464 = vadd.f32 %v4234, %v4463
      %v4465 = vpop.f32.mrb[0].mxu0
      %v4466 = vpop.f32.mrb[0].mxu0
      %v4467 = vadd.f32 %v4234, %v4466
      %v4468 = vpop.f32.mrb[0].mxu0
      %4469 = vmatprep.mubr.bf16.mxu0 0
      %4470 = vmatmul.mubr.bf16.gmra.mrb[0].mxu0 %v4300
      %v4471 = vpop.f32.mrb[0].mxu0
      %v4472 = vadd.f32 %v4234, %v4471
      %v4473 = vpop.f32.mrb[0].mxu0
      %v4474 = vpop.f32.mrb[0].mxu0
      %v4475 = vadd.f32 %v4234, %v4474
      %v4476 = vpop.f32.mrb[0].mxu0
      %4477 = vmatprep.mubr.bf16.mxu0 0
      %4478 = vmatmul.mubr.bf16.gmra.mrb[0].mxu0 %v4303
      %v4479 = vpop.f32.mrb[0].mxu0
      %v4480 = vadd.f32 %v4234, %v4479
      %v4481 = vpop.f32.mrb[0].mxu0
      %v4482 = vpop.f32.mrb[0].mxu0
      %v4483 = vadd.f32 %v4234, %v4482
      %v4484 = vpop.f32.mrb[0].mxu0
      %4485 = vdwg.mxu0
      %v4486 = vmax.f32 %v4344, 0.0
      %v4487 = vmax.f32 %v4347, 0.0
      %v4488 = vmax.f32 %v4352, 0.0
      %v4489 = vmax.f32 %v4355, 0.0
      %v4490 = vmax.f32 %v4360, 0.0
      %v4491 = vmax.f32 %v4363, 0.0
      %v4492 = vmax.f32 %v4368, 0.0
      %v4493 = vmax.f32 %v4371, 0.0
      %v4494 = vmax.f32 %v4376, 0.0
      %v4495 = vmax.f32 %v4379, 0.0
      %v4496 = vmax.f32 %v4384, 0.0
      %v4497 = vmax.f32 %v4387, 0.0
      %v4498 = vmax.f32 %v4392, 0.0
      %v4499 = vmax.f32 %v4395, 0.0
      %v4500 = vmax.f32 %v4400, 0.0
      %v4501 = vmax.f32 %v4403, 0.0
      %v4502 = vmax.f32 %v4408, 0.0
      %v4503 = vmax.f32 %v4411, 0.0
      %v4504 = vmax.f32 %v4416, 0.0
      %v4505 = vmax.f32 %v4419, 0.0
      %v4506 = vmax.f32 %v4424, 0.0
      %v4507 = vmax.f32 %v4427, 0.0
      %v4508 = vmax.f32 %v4432, 0.0
      %v4509 = vmax.f32 %v4435, 0.0
      %v4510 = vmax.f32 %v4440, 0.0
      %v4511 = vmax.f32 %v4443, 0.0
      %v4512 = vmax.f32 %v4448, 0.0
      %v4513 = vmax.f32 %v4451, 0.0
      %v4514 = vmax.f32 %v4456, 0.0
      %v4515 = vmax.f32 %v4459, 0.0
      %v4516 = vmax.f32 %v4464, 0.0
      %v4517 = vmax.f32 %v4467, 0.0
      %v4518 = vmax.f32 %v4472, 0.0
      %v4519 = vmax.f32 %v4475, 0.0
      %v4520 = vmax.f32 %v4480, 0.0
      %v4521 = vmax.f32 %v4483, 0.0
      %v4522 = vpack.c.bf16 %v4487, %v4486
      %v4523 = vpack.c.bf16 %v4489, %v4488
      %v4524 = vpack.c.bf16 %v4491, %v4490
      %v4525 = vpack.c.bf16 %v4493, %v4492
      %v4526 = vpack.c.bf16 %v4495, %v4494
      %v4527 = vpack.c.bf16 %v4497, %v4496
      %v4528 = vpack.c.bf16 %v4499, %v4498
      %v4529 = vpack.c.bf16 %v4501, %v4500
      %v4530 = vpack.c.bf16 %v4503, %v4502
      %v4531 = vpack.c.bf16 %v4505, %v4504
      %v4532 = vpack.c.bf16 %v4507, %v4506
      %v4533 = vpack.c.bf16 %v4509, %v4508
      %v4534 = vpack.c.bf16 %v4511, %v4510
      %v4535 = vpack.c.bf16 %v4513, %v4512
      %v4536 = vpack.c.bf16 %v4515, %v4514
      %v4537 = vpack.c.bf16 %v4517, %v4516
      %v4538 = vpack.c.bf16 %v4519, %v4518
      %v4539 = vpack.c.bf16 %v4521, %v4520
      %v4558 = vunpack.c.l.b16 %v4522
      %v4559 = vunpack.c.h.b16 %v4522
      %v4560 = vunpack.c.l.b16 %v4523
      %v4561 = vunpack.c.h.b16 %v4523
      %v4562 = vunpack.c.l.b16 %v4524
      %v4563 = vunpack.c.h.b16 %v4524
      %v4564 = vunpack.c.l.b16 %v4525
      %v4565 = vunpack.c.h.b16 %v4525
      %v4566 = vunpack.c.l.b16 %v4526
      %v4567 = vunpack.c.h.b16 %v4526
      %v4568 = vunpack.c.l.b16 %v4527
      %v4569 = vunpack.c.h.b16 %v4527
      %v4570 = vunpack.c.l.b16 %v4528
      %v4571 = vunpack.c.h.b16 %v4528
      %v4572 = vunpack.c.l.b16 %v4529
      %v4573 = vunpack.c.h.b16 %v4529
      %v4574 = vunpack.c.l.b16 %v4530
      %v4575 = vunpack.c.h.b16 %v4530
      %v4576 = vunpack.c.l.b16 %v4531
      %v4577 = vunpack.c.h.b16 %v4531
      %v4578 = vunpack.c.l.b16 %v4532
      %v4579 = vunpack.c.h.b16 %v4532
      %v4580 = vunpack.c.l.b16 %v4533
      %v4581 = vunpack.c.h.b16 %v4533
      %v4582 = vunpack.c.l.b16 %v4534
      %v4583 = vunpack.c.h.b16 %v4534
      %v4584 = vunpack.c.l.b16 %v4535
      %v4585 = vunpack.c.h.b16 %v4535
      %v4586 = vunpack.c.l.b16 %v4536
      %v4587 = vunpack.c.h.b16 %v4536
      %v4588 = vunpack.c.l.b16 %v4537
      %v4589 = vunpack.c.h.b16 %v4537
      %v4590 = vunpack.c.l.b16 %v4538
      %v4591 = vunpack.c.h.b16 %v4538
      %v4592 = vunpack.c.l.b16 %v4539
      %v4593 = vunpack.c.h.b16 %v4539
      %v4594 = vpack.c.b16 %v4558, %v4558
      %v4595 = vpack.c.b16 %v4559, %v4559
      %v4596 = vpack.c.b16 %v4560, %v4560
      %v4597 = vpack.c.b16 %v4561, %v4561
      %v4598 = vpack.c.b16 %v4562, %v4562
      %v4599 = vpack.c.b16 %v4563, %v4563
      %v4600 = vpack.c.b16 %v4564, %v4564
      %v4601 = vpack.c.b16 %v4565, %v4565
      %v4602 = vpack.c.b16 %v4566, %v4566
      %v4603 = vpack.c.b16 %v4567, %v4567
      %v4604 = vpack.c.b16 %v4568, %v4568
      %v4605 = vpack.c.b16 %v4569, %v4569
      %v4606 = vpack.c.b16 %v4570, %v4570
      %v4607 = vpack.c.b16 %v4571, %v4571
      %v4608 = vpack.c.b16 %v4572, %v4572
      %v4609 = vpack.c.b16 %v4573, %v4573
      %v4610 = vpack.c.b16 %v4574, %v4574
      %v4611 = vpack.c.b16 %v4575, %v4575
      %v4612 = vpack.c.b16 %v4576, %v4576
      %v4613 = vpack.c.b16 %v4577, %v4577
      %v4614 = vpack.c.b16 %v4578, %v4578
      %v4615 = vpack.c.b16 %v4579, %v4579
      %v4616 = vpack.c.b16 %v4580, %v4580
      %v4617 = vpack.c.b16 %v4581, %v4581
      %v4618 = vpack.c.b16 %v4582, %v4582
      %v4619 = vpack.c.b16 %v4583, %v4583
      %v4620 = vpack.c.b16 %v4584, %v4584
      %v4621 = vpack.c.b16 %v4585, %v4585
      %v4622 = vpack.c.b16 %v4586, %v4586
      %v4623 = vpack.c.b16 %v4587, %v4587
      %v4624 = vpack.c.b16 %v4588, %v4588
      %v4625 = vpack.c.b16 %v4589, %v4589
      %v4626 = vpack.c.b16 %v4590, %v4590
      %v4627 = vpack.c.b16 %v4591, %v4591
      %v4628 = vpack.c.b16 %v4592, %v4592
      %v4629 = vpack.c.b16 %v4593, %v4593
      %v4631 = vshrl.u32 %v4594, 16
      %v4633 = vrot.slane %v4631, 7
      %v4634 = vshll.u32 %v4594, 16
      %v4636 = vor.u32 %v4633, %v4634
      %v4637 = vrot.slane %v4633, 4
      %v4639 = vshrl.u32 %v4595, 16
      %v4641 = vrot.slane %v4639, 7
      %v4642 = vshll.u32 %v4595, 16
      %v4644 = vor.u32 %v4641, %v4642
      %v4645 = vsel %vm481, %v4637, %v4644
      %v4646 = vrot.slane %v4641, 4
      %v4648 = vshrl.u32 %v4596, 16
      %v4650 = vrot.slane %v4648, 7
      %v4651 = vshll.u32 %v4596, 16
      %v4653 = vor.u32 %v4650, %v4651
      %v4654 = vrot.slane %v4650, 4
      %v4656 = vshrl.u32 %v4597, 16
      %v4658 = vrot.slane %v4656, 7
      %v4659 = vshll.u32 %v4597, 16
      %v4661 = vor.u32 %v4658, %v4659
      %v4662 = vsel %vm481, %v4654, %v4661
      %v4663 = vrot.slane %v4658, 4
      %v4665 = vshrl.u32 %v4598, 16
      %v4667 = vrot.slane %v4665, 7
      %v4668 = vshll.u32 %v4598, 16
      %v4670 = vor.u32 %v4667, %v4668
      %v4671 = vrot.slane %v4667, 4
      %v4673 = vshrl.u32 %v4599, 16
      %v4675 = vrot.slane %v4673, 7
      %v4676 = vshll.u32 %v4599, 16
      %v4678 = vor.u32 %v4675, %v4676
      %v4679 = vsel %vm481, %v4671, %v4678
      %v4680 = vrot.slane %v4675, 4
      %v4682 = vshrl.u32 %v4600, 16
      %v4684 = vrot.slane %v4682, 7
      %v4685 = vshll.u32 %v4600, 16
      %v4687 = vor.u32 %v4684, %v4685
      %v4688 = vrot.slane %v4684, 4
      %v4690 = vshrl.u32 %v4601, 16
      %v4692 = vrot.slane %v4690, 7
      %v4693 = vshll.u32 %v4601, 16
      %v4695 = vor.u32 %v4692, %v4693
      %v4696 = vsel %vm481, %v4688, %v4695
      %v4697 = vrot.slane %v4692, 4
      %v4699 = vshrl.u32 %v4602, 16
      %v4701 = vrot.slane %v4699, 7
      %v4702 = vshll.u32 %v4602, 16
      %v4704 = vor.u32 %v4701, %v4702
      %v4705 = vrot.slane %v4701, 4
      %v4707 = vshrl.u32 %v4603, 16
      %v4709 = vrot.slane %v4707, 7
      %v4710 = vshll.u32 %v4603, 16
      %v4712 = vor.u32 %v4709, %v4710
      %v4713 = vsel %vm481, %v4705, %v4712
      %v4714 = vrot.slane %v4709, 4
      %v4716 = vshrl.u32 %v4604, 16
      %v4718 = vrot.slane %v4716, 7
      %v4719 = vshll.u32 %v4604, 16
      %v4721 = vor.u32 %v4718, %v4719
      %v4722 = vrot.slane %v4718, 4
      %v4724 = vshrl.u32 %v4605, 16
      %v4726 = vrot.slane %v4724, 7
      %v4727 = vshll.u32 %v4605, 16
      %v4729 = vor.u32 %v4726, %v4727
      %v4730 = vsel %vm481, %v4722, %v4729
      %v4731 = vrot.slane %v4726, 4
      %v4733 = vshrl.u32 %v4606, 16
      %v4735 = vrot.slane %v4733, 7
      %v4736 = vshll.u32 %v4606, 16
      %v4738 = vor.u32 %v4735, %v4736
      %v4739 = vrot.slane %v4735, 4
      %v4741 = vshrl.u32 %v4607, 16
      %v4743 = vrot.slane %v4741, 7
      %v4744 = vshll.u32 %v4607, 16
      %v4746 = vor.u32 %v4743, %v4744
      %v4747 = vsel %vm481, %v4739, %v4746
      %v4748 = vrot.slane %v4743, 4
      %v4750 = vshrl.u32 %v4608, 16
      %v4752 = vrot.slane %v4750, 7
      %v4753 = vshll.u32 %v4608, 16
      %v4755 = vor.u32 %v4752, %v4753
      %v4756 = vrot.slane %v4752, 4
      %v4758 = vshrl.u32 %v4609, 16
      %v4760 = vrot.slane %v4758, 7
      %v4761 = vshll.u32 %v4609, 16
      %v4763 = vor.u32 %v4760, %v4761
      %v4764 = vsel %vm481, %v4756, %v4763
      %v4765 = vrot.slane %v4760, 4
      %v4767 = vshrl.u32 %v4610, 16
      %v4769 = vrot.slane %v4767, 7
      %v4770 = vshll.u32 %v4610, 16
      %v4772 = vor.u32 %v4769, %v4770
      %v4773 = vrot.slane %v4769, 4
      %v4775 = vshrl.u32 %v4611, 16
      %v4777 = vrot.slane %v4775, 7
      %v4778 = vshll.u32 %v4611, 16
      %v4780 = vor.u32 %v4777, %v4778
      %v4781 = vsel %vm481, %v4773, %v4780
      %v4782 = vrot.slane %v4777, 4
      %v4784 = vshrl.u32 %v4612, 16
      %v4786 = vrot.slane %v4784, 7
      %v4787 = vshll.u32 %v4612, 16
      %v4789 = vor.u32 %v4786, %v4787
      %v4790 = vrot.slane %v4786, 4
      %v4792 = vshrl.u32 %v4613, 16
      %v4794 = vrot.slane %v4792, 7
      %v4795 = vshll.u32 %v4613, 16
      %v4797 = vor.u32 %v4794, %v4795
      %v4798 = vsel %vm481, %v4790, %v4797
      %v4799 = vrot.slane %v4794, 4
      %v4801 = vshrl.u32 %v4614, 16
      %v4803 = vrot.slane %v4801, 7
      %v4804 = vshll.u32 %v4614, 16
      %v4806 = vor.u32 %v4803, %v4804
      %v4807 = vrot.slane %v4803, 4
      %v4809 = vshrl.u32 %v4615, 16
      %v4811 = vrot.slane %v4809, 7
      %v4812 = vshll.u32 %v4615, 16
      %v4814 = vor.u32 %v4811, %v4812
      %v4815 = vsel %vm481, %v4807, %v4814
      %v4816 = vrot.slane %v4811, 4
      %v4818 = vshrl.u32 %v4616, 16
      %v4820 = vrot.slane %v4818, 7
      %v4821 = vshll.u32 %v4616, 16
      %v4823 = vor.u32 %v4820, %v4821
      %v4824 = vrot.slane %v4820, 4
      %v4826 = vshrl.u32 %v4617, 16
      %v4828 = vrot.slane %v4826, 7
      %v4829 = vshll.u32 %v4617, 16
      %v4831 = vor.u32 %v4828, %v4829
      %v4832 = vsel %vm481, %v4824, %v4831
      %v4833 = vrot.slane %v4828, 4
      %v4835 = vshrl.u32 %v4618, 16
      %v4837 = vrot.slane %v4835, 7
      %v4838 = vshll.u32 %v4618, 16
      %v4840 = vor.u32 %v4837, %v4838
      %v4841 = vrot.slane %v4837, 4
      %v4843 = vshrl.u32 %v4619, 16
      %v4845 = vrot.slane %v4843, 7
      %v4846 = vshll.u32 %v4619, 16
      %v4848 = vor.u32 %v4845, %v4846
      %v4849 = vsel %vm481, %v4841, %v4848
      %v4850 = vrot.slane %v4845, 4
      %v4852 = vshrl.u32 %v4620, 16
      %v4854 = vrot.slane %v4852, 7
      %v4855 = vshll.u32 %v4620, 16
      %v4857 = vor.u32 %v4854, %v4855
      %v4858 = vrot.slane %v4854, 4
      %v4860 = vshrl.u32 %v4621, 16
      %v4862 = vrot.slane %v4860, 7
      %v4863 = vshll.u32 %v4621, 16
      %v4865 = vor.u32 %v4862, %v4863
      %v4866 = vsel %vm481, %v4858, %v4865
      %v4867 = vrot.slane %v4862, 4
      %v4869 = vshrl.u32 %v4622, 16
      %v4871 = vrot.slane %v4869, 7
      %v4872 = vshll.u32 %v4622, 16
      %v4874 = vor.u32 %v4871, %v4872
      %v4875 = vrot.slane %v4871, 4
      %v4877 = vshrl.u32 %v4623, 16
      %v4879 = vrot.slane %v4877, 7
      %v4880 = vshll.u32 %v4623, 16
      %v4882 = vor.u32 %v4879, %v4880
      %v4883 = vsel %vm481, %v4875, %v4882
      %v4884 = vrot.slane %v4879, 4
      %v4886 = vshrl.u32 %v4624, 16
      %v4888 = vrot.slane %v4886, 7
      %v4889 = vshll.u32 %v4624, 16
      %v4891 = vor.u32 %v4888, %v4889
      %v4892 = vrot.slane %v4888, 4
      %v4894 = vshrl.u32 %v4625, 16
      %v4896 = vrot.slane %v4894, 7
      %v4897 = vshll.u32 %v4625, 16
      %v4899 = vor.u32 %v4896, %v4897
      %v4900 = vsel %vm481, %v4892, %v4899
      %v4901 = vrot.slane %v4896, 4
      %v4903 = vshrl.u32 %v4626, 16
      %v4905 = vrot.slane %v4903, 7
      %v4906 = vshll.u32 %v4626, 16
      %v4908 = vor.u32 %v4905, %v4906
      %v4909 = vrot.slane %v4905, 4
      %v4911 = vshrl.u32 %v4627, 16
      %v4913 = vrot.slane %v4911, 7
      %v4914 = vshll.u32 %v4627, 16
      %v4916 = vor.u32 %v4913, %v4914
      %v4917 = vsel %vm481, %v4909, %v4916
      %v4918 = vrot.slane %v4913, 4
      %v4920 = vshrl.u32 %v4628, 16
      %v4922 = vrot.slane %v4920, 7
      %v4923 = vshll.u32 %v4628, 16
      %v4925 = vor.u32 %v4922, %v4923
      %v4926 = vrot.slane %v4922, 4
      %v4928 = vshrl.u32 %v4629, 16
      %v4930 = vrot.slane %v4928, 7
      %v4931 = vshll.u32 %v4629, 16
      %v4933 = vor.u32 %v4930, %v4931
      %v4934 = vsel %vm481, %v4926, %v4933
      %v4935 = vrot.slane %v4930, 4
      %v4990 = vld [vmem:[#allocation4] sm:$0xf]
      %v4991 = vsel %vm804, %v4636, %v4990
      %4992 = vst [vmem:[#allocation4] sm:$0xf] %v4991
      %4993 = vst.msk [vmem:[#allocation4 + $0x4] sm:$0xf] %vm808, %v4645
      %v4994 = vld [vmem:[#allocation4 + $0x8] sm:$0x1]
      %v4995 = vsel %vm227, %v4646, %v4994
      %4996 = vst [vmem:[#allocation4 + $0x8] sm:$0x1] %v4995
      %v4997 = vld [vmem:[#allocation4 + $0xc] sm:$0xf]
      %v4998 = vsel %vm804, %v4653, %v4997
      %4999 = vst [vmem:[#allocation4 + $0xc] sm:$0xf] %v4998
      %5000 = vst.msk [vmem:[#allocation4 + $0x10] sm:$0xf] %vm808, %v4662
      %v5001 = vld [vmem:[#allocation4 + $0x14] sm:$0x1]
      %v5002 = vsel %vm227, %v4663, %v5001
      %5003 = vst [vmem:[#allocation4 + $0x14] sm:$0x1] %v5002
      %v5004 = vld [vmem:[#allocation4 + $0x18] sm:$0xf]
      %v5005 = vsel %vm804, %v4670, %v5004
      %5006 = vst [vmem:[#allocation4 + $0x18] sm:$0xf] %v5005
      %5007 = vst.msk [vmem:[#allocation4 + $0x1c] sm:$0xf] %vm808, %v4679
      %v5008 = vld [vmem:[#allocation4 + $0x20] sm:$0x1]
      %v5009 = vsel %vm227, %v4680, %v5008
      %5010 = vst [vmem:[#allocation4 + $0x20] sm:$0x1] %v5009
      %v5011 = vld [vmem:[#allocation4 + $0x24] sm:$0xf]
      %v5012 = vsel %vm804, %v4687, %v5011
      %5013 = vst [vmem:[#allocation4 + $0x24] sm:$0xf] %v5012
      %5014 = vst.msk [vmem:[#allocation4 + $0x28] sm:$0xf] %vm808, %v4696
      %v5015 = vld [vmem:[#allocation4 + $0x2c] sm:$0x1]
      %v5016 = vsel %vm227, %v4697, %v5015
      %5017 = vst [vmem:[#allocation4 + $0x2c] sm:$0x1] %v5016
      %v5018 = vld [vmem:[#allocation4 + $0x30] sm:$0xf]
      %v5019 = vsel %vm804, %v4704, %v5018
      %5020 = vst [vmem:[#allocation4 + $0x30] sm:$0xf] %v5019
      %5021 = vst.msk [vmem:[#allocation4 + $0x34] sm:$0xf] %vm808, %v4713
      %v5022 = vld [vmem:[#allocation4 + $0x38] sm:$0x1]
      %v5023 = vsel %vm227, %v4714, %v5022
      %5024 = vst [vmem:[#allocation4 + $0x38] sm:$0x1] %v5023
      %v5025 = vld [vmem:[#allocation4 + $0x3c] sm:$0xf]
      %v5026 = vsel %vm804, %v4721, %v5025
      %5027 = vst [vmem:[#allocation4 + $0x3c] sm:$0xf] %v5026
      %5028 = vst.msk [vmem:[#allocation4 + $0x40] sm:$0xf] %vm808, %v4730
      %v5029 = vld [vmem:[#allocation4 + $0x44] sm:$0x1]
      %v5030 = vsel %vm227, %v4731, %v5029
      %5031 = vst [vmem:[#allocation4 + $0x44] sm:$0x1] %v5030
      %v5032 = vld [vmem:[#allocation4 + $0x48] sm:$0xf]
      %v5033 = vsel %vm804, %v4738, %v5032
      %5034 = vst [vmem:[#allocation4 + $0x48] sm:$0xf] %v5033
      %5035 = vst.msk [vmem:[#allocation4 + $0x4c] sm:$0xf] %vm808, %v4747
      %v5036 = vld [vmem:[#allocation4 + $0x50] sm:$0x1]
      %v5037 = vsel %vm227, %v4748, %v5036
      %5038 = vst [vmem:[#allocation4 + $0x50] sm:$0x1] %v5037
      %v5039 = vld [vmem:[#allocation4 + $0x54] sm:$0xf]
      %v5040 = vsel %vm804, %v4755, %v5039
      %5041 = vst [vmem:[#allocation4 + $0x54] sm:$0xf] %v5040
      %5042 = vst.msk [vmem:[#allocation4 + $0x58] sm:$0xf] %vm808, %v4764
      %v5043 = vld [vmem:[#allocation4 + $0x5c] sm:$0x1]
      %v5044 = vsel %vm227, %v4765, %v5043
      %5045 = vst [vmem:[#allocation4 + $0x5c] sm:$0x1] %v5044
      %v5046 = vld [vmem:[#allocation4 + $0x60] sm:$0xf]
      %v5047 = vsel %vm804, %v4772, %v5046
      %5048 = vst [vmem:[#allocation4 + $0x60] sm:$0xf] %v5047
      %5049 = vst.msk [vmem:[#allocation4 + $0x64] sm:$0xf] %vm808, %v4781
      %v5050 = vld [vmem:[#allocation4 + $0x68] sm:$0x1]
      %v5051 = vsel %vm227, %v4782, %v5050
      %5052 = vst [vmem:[#allocation4 + $0x68] sm:$0x1] %v5051
      %v5053 = vld [vmem:[#allocation4 + $0x6c] sm:$0xf]
      %v5054 = vsel %vm804, %v4789, %v5053
      %5055 = vst [vmem:[#allocation4 + $0x6c] sm:$0xf] %v5054
      %5056 = vst.msk [vmem:[#allocation4 + $0x70] sm:$0xf] %vm808, %v4798
      %v5057 = vld [vmem:[#allocation4 + $0x74] sm:$0x1]
      %v5058 = vsel %vm227, %v4799, %v5057
      %5059 = vst [vmem:[#allocation4 + $0x74] sm:$0x1] %v5058
      %v5060 = vld [vmem:[#allocation4 + $0x78] sm:$0xf]
      %v5061 = vsel %vm804, %v4806, %v5060
      %5062 = vst [vmem:[#allocation4 + $0x78] sm:$0xf] %v5061
      %5063 = vst.msk [vmem:[#allocation4 + $0x7c] sm:$0xf] %vm808, %v4815
      %v5064 = vld [vmem:[#allocation4 + $0x80] sm:$0x1]
      %v5065 = vsel %vm227, %v4816, %v5064
      %5066 = vst [vmem:[#allocation4 + $0x80] sm:$0x1] %v5065
      %v5067 = vld [vmem:[#allocation4 + $0x84] sm:$0xf]
      %v5068 = vsel %vm804, %v4823, %v5067
      %5069 = vst [vmem:[#allocation4 + $0x84] sm:$0xf] %v5068
      %5070 = vst.msk [vmem:[#allocation4 + $0x88] sm:$0xf] %vm808, %v4832
      %v5071 = vld [vmem:[#allocation4 + $0x8c] sm:$0x1]
      %v5072 = vsel %vm227, %v4833, %v5071
      %5073 = vst [vmem:[#allocation4 + $0x8c] sm:$0x1] %v5072
      %v5074 = vld [vmem:[#allocation4 + $0x90] sm:$0xf]
      %v5075 = vsel %vm804, %v4840, %v5074
      %5076 = vst [vmem:[#allocation4 + $0x90] sm:$0xf] %v5075
      %5077 = vst.msk [vmem:[#allocation4 + $0x94] sm:$0xf] %vm808, %v4849
      %v5078 = vld [vmem:[#allocation4 + $0x98] sm:$0x1]
      %v5079 = vsel %vm227, %v4850, %v5078
      %5080 = vst [vmem:[#allocation4 + $0x98] sm:$0x1] %v5079
      %v5081 = vld [vmem:[#allocation4 + $0x9c] sm:$0xf]
      %v5082 = vsel %vm804, %v4857, %v5081
      %5083 = vst [vmem:[#allocation4 + $0x9c] sm:$0xf] %v5082
      %5084 = vst.msk [vmem:[#allocation4 + $0xa0] sm:$0xf] %vm808, %v4866
      %v5085 = vld [vmem:[#allocation4 + $0xa4] sm:$0x1]
      %v5086 = vsel %vm227, %v4867, %v5085
      %5087 = vst [vmem:[#allocation4 + $0xa4] sm:$0x1] %v5086
      %v5088 = vld [vmem:[#allocation4 + $0xa8] sm:$0xf]
      %v5089 = vsel %vm804, %v4874, %v5088
      %5090 = vst [vmem:[#allocation4 + $0xa8] sm:$0xf] %v5089
      %5091 = vst.msk [vmem:[#allocation4 + $0xac] sm:$0xf] %vm808, %v4883
      %v5092 = vld [vmem:[#allocation4 + $0xb0] sm:$0x1]
      %v5093 = vsel %vm227, %v4884, %v5092
      %5094 = vst [vmem:[#allocation4 + $0xb0] sm:$0x1] %v5093
      %v5095 = vld [vmem:[#allocation4 + $0xb4] sm:$0xf]
      %v5096 = vsel %vm804, %v4891, %v5095
      %5097 = vst [vmem:[#allocation4 + $0xb4] sm:$0xf] %v5096
      %5098 = vst.msk [vmem:[#allocation4 + $0xb8] sm:$0xf] %vm808, %v4900
      %v5099 = vld [vmem:[#allocation4 + $0xbc] sm:$0x1]
      %v5100 = vsel %vm227, %v4901, %v5099
      %5101 = vst [vmem:[#allocation4 + $0xbc] sm:$0x1] %v5100
      %v5102 = vld [vmem:[#allocation4 + $0xc0] sm:$0xf]
      %v5103 = vsel %vm804, %v4908, %v5102
      %5104 = vst [vmem:[#allocation4 + $0xc0] sm:$0xf] %v5103
      %5105 = vst.msk [vmem:[#allocation4 + $0xc4] sm:$0xf] %vm808, %v4917
      %v5106 = vld [vmem:[#allocation4 + $0xc8] sm:$0x1]
      %v5107 = vsel %vm227, %v4918, %v5106
      %5108 = vst [vmem:[#allocation4 + $0xc8] sm:$0x1] %v5107
      %v5109 = vld [vmem:[#allocation4 + $0xcc] sm:$0xf]
      %v5110 = vsel %vm804, %v4925, %v5109
      %5111 = vst [vmem:[#allocation4 + $0xcc] sm:$0xf] %v5110
      %5112 = vst.msk [vmem:[#allocation4 + $0xd0] sm:$0xf] %vm808, %v4934
      %v5113 = vld [vmem:[#allocation4 + $0xd4] sm:$0x1]
      %v5114 = vsel %vm227, %v4935, %v5113
      %5115 = vst [vmem:[#allocation4 + $0xd4] sm:$0x1] %v5114
      %v5116 = vld [vmem:[#allocation4] sm:$0x1]
      %v5117 = vsel %vm227, 0, %v5116
      %5118 = vst [vmem:[#allocation4] sm:$0x1] %v5117
      %v5119 = vld [vmem:[#allocation4 + $0xc] sm:$0x1]
      %v5120 = vsel %vm227, 0, %v5119
      %5121 = vst [vmem:[#allocation4 + $0xc] sm:$0x1] %v5120
      %v5122 = vld [vmem:[#allocation4 + $0x18] sm:$0x1]
      %v5123 = vsel %vm227, 0, %v5122
      %5124 = vst [vmem:[#allocation4 + $0x18] sm:$0x1] %v5123
      %v5125 = vld [vmem:[#allocation4 + $0x24] sm:$0x1]
      %v5126 = vsel %vm227, 0, %v5125
      %5127 = vst [vmem:[#allocation4 + $0x24] sm:$0x1] %v5126
      %v5128 = vld [vmem:[#allocation4 + $0x30] sm:$0x1]
      %v5129 = vsel %vm227, 0, %v5128
      %5130 = vst [vmem:[#allocation4 + $0x30] sm:$0x1] %v5129
      %v5131 = vld [vmem:[#allocation4 + $0x3c] sm:$0x1]
      %v5132 = vsel %vm227, 0, %v5131
      %5133 = vst [vmem:[#allocation4 + $0x3c] sm:$0x1] %v5132
      %v5134 = vld [vmem:[#allocation4 + $0x48] sm:$0x1]
      %v5135 = vsel %vm227, 0, %v5134
      %5136 = vst [vmem:[#allocation4 + $0x48] sm:$0x1] %v5135
      %v5137 = vld [vmem:[#allocation4 + $0x54] sm:$0x1]
      %v5138 = vsel %vm227, 0, %v5137
      %5139 = vst [vmem:[#allocation4 + $0x54] sm:$0x1] %v5138
      %v5140 = vld [vmem:[#allocation4 + $0x60] sm:$0x1]
      %v5141 = vsel %vm227, 0, %v5140
      %5142 = vst [vmem:[#allocation4 + $0x60] sm:$0x1] %v5141
      %v5143 = vld [vmem:[#allocation4 + $0x6c] sm:$0x1]
      %v5144 = vsel %vm227, 0, %v5143
      %5145 = vst [vmem:[#allocation4 + $0x6c] sm:$0x1] %v5144
      %v5146 = vld [vmem:[#allocation4 + $0x78] sm:$0x1]
      %v5147 = vsel %vm227, 0, %v5146
      %5148 = vst [vmem:[#allocation4 + $0x78] sm:$0x1] %v5147
      %v5149 = vld [vmem:[#allocation4 + $0x84] sm:$0x1]
      %v5150 = vsel %vm227, 0, %v5149
      %5151 = vst [vmem:[#allocation4 + $0x84] sm:$0x1] %v5150
      %v5152 = vld [vmem:[#allocation4 + $0x90] sm:$0x1]
      %v5153 = vsel %vm227, 0, %v5152
      %5154 = vst [vmem:[#allocation4 + $0x90] sm:$0x1] %v5153
      %v5155 = vld [vmem:[#allocation4 + $0x9c] sm:$0x1]
      %v5156 = vsel %vm227, 0, %v5155
      %5157 = vst [vmem:[#allocation4 + $0x9c] sm:$0x1] %v5156
      %v5158 = vld [vmem:[#allocation4 + $0xa8] sm:$0x1]
      %v5159 = vsel %vm227, 0, %v5158
      %5160 = vst [vmem:[#allocation4 + $0xa8] sm:$0x1] %v5159
      %v5161 = vld [vmem:[#allocation4 + $0xb4] sm:$0x1]
      %v5162 = vsel %vm227, 0, %v5161
      %5163 = vst [vmem:[#allocation4 + $0xb4] sm:$0x1] %v5162
      %v5164 = vld [vmem:[#allocation4 + $0xc0] sm:$0x1]
      %v5165 = vsel %vm227, 0, %v5164
      %5166 = vst [vmem:[#allocation4 + $0xc0] sm:$0x1] %v5165
      %v5167 = vld [vmem:[#allocation4 + $0xcc] sm:$0x1]
      %v5168 = vsel %vm227, 0, %v5167
      %5169 = vst [vmem:[#allocation4 + $0xcc] sm:$0x1] %v5168
      %v5170 = vld [vmem:[#allocation4 + $0x8] sm:$0x1]
      %v5171 = vsel %vm289, 0, %v5170
      %5172 = vst [vmem:[#allocation4 + $0x8] sm:$0x1] %v5171
      %v5173 = vld [vmem:[#allocation4 + $0x14] sm:$0x1]
      %v5174 = vsel %vm289, 0, %v5173
      %5175 = vst [vmem:[#allocation4 + $0x14] sm:$0x1] %v5174
      %v5176 = vld [vmem:[#allocation4 + $0x20] sm:$0x1]
      %v5177 = vsel %vm289, 0, %v5176
      %5178 = vst [vmem:[#allocation4 + $0x20] sm:$0x1] %v5177
      %v5179 = vld [vmem:[#allocation4 + $0x2c] sm:$0x1]
      %v5180 = vsel %vm289, 0, %v5179
      %5181 = vst [vmem:[#allocation4 + $0x2c] sm:$0x1] %v5180
      %v5182 = vld [vmem:[#allocation4 + $0x38] sm:$0x1]
      %v5183 = vsel %vm289, 0, %v5182
      %5184 = vst [vmem:[#allocation4 + $0x38] sm:$0x1] %v5183
      %v5185 = vld [vmem:[#allocation4 + $0x44] sm:$0x1]
      %v5186 = vsel %vm289, 0, %v5185
      %5187 = vst [vmem:[#allocation4 + $0x44] sm:$0x1] %v5186
      %v5188 = vld [vmem:[#allocation4 + $0x50] sm:$0x1]
      %v5189 = vsel %vm289, 0, %v5188
      %5190 = vst [vmem:[#allocation4 + $0x50] sm:$0x1] %v5189
      %v5191 = vld [vmem:[#allocation4 + $0x5c] sm:$0x1]
      %v5192 = vsel %vm289, 0, %v5191
      %5193 = vst [vmem:[#allocation4 + $0x5c] sm:$0x1] %v5192
      %v5194 = vld [vmem:[#allocation4 + $0x68] sm:$0x1]
      %v5195 = vsel %vm289, 0, %v5194
      %5196 = vst [vmem:[#allocation4 + $0x68] sm:$0x1] %v5195
      %v5197 = vld [vmem:[#allocation4 + $0x74] sm:$0x1]
      %v5198 = vsel %vm289, 0, %v5197
      %5199 = vst [vmem:[#allocation4 + $0x74] sm:$0x1] %v5198
      %v5200 = vld [vmem:[#allocation4 + $0x80] sm:$0x1]
      %v5201 = vsel %vm289, 0, %v5200
      %5202 = vst [vmem:[#allocation4 + $0x80] sm:$0x1] %v5201
      %v5203 = vld [vmem:[#allocation4 + $0x8c] sm:$0x1]
      %v5204 = vsel %vm289, 0, %v5203
      %5205 = vst [vmem:[#allocation4 + $0x8c] sm:$0x1] %v5204
      %v5206 = vld [vmem:[#allocation4 + $0x98] sm:$0x1]
      %v5207 = vsel %vm289, 0, %v5206
      %5208 = vst [vmem:[#allocation4 + $0x98] sm:$0x1] %v5207
      %v5209 = vld [vmem:[#allocation4 + $0xa4] sm:$0x1]
      %v5210 = vsel %vm289, 0, %v5209
      %5211 = vst [vmem:[#allocation4 + $0xa4] sm:$0x1] %v5210
      %v5212 = vld [vmem:[#allocation4 + $0xb0] sm:$0x1]
      %v5213 = vsel %vm289, 0, %v5212
      %5214 = vst [vmem:[#allocation4 + $0xb0] sm:$0x1] %v5213
      %v5215 = vld [vmem:[#allocation4 + $0xbc] sm:$0x1]
      %v5216 = vsel %vm289, 0, %v5215
      %5217 = vst [vmem:[#allocation4 + $0xbc] sm:$0x1] %v5216
      %v5218 = vld [vmem:[#allocation4 + $0xc8] sm:$0x1]
      %v5219 = vsel %vm289, 0, %v5218
      %5220 = vst [vmem:[#allocation4 + $0xc8] sm:$0x1] %v5219
      %v5221 = vld [vmem:[#allocation4 + $0xd4] sm:$0x1]
      %v5222 = vsel %vm289, 0, %v5221
      %5223 = vst [vmem:[#allocation4 + $0xd4] sm:$0x1] %v5222
      // Predicated region
      $region53: #{tpu_custom_call.1} parent=35 // pred_check
        %p5224 = pneg %p918
      $region54: #{tpu_custom_call.1} parent=35 // pred_check_branch
        %5226 = sbr.rel (%p5224) target = $region56
      $region55: #{tpu_custom_call.1} parent=35 // pred_region
        %5227 = vst.msk [vmem:[#allocation4] sm:$0xf] %vm808, 0
        %5228 = vst.msk [vmem:[#allocation4 + $0x4] sm:$0xf] %vm808, 0
        %vm5229 = vcmask 24576
        %5230 = vst.msk [vmem:[#allocation4 + $0x8] sm:$0x1] %vm5229, 0
        %s5231 = scalar_lea.vmem [#allocation4], 204
        %5232 = vst.msk [vmem:[%s5231] sm:$0xf] %vm808, 0
        %5233 = vst.msk [vmem:[%s5231 + $0x4] sm:$0xf] %vm808, 0
        %5234 = vst.msk [vmem:[%s5231 + $0x8] sm:$0x1] %vm5229, 0
      $region56: #{tpu_custom_call.1} parent=35 // pred_fallthru
        _
      %v5235 = vld [vmem:[#allocation4] sm:$0xf]
      %v5236 = vld [vmem:[#allocation4 + $0x4] sm:$0xf]
      %v5237 = vld [vmem:[#allocation4 + $0x8] sm:$0x1]
      %v5238 = vld [vmem:[#allocation4 + $0xc] sm:$0xf]
      %v5239 = vld [vmem:[#allocation4 + $0x10] sm:$0xf]
      %v5240 = vld [vmem:[#allocation4 + $0x14] sm:$0x1]
      %v5241 = vld [vmem:[#allocation4 + $0x18] sm:$0xf]
      %v5242 = vld [vmem:[#allocation4 + $0x1c] sm:$0xf]
      %v5243 = vld [vmem:[#allocation4 + $0x20] sm:$0x1]
      %v5244 = vld [vmem:[#allocation4 + $0x24] sm:$0xf]
      %v5245 = vld [vmem:[#allocation4 + $0x28] sm:$0xf]
      %v5246 = vld [vmem:[#allocation4 + $0x2c] sm:$0x1]
      %v5247 = vld [vmem:[#allocation4 + $0x30] sm:$0xf]
      %v5248 = vld [vmem:[#allocation4 + $0x34] sm:$0xf]
      %v5249 = vld [vmem:[#allocation4 + $0x38] sm:$0x1]
      %v5250 = vld [vmem:[#allocation4 + $0x3c] sm:$0xf]
      %v5251 = vld [vmem:[#allocation4 + $0x40] sm:$0xf]
      %v5252 = vld [vmem:[#allocation4 + $0x44] sm:$0x1]
      %v5253 = vld [vmem:[#allocation4 + $0x48] sm:$0xf]
      %v5254 = vld [vmem:[#allocation4 + $0x4c] sm:$0xf]
      %v5255 = vld [vmem:[#allocation4 + $0x50] sm:$0x1]
      %v5256 = vld [vmem:[#allocation4 + $0x54] sm:$0xf]
      %v5257 = vld [vmem:[#allocation4 + $0x58] sm:$0xf]
      %v5258 = vld [vmem:[#allocation4 + $0x5c] sm:$0x1]
      %v5259 = vld [vmem:[#allocation4 + $0x60] sm:$0xf]
      %v5260 = vld [vmem:[#allocation4 + $0x64] sm:$0xf]
      %v5261 = vld [vmem:[#allocation4 + $0x68] sm:$0x1]
      %v5262 = vld [vmem:[#allocation4 + $0x6c] sm:$0xf]
      %v5263 = vld [vmem:[#allocation4 + $0x70] sm:$0xf]
      %v5264 = vld [vmem:[#allocation4 + $0x74] sm:$0x1]
      %v5265 = vld [vmem:[#allocation4 + $0x78] sm:$0xf]
      %v5266 = vld [vmem:[#allocation4 + $0x7c] sm:$0xf]
      %v5267 = vld [vmem:[#allocation4 + $0x80] sm:$0x1]
      %v5268 = vld [vmem:[#allocation4 + $0x84] sm:$0xf]
      %v5269 = vld [vmem:[#allocation4 + $0x88] sm:$0xf]
      %v5270 = vld [vmem:[#allocation4 + $0x8c] sm:$0x1]
      %v5271 = vld [vmem:[#allocation4 + $0x90] sm:$0xf]
      %v5272 = vld [vmem:[#allocation4 + $0x94] sm:$0xf]
      %v5273 = vld [vmem:[#allocation4 + $0x98] sm:$0x1]
      %v5274 = vld [vmem:[#allocation4 + $0x9c] sm:$0xf]
      %v5275 = vld [vmem:[#allocation4 + $0xa0] sm:$0xf]
      %v5276 = vld [vmem:[#allocation4 + $0xa4] sm:$0x1]
      %v5277 = vld [vmem:[#allocation4 + $0xa8] sm:$0xf]
      %v5278 = vld [vmem:[#allocation4 + $0xac] sm:$0xf]
      %v5279 = vld [vmem:[#allocation4 + $0xb0] sm:$0x1]
      %v5280 = vld [vmem:[#allocation4 + $0xb4] sm:$0xf]
      %v5281 = vld [vmem:[#allocation4 + $0xb8] sm:$0xf]
      %v5282 = vld [vmem:[#allocation4 + $0xbc] sm:$0x1]
      %v5315 = vunpack.c.l.b16 %v5235
      %v5316 = vunpack.c.l.b16 %v5236
      %v5317 = vunpack.c.l.b16 %v5238
      %v5318 = vunpack.c.l.b16 %v5239
      %v5319 = vunpack.c.l.b16 %v5241
      %v5320 = vunpack.c.l.b16 %v5242
      %v5321 = vunpack.c.l.b16 %v5244
      %v5322 = vunpack.c.l.b16 %v5245
      %v5323 = vunpack.c.l.b16 %v5247
      %v5324 = vunpack.c.l.b16 %v5248
      %v5325 = vunpack.c.l.b16 %v5250
      %v5326 = vunpack.c.l.b16 %v5251
      %v5327 = vunpack.c.l.b16 %v5253
      %v5328 = vunpack.c.l.b16 %v5254
      %v5329 = vunpack.c.l.b16 %v5256
      %v5330 = vunpack.c.l.b16 %v5257
      %v5331 = vunpack.c.l.b16 %v5259
      %v5332 = vunpack.c.l.b16 %v5260
      %v5333 = vunpack.c.l.b16 %v5262
      %v5334 = vunpack.c.l.b16 %v5263
      %v5335 = vunpack.c.l.b16 %v5265
      %v5336 = vunpack.c.l.b16 %v5266
      %v5337 = vunpack.c.l.b16 %v5268
      %v5338 = vunpack.c.l.b16 %v5269
      %v5339 = vunpack.c.l.b16 %v5271
      %v5340 = vunpack.c.l.b16 %v5272
      %v5341 = vunpack.c.l.b16 %v5274
      %v5342 = vunpack.c.l.b16 %v5275
      %v5343 = vunpack.c.l.b16 %v5277
      %v5344 = vunpack.c.l.b16 %v5278
      %v5345 = vunpack.c.l.b16 %v5280
      %v5346 = vunpack.c.l.b16 %v5281
      %v5347 = vpack.c.b16 %v5316, %v5315
      %v5348 = vpack.c.b16 %v5318, %v5317
      %v5349 = vpack.c.b16 %v5320, %v5319
      %v5350 = vpack.c.b16 %v5322, %v5321
      %v5351 = vpack.c.b16 %v5324, %v5323
      %v5352 = vpack.c.b16 %v5326, %v5325
      %v5353 = vpack.c.b16 %v5328, %v5327
      %v5354 = vpack.c.b16 %v5330, %v5329
      %v5355 = vpack.c.b16 %v5332, %v5331
      %v5356 = vpack.c.b16 %v5334, %v5333
      %v5357 = vpack.c.b16 %v5336, %v5335
      %v5358 = vpack.c.b16 %v5338, %v5337
      %v5359 = vpack.c.b16 %v5340, %v5339
      %v5360 = vpack.c.b16 %v5342, %v5341
      %v5361 = vpack.c.b16 %v5344, %v5343
      %v5362 = vpack.c.b16 %v5346, %v5345
      %5379 = vst.msk [vmem:[#allocation5] sm:$0xff] %vm1257, %v5347
      %5380 = vst.msk [vmem:[#allocation5 + $0x8] sm:$0xff] %vm1257, %v5348
      %5381 = vst.msk [vmem:[#allocation5 + $0x10] sm:$0xff] %vm1257, %v5349
      %5382 = vst.msk [vmem:[#allocation5 + $0x18] sm:$0xff] %vm1257, %v5350
      %5383 = vst.msk [vmem:[#allocation5 + $0x20] sm:$0xff] %vm1257, %v5351
      %5384 = vst.msk [vmem:[#allocation5 + $0x28] sm:$0xff] %vm1257, %v5352
      %5385 = vst.msk [vmem:[#allocation5 + $0x30] sm:$0xff] %vm1257, %v5353
      %5386 = vst.msk [vmem:[#allocation5 + $0x38] sm:$0xff] %vm1257, %v5354
      %5387 = vst.msk [vmem:[#allocation5 + $0x40] sm:$0xff] %vm1257, %v5355
      %5388 = vst.msk [vmem:[#allocation5 + $0x48] sm:$0xff] %vm1257, %v5356
      %5389 = vst.msk [vmem:[#allocation5 + $0x50] sm:$0xff] %vm1257, %v5357
      %5390 = vst.msk [vmem:[#allocation5 + $0x58] sm:$0xff] %vm1257, %v5358
      %5391 = vst.msk [vmem:[#allocation5 + $0x60] sm:$0xff] %vm1257, %v5359
      %5392 = vst.msk [vmem:[#allocation5 + $0x68] sm:$0xff] %vm1257, %v5360
      %5393 = vst.msk [vmem:[#allocation5 + $0x70] sm:$0xff] %vm1257, %v5361
      %5394 = vst.msk [vmem:[#allocation5 + $0x78] sm:$0xff] %vm1257, %v5362
      %v5396 = vshrl.u32 %v5235, 16
      %v5398 = vrot.slane %v5396, 4
      %v5399 = vshll.u32 %v5235, 16
      %v5401 = vrot.slane %v5399, 5
      %v5402 = vor.u32 %v5398, %v5401
      %v5403 = vrot.slane %v5402, 4
      %v5405 = vshll.u32 %v5236, 16
      %v5407 = vrot.slane %v5405, 5
      %v5408 = vsel %vm1278, %v5403, %v5407
      %v5409 = vshrl.u32 %v5236, 16
      %v5411 = vrot.slane %v5409, 4
      %v5412 = vor.u32 %v5411, %v5407
      %v5413 = vrot.slane %v5412, 4
      %v5415 = vshll.u32 %v5237, 16
      %v5417 = vrot.slane %v5415, 5
      %v5418 = vsel %vm1278, %v5413, %v5417
      %v5420 = vshrl.u32 %v5238, 16
      %v5422 = vrot.slane %v5420, 4
      %v5423 = vshll.u32 %v5238, 16
      %v5425 = vrot.slane %v5423, 5
      %v5426 = vor.u32 %v5422, %v5425
      %v5427 = vrot.slane %v5426, 4
      %v5429 = vshll.u32 %v5239, 16
      %v5431 = vrot.slane %v5429, 5
      %v5432 = vsel %vm1278, %v5427, %v5431
      %v5433 = vshrl.u32 %v5239, 16
      %v5435 = vrot.slane %v5433, 4
      %v5436 = vor.u32 %v5435, %v5431
      %v5437 = vrot.slane %v5436, 4
      %v5439 = vshll.u32 %v5240, 16
      %v5441 = vrot.slane %v5439, 5
      %v5442 = vsel %vm1278, %v5437, %v5441
      %v5444 = vshrl.u32 %v5241, 16
      %v5446 = vrot.slane %v5444, 4
      %v5447 = vshll.u32 %v5241, 16
      %v5449 = vrot.slane %v5447, 5
      %v5450 = vor.u32 %v5446, %v5449
      %v5451 = vrot.slane %v5450, 4
      %v5453 = vshll.u32 %v5242, 16
      %v5455 = vrot.slane %v5453, 5
      %v5456 = vsel %vm1278, %v5451, %v5455
      %v5457 = vshrl.u32 %v5242, 16
      %v5459 = vrot.slane %v5457, 4
      %v5460 = vor.u32 %v5459, %v5455
      %v5461 = vrot.slane %v5460, 4
      %v5463 = vshll.u32 %v5243, 16
      %v5465 = vrot.slane %v5463, 5
      %v5466 = vsel %vm1278, %v5461, %v5465
      %v5468 = vshrl.u32 %v5244, 16
      %v5470 = vrot.slane %v5468, 4
      %v5471 = vshll.u32 %v5244, 16
      %v5473 = vrot.slane %v5471, 5
      %v5474 = vor.u32 %v5470, %v5473
      %v5475 = vrot.slane %v5474, 4
      %v5477 = vshll.u32 %v5245, 16
      %v5479 = vrot.slane %v5477, 5
      %v5480 = vsel %vm1278, %v5475, %v5479
      %v5481 = vshrl.u32 %v5245, 16
      %v5483 = vrot.slane %v5481, 4
      %v5484 = vor.u32 %v5483, %v5479
      %v5485 = vrot.slane %v5484, 4
      %v5487 = vshll.u32 %v5246, 16
      %v5489 = vrot.slane %v5487, 5
      %v5490 = vsel %vm1278, %v5485, %v5489
      %v5492 = vshrl.u32 %v5247, 16
      %v5494 = vrot.slane %v5492, 4
      %v5495 = vshll.u32 %v5247, 16
      %v5497 = vrot.slane %v5495, 5
      %v5498 = vor.u32 %v5494, %v5497
      %v5499 = vrot.slane %v5498, 4
      %v5501 = vshll.u32 %v5248, 16
      %v5503 = vrot.slane %v5501, 5
      %v5504 = vsel %vm1278, %v5499, %v5503
      %v5505 = vshrl.u32 %v5248, 16
      %v5507 = vrot.slane %v5505, 4
      %v5508 = vor.u32 %v5507, %v5503
      %v5509 = vrot.slane %v5508, 4
      %v5511 = vshll.u32 %v5249, 16
      %v5513 = vrot.slane %v5511, 5
      %v5514 = vsel %vm1278, %v5509, %v5513
      %v5516 = vshrl.u32 %v5250, 16
      %v5518 = vrot.slane %v5516, 4
      %v5519 = vshll.u32 %v5250, 16
      %v5521 = vrot.slane %v5519, 5
      %v5522 = vor.u32 %v5518, %v5521
      %v5523 = vrot.slane %v5522, 4
      %v5525 = vshll.u32 %v5251, 16
      %v5527 = vrot.slane %v5525, 5
      %v5528 = vsel %vm1278, %v5523, %v5527
      %v5529 = vshrl.u32 %v5251, 16
      %v5531 = vrot.slane %v5529, 4
      %v5532 = vor.u32 %v5531, %v5527
      %v5533 = vrot.slane %v5532, 4
      %v5535 = vshll.u32 %v5252, 16
      %v5537 = vrot.slane %v5535, 5
      %v5538 = vsel %vm1278, %v5533, %v5537
      %v5540 = vshrl.u32 %v5253, 16
      %v5542 = vrot.slane %v5540, 4
      %v5543 = vshll.u32 %v5253, 16
      %v5545 = vrot.slane %v5543, 5
      %v5546 = vor.u32 %v5542, %v5545
      %v5547 = vrot.slane %v5546, 4
      %v5549 = vshll.u32 %v5254, 16
      %v5551 = vrot.slane %v5549, 5
      %v5552 = vsel %vm1278, %v5547, %v5551
      %v5553 = vshrl.u32 %v5254, 16
      %v5555 = vrot.slane %v5553, 4
      %v5556 = vor.u32 %v5555, %v5551
      %v5557 = vrot.slane %v5556, 4
      %v5559 = vshll.u32 %v5255, 16
      %v5561 = vrot.slane %v5559, 5
      %v5562 = vsel %vm1278, %v5557, %v5561
      %v5564 = vshrl.u32 %v5256, 16
      %v5566 = vrot.slane %v5564, 4
      %v5567 = vshll.u32 %v5256, 16
      %v5569 = vrot.slane %v5567, 5
      %v5570 = vor.u32 %v5566, %v5569
      %v5571 = vrot.slane %v5570, 4
      %v5573 = vshll.u32 %v5257, 16
      %v5575 = vrot.slane %v5573, 5
      %v5576 = vsel %vm1278, %v5571, %v5575
      %v5577 = vshrl.u32 %v5257, 16
      %v5579 = vrot.slane %v5577, 4
      %v5580 = vor.u32 %v5579, %v5575
      %v5581 = vrot.slane %v5580, 4
      %v5583 = vshll.u32 %v5258, 16
      %v5585 = vrot.slane %v5583, 5
      %v5586 = vsel %vm1278, %v5581, %v5585
      %v5588 = vshrl.u32 %v5259, 16
      %v5590 = vrot.slane %v5588, 4
      %v5591 = vshll.u32 %v5259, 16
      %v5593 = vrot.slane %v5591, 5
      %v5594 = vor.u32 %v5590, %v5593
      %v5595 = vrot.slane %v5594, 4
      %v5597 = vshll.u32 %v5260, 16
      %v5599 = vrot.slane %v5597, 5
      %v5600 = vsel %vm1278, %v5595, %v5599
      %v5601 = vshrl.u32 %v5260, 16
      %v5603 = vrot.slane %v5601, 4
      %v5604 = vor.u32 %v5603, %v5599
      %v5605 = vrot.slane %v5604, 4
      %v5607 = vshll.u32 %v5261, 16
      %v5609 = vrot.slane %v5607, 5
      %v5610 = vsel %vm1278, %v5605, %v5609
      %v5612 = vshrl.u32 %v5262, 16
      %v5614 = vrot.slane %v5612, 4
      %v5615 = vshll.u32 %v5262, 16
      %v5617 = vrot.slane %v5615, 5
      %v5618 = vor.u32 %v5614, %v5617
      %v5619 = vrot.slane %v5618, 4
      %v5621 = vshll.u32 %v5263, 16
      %v5623 = vrot.slane %v5621, 5
      %v5624 = vsel %vm1278, %v5619, %v5623
      %v5625 = vshrl.u32 %v5263, 16
      %v5627 = vrot.slane %v5625, 4
      %v5628 = vor.u32 %v5627, %v5623
      %v5629 = vrot.slane %v5628, 4
      %v5631 = vshll.u32 %v5264, 16
      %v5633 = vrot.slane %v5631, 5
      %v5634 = vsel %vm1278, %v5629, %v5633
      %v5636 = vshrl.u32 %v5265, 16
      %v5638 = vrot.slane %v5636, 4
      %v5639 = vshll.u32 %v5265, 16
      %v5641 = vrot.slane %v5639, 5
      %v5642 = vor.u32 %v5638, %v5641
      %v5643 = vrot.slane %v5642, 4
      %v5645 = vshll.u32 %v5266, 16
      %v5647 = vrot.slane %v5645, 5
      %v5648 = vsel %vm1278, %v5643, %v5647
      %v5649 = vshrl.u32 %v5266, 16
      %v5651 = vrot.slane %v5649, 4
      %v5652 = vor.u32 %v5651, %v5647
      %v5653 = vrot.slane %v5652, 4
      %v5655 = vshll.u32 %v5267, 16
      %v5657 = vrot.slane %v5655, 5
      %v5658 = vsel %vm1278, %v5653, %v5657
      %v5660 = vshrl.u32 %v5268, 16
      %v5662 = vrot.slane %v5660, 4
      %v5663 = vshll.u32 %v5268, 16
      %v5665 = vrot.slane %v5663, 5
      %v5666 = vor.u32 %v5662, %v5665
      %v5667 = vrot.slane %v5666, 4
      %v5669 = vshll.u32 %v5269, 16
      %v5671 = vrot.slane %v5669, 5
      %v5672 = vsel %vm1278, %v5667, %v5671
      %v5673 = vshrl.u32 %v5269, 16
      %v5675 = vrot.slane %v5673, 4
      %v5676 = vor.u32 %v5675, %v5671
      %v5677 = vrot.slane %v5676, 4
      %v5679 = vshll.u32 %v5270, 16
      %v5681 = vrot.slane %v5679, 5
      %v5682 = vsel %vm1278, %v5677, %v5681
      %v5684 = vshrl.u32 %v5271, 16
      %v5686 = vrot.slane %v5684, 4
      %v5687 = vshll.u32 %v5271, 16
      %v5689 = vrot.slane %v5687, 5
      %v5690 = vor.u32 %v5686, %v5689
      %v5691 = vrot.slane %v5690, 4
      %v5693 = vshll.u32 %v5272, 16
      %v5695 = vrot.slane %v5693, 5
      %v5696 = vsel %vm1278, %v5691, %v5695
      %v5697 = vshrl.u32 %v5272, 16
      %v5699 = vrot.slane %v5697, 4
      %v5700 = vor.u32 %v5699, %v5695
      %v5701 = vrot.slane %v5700, 4
      %v5703 = vshll.u32 %v5273, 16
      %v5705 = vrot.slane %v5703, 5
      %v5706 = vsel %vm1278, %v5701, %v5705
      %v5708 = vshrl.u32 %v5274, 16
      %v5710 = vrot.slane %v5708, 4
      %v5711 = vshll.u32 %v5274, 16
      %v5713 = vrot.slane %v5711, 5
      %v5714 = vor.u32 %v5710, %v5713
      %v5715 = vrot.slane %v5714, 4
      %v5717 = vshll.u32 %v5275, 16
      %v5719 = vrot.slane %v5717, 5
      %v5720 = vsel %vm1278, %v5715, %v5719
      %v5721 = vshrl.u32 %v5275, 16
      %v5723 = vrot.slane %v5721, 4
      %v5724 = vor.u32 %v5723, %v5719
      %v5725 = vrot.slane %v5724, 4
      %v5727 = vshll.u32 %v5276, 16
      %v5729 = vrot.slane %v5727, 5
      %v5730 = vsel %vm1278, %v5725, %v5729
      %v5732 = vshrl.u32 %v5277, 16
      %v5734 = vrot.slane %v5732, 4
      %v5735 = vshll.u32 %v5277, 16
      %v5737 = vrot.slane %v5735, 5
      %v5738 = vor.u32 %v5734, %v5737
      %v5739 = vrot.slane %v5738, 4
      %v5741 = vshll.u32 %v5278, 16
      %v5743 = vrot.slane %v5741, 5
      %v5744 = vsel %vm1278, %v5739, %v5743
      %v5745 = vshrl.u32 %v5278, 16
      %v5747 = vrot.slane %v5745, 4
      %v5748 = vor.u32 %v5747, %v5743
      %v5749 = vrot.slane %v5748, 4
      %v5751 = vshll.u32 %v5279, 16
      %v5753 = vrot.slane %v5751, 5
      %v5754 = vsel %vm1278, %v5749, %v5753
      %v5756 = vshrl.u32 %v5280, 16
      %v5758 = vrot.slane %v5756, 4
      %v5759 = vshll.u32 %v5280, 16
      %v5761 = vrot.slane %v5759, 5
      %v5762 = vor.u32 %v5758, %v5761
      %v5763 = vrot.slane %v5762, 4
      %v5765 = vshll.u32 %v5281, 16
      %v5767 = vrot.slane %v5765, 5
      %v5768 = vsel %vm1278, %v5763, %v5767
      %v5769 = vshrl.u32 %v5281, 16
      %v5771 = vrot.slane %v5769, 4
      %v5772 = vor.u32 %v5771, %v5767
      %v5773 = vrot.slane %v5772, 4
      %v5775 = vshll.u32 %v5282, 16
      %v5777 = vrot.slane %v5775, 5
      %v5778 = vsel %vm1278, %v5773, %v5777
      %v5779 = vunpack.c.l.b16 %v5408
      %v5780 = vunpack.c.l.b16 %v5418
      %v5781 = vunpack.c.l.b16 %v5432
      %v5782 = vunpack.c.l.b16 %v5442
      %v5783 = vunpack.c.l.b16 %v5456
      %v5784 = vunpack.c.l.b16 %v5466
      %v5785 = vunpack.c.l.b16 %v5480
      %v5786 = vunpack.c.l.b16 %v5490
      %v5787 = vunpack.c.l.b16 %v5504
      %v5788 = vunpack.c.l.b16 %v5514
      %v5789 = vunpack.c.l.b16 %v5528
      %v5790 = vunpack.c.l.b16 %v5538
      %v5791 = vunpack.c.l.b16 %v5552
      %v5792 = vunpack.c.l.b16 %v5562
      %v5793 = vunpack.c.l.b16 %v5576
      %v5794 = vunpack.c.l.b16 %v5586
      %v5795 = vunpack.c.l.b16 %v5600
      %v5796 = vunpack.c.l.b16 %v5610
      %v5797 = vunpack.c.l.b16 %v5624
      %v5798 = vunpack.c.l.b16 %v5634
      %v5799 = vunpack.c.l.b16 %v5648
      %v5800 = vunpack.c.l.b16 %v5658
      %v5801 = vunpack.c.l.b16 %v5672
      %v5802 = vunpack.c.l.b16 %v5682
      %v5803 = vunpack.c.l.b16 %v5696
      %v5804 = vunpack.c.l.b16 %v5706
      %v5805 = vunpack.c.l.b16 %v5720
      %v5806 = vunpack.c.l.b16 %v5730
      %v5807 = vunpack.c.l.b16 %v5744
      %v5808 = vunpack.c.l.b16 %v5754
      %v5809 = vunpack.c.l.b16 %v5768
      %v5810 = vunpack.c.l.b16 %v5778
      %v5811 = vpack.c.b16 %v5780, %v5779
      %v5812 = vpack.c.b16 %v5782, %v5781
      %v5813 = vpack.c.b16 %v5784, %v5783
      %v5814 = vpack.c.b16 %v5786, %v5785
      %v5815 = vpack.c.b16 %v5788, %v5787
      %v5816 = vpack.c.b16 %v5790, %v5789
      %v5817 = vpack.c.b16 %v5792, %v5791
      %v5818 = vpack.c.b16 %v5794, %v5793
      %v5819 = vpack.c.b16 %v5796, %v5795
      %v5820 = vpack.c.b16 %v5798, %v5797
      %v5821 = vpack.c.b16 %v5800, %v5799
      %v5822 = vpack.c.b16 %v5802, %v5801
      %v5823 = vpack.c.b16 %v5804, %v5803
      %v5824 = vpack.c.b16 %v5806, %v5805
      %v5825 = vpack.c.b16 %v5808, %v5807
      %v5826 = vpack.c.b16 %v5810, %v5809
      %5827 = vrot.lane.b32.xlu0 %v5811, 4
      %v5828 = vpop.permute.xlu0 %5827
      %5829 = vrot.lane.b32.xlu0 %v5812, 4
      %v5830 = vpop.permute.xlu0 %5829
      %5831 = vrot.lane.b32.xlu0 %v5813, 4
      %v5832 = vpop.permute.xlu0 %5831
      %5833 = vrot.lane.b32.xlu0 %v5814, 4
      %v5834 = vpop.permute.xlu0 %5833
      %5835 = vrot.lane.b32.xlu0 %v5815, 4
      %v5836 = vpop.permute.xlu0 %5835
      %5837 = vrot.lane.b32.xlu0 %v5816, 4
      %v5838 = vpop.permute.xlu0 %5837
      %5839 = vrot.lane.b32.xlu0 %v5817, 4
      %v5840 = vpop.permute.xlu0 %5839
      %5841 = vrot.lane.b32.xlu0 %v5818, 4
      %v5842 = vpop.permute.xlu0 %5841
      %5843 = vrot.lane.b32.xlu0 %v5819, 4
      %v5844 = vpop.permute.xlu0 %5843
      %5845 = vrot.lane.b32.xlu0 %v5820, 4
      %v5846 = vpop.permute.xlu0 %5845
      %5847 = vrot.lane.b32.xlu0 %v5821, 4
      %v5848 = vpop.permute.xlu0 %5847
      %5849 = vrot.lane.b32.xlu0 %v5822, 4
      %v5850 = vpop.permute.xlu0 %5849
      %5851 = vrot.lane.b32.xlu0 %v5823, 4
      %v5852 = vpop.permute.xlu0 %5851
      %5853 = vrot.lane.b32.xlu0 %v5824, 4
      %v5854 = vpop.permute.xlu0 %5853
      %5855 = vrot.lane.b32.xlu0 %v5825, 4
      %v5856 = vpop.permute.xlu0 %5855
      %5857 = vrot.lane.b32.xlu0 %v5826, 4
      %v5858 = vpop.permute.xlu0 %5857
      %5875 = vst.msk [vmem:[#allocation5] sm:$0xff] %vm1819, %v5828
      %5876 = vst.msk [vmem:[#allocation5 + $0x8] sm:$0xff] %vm1819, %v5830
      %5877 = vst.msk [vmem:[#allocation5 + $0x10] sm:$0xff] %vm1819, %v5832
      %5878 = vst.msk [vmem:[#allocation5 + $0x18] sm:$0xff] %vm1819, %v5834
      %5879 = vst.msk [vmem:[#allocation5 + $0x20] sm:$0xff] %vm1819, %v5836
      %5880 = vst.msk [vmem:[#allocation5 + $0x28] sm:$0xff] %vm1819, %v5838
      %5881 = vst.msk [vmem:[#allocation5 + $0x30] sm:$0xff] %vm1819, %v5840
      %5882 = vst.msk [vmem:[#allocation5 + $0x38] sm:$0xff] %vm1819, %v5842
      %5883 = vst.msk [vmem:[#allocation5 + $0x40] sm:$0xff] %vm1819, %v5844
      %5884 = vst.msk [vmem:[#allocation5 + $0x48] sm:$0xff] %vm1819, %v5846
      %5885 = vst.msk [vmem:[#allocation5 + $0x50] sm:$0xff] %vm1819, %v5848
      %5886 = vst.msk [vmem:[#allocation5 + $0x58] sm:$0xff] %vm1819, %v5850
      %5887 = vst.msk [vmem:[#allocation5 + $0x60] sm:$0xff] %vm1819, %v5852
      %5888 = vst.msk [vmem:[#allocation5 + $0x68] sm:$0xff] %vm1819, %v5854
      %5889 = vst.msk [vmem:[#allocation5 + $0x70] sm:$0xff] %vm1819, %v5856
      %5890 = vst.msk [vmem:[#allocation5 + $0x78] sm:$0xff] %vm1819, %v5858
      %v5907 = vrot.slane %v5235, 5
      %v5908 = vrot.slane %v5907, 4
      %v5909 = vrot.slane %v5236, 5
      %v5910 = vsel %vm1858, %v5908, %v5909
      %v5911 = vrot.slane %v5909, 4
      %v5912 = vrot.slane %v5237, 5
      %v5913 = vsel %vm1858, %v5911, %v5912
      %v5914 = vrot.slane %v5238, 5
      %v5915 = vrot.slane %v5914, 4
      %v5916 = vrot.slane %v5239, 5
      %v5917 = vsel %vm1858, %v5915, %v5916
      %v5918 = vrot.slane %v5916, 4
      %v5919 = vrot.slane %v5240, 5
      %v5920 = vsel %vm1858, %v5918, %v5919
      %v5921 = vrot.slane %v5241, 5
      %v5922 = vrot.slane %v5921, 4
      %v5923 = vrot.slane %v5242, 5
      %v5924 = vsel %vm1858, %v5922, %v5923
      %v5925 = vrot.slane %v5923, 4
      %v5926 = vrot.slane %v5243, 5
      %v5927 = vsel %vm1858, %v5925, %v5926
      %v5928 = vrot.slane %v5244, 5
      %v5929 = vrot.slane %v5928, 4
      %v5930 = vrot.slane %v5245, 5
      %v5931 = vsel %vm1858, %v5929, %v5930
      %v5932 = vrot.slane %v5930, 4
      %v5933 = vrot.slane %v5246, 5
      %v5934 = vsel %vm1858, %v5932, %v5933
      %v5935 = vrot.slane %v5247, 5
      %v5936 = vrot.slane %v5935, 4
      %v5937 = vrot.slane %v5248, 5
      %v5938 = vsel %vm1858, %v5936, %v5937
      %v5939 = vrot.slane %v5937, 4
      %v5940 = vrot.slane %v5249, 5
      %v5941 = vsel %vm1858, %v5939, %v5940
      %v5942 = vrot.slane %v5250, 5
      %v5943 = vrot.slane %v5942, 4
      %v5944 = vrot.slane %v5251, 5
      %v5945 = vsel %vm1858, %v5943, %v5944
      %v5946 = vrot.slane %v5944, 4
      %v5947 = vrot.slane %v5252, 5
      %v5948 = vsel %vm1858, %v5946, %v5947
      %v5949 = vrot.slane %v5253, 5
      %v5950 = vrot.slane %v5949, 4
      %v5951 = vrot.slane %v5254, 5
      %v5952 = vsel %vm1858, %v5950, %v5951
      %v5953 = vrot.slane %v5951, 4
      %v5954 = vrot.slane %v5255, 5
      %v5955 = vsel %vm1858, %v5953, %v5954
      %v5956 = vrot.slane %v5256, 5
      %v5957 = vrot.slane %v5956, 4
      %v5958 = vrot.slane %v5257, 5
      %v5959 = vsel %vm1858, %v5957, %v5958
      %v5960 = vrot.slane %v5958, 4
      %v5961 = vrot.slane %v5258, 5
      %v5962 = vsel %vm1858, %v5960, %v5961
      %v5963 = vrot.slane %v5259, 5
      %v5964 = vrot.slane %v5963, 4
      %v5965 = vrot.slane %v5260, 5
      %v5966 = vsel %vm1858, %v5964, %v5965
      %v5967 = vrot.slane %v5965, 4
      %v5968 = vrot.slane %v5261, 5
      %v5969 = vsel %vm1858, %v5967, %v5968
      %v5970 = vrot.slane %v5262, 5
      %v5971 = vrot.slane %v5970, 4
      %v5972 = vrot.slane %v5263, 5
      %v5973 = vsel %vm1858, %v5971, %v5972
      %v5974 = vrot.slane %v5972, 4
      %v5975 = vrot.slane %v5264, 5
      %v5976 = vsel %vm1858, %v5974, %v5975
      %v5977 = vrot.slane %v5265, 5
      %v5978 = vrot.slane %v5977, 4
      %v5979 = vrot.slane %v5266, 5
      %v5980 = vsel %vm1858, %v5978, %v5979
      %v5981 = vrot.slane %v5979, 4
      %v5982 = vrot.slane %v5267, 5
      %v5983 = vsel %vm1858, %v5981, %v5982
      %v5984 = vrot.slane %v5268, 5
      %v5985 = vrot.slane %v5984, 4
      %v5986 = vrot.slane %v5269, 5
      %v5987 = vsel %vm1858, %v5985, %v5986
      %v5988 = vrot.slane %v5986, 4
      %v5989 = vrot.slane %v5270, 5
      %v5990 = vsel %vm1858, %v5988, %v5989
      %v5991 = vrot.slane %v5271, 5
      %v5992 = vrot.slane %v5991, 4
      %v5993 = vrot.slane %v5272, 5
      %v5994 = vsel %vm1858, %v5992, %v5993
      %v5995 = vrot.slane %v5993, 4
      %v5996 = vrot.slane %v5273, 5
      %v5997 = vsel %vm1858, %v5995, %v5996
      %v5998 = vrot.slane %v5274, 5
      %v5999 = vrot.slane %v5998, 4
      %v6000 = vrot.slane %v5275, 5
      %v6001 = vsel %vm1858, %v5999, %v6000
      %v6002 = vrot.slane %v6000, 4
      %v6003 = vrot.slane %v5276, 5
      %v6004 = vsel %vm1858, %v6002, %v6003
      %v6005 = vrot.slane %v5277, 5
      %v6006 = vrot.slane %v6005, 4
      %v6007 = vrot.slane %v5278, 5
      %v6008 = vsel %vm1858, %v6006, %v6007
      %v6009 = vrot.slane %v6007, 4
      %v6010 = vrot.slane %v5279, 5
      %v6011 = vsel %vm1858, %v6009, %v6010
      %v6012 = vrot.slane %v5280, 5
      %v6013 = vrot.slane %v6012, 4
      %v6014 = vrot.slane %v5281, 5
      %v6015 = vsel %vm1858, %v6013, %v6014
      %v6016 = vrot.slane %v6014, 4
      %v6017 = vrot.slane %v5282, 5
      %v6018 = vsel %vm1858, %v6016, %v6017
      %v6019 = vunpack.c.l.b16 %v5910
      %v6020 = vunpack.c.l.b16 %v5913
      %v6021 = vunpack.c.l.b16 %v5917
      %v6022 = vunpack.c.l.b16 %v5920
      %v6023 = vunpack.c.l.b16 %v5924
      %v6024 = vunpack.c.l.b16 %v5927
      %v6025 = vunpack.c.l.b16 %v5931
      %v6026 = vunpack.c.l.b16 %v5934
      %v6027 = vunpack.c.l.b16 %v5938
      %v6028 = vunpack.c.l.b16 %v5941
      %v6029 = vunpack.c.l.b16 %v5945
      %v6030 = vunpack.c.l.b16 %v5948
      %v6031 = vunpack.c.l.b16 %v5952
      %v6032 = vunpack.c.l.b16 %v5955
      %v6033 = vunpack.c.l.b16 %v5959
      %v6034 = vunpack.c.l.b16 %v5962
      %v6035 = vunpack.c.l.b16 %v5966
      %v6036 = vunpack.c.l.b16 %v5969
      %v6037 = vunpack.c.l.b16 %v5973
      %v6038 = vunpack.c.l.b16 %v5976
      %v6039 = vunpack.c.l.b16 %v5980
      %v6040 = vunpack.c.l.b16 %v5983
      %v6041 = vunpack.c.l.b16 %v5987
      %v6042 = vunpack.c.l.b16 %v5990
      %v6043 = vunpack.c.l.b16 %v5994
      %v6044 = vunpack.c.l.b16 %v5997
      %v6045 = vunpack.c.l.b16 %v6001
      %v6046 = vunpack.c.l.b16 %v6004
      %v6047 = vunpack.c.l.b16 %v6008
      %v6048 = vunpack.c.l.b16 %v6011
      %v6049 = vunpack.c.l.b16 %v6015
      %v6050 = vunpack.c.l.b16 %v6018
      %v6051 = vpack.c.b16 %v6020, %v6019
      %v6052 = vpack.c.b16 %v6022, %v6021
      %v6053 = vpack.c.b16 %v6024, %v6023
      %v6054 = vpack.c.b16 %v6026, %v6025
      %v6055 = vpack.c.b16 %v6028, %v6027
      %v6056 = vpack.c.b16 %v6030, %v6029
      %v6057 = vpack.c.b16 %v6032, %v6031
      %v6058 = vpack.c.b16 %v6034, %v6033
      %v6059 = vpack.c.b16 %v6036, %v6035
      %v6060 = vpack.c.b16 %v6038, %v6037
      %v6061 = vpack.c.b16 %v6040, %v6039
      %v6062 = vpack.c.b16 %v6042, %v6041
      %v6063 = vpack.c.b16 %v6044, %v6043
      %v6064 = vpack.c.b16 %v6046, %v6045
      %v6065 = vpack.c.b16 %v6048, %v6047
      %v6066 = vpack.c.b16 %v6050, %v6049
      %6067 = vrot.lane.b32.xlu0 %v6051, 8
      %v6068 = vpop.permute.xlu0 %6067
      %6069 = vrot.lane.b32.xlu0 %v6052, 8
      %v6070 = vpop.permute.xlu0 %6069
      %6071 = vrot.lane.b32.xlu0 %v6053, 8
      %v6072 = vpop.permute.xlu0 %6071
      %6073 = vrot.lane.b32.xlu0 %v6054, 8
      %v6074 = vpop.permute.xlu0 %6073
      %6075 = vrot.lane.b32.xlu0 %v6055, 8
      %v6076 = vpop.permute.xlu0 %6075
      %6077 = vrot.lane.b32.xlu0 %v6056, 8
      %v6078 = vpop.permute.xlu0 %6077
      %6079 = vrot.lane.b32.xlu0 %v6057, 8
      %v6080 = vpop.permute.xlu0 %6079
      %6081 = vrot.lane.b32.xlu0 %v6058, 8
      %v6082 = vpop.permute.xlu0 %6081
      %6083 = vrot.lane.b32.xlu0 %v6059, 8
      %v6084 = vpop.permute.xlu0 %6083
      %6085 = vrot.lane.b32.xlu0 %v6060, 8
      %v6086 = vpop.permute.xlu0 %6085
      %6087 = vrot.lane.b32.xlu0 %v6061, 8
      %v6088 = vpop.permute.xlu0 %6087
      %6089 = vrot.lane.b32.xlu0 %v6062, 8
      %v6090 = vpop.permute.xlu0 %6089
      %6091 = vrot.lane.b32.xlu0 %v6063, 8
      %v6092 = vpop.permute.xlu0 %6091
      %6093 = vrot.lane.b32.xlu0 %v6064, 8
      %v6094 = vpop.permute.xlu0 %6093
      %6095 = vrot.lane.b32.xlu0 %v6065, 8
      %v6096 = vpop.permute.xlu0 %6095
      %6097 = vrot.lane.b32.xlu0 %v6066, 8
      %v6098 = vpop.permute.xlu0 %6097
      %6115 = vst.msk [vmem:[#allocation5] sm:$0xff] %vm2093, %v6068
      %6116 = vst.msk [vmem:[#allocation5 + $0x8] sm:$0xff] %vm2093, %v6070
      %6117 = vst.msk [vmem:[#allocation5 + $0x10] sm:$0xff] %vm2093, %v6072
      %6118 = vst.msk [vmem:[#allocation5 + $0x18] sm:$0xff] %vm2093, %v6074
      %6119 = vst.msk [vmem:[#allocation5 + $0x20] sm:$0xff] %vm2093, %v6076
      %6120 = vst.msk [vmem:[#allocation5 + $0x28] sm:$0xff] %vm2093, %v6078
      %6121 = vst.msk [vmem:[#allocation5 + $0x30] sm:$0xff] %vm2093, %v6080
      %6122 = vst.msk [vmem:[#allocation5 + $0x38] sm:$0xff] %vm2093, %v6082
      %6123 = vst.msk [vmem:[#allocation5 + $0x40] sm:$0xff] %vm2093, %v6084
      %6124 = vst.msk [vmem:[#allocation5 + $0x48] sm:$0xff] %vm2093, %v6086
      %6125 = vst.msk [vmem:[#allocation5 + $0x50] sm:$0xff] %vm2093, %v6088
      %6126 = vst.msk [vmem:[#allocation5 + $0x58] sm:$0xff] %vm2093, %v6090
      %6127 = vst.msk [vmem:[#allocation5 + $0x60] sm:$0xff] %vm2093, %v6092
      %6128 = vst.msk [vmem:[#allocation5 + $0x68] sm:$0xff] %vm2093, %v6094
      %6129 = vst.msk [vmem:[#allocation5 + $0x70] sm:$0xff] %vm2093, %v6096
      %6130 = vst.msk [vmem:[#allocation5 + $0x78] sm:$0xff] %vm2093, %v6098
      %s6131 = scalar_lea.vmem [#allocation4], 12
      %v6132 = vld [vmem:[%s6131] sm:$0xf]
      %v6133 = vld [vmem:[%s6131 + $0x4] sm:$0xf]
      %v6134 = vld [vmem:[%s6131 + $0x8] sm:$0x1]
      %v6135 = vld [vmem:[%s6131 + $0xc] sm:$0xf]
      %v6136 = vld [vmem:[%s6131 + $0x10] sm:$0xf]
      %v6137 = vld [vmem:[%s6131 + $0x14] sm:$0x1]
      %v6138 = vld [vmem:[%s6131 + $0x18] sm:$0xf]
      %v6139 = vld [vmem:[%s6131 + $0x1c] sm:$0xf]
      %v6140 = vld [vmem:[%s6131 + $0x20] sm:$0x1]
      %v6141 = vld [vmem:[%s6131 + $0x24] sm:$0xf]
      %v6142 = vld [vmem:[%s6131 + $0x28] sm:$0xf]
      %v6143 = vld [vmem:[%s6131 + $0x2c] sm:$0x1]
      %v6144 = vld [vmem:[%s6131 + $0x30] sm:$0xf]
      %v6145 = vld [vmem:[%s6131 + $0x34] sm:$0xf]
      %v6146 = vld [vmem:[%s6131 + $0x38] sm:$0x1]
      %v6147 = vld [vmem:[%s6131 + $0x3c] sm:$0xf]
      %v6148 = vld [vmem:[%s6131 + $0x40] sm:$0xf]
      %v6149 = vld [vmem:[%s6131 + $0x44] sm:$0x1]
      %v6150 = vld [vmem:[%s6131 + $0x48] sm:$0xf]
      %v6151 = vld [vmem:[%s6131 + $0x4c] sm:$0xf]
      %v6152 = vld [vmem:[%s6131 + $0x50] sm:$0x1]
      %v6153 = vld [vmem:[%s6131 + $0x54] sm:$0xf]
      %v6154 = vld [vmem:[%s6131 + $0x58] sm:$0xf]
      %v6155 = vld [vmem:[%s6131 + $0x5c] sm:$0x1]
      %v6156 = vld [vmem:[%s6131 + $0x60] sm:$0xf]
      %v6157 = vld [vmem:[%s6131 + $0x64] sm:$0xf]
      %v6158 = vld [vmem:[%s6131 + $0x68] sm:$0x1]
      %v6159 = vld [vmem:[%s6131 + $0x6c] sm:$0xf]
      %v6160 = vld [vmem:[%s6131 + $0x70] sm:$0xf]
      %v6161 = vld [vmem:[%s6131 + $0x74] sm:$0x1]
      %v6162 = vld [vmem:[%s6131 + $0x78] sm:$0xf]
      %v6163 = vld [vmem:[%s6131 + $0x7c] sm:$0xf]
      %v6164 = vld [vmem:[%s6131 + $0x80] sm:$0x1]
      %v6165 = vld [vmem:[%s6131 + $0x84] sm:$0xf]
      %v6166 = vld [vmem:[%s6131 + $0x88] sm:$0xf]
      %v6167 = vld [vmem:[%s6131 + $0x8c] sm:$0x1]
      %v6168 = vld [vmem:[%s6131 + $0x90] sm:$0xf]
      %v6169 = vld [vmem:[%s6131 + $0x94] sm:$0xf]
      %v6170 = vld [vmem:[%s6131 + $0x98] sm:$0x1]
      %v6171 = vld [vmem:[%s6131 + $0x9c] sm:$0xf]
      %v6172 = vld [vmem:[%s6131 + $0xa0] sm:$0xf]
      %v6173 = vld [vmem:[%s6131 + $0xa4] sm:$0x1]
      %v6174 = vld [vmem:[%s6131 + $0xa8] sm:$0xf]
      %v6175 = vld [vmem:[%s6131 + $0xac] sm:$0xf]
      %v6176 = vld [vmem:[%s6131 + $0xb0] sm:$0x1]
      %v6177 = vld [vmem:[%s6131 + $0xb4] sm:$0xf]
      %v6178 = vld [vmem:[%s6131 + $0xb8] sm:$0xf]
      %v6179 = vld [vmem:[%s6131 + $0xbc] sm:$0x1]
      %v6212 = vunpack.c.l.b16 %v6132
      %v6213 = vunpack.c.l.b16 %v6133
      %v6214 = vunpack.c.l.b16 %v6135
      %v6215 = vunpack.c.l.b16 %v6136
      %v6216 = vunpack.c.l.b16 %v6138
      %v6217 = vunpack.c.l.b16 %v6139
      %v6218 = vunpack.c.l.b16 %v6141
      %v6219 = vunpack.c.l.b16 %v6142
      %v6220 = vunpack.c.l.b16 %v6144
      %v6221 = vunpack.c.l.b16 %v6145
      %v6222 = vunpack.c.l.b16 %v6147
      %v6223 = vunpack.c.l.b16 %v6148
      %v6224 = vunpack.c.l.b16 %v6150
      %v6225 = vunpack.c.l.b16 %v6151
      %v6226 = vunpack.c.l.b16 %v6153
      %v6227 = vunpack.c.l.b16 %v6154
      %v6228 = vunpack.c.l.b16 %v6156
      %v6229 = vunpack.c.l.b16 %v6157
      %v6230 = vunpack.c.l.b16 %v6159
      %v6231 = vunpack.c.l.b16 %v6160
      %v6232 = vunpack.c.l.b16 %v6162
      %v6233 = vunpack.c.l.b16 %v6163
      %v6234 = vunpack.c.l.b16 %v6165
      %v6235 = vunpack.c.l.b16 %v6166
      %v6236 = vunpack.c.l.b16 %v6168
      %v6237 = vunpack.c.l.b16 %v6169
      %v6238 = vunpack.c.l.b16 %v6171
      %v6239 = vunpack.c.l.b16 %v6172
      %v6240 = vunpack.c.l.b16 %v6174
      %v6241 = vunpack.c.l.b16 %v6175
      %v6242 = vunpack.c.l.b16 %v6177
      %v6243 = vunpack.c.l.b16 %v6178
      %v6244 = vpack.c.b16 %v6213, %v6212
      %v6245 = vpack.c.b16 %v6215, %v6214
      %v6246 = vpack.c.b16 %v6217, %v6216
      %v6247 = vpack.c.b16 %v6219, %v6218
      %v6248 = vpack.c.b16 %v6221, %v6220
      %v6249 = vpack.c.b16 %v6223, %v6222
      %v6250 = vpack.c.b16 %v6225, %v6224
      %v6251 = vpack.c.b16 %v6227, %v6226
      %v6252 = vpack.c.b16 %v6229, %v6228
      %v6253 = vpack.c.b16 %v6231, %v6230
      %v6254 = vpack.c.b16 %v6233, %v6232
      %v6255 = vpack.c.b16 %v6235, %v6234
      %v6256 = vpack.c.b16 %v6237, %v6236
      %v6257 = vpack.c.b16 %v6239, %v6238
      %v6258 = vpack.c.b16 %v6241, %v6240
      %v6259 = vpack.c.b16 %v6243, %v6242
      %6260 = vrot.lane.b32.xlu0 %v6244, 12
      %v6261 = vpop.permute.xlu0 %6260
      %6262 = vrot.lane.b32.xlu0 %v6245, 12
      %v6263 = vpop.permute.xlu0 %6262
      %6264 = vrot.lane.b32.xlu0 %v6246, 12
      %v6265 = vpop.permute.xlu0 %6264
      %6266 = vrot.lane.b32.xlu0 %v6247, 12
      %v6267 = vpop.permute.xlu0 %6266
      %6268 = vrot.lane.b32.xlu0 %v6248, 12
      %v6269 = vpop.permute.xlu0 %6268
      %6270 = vrot.lane.b32.xlu0 %v6249, 12
      %v6271 = vpop.permute.xlu0 %6270
      %6272 = vrot.lane.b32.xlu0 %v6250, 12
      %v6273 = vpop.permute.xlu0 %6272
      %6274 = vrot.lane.b32.xlu0 %v6251, 12
      %v6275 = vpop.permute.xlu0 %6274
      %6276 = vrot.lane.b32.xlu0 %v6252, 12
      %v6277 = vpop.permute.xlu0 %6276
      %6278 = vrot.lane.b32.xlu0 %v6253, 12
      %v6279 = vpop.permute.xlu0 %6278
      %6280 = vrot.lane.b32.xlu0 %v6254, 12
      %v6281 = vpop.permute.xlu0 %6280
      %6282 = vrot.lane.b32.xlu0 %v6255, 12
      %v6283 = vpop.permute.xlu0 %6282
      %6284 = vrot.lane.b32.xlu0 %v6256, 12
      %v6285 = vpop.permute.xlu0 %6284
      %6286 = vrot.lane.b32.xlu0 %v6257, 12
      %v6287 = vpop.permute.xlu0 %6286
      %6288 = vrot.lane.b32.xlu0 %v6258, 12
      %v6289 = vpop.permute.xlu0 %6288
      %6290 = vrot.lane.b32.xlu0 %v6259, 12
      %v6291 = vpop.permute.xlu0 %6290
      %6308 = vst.msk [vmem:[#allocation5] sm:$0xff] %vm2311, %v6261
      %6309 = vst.msk [vmem:[#allocation5 + $0x8] sm:$0xff] %vm2311, %v6263
      %6310 = vst.msk [vmem:[#allocation5 + $0x10] sm:$0xff] %vm2311, %v6265
      %6311 = vst.msk [vmem:[#allocation5 + $0x18] sm:$0xff] %vm2311, %v6267
      %6312 = vst.msk [vmem:[#allocation5 + $0x20] sm:$0xff] %vm2311, %v6269
      %6313 = vst.msk [vmem:[#allocation5 + $0x28] sm:$0xff] %vm2311, %v6271
      %6314 = vst.msk [vmem:[#allocation5 + $0x30] sm:$0xff] %vm2311, %v6273
      %6315 = vst.msk [vmem:[#allocation5 + $0x38] sm:$0xff] %vm2311, %v6275
      %6316 = vst.msk [vmem:[#allocation5 + $0x40] sm:$0xff] %vm2311, %v6277
      %6317 = vst.msk [vmem:[#allocation5 + $0x48] sm:$0xff] %vm2311, %v6279
      %6318 = vst.msk [vmem:[#allocation5 + $0x50] sm:$0xff] %vm2311, %v6281
      %6319 = vst.msk [vmem:[#allocation5 + $0x58] sm:$0xff] %vm2311, %v6283
      %6320 = vst.msk [vmem:[#allocation5 + $0x60] sm:$0xff] %vm2311, %v6285
      %6321 = vst.msk [vmem:[#allocation5 + $0x68] sm:$0xff] %vm2311, %v6287
      %6322 = vst.msk [vmem:[#allocation5 + $0x70] sm:$0xff] %vm2311, %v6289
      %6323 = vst.msk [vmem:[#allocation5 + $0x78] sm:$0xff] %vm2311, %v6291
      %v6325 = vshrl.u32 %v6132, 16
      %v6327 = vrot.slane %v6325, 4
      %v6328 = vshll.u32 %v6132, 16
      %v6330 = vrot.slane %v6328, 5
      %v6331 = vor.u32 %v6327, %v6330
      %v6332 = vrot.slane %v6331, 4
      %v6334 = vshll.u32 %v6133, 16
      %v6336 = vrot.slane %v6334, 5
      %v6337 = vsel %vm1278, %v6332, %v6336
      %v6338 = vshrl.u32 %v6133, 16
      %v6340 = vrot.slane %v6338, 4
      %v6341 = vor.u32 %v6340, %v6336
      %v6342 = vrot.slane %v6341, 4
      %v6344 = vshll.u32 %v6134, 16
      %v6346 = vrot.slane %v6344, 5
      %v6347 = vsel %vm1278, %v6342, %v6346
      %v6349 = vshrl.u32 %v6135, 16
      %v6351 = vrot.slane %v6349, 4
      %v6352 = vshll.u32 %v6135, 16
      %v6354 = vrot.slane %v6352, 5
      %v6355 = vor.u32 %v6351, %v6354
      %v6356 = vrot.slane %v6355, 4
      %v6358 = vshll.u32 %v6136, 16
      %v6360 = vrot.slane %v6358, 5
      %v6361 = vsel %vm1278, %v6356, %v6360
      %v6362 = vshrl.u32 %v6136, 16
      %v6364 = vrot.slane %v6362, 4
      %v6365 = vor.u32 %v6364, %v6360
      %v6366 = vrot.slane %v6365, 4
      %v6368 = vshll.u32 %v6137, 16
      %v6370 = vrot.slane %v6368, 5
      %v6371 = vsel %vm1278, %v6366, %v6370
      %v6373 = vshrl.u32 %v6138, 16
      %v6375 = vrot.slane %v6373, 4
      %v6376 = vshll.u32 %v6138, 16
      %v6378 = vrot.slane %v6376, 5
      %v6379 = vor.u32 %v6375, %v6378
      %v6380 = vrot.slane %v6379, 4
      %v6382 = vshll.u32 %v6139, 16
      %v6384 = vrot.slane %v6382, 5
      %v6385 = vsel %vm1278, %v6380, %v6384
      %v6386 = vshrl.u32 %v6139, 16
      %v6388 = vrot.slane %v6386, 4
      %v6389 = vor.u32 %v6388, %v6384
      %v6390 = vrot.slane %v6389, 4
      %v6392 = vshll.u32 %v6140, 16
      %v6394 = vrot.slane %v6392, 5
      %v6395 = vsel %vm1278, %v6390, %v6394
      %v6397 = vshrl.u32 %v6141, 16
      %v6399 = vrot.slane %v6397, 4
      %v6400 = vshll.u32 %v6141, 16
      %v6402 = vrot.slane %v6400, 5
      %v6403 = vor.u32 %v6399, %v6402
      %v6404 = vrot.slane %v6403, 4
      %v6406 = vshll.u32 %v6142, 16
      %v6408 = vrot.slane %v6406, 5
      %v6409 = vsel %vm1278, %v6404, %v6408
      %v6410 = vshrl.u32 %v6142, 16
      %v6412 = vrot.slane %v6410, 4
      %v6413 = vor.u32 %v6412, %v6408
      %v6414 = vrot.slane %v6413, 4
      %v6416 = vshll.u32 %v6143, 16
      %v6418 = vrot.slane %v6416, 5
      %v6419 = vsel %vm1278, %v6414, %v6418
      %v6421 = vshrl.u32 %v6144, 16
      %v6423 = vrot.slane %v6421, 4
      %v6424 = vshll.u32 %v6144, 16
      %v6426 = vrot.slane %v6424, 5
      %v6427 = vor.u32 %v6423, %v6426
      %v6428 = vrot.slane %v6427, 4
      %v6430 = vshll.u32 %v6145, 16
      %v6432 = vrot.slane %v6430, 5
      %v6433 = vsel %vm1278, %v6428, %v6432
      %v6434 = vshrl.u32 %v6145, 16
      %v6436 = vrot.slane %v6434, 4
      %v6437 = vor.u32 %v6436, %v6432
      %v6438 = vrot.slane %v6437, 4
      %v6440 = vshll.u32 %v6146, 16
      %v6442 = vrot.slane %v6440, 5
      %v6443 = vsel %vm1278, %v6438, %v6442
      %v6445 = vshrl.u32 %v6147, 16
      %v6447 = vrot.slane %v6445, 4
      %v6448 = vshll.u32 %v6147, 16
      %v6450 = vrot.slane %v6448, 5
      %v6451 = vor.u32 %v6447, %v6450
      %v6452 = vrot.slane %v6451, 4
      %v6454 = vshll.u32 %v6148, 16
      %v6456 = vrot.slane %v6454, 5
      %v6457 = vsel %vm1278, %v6452, %v6456
      %v6458 = vshrl.u32 %v6148, 16
      %v6460 = vrot.slane %v6458, 4
      %v6461 = vor.u32 %v6460, %v6456
      %v6462 = vrot.slane %v6461, 4
      %v6464 = vshll.u32 %v6149, 16
      %v6466 = vrot.slane %v6464, 5
      %v6467 = vsel %vm1278, %v6462, %v6466
      %v6469 = vshrl.u32 %v6150, 16
      %v6471 = vrot.slane %v6469, 4
      %v6472 = vshll.u32 %v6150, 16
      %v6474 = vrot.slane %v6472, 5
      %v6475 = vor.u32 %v6471, %v6474
      %v6476 = vrot.slane %v6475, 4
      %v6478 = vshll.u32 %v6151, 16
      %v6480 = vrot.slane %v6478, 5
      %v6481 = vsel %vm1278, %v6476, %v6480
      %v6482 = vshrl.u32 %v6151, 16
      %v6484 = vrot.slane %v6482, 4
      %v6485 = vor.u32 %v6484, %v6480
      %v6486 = vrot.slane %v6485, 4
      %v6488 = vshll.u32 %v6152, 16
      %v6490 = vrot.slane %v6488, 5
      %v6491 = vsel %vm1278, %v6486, %v6490
      %v6493 = vshrl.u32 %v6153, 16
      %v6495 = vrot.slane %v6493, 4
      %v6496 = vshll.u32 %v6153, 16
      %v6498 = vrot.slane %v6496, 5
      %v6499 = vor.u32 %v6495, %v6498
      %v6500 = vrot.slane %v6499, 4
      %v6502 = vshll.u32 %v6154, 16
      %v6504 = vrot.slane %v6502, 5
      %v6505 = vsel %vm1278, %v6500, %v6504
      %v6506 = vshrl.u32 %v6154, 16
      %v6508 = vrot.slane %v6506, 4
      %v6509 = vor.u32 %v6508, %v6504
      %v6510 = vrot.slane %v6509, 4
      %v6512 = vshll.u32 %v6155, 16
      %v6514 = vrot.slane %v6512, 5
      %v6515 = vsel %vm1278, %v6510, %v6514
      %v6517 = vshrl.u32 %v6156, 16
      %v6519 = vrot.slane %v6517, 4
      %v6520 = vshll.u32 %v6156, 16
      %v6522 = vrot.slane %v6520, 5
      %v6523 = vor.u32 %v6519, %v6522
      %v6524 = vrot.slane %v6523, 4
      %v6526 = vshll.u32 %v6157, 16
      %v6528 = vrot.slane %v6526, 5
      %v6529 = vsel %vm1278, %v6524, %v6528
      %v6530 = vshrl.u32 %v6157, 16
      %v6532 = vrot.slane %v6530, 4
      %v6533 = vor.u32 %v6532, %v6528
      %v6534 = vrot.slane %v6533, 4
      %v6536 = vshll.u32 %v6158, 16
      %v6538 = vrot.slane %v6536, 5
      %v6539 = vsel %vm1278, %v6534, %v6538
      %v6541 = vshrl.u32 %v6159, 16
      %v6543 = vrot.slane %v6541, 4
      %v6544 = vshll.u32 %v6159, 16
      %v6546 = vrot.slane %v6544, 5
      %v6547 = vor.u32 %v6543, %v6546
      %v6548 = vrot.slane %v6547, 4
      %v6550 = vshll.u32 %v6160, 16
      %v6552 = vrot.slane %v6550, 5
      %v6553 = vsel %vm1278, %v6548, %v6552
      %v6554 = vshrl.u32 %v6160, 16
      %v6556 = vrot.slane %v6554, 4
      %v6557 = vor.u32 %v6556, %v6552
      %v6558 = vrot.slane %v6557, 4
      %v6560 = vshll.u32 %v6161, 16
      %v6562 = vrot.slane %v6560, 5
      %v6563 = vsel %vm1278, %v6558, %v6562
      %v6565 = vshrl.u32 %v6162, 16
      %v6567 = vrot.slane %v6565, 4
      %v6568 = vshll.u32 %v6162, 16
      %v6570 = vrot.slane %v6568, 5
      %v6571 = vor.u32 %v6567, %v6570
      %v6572 = vrot.slane %v6571, 4
      %v6574 = vshll.u32 %v6163, 16
      %v6576 = vrot.slane %v6574, 5
      %v6577 = vsel %vm1278, %v6572, %v6576
      %v6578 = vshrl.u32 %v6163, 16
      %v6580 = vrot.slane %v6578, 4
      %v6581 = vor.u32 %v6580, %v6576
      %v6582 = vrot.slane %v6581, 4
      %v6584 = vshll.u32 %v6164, 16
      %v6586 = vrot.slane %v6584, 5
      %v6587 = vsel %vm1278, %v6582, %v6586
      %v6589 = vshrl.u32 %v6165, 16
      %v6591 = vrot.slane %v6589, 4
      %v6592 = vshll.u32 %v6165, 16
      %v6594 = vrot.slane %v6592, 5
      %v6595 = vor.u32 %v6591, %v6594
      %v6596 = vrot.slane %v6595, 4
      %v6598 = vshll.u32 %v6166, 16
      %v6600 = vrot.slane %v6598, 5
      %v6601 = vsel %vm1278, %v6596, %v6600
      %v6602 = vshrl.u32 %v6166, 16
      %v6604 = vrot.slane %v6602, 4
      %v6605 = vor.u32 %v6604, %v6600
      %v6606 = vrot.slane %v6605, 4
      %v6608 = vshll.u32 %v6167, 16
      %v6610 = vrot.slane %v6608, 5
      %v6611 = vsel %vm1278, %v6606, %v6610
      %v6613 = vshrl.u32 %v6168, 16
      %v6615 = vrot.slane %v6613, 4
      %v6616 = vshll.u32 %v6168, 16
      %v6618 = vrot.slane %v6616, 5
      %v6619 = vor.u32 %v6615, %v6618
      %v6620 = vrot.slane %v6619, 4
      %v6622 = vshll.u32 %v6169, 16
      %v6624 = vrot.slane %v6622, 5
      %v6625 = vsel %vm1278, %v6620, %v6624
      %v6626 = vshrl.u32 %v6169, 16
      %v6628 = vrot.slane %v6626, 4
      %v6629 = vor.u32 %v6628, %v6624
      %v6630 = vrot.slane %v6629, 4
      %v6632 = vshll.u32 %v6170, 16
      %v6634 = vrot.slane %v6632, 5
      %v6635 = vsel %vm1278, %v6630, %v6634
      %v6637 = vshrl.u32 %v6171, 16
      %v6639 = vrot.slane %v6637, 4
      %v6640 = vshll.u32 %v6171, 16
      %v6642 = vrot.slane %v6640, 5
      %v6643 = vor.u32 %v6639, %v6642
      %v6644 = vrot.slane %v6643, 4
      %v6646 = vshll.u32 %v6172, 16
      %v6648 = vrot.slane %v6646, 5
      %v6649 = vsel %vm1278, %v6644, %v6648
      %v6650 = vshrl.u32 %v6172, 16
      %v6652 = vrot.slane %v6650, 4
      %v6653 = vor.u32 %v6652, %v6648
      %v6654 = vrot.slane %v6653, 4
      %v6656 = vshll.u32 %v6173, 16
      %v6658 = vrot.slane %v6656, 5
      %v6659 = vsel %vm1278, %v6654, %v6658
      %v6661 = vshrl.u32 %v6174, 16
      %v6663 = vrot.slane %v6661, 4
      %v6664 = vshll.u32 %v6174, 16
      %v6666 = vrot.slane %v6664, 5
      %v6667 = vor.u32 %v6663, %v6666
      %v6668 = vrot.slane %v6667, 4
      %v6670 = vshll.u32 %v6175, 16
      %v6672 = vrot.slane %v6670, 5
      %v6673 = vsel %vm1278, %v6668, %v6672
      %v6674 = vshrl.u32 %v6175, 16
      %v6676 = vrot.slane %v6674, 4
      %v6677 = vor.u32 %v6676, %v6672
      %v6678 = vrot.slane %v6677, 4
      %v6680 = vshll.u32 %v6176, 16
      %v6682 = vrot.slane %v6680, 5
      %v6683 = vsel %vm1278, %v6678, %v6682
      %v6685 = vshrl.u32 %v6177, 16
      %v6687 = vrot.slane %v6685, 4
      %v6688 = vshll.u32 %v6177, 16
      %v6690 = vrot.slane %v6688, 5
      %v6691 = vor.u32 %v6687, %v6690
      %v6692 = vrot.slane %v6691, 4
      %v6694 = vshll.u32 %v6178, 16
      %v6696 = vrot.slane %v6694, 5
      %v6697 = vsel %vm1278, %v6692, %v6696
      %v6698 = vshrl.u32 %v6178, 16
      %v6700 = vrot.slane %v6698, 4
      %v6701 = vor.u32 %v6700, %v6696
      %v6702 = vrot.slane %v6701, 4
      %v6704 = vshll.u32 %v6179, 16
      %v6706 = vrot.slane %v6704, 5
      %v6707 = vsel %vm1278, %v6702, %v6706
      %v6708 = vunpack.c.l.b16 %v6337
      %v6709 = vunpack.c.l.b16 %v6347
      %v6710 = vunpack.c.l.b16 %v6361
      %v6711 = vunpack.c.l.b16 %v6371
      %v6712 = vunpack.c.l.b16 %v6385
      %v6713 = vunpack.c.l.b16 %v6395
      %v6714 = vunpack.c.l.b16 %v6409
      %v6715 = vunpack.c.l.b16 %v6419
      %v6716 = vunpack.c.l.b16 %v6433
      %v6717 = vunpack.c.l.b16 %v6443
      %v6718 = vunpack.c.l.b16 %v6457
      %v6719 = vunpack.c.l.b16 %v6467
      %v6720 = vunpack.c.l.b16 %v6481
      %v6721 = vunpack.c.l.b16 %v6491
      %v6722 = vunpack.c.l.b16 %v6505
      %v6723 = vunpack.c.l.b16 %v6515
      %v6724 = vunpack.c.l.b16 %v6529
      %v6725 = vunpack.c.l.b16 %v6539
      %v6726 = vunpack.c.l.b16 %v6553
      %v6727 = vunpack.c.l.b16 %v6563
      %v6728 = vunpack.c.l.b16 %v6577
      %v6729 = vunpack.c.l.b16 %v6587
      %v6730 = vunpack.c.l.b16 %v6601
      %v6731 = vunpack.c.l.b16 %v6611
      %v6732 = vunpack.c.l.b16 %v6625
      %v6733 = vunpack.c.l.b16 %v6635
      %v6734 = vunpack.c.l.b16 %v6649
      %v6735 = vunpack.c.l.b16 %v6659
      %v6736 = vunpack.c.l.b16 %v6673
      %v6737 = vunpack.c.l.b16 %v6683
      %v6738 = vunpack.c.l.b16 %v6697
      %v6739 = vunpack.c.l.b16 %v6707
      %v6740 = vpack.c.b16 %v6709, %v6708
      %v6741 = vpack.c.b16 %v6711, %v6710
      %v6742 = vpack.c.b16 %v6713, %v6712
      %v6743 = vpack.c.b16 %v6715, %v6714
      %v6744 = vpack.c.b16 %v6717, %v6716
      %v6745 = vpack.c.b16 %v6719, %v6718
      %v6746 = vpack.c.b16 %v6721, %v6720
      %v6747 = vpack.c.b16 %v6723, %v6722
      %v6748 = vpack.c.b16 %v6725, %v6724
      %v6749 = vpack.c.b16 %v6727, %v6726
      %v6750 = vpack.c.b16 %v6729, %v6728
      %v6751 = vpack.c.b16 %v6731, %v6730
      %v6752 = vpack.c.b16 %v6733, %v6732
      %v6753 = vpack.c.b16 %v6735, %v6734
      %v6754 = vpack.c.b16 %v6737, %v6736
      %v6755 = vpack.c.b16 %v6739, %v6738
      %6756 = vrot.lane.b32.xlu0 %v6740, 16
      %v6757 = vpop.permute.xlu0 %6756
      %6758 = vrot.lane.b32.xlu0 %v6741, 16
      %v6759 = vpop.permute.xlu0 %6758
      %6760 = vrot.lane.b32.xlu0 %v6742, 16
      %v6761 = vpop.permute.xlu0 %6760
      %6762 = vrot.lane.b32.xlu0 %v6743, 16
      %v6763 = vpop.permute.xlu0 %6762
      %6764 = vrot.lane.b32.xlu0 %v6744, 16
      %v6765 = vpop.permute.xlu0 %6764
      %6766 = vrot.lane.b32.xlu0 %v6745, 16
      %v6767 = vpop.permute.xlu0 %6766
      %6768 = vrot.lane.b32.xlu0 %v6746, 16
      %v6769 = vpop.permute.xlu0 %6768
      %6770 = vrot.lane.b32.xlu0 %v6747, 16
      %v6771 = vpop.permute.xlu0 %6770
      %6772 = vrot.lane.b32.xlu0 %v6748, 16
      %v6773 = vpop.permute.xlu0 %6772
      %6774 = vrot.lane.b32.xlu0 %v6749, 16
      %v6775 = vpop.permute.xlu0 %6774
      %6776 = vrot.lane.b32.xlu0 %v6750, 16
      %v6777 = vpop.permute.xlu0 %6776
      %6778 = vrot.lane.b32.xlu0 %v6751, 16
      %v6779 = vpop.permute.xlu0 %6778
      %6780 = vrot.lane.b32.xlu0 %v6752, 16
      %v6781 = vpop.permute.xlu0 %6780
      %6782 = vrot.lane.b32.xlu0 %v6753, 16
      %v6783 = vpop.permute.xlu0 %6782
      %6784 = vrot.lane.b32.xlu0 %v6754, 16
      %v6785 = vpop.permute.xlu0 %6784
      %6786 = vrot.lane.b32.xlu0 %v6755, 16
      %v6787 = vpop.permute.xlu0 %6786
      %6804 = vst.msk [vmem:[#allocation5] sm:$0xff] %vm2870, %v6757
      %6805 = vst.msk [vmem:[#allocation5 + $0x8] sm:$0xff] %vm2870, %v6759
      %6806 = vst.msk [vmem:[#allocation5 + $0x10] sm:$0xff] %vm2870, %v6761
      %6807 = vst.msk [vmem:[#allocation5 + $0x18] sm:$0xff] %vm2870, %v6763
      %6808 = vst.msk [vmem:[#allocation5 + $0x20] sm:$0xff] %vm2870, %v6765
      %6809 = vst.msk [vmem:[#allocation5 + $0x28] sm:$0xff] %vm2870, %v6767
      %6810 = vst.msk [vmem:[#allocation5 + $0x30] sm:$0xff] %vm2870, %v6769
      %6811 = vst.msk [vmem:[#allocation5 + $0x38] sm:$0xff] %vm2870, %v6771
      %6812 = vst.msk [vmem:[#allocation5 + $0x40] sm:$0xff] %vm2870, %v6773
      %6813 = vst.msk [vmem:[#allocation5 + $0x48] sm:$0xff] %vm2870, %v6775
      %6814 = vst.msk [vmem:[#allocation5 + $0x50] sm:$0xff] %vm2870, %v6777
      %6815 = vst.msk [vmem:[#allocation5 + $0x58] sm:$0xff] %vm2870, %v6779
      %6816 = vst.msk [vmem:[#allocation5 + $0x60] sm:$0xff] %vm2870, %v6781
      %6817 = vst.msk [vmem:[#allocation5 + $0x68] sm:$0xff] %vm2870, %v6783
      %6818 = vst.msk [vmem:[#allocation5 + $0x70] sm:$0xff] %vm2870, %v6785
      %6819 = vst.msk [vmem:[#allocation5 + $0x78] sm:$0xff] %vm2870, %v6787
      %v6836 = vrot.slane %v6132, 5
      %v6837 = vrot.slane %v6836, 4
      %v6838 = vrot.slane %v6133, 5
      %v6839 = vsel %vm1858, %v6837, %v6838
      %v6840 = vrot.slane %v6838, 4
      %v6841 = vrot.slane %v6134, 5
      %v6842 = vsel %vm1858, %v6840, %v6841
      %v6843 = vrot.slane %v6135, 5
      %v6844 = vrot.slane %v6843, 4
      %v6845 = vrot.slane %v6136, 5
      %v6846 = vsel %vm1858, %v6844, %v6845
      %v6847 = vrot.slane %v6845, 4
      %v6848 = vrot.slane %v6137, 5
      %v6849 = vsel %vm1858, %v6847, %v6848
      %v6850 = vrot.slane %v6138, 5
      %v6851 = vrot.slane %v6850, 4
      %v6852 = vrot.slane %v6139, 5
      %v6853 = vsel %vm1858, %v6851, %v6852
      %v6854 = vrot.slane %v6852, 4
      %v6855 = vrot.slane %v6140, 5
      %v6856 = vsel %vm1858, %v6854, %v6855
      %v6857 = vrot.slane %v6141, 5
      %v6858 = vrot.slane %v6857, 4
      %v6859 = vrot.slane %v6142, 5
      %v6860 = vsel %vm1858, %v6858, %v6859
      %v6861 = vrot.slane %v6859, 4
      %v6862 = vrot.slane %v6143, 5
      %v6863 = vsel %vm1858, %v6861, %v6862
      %v6864 = vrot.slane %v6144, 5
      %v6865 = vrot.slane %v6864, 4
      %v6866 = vrot.slane %v6145, 5
      %v6867 = vsel %vm1858, %v6865, %v6866
      %v6868 = vrot.slane %v6866, 4
      %v6869 = vrot.slane %v6146, 5
      %v6870 = vsel %vm1858, %v6868, %v6869
      %v6871 = vrot.slane %v6147, 5
      %v6872 = vrot.slane %v6871, 4
      %v6873 = vrot.slane %v6148, 5
      %v6874 = vsel %vm1858, %v6872, %v6873
      %v6875 = vrot.slane %v6873, 4
      %v6876 = vrot.slane %v6149, 5
      %v6877 = vsel %vm1858, %v6875, %v6876
      %v6878 = vrot.slane %v6150, 5
      %v6879 = vrot.slane %v6878, 4
      %v6880 = vrot.slane %v6151, 5
      %v6881 = vsel %vm1858, %v6879, %v6880
      %v6882 = vrot.slane %v6880, 4
      %v6883 = vrot.slane %v6152, 5
      %v6884 = vsel %vm1858, %v6882, %v6883
      %v6885 = vrot.slane %v6153, 5
      %v6886 = vrot.slane %v6885, 4
      %v6887 = vrot.slane %v6154, 5
      %v6888 = vsel %vm1858, %v6886, %v6887
      %v6889 = vrot.slane %v6887, 4
      %v6890 = vrot.slane %v6155, 5
      %v6891 = vsel %vm1858, %v6889, %v6890
      %v6892 = vrot.slane %v6156, 5
      %v6893 = vrot.slane %v6892, 4
      %v6894 = vrot.slane %v6157, 5
      %v6895 = vsel %vm1858, %v6893, %v6894
      %v6896 = vrot.slane %v6894, 4
      %v6897 = vrot.slane %v6158, 5
      %v6898 = vsel %vm1858, %v6896, %v6897
      %v6899 = vrot.slane %v6159, 5
      %v6900 = vrot.slane %v6899, 4
      %v6901 = vrot.slane %v6160, 5
      %v6902 = vsel %vm1858, %v6900, %v6901
      %v6903 = vrot.slane %v6901, 4
      %v6904 = vrot.slane %v6161, 5
      %v6905 = vsel %vm1858, %v6903, %v6904
      %v6906 = vrot.slane %v6162, 5
      %v6907 = vrot.slane %v6906, 4
      %v6908 = vrot.slane %v6163, 5
      %v6909 = vsel %vm1858, %v6907, %v6908
      %v6910 = vrot.slane %v6908, 4
      %v6911 = vrot.slane %v6164, 5
      %v6912 = vsel %vm1858, %v6910, %v6911
      %v6913 = vrot.slane %v6165, 5
      %v6914 = vrot.slane %v6913, 4
      %v6915 = vrot.slane %v6166, 5
      %v6916 = vsel %vm1858, %v6914, %v6915
      %v6917 = vrot.slane %v6915, 4
      %v6918 = vrot.slane %v6167, 5
      %v6919 = vsel %vm1858, %v6917, %v6918
      %v6920 = vrot.slane %v6168, 5
      %v6921 = vrot.slane %v6920, 4
      %v6922 = vrot.slane %v6169, 5
      %v6923 = vsel %vm1858, %v6921, %v6922
      %v6924 = vrot.slane %v6922, 4
      %v6925 = vrot.slane %v6170, 5
      %v6926 = vsel %vm1858, %v6924, %v6925
      %v6927 = vrot.slane %v6171, 5
      %v6928 = vrot.slane %v6927, 4
      %v6929 = vrot.slane %v6172, 5
      %v6930 = vsel %vm1858, %v6928, %v6929
      %v6931 = vrot.slane %v6929, 4
      %v6932 = vrot.slane %v6173, 5
      %v6933 = vsel %vm1858, %v6931, %v6932
      %v6934 = vrot.slane %v6174, 5
      %v6935 = vrot.slane %v6934, 4
      %v6936 = vrot.slane %v6175, 5
      %v6937 = vsel %vm1858, %v6935, %v6936
      %v6938 = vrot.slane %v6936, 4
      %v6939 = vrot.slane %v6176, 5
      %v6940 = vsel %vm1858, %v6938, %v6939
      %v6941 = vrot.slane %v6177, 5
      %v6942 = vrot.slane %v6941, 4
      %v6943 = vrot.slane %v6178, 5
      %v6944 = vsel %vm1858, %v6942, %v6943
      %v6945 = vrot.slane %v6943, 4
      %v6946 = vrot.slane %v6179, 5
      %v6947 = vsel %vm1858, %v6945, %v6946
      %v6948 = vunpack.c.l.b16 %v6839
      %v6949 = vunpack.c.l.b16 %v6842
      %v6950 = vunpack.c.l.b16 %v6846
      %v6951 = vunpack.c.l.b16 %v6849
      %v6952 = vunpack.c.l.b16 %v6853
      %v6953 = vunpack.c.l.b16 %v6856
      %v6954 = vunpack.c.l.b16 %v6860
      %v6955 = vunpack.c.l.b16 %v6863
      %v6956 = vunpack.c.l.b16 %v6867
      %v6957 = vunpack.c.l.b16 %v6870
      %v6958 = vunpack.c.l.b16 %v6874
      %v6959 = vunpack.c.l.b16 %v6877
      %v6960 = vunpack.c.l.b16 %v6881
      %v6961 = vunpack.c.l.b16 %v6884
      %v6962 = vunpack.c.l.b16 %v6888
      %v6963 = vunpack.c.l.b16 %v6891
      %v6964 = vunpack.c.l.b16 %v6895
      %v6965 = vunpack.c.l.b16 %v6898
      %v6966 = vunpack.c.l.b16 %v6902
      %v6967 = vunpack.c.l.b16 %v6905
      %v6968 = vunpack.c.l.b16 %v6909
      %v6969 = vunpack.c.l.b16 %v6912
      %v6970 = vunpack.c.l.b16 %v6916
      %v6971 = vunpack.c.l.b16 %v6919
      %v6972 = vunpack.c.l.b16 %v6923
      %v6973 = vunpack.c.l.b16 %v6926
      %v6974 = vunpack.c.l.b16 %v6930
      %v6975 = vunpack.c.l.b16 %v6933
      %v6976 = vunpack.c.l.b16 %v6937
      %v6977 = vunpack.c.l.b16 %v6940
      %v6978 = vunpack.c.l.b16 %v6944
      %v6979 = vunpack.c.l.b16 %v6947
      %v6980 = vpack.c.b16 %v6949, %v6948
      %v6981 = vpack.c.b16 %v6951, %v6950
      %v6982 = vpack.c.b16 %v6953, %v6952
      %v6983 = vpack.c.b16 %v6955, %v6954
      %v6984 = vpack.c.b16 %v6957, %v6956
      %v6985 = vpack.c.b16 %v6959, %v6958
      %v6986 = vpack.c.b16 %v6961, %v6960
      %v6987 = vpack.c.b16 %v6963, %v6962
      %v6988 = vpack.c.b16 %v6965, %v6964
      %v6989 = vpack.c.b16 %v6967, %v6966
      %v6990 = vpack.c.b16 %v6969, %v6968
      %v6991 = vpack.c.b16 %v6971, %v6970
      %v6992 = vpack.c.b16 %v6973, %v6972
      %v6993 = vpack.c.b16 %v6975, %v6974
      %v6994 = vpack.c.b16 %v6977, %v6976
      %v6995 = vpack.c.b16 %v6979, %v6978
      %6996 = vrot.lane.b32.xlu0 %v6980, 20
      %v6997 = vpop.permute.xlu0 %6996
      %6998 = vrot.lane.b32.xlu0 %v6981, 20
      %v6999 = vpop.permute.xlu0 %6998
      %7000 = vrot.lane.b32.xlu0 %v6982, 20
      %v7001 = vpop.permute.xlu0 %7000
      %7002 = vrot.lane.b32.xlu0 %v6983, 20
      %v7003 = vpop.permute.xlu0 %7002
      %7004 = vrot.lane.b32.xlu0 %v6984, 20
      %v7005 = vpop.permute.xlu0 %7004
      %7006 = vrot.lane.b32.xlu0 %v6985, 20
      %v7007 = vpop.permute.xlu0 %7006
      %7008 = vrot.lane.b32.xlu0 %v6986, 20
      %v7009 = vpop.permute.xlu0 %7008
      %7010 = vrot.lane.b32.xlu0 %v6987, 20
      %v7011 = vpop.permute.xlu0 %7010
      %7012 = vrot.lane.b32.xlu0 %v6988, 20
      %v7013 = vpop.permute.xlu0 %7012
      %7014 = vrot.lane.b32.xlu0 %v6989, 20
      %v7015 = vpop.permute.xlu0 %7014
      %7016 = vrot.lane.b32.xlu0 %v6990, 20
      %v7017 = vpop.permute.xlu0 %7016
      %7018 = vrot.lane.b32.xlu0 %v6991, 20
      %v7019 = vpop.permute.xlu0 %7018
      %7020 = vrot.lane.b32.xlu0 %v6992, 20
      %v7021 = vpop.permute.xlu0 %7020
      %7022 = vrot.lane.b32.xlu0 %v6993, 20
      %v7023 = vpop.permute.xlu0 %7022
      %7024 = vrot.lane.b32.xlu0 %v6994, 20
      %v7025 = vpop.permute.xlu0 %7024
      %7026 = vrot.lane.b32.xlu0 %v6995, 20
      %v7027 = vpop.permute.xlu0 %7026
      %7044 = vst.msk [vmem:[#allocation5] sm:$0xff] %vm3141, %v6997
      %7045 = vst.msk [vmem:[#allocation5 + $0x8] sm:$0xff] %vm3141, %v6999
      %7046 = vst.msk [vmem:[#allocation5 + $0x10] sm:$0xff] %vm3141, %v7001
      %7047 = vst.msk [vmem:[#allocation5 + $0x18] sm:$0xff] %vm3141, %v7003
      %7048 = vst.msk [vmem:[#allocation5 + $0x20] sm:$0xff] %vm3141, %v7005
      %7049 = vst.msk [vmem:[#allocation5 + $0x28] sm:$0xff] %vm3141, %v7007
      %7050 = vst.msk [vmem:[#allocation5 + $0x30] sm:$0xff] %vm3141, %v7009
      %7051 = vst.msk [vmem:[#allocation5 + $0x38] sm:$0xff] %vm3141, %v7011
      %7052 = vst.msk [vmem:[#allocation5 + $0x40] sm:$0xff] %vm3141, %v7013
      %7053 = vst.msk [vmem:[#allocation5 + $0x48] sm:$0xff] %vm3141, %v7015
      %7054 = vst.msk [vmem:[#allocation5 + $0x50] sm:$0xff] %vm3141, %v7017
      %7055 = vst.msk [vmem:[#allocation5 + $0x58] sm:$0xff] %vm3141, %v7019
      %7056 = vst.msk [vmem:[#allocation5 + $0x60] sm:$0xff] %vm3141, %v7021
      %7057 = vst.msk [vmem:[#allocation5 + $0x68] sm:$0xff] %vm3141, %v7023
      %7058 = vst.msk [vmem:[#allocation5 + $0x70] sm:$0xff] %vm3141, %v7025
      %7059 = vst.msk [vmem:[#allocation5 + $0x78] sm:$0xff] %vm3141, %v7027
      %s7060 = scalar_lea.vmem [#allocation4], 24
      %v7061 = vld [vmem:[%s7060] sm:$0xf]
      %v7062 = vld [vmem:[%s7060 + $0x4] sm:$0xf]
      %v7063 = vld [vmem:[%s7060 + $0x8] sm:$0x1]
      %v7064 = vld [vmem:[%s7060 + $0xc] sm:$0xf]
      %v7065 = vld [vmem:[%s7060 + $0x10] sm:$0xf]
      %v7066 = vld [vmem:[%s7060 + $0x14] sm:$0x1]
      %v7067 = vld [vmem:[%s7060 + $0x18] sm:$0xf]
      %v7068 = vld [vmem:[%s7060 + $0x1c] sm:$0xf]
      %v7069 = vld [vmem:[%s7060 + $0x20] sm:$0x1]
      %v7070 = vld [vmem:[%s7060 + $0x24] sm:$0xf]
      %v7071 = vld [vmem:[%s7060 + $0x28] sm:$0xf]
      %v7072 = vld [vmem:[%s7060 + $0x2c] sm:$0x1]
      %v7073 = vld [vmem:[%s7060 + $0x30] sm:$0xf]
      %v7074 = vld [vmem:[%s7060 + $0x34] sm:$0xf]
      %v7075 = vld [vmem:[%s7060 + $0x38] sm:$0x1]
      %v7076 = vld [vmem:[%s7060 + $0x3c] sm:$0xf]
      %v7077 = vld [vmem:[%s7060 + $0x40] sm:$0xf]
      %v7078 = vld [vmem:[%s7060 + $0x44] sm:$0x1]
      %v7079 = vld [vmem:[%s7060 + $0x48] sm:$0xf]
      %v7080 = vld [vmem:[%s7060 + $0x4c] sm:$0xf]
      %v7081 = vld [vmem:[%s7060 + $0x50] sm:$0x1]
      %v7082 = vld [vmem:[%s7060 + $0x54] sm:$0xf]
      %v7083 = vld [vmem:[%s7060 + $0x58] sm:$0xf]
      %v7084 = vld [vmem:[%s7060 + $0x5c] sm:$0x1]
      %v7085 = vld [vmem:[%s7060 + $0x60] sm:$0xf]
      %v7086 = vld [vmem:[%s7060 + $0x64] sm:$0xf]
      %v7087 = vld [vmem:[%s7060 + $0x68] sm:$0x1]
      %v7088 = vld [vmem:[%s7060 + $0x6c] sm:$0xf]
      %v7089 = vld [vmem:[%s7060 + $0x70] sm:$0xf]
      %v7090 = vld [vmem:[%s7060 + $0x74] sm:$0x1]
      %v7091 = vld [vmem:[%s7060 + $0x78] sm:$0xf]
      %v7092 = vld [vmem:[%s7060 + $0x7c] sm:$0xf]
      %v7093 = vld [vmem:[%s7060 + $0x80] sm:$0x1]
      %v7094 = vld [vmem:[%s7060 + $0x84] sm:$0xf]
      %v7095 = vld [vmem:[%s7060 + $0x88] sm:$0xf]
      %v7096 = vld [vmem:[%s7060 + $0x8c] sm:$0x1]
      %v7097 = vld [vmem:[%s7060 + $0x90] sm:$0xf]
      %v7098 = vld [vmem:[%s7060 + $0x94] sm:$0xf]
      %v7099 = vld [vmem:[%s7060 + $0x98] sm:$0x1]
      %v7100 = vld [vmem:[%s7060 + $0x9c] sm:$0xf]
      %v7101 = vld [vmem:[%s7060 + $0xa0] sm:$0xf]
      %v7102 = vld [vmem:[%s7060 + $0xa4] sm:$0x1]
      %v7103 = vld [vmem:[%s7060 + $0xa8] sm:$0xf]
      %v7104 = vld [vmem:[%s7060 + $0xac] sm:$0xf]
      %v7105 = vld [vmem:[%s7060 + $0xb0] sm:$0x1]
      %v7106 = vld [vmem:[%s7060 + $0xb4] sm:$0xf]
      %v7107 = vld [vmem:[%s7060 + $0xb8] sm:$0xf]
      %v7108 = vld [vmem:[%s7060 + $0xbc] sm:$0x1]
      %v7141 = vunpack.c.l.b16 %v7061
      %v7142 = vunpack.c.l.b16 %v7062
      %v7143 = vunpack.c.l.b16 %v7064
      %v7144 = vunpack.c.l.b16 %v7065
      %v7145 = vunpack.c.l.b16 %v7067
      %v7146 = vunpack.c.l.b16 %v7068
      %v7147 = vunpack.c.l.b16 %v7070
      %v7148 = vunpack.c.l.b16 %v7071
      %v7149 = vunpack.c.l.b16 %v7073
      %v7150 = vunpack.c.l.b16 %v7074
      %v7151 = vunpack.c.l.b16 %v7076
      %v7152 = vunpack.c.l.b16 %v7077
      %v7153 = vunpack.c.l.b16 %v7079
      %v7154 = vunpack.c.l.b16 %v7080
      %v7155 = vunpack.c.l.b16 %v7082
      %v7156 = vunpack.c.l.b16 %v7083
      %v7157 = vunpack.c.l.b16 %v7085
      %v7158 = vunpack.c.l.b16 %v7086
      %v7159 = vunpack.c.l.b16 %v7088
      %v7160 = vunpack.c.l.b16 %v7089
      %v7161 = vunpack.c.l.b16 %v7091
      %v7162 = vunpack.c.l.b16 %v7092
      %v7163 = vunpack.c.l.b16 %v7094
      %v7164 = vunpack.c.l.b16 %v7095
      %v7165 = vunpack.c.l.b16 %v7097
      %v7166 = vunpack.c.l.b16 %v7098
      %v7167 = vunpack.c.l.b16 %v7100
      %v7168 = vunpack.c.l.b16 %v7101
      %v7169 = vunpack.c.l.b16 %v7103
      %v7170 = vunpack.c.l.b16 %v7104
      %v7171 = vunpack.c.l.b16 %v7106
      %v7172 = vunpack.c.l.b16 %v7107
      %v7173 = vpack.c.b16 %v7142, %v7141
      %v7174 = vpack.c.b16 %v7144, %v7143
      %v7175 = vpack.c.b16 %v7146, %v7145
      %v7176 = vpack.c.b16 %v7148, %v7147
      %v7177 = vpack.c.b16 %v7150, %v7149
      %v7178 = vpack.c.b16 %v7152, %v7151
      %v7179 = vpack.c.b16 %v7154, %v7153
      %v7180 = vpack.c.b16 %v7156, %v7155
      %v7181 = vpack.c.b16 %v7158, %v7157
      %v7182 = vpack.c.b16 %v7160, %v7159
      %v7183 = vpack.c.b16 %v7162, %v7161
      %v7184 = vpack.c.b16 %v7164, %v7163
      %v7185 = vpack.c.b16 %v7166, %v7165
      %v7186 = vpack.c.b16 %v7168, %v7167
      %v7187 = vpack.c.b16 %v7170, %v7169
      %v7188 = vpack.c.b16 %v7172, %v7171
      %7189 = vrot.lane.b32.xlu0 %v7173, 24
      %v7190 = vpop.permute.xlu0 %7189
      %7191 = vrot.lane.b32.xlu0 %v7174, 24
      %v7192 = vpop.permute.xlu0 %7191
      %7193 = vrot.lane.b32.xlu0 %v7175, 24
      %v7194 = vpop.permute.xlu0 %7193
      %7195 = vrot.lane.b32.xlu0 %v7176, 24
      %v7196 = vpop.permute.xlu0 %7195
      %7197 = vrot.lane.b32.xlu0 %v7177, 24
      %v7198 = vpop.permute.xlu0 %7197
      %7199 = vrot.lane.b32.xlu0 %v7178, 24
      %v7200 = vpop.permute.xlu0 %7199
      %7201 = vrot.lane.b32.xlu0 %v7179, 24
      %v7202 = vpop.permute.xlu0 %7201
      %7203 = vrot.lane.b32.xlu0 %v7180, 24
      %v7204 = vpop.permute.xlu0 %7203
      %7205 = vrot.lane.b32.xlu0 %v7181, 24
      %v7206 = vpop.permute.xlu0 %7205
      %7207 = vrot.lane.b32.xlu0 %v7182, 24
      %v7208 = vpop.permute.xlu0 %7207
      %7209 = vrot.lane.b32.xlu0 %v7183, 24
      %v7210 = vpop.permute.xlu0 %7209
      %7211 = vrot.lane.b32.xlu0 %v7184, 24
      %v7212 = vpop.permute.xlu0 %7211
      %7213 = vrot.lane.b32.xlu0 %v7185, 24
      %v7214 = vpop.permute.xlu0 %7213
      %7215 = vrot.lane.b32.xlu0 %v7186, 24
      %v7216 = vpop.permute.xlu0 %7215
      %7217 = vrot.lane.b32.xlu0 %v7187, 24
      %v7218 = vpop.permute.xlu0 %7217
      %7219 = vrot.lane.b32.xlu0 %v7188, 24
      %v7220 = vpop.permute.xlu0 %7219
      %7237 = vst.msk [vmem:[#allocation5] sm:$0xff] %vm3358, %v7190
      %7238 = vst.msk [vmem:[#allocation5 + $0x8] sm:$0xff] %vm3358, %v7192
      %7239 = vst.msk [vmem:[#allocation5 + $0x10] sm:$0xff] %vm3358, %v7194
      %7240 = vst.msk [vmem:[#allocation5 + $0x18] sm:$0xff] %vm3358, %v7196
      %7241 = vst.msk [vmem:[#allocation5 + $0x20] sm:$0xff] %vm3358, %v7198
      %7242 = vst.msk [vmem:[#allocation5 + $0x28] sm:$0xff] %vm3358, %v7200
      %7243 = vst.msk [vmem:[#allocation5 + $0x30] sm:$0xff] %vm3358, %v7202
      %7244 = vst.msk [vmem:[#allocation5 + $0x38] sm:$0xff] %vm3358, %v7204
      %7245 = vst.msk [vmem:[#allocation5 + $0x40] sm:$0xff] %vm3358, %v7206
      %7246 = vst.msk [vmem:[#allocation5 + $0x48] sm:$0xff] %vm3358, %v7208
      %7247 = vst.msk [vmem:[#allocation5 + $0x50] sm:$0xff] %vm3358, %v7210
      %7248 = vst.msk [vmem:[#allocation5 + $0x58] sm:$0xff] %vm3358, %v7212
      %7249 = vst.msk [vmem:[#allocation5 + $0x60] sm:$0xff] %vm3358, %v7214
      %7250 = vst.msk [vmem:[#allocation5 + $0x68] sm:$0xff] %vm3358, %v7216
      %7251 = vst.msk [vmem:[#allocation5 + $0x70] sm:$0xff] %vm3358, %v7218
      %7252 = vst.msk [vmem:[#allocation5 + $0x78] sm:$0xff] %vm3358, %v7220
      %v7254 = vshrl.u32 %v7061, 16
      %v7256 = vrot.slane %v7254, 4
      %v7257 = vshll.u32 %v7061, 16
      %v7259 = vrot.slane %v7257, 5
      %v7260 = vor.u32 %v7256, %v7259
      %v7261 = vrot.slane %v7260, 4
      %v7263 = vshll.u32 %v7062, 16
      %v7265 = vrot.slane %v7263, 5
      %v7266 = vsel %vm1278, %v7261, %v7265
      %v7267 = vshrl.u32 %v7062, 16
      %v7269 = vrot.slane %v7267, 4
      %v7270 = vor.u32 %v7269, %v7265
      %v7271 = vrot.slane %v7270, 4
      %v7273 = vshll.u32 %v7063, 16
      %v7275 = vrot.slane %v7273, 5
      %v7276 = vsel %vm1278, %v7271, %v7275
      %v7278 = vshrl.u32 %v7064, 16
      %v7280 = vrot.slane %v7278, 4
      %v7281 = vshll.u32 %v7064, 16
      %v7283 = vrot.slane %v7281, 5
      %v7284 = vor.u32 %v7280, %v7283
      %v7285 = vrot.slane %v7284, 4
      %v7287 = vshll.u32 %v7065, 16
      %v7289 = vrot.slane %v7287, 5
      %v7290 = vsel %vm1278, %v7285, %v7289
      %v7291 = vshrl.u32 %v7065, 16
      %v7293 = vrot.slane %v7291, 4
      %v7294 = vor.u32 %v7293, %v7289
      %v7295 = vrot.slane %v7294, 4
      %v7297 = vshll.u32 %v7066, 16
      %v7299 = vrot.slane %v7297, 5
      %v7300 = vsel %vm1278, %v7295, %v7299
      %v7302 = vshrl.u32 %v7067, 16
      %v7304 = vrot.slane %v7302, 4
      %v7305 = vshll.u32 %v7067, 16
      %v7307 = vrot.slane %v7305, 5
      %v7308 = vor.u32 %v7304, %v7307
      %v7309 = vrot.slane %v7308, 4
      %v7311 = vshll.u32 %v7068, 16
      %v7313 = vrot.slane %v7311, 5
      %v7314 = vsel %vm1278, %v7309, %v7313
      %v7315 = vshrl.u32 %v7068, 16
      %v7317 = vrot.slane %v7315, 4
      %v7318 = vor.u32 %v7317, %v7313
      %v7319 = vrot.slane %v7318, 4
      %v7321 = vshll.u32 %v7069, 16
      %v7323 = vrot.slane %v7321, 5
      %v7324 = vsel %vm1278, %v7319, %v7323
      %v7326 = vshrl.u32 %v7070, 16
      %v7328 = vrot.slane %v7326, 4
      %v7329 = vshll.u32 %v7070, 16
      %v7331 = vrot.slane %v7329, 5
      %v7332 = vor.u32 %v7328, %v7331
      %v7333 = vrot.slane %v7332, 4
      %v7335 = vshll.u32 %v7071, 16
      %v7337 = vrot.slane %v7335, 5
      %v7338 = vsel %vm1278, %v7333, %v7337
      %v7339 = vshrl.u32 %v7071, 16
      %v7341 = vrot.slane %v7339, 4
      %v7342 = vor.u32 %v7341, %v7337
      %v7343 = vrot.slane %v7342, 4
      %v7345 = vshll.u32 %v7072, 16
      %v7347 = vrot.slane %v7345, 5
      %v7348 = vsel %vm1278, %v7343, %v7347
      %v7350 = vshrl.u32 %v7073, 16
      %v7352 = vrot.slane %v7350, 4
      %v7353 = vshll.u32 %v7073, 16
      %v7355 = vrot.slane %v7353, 5
      %v7356 = vor.u32 %v7352, %v7355
      %v7357 = vrot.slane %v7356, 4
      %v7359 = vshll.u32 %v7074, 16
      %v7361 = vrot.slane %v7359, 5
      %v7362 = vsel %vm1278, %v7357, %v7361
      %v7363 = vshrl.u32 %v7074, 16
      %v7365 = vrot.slane %v7363, 4
      %v7366 = vor.u32 %v7365, %v7361
      %v7367 = vrot.slane %v7366, 4
      %v7369 = vshll.u32 %v7075, 16
      %v7371 = vrot.slane %v7369, 5
      %v7372 = vsel %vm1278, %v7367, %v7371
      %v7374 = vshrl.u32 %v7076, 16
      %v7376 = vrot.slane %v7374, 4
      %v7377 = vshll.u32 %v7076, 16
      %v7379 = vrot.slane %v7377, 5
      %v7380 = vor.u32 %v7376, %v7379
      %v7381 = vrot.slane %v7380, 4
      %v7383 = vshll.u32 %v7077, 16
      %v7385 = vrot.slane %v7383, 5
      %v7386 = vsel %vm1278, %v7381, %v7385
      %v7387 = vshrl.u32 %v7077, 16
      %v7389 = vrot.slane %v7387, 4
      %v7390 = vor.u32 %v7389, %v7385
      %v7391 = vrot.slane %v7390, 4
      %v7393 = vshll.u32 %v7078, 16
      %v7395 = vrot.slane %v7393, 5
      %v7396 = vsel %vm1278, %v7391, %v7395
      %v7398 = vshrl.u32 %v7079, 16
      %v7400 = vrot.slane %v7398, 4
      %v7401 = vshll.u32 %v7079, 16
      %v7403 = vrot.slane %v7401, 5
      %v7404 = vor.u32 %v7400, %v7403
      %v7405 = vrot.slane %v7404, 4
      %v7407 = vshll.u32 %v7080, 16
      %v7409 = vrot.slane %v7407, 5
      %v7410 = vsel %vm1278, %v7405, %v7409
      %v7411 = vshrl.u32 %v7080, 16
      %v7413 = vrot.slane %v7411, 4
      %v7414 = vor.u32 %v7413, %v7409
      %v7415 = vrot.slane %v7414, 4
      %v7417 = vshll.u32 %v7081, 16
      %v7419 = vrot.slane %v7417, 5
      %v7420 = vsel %vm1278, %v7415, %v7419
      %v7422 = vshrl.u32 %v7082, 16
      %v7424 = vrot.slane %v7422, 4
      %v7425 = vshll.u32 %v7082, 16
      %v7427 = vrot.slane %v7425, 5
      %v7428 = vor.u32 %v7424, %v7427
      %v7429 = vrot.slane %v7428, 4
      %v7431 = vshll.u32 %v7083, 16
      %v7433 = vrot.slane %v7431, 5
      %v7434 = vsel %vm1278, %v7429, %v7433
      %v7435 = vshrl.u32 %v7083, 16
      %v7437 = vrot.slane %v7435, 4
      %v7438 = vor.u32 %v7437, %v7433
      %v7439 = vrot.slane %v7438, 4
      %v7441 = vshll.u32 %v7084, 16
      %v7443 = vrot.slane %v7441, 5
      %v7444 = vsel %vm1278, %v7439, %v7443
      %v7446 = vshrl.u32 %v7085, 16
      %v7448 = vrot.slane %v7446, 4
      %v7449 = vshll.u32 %v7085, 16
      %v7451 = vrot.slane %v7449, 5
      %v7452 = vor.u32 %v7448, %v7451
      %v7453 = vrot.slane %v7452, 4
      %v7455 = vshll.u32 %v7086, 16
      %v7457 = vrot.slane %v7455, 5
      %v7458 = vsel %vm1278, %v7453, %v7457
      %v7459 = vshrl.u32 %v7086, 16
      %v7461 = vrot.slane %v7459, 4
      %v7462 = vor.u32 %v7461, %v7457
      %v7463 = vrot.slane %v7462, 4
      %v7465 = vshll.u32 %v7087, 16
      %v7467 = vrot.slane %v7465, 5
      %v7468 = vsel %vm1278, %v7463, %v7467
      %v7470 = vshrl.u32 %v7088, 16
      %v7472 = vrot.slane %v7470, 4
      %v7473 = vshll.u32 %v7088, 16
      %v7475 = vrot.slane %v7473, 5
      %v7476 = vor.u32 %v7472, %v7475
      %v7477 = vrot.slane %v7476, 4
      %v7479 = vshll.u32 %v7089, 16
      %v7481 = vrot.slane %v7479, 5
      %v7482 = vsel %vm1278, %v7477, %v7481
      %v7483 = vshrl.u32 %v7089, 16
      %v7485 = vrot.slane %v7483, 4
      %v7486 = vor.u32 %v7485, %v7481
      %v7487 = vrot.slane %v7486, 4
      %v7489 = vshll.u32 %v7090, 16
      %v7491 = vrot.slane %v7489, 5
      %v7492 = vsel %vm1278, %v7487, %v7491
      %v7494 = vshrl.u32 %v7091, 16
      %v7496 = vrot.slane %v7494, 4
      %v7497 = vshll.u32 %v7091, 16
      %v7499 = vrot.slane %v7497, 5
      %v7500 = vor.u32 %v7496, %v7499
      %v7501 = vrot.slane %v7500, 4
      %v7503 = vshll.u32 %v7092, 16
      %v7505 = vrot.slane %v7503, 5
      %v7506 = vsel %vm1278, %v7501, %v7505
      %v7507 = vshrl.u32 %v7092, 16
      %v7509 = vrot.slane %v7507, 4
      %v7510 = vor.u32 %v7509, %v7505
      %v7511 = vrot.slane %v7510, 4
      %v7513 = vshll.u32 %v7093, 16
      %v7515 = vrot.slane %v7513, 5
      %v7516 = vsel %vm1278, %v7511, %v7515
      %v7518 = vshrl.u32 %v7094, 16
      %v7520 = vrot.slane %v7518, 4
      %v7521 = vshll.u32 %v7094, 16
      %v7523 = vrot.slane %v7521, 5
      %v7524 = vor.u32 %v7520, %v7523
      %v7525 = vrot.slane %v7524, 4
      %v7527 = vshll.u32 %v7095, 16
      %v7529 = vrot.slane %v7527, 5
      %v7530 = vsel %vm1278, %v7525, %v7529
      %v7531 = vshrl.u32 %v7095, 16
      %v7533 = vrot.slane %v7531, 4
      %v7534 = vor.u32 %v7533, %v7529
      %v7535 = vrot.slane %v7534, 4
      %v7537 = vshll.u32 %v7096, 16
      %v7539 = vrot.slane %v7537, 5
      %v7540 = vsel %vm1278, %v7535, %v7539
      %v7542 = vshrl.u32 %v7097, 16
      %v7544 = vrot.slane %v7542, 4
      %v7545 = vshll.u32 %v7097, 16
      %v7547 = vrot.slane %v7545, 5
      %v7548 = vor.u32 %v7544, %v7547
      %v7549 = vrot.slane %v7548, 4
      %v7551 = vshll.u32 %v7098, 16
      %v7553 = vrot.slane %v7551, 5
      %v7554 = vsel %vm1278, %v7549, %v7553
      %v7555 = vshrl.u32 %v7098, 16
      %v7557 = vrot.slane %v7555, 4
      %v7558 = vor.u32 %v7557, %v7553
      %v7559 = vrot.slane %v7558, 4
      %v7561 = vshll.u32 %v7099, 16
      %v7563 = vrot.slane %v7561, 5
      %v7564 = vsel %vm1278, %v7559, %v7563
      %v7566 = vshrl.u32 %v7100, 16
      %v7568 = vrot.slane %v7566, 4
      %v7569 = vshll.u32 %v7100, 16
      %v7571 = vrot.slane %v7569, 5
      %v7572 = vor.u32 %v7568, %v7571
      %v7573 = vrot.slane %v7572, 4
      %v7575 = vshll.u32 %v7101, 16
      %v7577 = vrot.slane %v7575, 5
      %v7578 = vsel %vm1278, %v7573, %v7577
      %v7579 = vshrl.u32 %v7101, 16
      %v7581 = vrot.slane %v7579, 4
      %v7582 = vor.u32 %v7581, %v7577
      %v7583 = vrot.slane %v7582, 4
      %v7585 = vshll.u32 %v7102, 16
      %v7587 = vrot.slane %v7585, 5
      %v7588 = vsel %vm1278, %v7583, %v7587
      %v7590 = vshrl.u32 %v7103, 16
      %v7592 = vrot.slane %v7590, 4
      %v7593 = vshll.u32 %v7103, 16
      %v7595 = vrot.slane %v7593, 5
      %v7596 = vor.u32 %v7592, %v7595
      %v7597 = vrot.slane %v7596, 4
      %v7599 = vshll.u32 %v7104, 16
      %v7601 = vrot.slane %v7599, 5
      %v7602 = vsel %vm1278, %v7597, %v7601
      %v7603 = vshrl.u32 %v7104, 16
      %v7605 = vrot.slane %v7603, 4
      %v7606 = vor.u32 %v7605, %v7601
      %v7607 = vrot.slane %v7606, 4
      %v7609 = vshll.u32 %v7105, 16
      %v7611 = vrot.slane %v7609, 5
      %v7612 = vsel %vm1278, %v7607, %v7611
      %v7614 = vshrl.u32 %v7106, 16
      %v7616 = vrot.slane %v7614, 4
      %v7617 = vshll.u32 %v7106, 16
      %v7619 = vrot.slane %v7617, 5
      %v7620 = vor.u32 %v7616, %v7619
      %v7621 = vrot.slane %v7620, 4
      %v7623 = vshll.u32 %v7107, 16
      %v7625 = vrot.slane %v7623, 5
      %v7626 = vsel %vm1278, %v7621, %v7625
      %v7627 = vshrl.u32 %v7107, 16
      %v7629 = vrot.slane %v7627, 4
      %v7630 = vor.u32 %v7629, %v7625
      %v7631 = vrot.slane %v7630, 4
      %v7633 = vshll.u32 %v7108, 16
      %v7635 = vrot.slane %v7633, 5
      %v7636 = vsel %vm1278, %v7631, %v7635
      %v7637 = vunpack.c.l.b16 %v7266
      %v7638 = vunpack.c.l.b16 %v7276
      %v7639 = vunpack.c.l.b16 %v7290
      %v7640 = vunpack.c.l.b16 %v7300
      %v7641 = vunpack.c.l.b16 %v7314
      %v7642 = vunpack.c.l.b16 %v7324
      %v7643 = vunpack.c.l.b16 %v7338
      %v7644 = vunpack.c.l.b16 %v7348
      %v7645 = vunpack.c.l.b16 %v7362
      %v7646 = vunpack.c.l.b16 %v7372
      %v7647 = vunpack.c.l.b16 %v7386
      %v7648 = vunpack.c.l.b16 %v7396
      %v7649 = vunpack.c.l.b16 %v7410
      %v7650 = vunpack.c.l.b16 %v7420
      %v7651 = vunpack.c.l.b16 %v7434
      %v7652 = vunpack.c.l.b16 %v7444
      %v7653 = vunpack.c.l.b16 %v7458
      %v7654 = vunpack.c.l.b16 %v7468
      %v7655 = vunpack.c.l.b16 %v7482
      %v7656 = vunpack.c.l.b16 %v7492
      %v7657 = vunpack.c.l.b16 %v7506
      %v7658 = vunpack.c.l.b16 %v7516
      %v7659 = vunpack.c.l.b16 %v7530
      %v7660 = vunpack.c.l.b16 %v7540
      %v7661 = vunpack.c.l.b16 %v7554
      %v7662 = vunpack.c.l.b16 %v7564
      %v7663 = vunpack.c.l.b16 %v7578
      %v7664 = vunpack.c.l.b16 %v7588
      %v7665 = vunpack.c.l.b16 %v7602
      %v7666 = vunpack.c.l.b16 %v7612
      %v7667 = vunpack.c.l.b16 %v7626
      %v7668 = vunpack.c.l.b16 %v7636
      %v7669 = vpack.c.b16 %v7638, %v7637
      %v7670 = vpack.c.b16 %v7640, %v7639
      %v7671 = vpack.c.b16 %v7642, %v7641
      %v7672 = vpack.c.b16 %v7644, %v7643
      %v7673 = vpack.c.b16 %v7646, %v7645
      %v7674 = vpack.c.b16 %v7648, %v7647
      %v7675 = vpack.c.b16 %v7650, %v7649
      %v7676 = vpack.c.b16 %v7652, %v7651
      %v7677 = vpack.c.b16 %v7654, %v7653
      %v7678 = vpack.c.b16 %v7656, %v7655
      %v7679 = vpack.c.b16 %v7658, %v7657
      %v7680 = vpack.c.b16 %v7660, %v7659
      %v7681 = vpack.c.b16 %v7662, %v7661
      %v7682 = vpack.c.b16 %v7664, %v7663
      %v7683 = vpack.c.b16 %v7666, %v7665
      %v7684 = vpack.c.b16 %v7668, %v7667
      %7685 = vrot.lane.b32.xlu0 %v7669, 28
      %v7686 = vpop.permute.xlu0 %7685
      %7687 = vrot.lane.b32.xlu0 %v7670, 28
      %v7688 = vpop.permute.xlu0 %7687
      %7689 = vrot.lane.b32.xlu0 %v7671, 28
      %v7690 = vpop.permute.xlu0 %7689
      %7691 = vrot.lane.b32.xlu0 %v7672, 28
      %v7692 = vpop.permute.xlu0 %7691
      %7693 = vrot.lane.b32.xlu0 %v7673, 28
      %v7694 = vpop.permute.xlu0 %7693
      %7695 = vrot.lane.b32.xlu0 %v7674, 28
      %v7696 = vpop.permute.xlu0 %7695
      %7697 = vrot.lane.b32.xlu0 %v7675, 28
      %v7698 = vpop.permute.xlu0 %7697
      %7699 = vrot.lane.b32.xlu0 %v7676, 28
      %v7700 = vpop.permute.xlu0 %7699
      %7701 = vrot.lane.b32.xlu0 %v7677, 28
      %v7702 = vpop.permute.xlu0 %7701
      %7703 = vrot.lane.b32.xlu0 %v7678, 28
      %v7704 = vpop.permute.xlu0 %7703
      %7705 = vrot.lane.b32.xlu0 %v7679, 28
      %v7706 = vpop.permute.xlu0 %7705
      %7707 = vrot.lane.b32.xlu0 %v7680, 28
      %v7708 = vpop.permute.xlu0 %7707
      %7709 = vrot.lane.b32.xlu0 %v7681, 28
      %v7710 = vpop.permute.xlu0 %7709
      %7711 = vrot.lane.b32.xlu0 %v7682, 28
      %v7712 = vpop.permute.xlu0 %7711
      %7713 = vrot.lane.b32.xlu0 %v7683, 28
      %v7714 = vpop.permute.xlu0 %7713
      %7715 = vrot.lane.b32.xlu0 %v7684, 28
      %v7716 = vpop.permute.xlu0 %7715
      %7733 = vst.msk [vmem:[#allocation5] sm:$0xff] %vm3917, %v7686
      %7734 = vst.msk [vmem:[#allocation5 + $0x8] sm:$0xff] %vm3917, %v7688
      %7735 = vst.msk [vmem:[#allocation5 + $0x10] sm:$0xff] %vm3917, %v7690
      %7736 = vst.msk [vmem:[#allocation5 + $0x18] sm:$0xff] %vm3917, %v7692
      %7737 = vst.msk [vmem:[#allocation5 + $0x20] sm:$0xff] %vm3917, %v7694
      %7738 = vst.msk [vmem:[#allocation5 + $0x28] sm:$0xff] %vm3917, %v7696
      %7739 = vst.msk [vmem:[#allocation5 + $0x30] sm:$0xff] %vm3917, %v7698
      %7740 = vst.msk [vmem:[#allocation5 + $0x38] sm:$0xff] %vm3917, %v7700
      %7741 = vst.msk [vmem:[#allocation5 + $0x40] sm:$0xff] %vm3917, %v7702
      %7742 = vst.msk [vmem:[#allocation5 + $0x48] sm:$0xff] %vm3917, %v7704
      %7743 = vst.msk [vmem:[#allocation5 + $0x50] sm:$0xff] %vm3917, %v7706
      %7744 = vst.msk [vmem:[#allocation5 + $0x58] sm:$0xff] %vm3917, %v7708
      %7745 = vst.msk [vmem:[#allocation5 + $0x60] sm:$0xff] %vm3917, %v7710
      %7746 = vst.msk [vmem:[#allocation5 + $0x68] sm:$0xff] %vm3917, %v7712
      %7747 = vst.msk [vmem:[#allocation5 + $0x70] sm:$0xff] %vm3917, %v7714
      %7748 = vst.msk [vmem:[#allocation5 + $0x78] sm:$0xff] %vm3917, %v7716
      %v7765 = vrot.slane %v7061, 5
      %v7766 = vrot.slane %v7765, 4
      %v7767 = vrot.slane %v7062, 5
      %v7768 = vsel %vm1858, %v7766, %v7767
      %v7769 = vrot.slane %v7767, 4
      %v7770 = vrot.slane %v7063, 5
      %v7771 = vsel %vm1858, %v7769, %v7770
      %v7772 = vrot.slane %v7064, 5
      %v7773 = vrot.slane %v7772, 4
      %v7774 = vrot.slane %v7065, 5
      %v7775 = vsel %vm1858, %v7773, %v7774
      %v7776 = vrot.slane %v7774, 4
      %v7777 = vrot.slane %v7066, 5
      %v7778 = vsel %vm1858, %v7776, %v7777
      %v7779 = vrot.slane %v7067, 5
      %v7780 = vrot.slane %v7779, 4
      %v7781 = vrot.slane %v7068, 5
      %v7782 = vsel %vm1858, %v7780, %v7781
      %v7783 = vrot.slane %v7781, 4
      %v7784 = vrot.slane %v7069, 5
      %v7785 = vsel %vm1858, %v7783, %v7784
      %v7786 = vrot.slane %v7070, 5
      %v7787 = vrot.slane %v7786, 4
      %v7788 = vrot.slane %v7071, 5
      %v7789 = vsel %vm1858, %v7787, %v7788
      %v7790 = vrot.slane %v7788, 4
      %v7791 = vrot.slane %v7072, 5
      %v7792 = vsel %vm1858, %v7790, %v7791
      %v7793 = vrot.slane %v7073, 5
      %v7794 = vrot.slane %v7793, 4
      %v7795 = vrot.slane %v7074, 5
      %v7796 = vsel %vm1858, %v7794, %v7795
      %v7797 = vrot.slane %v7795, 4
      %v7798 = vrot.slane %v7075, 5
      %v7799 = vsel %vm1858, %v7797, %v7798
      %v7800 = vrot.slane %v7076, 5
      %v7801 = vrot.slane %v7800, 4
      %v7802 = vrot.slane %v7077, 5
      %v7803 = vsel %vm1858, %v7801, %v7802
      %v7804 = vrot.slane %v7802, 4
      %v7805 = vrot.slane %v7078, 5
      %v7806 = vsel %vm1858, %v7804, %v7805
      %v7807 = vrot.slane %v7079, 5
      %v7808 = vrot.slane %v7807, 4
      %v7809 = vrot.slane %v7080, 5
      %v7810 = vsel %vm1858, %v7808, %v7809
      %v7811 = vrot.slane %v7809, 4
      %v7812 = vrot.slane %v7081, 5
      %v7813 = vsel %vm1858, %v7811, %v7812
      %v7814 = vrot.slane %v7082, 5
      %v7815 = vrot.slane %v7814, 4
      %v7816 = vrot.slane %v7083, 5
      %v7817 = vsel %vm1858, %v7815, %v7816
      %v7818 = vrot.slane %v7816, 4
      %v7819 = vrot.slane %v7084, 5
      %v7820 = vsel %vm1858, %v7818, %v7819
      %v7821 = vrot.slane %v7085, 5
      %v7822 = vrot.slane %v7821, 4
      %v7823 = vrot.slane %v7086, 5
      %v7824 = vsel %vm1858, %v7822, %v7823
      %v7825 = vrot.slane %v7823, 4
      %v7826 = vrot.slane %v7087, 5
      %v7827 = vsel %vm1858, %v7825, %v7826
      %v7828 = vrot.slane %v7088, 5
      %v7829 = vrot.slane %v7828, 4
      %v7830 = vrot.slane %v7089, 5
      %v7831 = vsel %vm1858, %v7829, %v7830
      %v7832 = vrot.slane %v7830, 4
      %v7833 = vrot.slane %v7090, 5
      %v7834 = vsel %vm1858, %v7832, %v7833
      %v7835 = vrot.slane %v7091, 5
      %v7836 = vrot.slane %v7835, 4
      %v7837 = vrot.slane %v7092, 5
      %v7838 = vsel %vm1858, %v7836, %v7837
      %v7839 = vrot.slane %v7837, 4
      %v7840 = vrot.slane %v7093, 5
      %v7841 = vsel %vm1858, %v7839, %v7840
      %v7842 = vrot.slane %v7094, 5
      %v7843 = vrot.slane %v7842, 4
      %v7844 = vrot.slane %v7095, 5
      %v7845 = vsel %vm1858, %v7843, %v7844
      %v7846 = vrot.slane %v7844, 4
      %v7847 = vrot.slane %v7096, 5
      %v7848 = vsel %vm1858, %v7846, %v7847
      %v7849 = vrot.slane %v7097, 5
      %v7850 = vrot.slane %v7849, 4
      %v7851 = vrot.slane %v7098, 5
      %v7852 = vsel %vm1858, %v7850, %v7851
      %v7853 = vrot.slane %v7851, 4
      %v7854 = vrot.slane %v7099, 5
      %v7855 = vsel %vm1858, %v7853, %v7854
      %v7856 = vrot.slane %v7100, 5
      %v7857 = vrot.slane %v7856, 4
      %v7858 = vrot.slane %v7101, 5
      %v7859 = vsel %vm1858, %v7857, %v7858
      %v7860 = vrot.slane %v7858, 4
      %v7861 = vrot.slane %v7102, 5
      %v7862 = vsel %vm1858, %v7860, %v7861
      %v7863 = vrot.slane %v7103, 5
      %v7864 = vrot.slane %v7863, 4
      %v7865 = vrot.slane %v7104, 5
      %v7866 = vsel %vm1858, %v7864, %v7865
      %v7867 = vrot.slane %v7865, 4
      %v7868 = vrot.slane %v7105, 5
      %v7869 = vsel %vm1858, %v7867, %v7868
      %v7870 = vrot.slane %v7106, 5
      %v7871 = vrot.slane %v7870, 4
      %v7872 = vrot.slane %v7107, 5
      %v7873 = vsel %vm1858, %v7871, %v7872
      %v7874 = vrot.slane %v7872, 4
      %v7875 = vrot.slane %v7108, 5
      %v7876 = vsel %vm1858, %v7874, %v7875
      %v7877 = vunpack.c.l.b16 %v7768
      %v7878 = vunpack.c.l.b16 %v7771
      %v7879 = vunpack.c.l.b16 %v7775
      %v7880 = vunpack.c.l.b16 %v7778
      %v7881 = vunpack.c.l.b16 %v7782
      %v7882 = vunpack.c.l.b16 %v7785
      %v7883 = vunpack.c.l.b16 %v7789
      %v7884 = vunpack.c.l.b16 %v7792
      %v7885 = vunpack.c.l.b16 %v7796
      %v7886 = vunpack.c.l.b16 %v7799
      %v7887 = vunpack.c.l.b16 %v7803
      %v7888 = vunpack.c.l.b16 %v7806
      %v7889 = vunpack.c.l.b16 %v7810
      %v7890 = vunpack.c.l.b16 %v7813
      %v7891 = vunpack.c.l.b16 %v7817
      %v7892 = vunpack.c.l.b16 %v7820
      %v7893 = vunpack.c.l.b16 %v7824
      %v7894 = vunpack.c.l.b16 %v7827
      %v7895 = vunpack.c.l.b16 %v7831
      %v7896 = vunpack.c.l.b16 %v7834
      %v7897 = vunpack.c.l.b16 %v7838
      %v7898 = vunpack.c.l.b16 %v7841
      %v7899 = vunpack.c.l.b16 %v7845
      %v7900 = vunpack.c.l.b16 %v7848
      %v7901 = vunpack.c.l.b16 %v7852
      %v7902 = vunpack.c.l.b16 %v7855
      %v7903 = vunpack.c.l.b16 %v7859
      %v7904 = vunpack.c.l.b16 %v7862
      %v7905 = vunpack.c.l.b16 %v7866
      %v7906 = vunpack.c.l.b16 %v7869
      %v7907 = vunpack.c.l.b16 %v7873
      %v7908 = vunpack.c.l.b16 %v7876
      %v7909 = vpack.c.b16 %v7878, %v7877
      %v7910 = vpack.c.b16 %v7880, %v7879
      %v7911 = vpack.c.b16 %v7882, %v7881
      %v7912 = vpack.c.b16 %v7884, %v7883
      %v7913 = vpack.c.b16 %v7886, %v7885
      %v7914 = vpack.c.b16 %v7888, %v7887
      %v7915 = vpack.c.b16 %v7890, %v7889
      %v7916 = vpack.c.b16 %v7892, %v7891
      %v7917 = vpack.c.b16 %v7894, %v7893
      %v7918 = vpack.c.b16 %v7896, %v7895
      %v7919 = vpack.c.b16 %v7898, %v7897
      %v7920 = vpack.c.b16 %v7900, %v7899
      %v7921 = vpack.c.b16 %v7902, %v7901
      %v7922 = vpack.c.b16 %v7904, %v7903
      %v7923 = vpack.c.b16 %v7906, %v7905
      %v7924 = vpack.c.b16 %v7908, %v7907
      %7925 = vrot.lane.b32.xlu0 %v7909, 32
      %v7926 = vpop.permute.xlu0 %7925
      %7927 = vrot.lane.b32.xlu0 %v7910, 32
      %v7928 = vpop.permute.xlu0 %7927
      %7929 = vrot.lane.b32.xlu0 %v7911, 32
      %v7930 = vpop.permute.xlu0 %7929
      %7931 = vrot.lane.b32.xlu0 %v7912, 32
      %v7932 = vpop.permute.xlu0 %7931
      %7933 = vrot.lane.b32.xlu0 %v7913, 32
      %v7934 = vpop.permute.xlu0 %7933
      %7935 = vrot.lane.b32.xlu0 %v7914, 32
      %v7936 = vpop.permute.xlu0 %7935
      %7937 = vrot.lane.b32.xlu0 %v7915, 32
      %v7938 = vpop.permute.xlu0 %7937
      %7939 = vrot.lane.b32.xlu0 %v7916, 32
      %v7940 = vpop.permute.xlu0 %7939
      %7941 = vrot.lane.b32.xlu0 %v7917, 32
      %v7942 = vpop.permute.xlu0 %7941
      %7943 = vrot.lane.b32.xlu0 %v7918, 32
      %v7944 = vpop.permute.xlu0 %7943
      %7945 = vrot.lane.b32.xlu0 %v7919, 32
      %v7946 = vpop.permute.xlu0 %7945
      %7947 = vrot.lane.b32.xlu0 %v7920, 32
      %v7948 = vpop.permute.xlu0 %7947
      %7949 = vrot.lane.b32.xlu0 %v7921, 32
      %v7950 = vpop.permute.xlu0 %7949
      %7951 = vrot.lane.b32.xlu0 %v7922, 32
      %v7952 = vpop.permute.xlu0 %7951
      %7953 = vrot.lane.b32.xlu0 %v7923, 32
      %v7954 = vpop.permute.xlu0 %7953
      %7955 = vrot.lane.b32.xlu0 %v7924, 32
      %v7956 = vpop.permute.xlu0 %7955
      %7973 = vst.msk [vmem:[#allocation5] sm:$0xff] %vm4188, %v7926
      %7974 = vst.msk [vmem:[#allocation5 + $0x8] sm:$0xff] %vm4188, %v7928
      %7975 = vst.msk [vmem:[#allocation5 + $0x10] sm:$0xff] %vm4188, %v7930
      %7976 = vst.msk [vmem:[#allocation5 + $0x18] sm:$0xff] %vm4188, %v7932
      %7977 = vst.msk [vmem:[#allocation5 + $0x20] sm:$0xff] %vm4188, %v7934
      %7978 = vst.msk [vmem:[#allocation5 + $0x28] sm:$0xff] %vm4188, %v7936
      %7979 = vst.msk [vmem:[#allocation5 + $0x30] sm:$0xff] %vm4188, %v7938
      %7980 = vst.msk [vmem:[#allocation5 + $0x38] sm:$0xff] %vm4188, %v7940
      %7981 = vst.msk [vmem:[#allocation5 + $0x40] sm:$0xff] %vm4188, %v7942
      %7982 = vst.msk [vmem:[#allocation5 + $0x48] sm:$0xff] %vm4188, %v7944
      %7983 = vst.msk [vmem:[#allocation5 + $0x50] sm:$0xff] %vm4188, %v7946
      %7984 = vst.msk [vmem:[#allocation5 + $0x58] sm:$0xff] %vm4188, %v7948
      %7985 = vst.msk [vmem:[#allocation5 + $0x60] sm:$0xff] %vm4188, %v7950
      %7986 = vst.msk [vmem:[#allocation5 + $0x68] sm:$0xff] %vm4188, %v7952
      %7987 = vst.msk [vmem:[#allocation5 + $0x70] sm:$0xff] %vm4188, %v7954
      %7988 = vst.msk [vmem:[#allocation5 + $0x78] sm:$0xff] %vm4188, %v7956
      %v7989 = vld [vmem:[#allocation5] sm:$0xff]
      %v7990 = vld [vmem:[#allocation5 + $0x8] sm:$0xff]
      %v7991 = vld [vmem:[#allocation5 + $0x10] sm:$0xff]
      %v7992 = vld [vmem:[#allocation5 + $0x18] sm:$0xff]
      %v7993 = vld [vmem:[#allocation5 + $0x20] sm:$0xff]
      %v7994 = vld [vmem:[#allocation5 + $0x28] sm:$0xff]
      %v7995 = vld [vmem:[#allocation5 + $0x30] sm:$0xff]
      %v7996 = vld [vmem:[#allocation5 + $0x38] sm:$0xff]
      %v7997 = vld [vmem:[#allocation5 + $0x40] sm:$0xff]
      %v7998 = vld [vmem:[#allocation5 + $0x48] sm:$0xff]
      %v7999 = vld [vmem:[#allocation5 + $0x50] sm:$0xff]
      %v8000 = vld [vmem:[#allocation5 + $0x58] sm:$0xff]
      %v8001 = vld [vmem:[#allocation5 + $0x60] sm:$0xff]
      %v8002 = vld [vmem:[#allocation5 + $0x68] sm:$0xff]
      %v8003 = vld [vmem:[#allocation5 + $0x70] sm:$0xff]
      %v8004 = vld [vmem:[#allocation5 + $0x78] sm:$0xff]
      %v8005 = vld [vmem:[%s2] sm:$0xf]
      %v8006 = vld [vmem:[%s2 + $0x4] sm:$0xf]
      %v8007 = vld [vmem:[%s2 + $0x8] sm:$0xf]
      %v8008 = vld [vmem:[%s2 + $0xc] sm:$0xf]
      %v8009 = vld [vmem:[%s2 + $0x10] sm:$0x3]
      %v8010 = vld [vmem:[%s3 + $0x1] sm:$0x1]
      %v8011 = vlaneseq
      %v8012 = vshrl.u32 %v8011, 7
      %v8013 = vsub.s32 0, %v8012
      %v8014 = vrot.slane %v8010, %v8013
      %v8020 = vunpack.c.l.b16 %v8005
      %v8021 = vunpack.c.l.b16 %v8006
      %v8022 = vunpack.c.l.b16 %v8007
      %v8023 = vunpack.c.l.b16 %v8008
      %v8024 = vunpack.c.l.b16 %v8009
      %v8025 = vpack.c.b16 %v8021, %v8020
      %v8026 = vpack.c.b16 %v8023, %v8022
      %v8027 = vpack.c.b16 %v8024, %v8024
      %v8031 = vsel %vm4250, %v7989, 0
      %v8034 = vsel %vm4250, %v7990, 0
      %v8037 = vsel %vm4250, %v7991, 0
      %v8040 = vsel %vm4250, %v7992, 0
      %v8043 = vsel %vm4250, %v7993, 0
      %v8046 = vsel %vm4250, %v7994, 0
      %v8049 = vsel %vm4250, %v7995, 0
      %v8052 = vsel %vm4250, %v7996, 0
      %v8055 = vsel %vm4250, %v7997, 0
      %v8058 = vsel %vm4250, %v7998, 0
      %v8061 = vsel %vm4250, %v7999, 0
      %v8064 = vsel %vm4250, %v8000, 0
      %v8067 = vsel %vm4250, %v8001, 0
      %v8070 = vsel %vm4250, %v8002, 0
      %v8073 = vsel %vm4250, %v8003, 0
      %v8076 = vsel %vm4250, %v8004, 0
      %v8079 = vsel %vm4305, %v8027, 0
      %8081 = vmatprep.subr.bf16.mxu0 0
      %8082 = vmatpush1.bf16.msra.mxu0 %v8025
      %8083 = vmatprep.subr.bf16.mxu0 0
      %8084 = vmatpush1.bf16.msra.mxu0 %v8026
      %8085 = vmatprep.subr.bf16.mxu0 0
      %8086 = vmatpush1.bf16.msra.mxu0 %v8079
      %8087 = vmatprep.subr.bf16.mxu0 0
      %8088 = vmatpush1.bf16.msra.mxu0 0
      %8089 = vmatprep.subr.bf16.mxu0 0
      %8090 = vmatpush1.bf16.msra.mxu0 0
      %8091 = vmatprep.subr.bf16.mxu0 0
      %8092 = vmatpush1.bf16.msra.mxu0 0
      %8093 = vmatprep.subr.bf16.mxu0 0
      %8094 = vmatpush1.bf16.msra.mxu0 0
      %8095 = vmatprep.subr.bf16.mxu0 0
      %8096 = vmatpush1.bf16.msra.mxu0 0
      %8097 = vmatprep.subr.bf16.mxu0 0
      %8098 = vmatpush1.bf16.msra.mxu0 0
      %8099 = vmatprep.subr.bf16.mxu0 0
      %8100 = vmatpush1.bf16.msra.mxu0 0
      %8101 = vmatprep.subr.bf16.mxu0 0
      %8102 = vmatpush1.bf16.msra.mxu0 0
      %8103 = vmatprep.subr.bf16.mxu0 0
      %8104 = vmatpush1.bf16.msra.mxu0 0
      %8105 = vmatprep.subr.bf16.mxu0 0
      %8106 = vmatpush1.bf16.msra.mxu0 0
      %8107 = vmatprep.subr.bf16.mxu0 0
      %8108 = vmatpush1.bf16.msra.mxu0 0
      %8109 = vmatprep.subr.bf16.mxu0 0
      %8110 = vmatpush1.bf16.msra.mxu0 0
      %8111 = vmatprep.subr.bf16.mxu0 0
      %8112 = vmatpush1.bf16.msra.mxu0 0
      %8113 = vmatprep.mubr.bf16.mxu0 0
      %8114 = vmatmul.mubr.bf16.gmra.mrb[0].mxu0 %v8031
      %v8115 = vpop.f32.mrb[0].mxu0
      %v8116 = vadd.f32 %v8014, %v8115
      %v8117 = vpop.f32.mrb[0].mxu0
      %v8118 = vpop.f32.mrb[0].mxu0
      %v8119 = vadd.f32 %v8014, %v8118
      %v8120 = vpop.f32.mrb[0].mxu0
      %8121 = vmatprep.mubr.bf16.mxu0 0
      %8122 = vmatmul.mubr.bf16.gmra.mrb[0].mxu0 %v8034
      %v8123 = vpop.f32.mrb[0].mxu0
      %v8124 = vadd.f32 %v8014, %v8123
      %v8125 = vpop.f32.mrb[0].mxu0
      %v8126 = vpop.f32.mrb[0].mxu0
      %v8127 = vadd.f32 %v8014, %v8126
      %v8128 = vpop.f32.mrb[0].mxu0
      %8129 = vmatprep.mubr.bf16.mxu0 0
      %8130 = vmatmul.mubr.bf16.gmra.mrb[0].mxu0 %v8037
      %v8131 = vpop.f32.mrb[0].mxu0
      %v8132 = vadd.f32 %v8014, %v8131
      %v8133 = vpop.f32.mrb[0].mxu0
      %v8134 = vpop.f32.mrb[0].mxu0
      %v8135 = vadd.f32 %v8014, %v8134
      %v8136 = vpop.f32.mrb[0].mxu0
      %8137 = vmatprep.mubr.bf16.mxu0 0
      %8138 = vmatmul.mubr.bf16.gmra.mrb[0].mxu0 %v8040
      %v8139 = vpop.f32.mrb[0].mxu0
      %v8140 = vadd.f32 %v8014, %v8139
      %v8141 = vpop.f32.mrb[0].mxu0
      %v8142 = vpop.f32.mrb[0].mxu0
      %v8143 = vadd.f32 %v8014, %v8142
      %v8144 = vpop.f32.mrb[0].mxu0
      %8145 = vmatprep.mubr.bf16.mxu0 0
      %8146 = vmatmul.mubr.bf16.gmra.mrb[0].mxu0 %v8043
      %v8147 = vpop.f32.mrb[0].mxu0
      %v8148 = vadd.f32 %v8014, %v8147
      %v8149 = vpop.f32.mrb[0].mxu0
      %v8150 = vpop.f32.mrb[0].mxu0
      %v8151 = vadd.f32 %v8014, %v8150
      %v8152 = vpop.f32.mrb[0].mxu0
      %8153 = vmatprep.mubr.bf16.mxu0 0
      %8154 = vmatmul.mubr.bf16.gmra.mrb[0].mxu0 %v8046
      %v8155 = vpop.f32.mrb[0].mxu0
      %v8156 = vadd.f32 %v8014, %v8155
      %v8157 = vpop.f32.mrb[0].mxu0
      %v8158 = vpop.f32.mrb[0].mxu0
      %v8159 = vadd.f32 %v8014, %v8158
      %v8160 = vpop.f32.mrb[0].mxu0
      %8161 = vmatprep.mubr.bf16.mxu0 0
      %8162 = vmatmul.mubr.bf16.gmra.mrb[0].mxu0 %v8049
      %v8163 = vpop.f32.mrb[0].mxu0
      %v8164 = vadd.f32 %v8014, %v8163
      %v8165 = vpop.f32.mrb[0].mxu0
      %v8166 = vpop.f32.mrb[0].mxu0
      %v8167 = vadd.f32 %v8014, %v8166
      %v8168 = vpop.f32.mrb[0].mxu0
      %8169 = vmatprep.mubr.bf16.mxu0 0
      %8170 = vmatmul.mubr.bf16.gmra.mrb[0].mxu0 %v8052
      %v8171 = vpop.f32.mrb[0].mxu0
      %v8172 = vadd.f32 %v8014, %v8171
      %v8173 = vpop.f32.mrb[0].mxu0
      %v8174 = vpop.f32.mrb[0].mxu0
      %v8175 = vadd.f32 %v8014, %v8174
      %v8176 = vpop.f32.mrb[0].mxu0
      %8177 = vmatprep.mubr.bf16.mxu0 0
      %8178 = vmatmul.mubr.bf16.gmra.mrb[0].mxu0 %v8055
      %v8179 = vpop.f32.mrb[0].mxu0
      %v8180 = vadd.f32 %v8014, %v8179
      %v8181 = vpop.f32.mrb[0].mxu0
      %v8182 = vpop.f32.mrb[0].mxu0
      %v8183 = vadd.f32 %v8014, %v8182
      %v8184 = vpop.f32.mrb[0].mxu0
      %8185 = vmatprep.mubr.bf16.mxu0 0
      %8186 = vmatmul.mubr.bf16.gmra.mrb[0].mxu0 %v8058
      %v8187 = vpop.f32.mrb[0].mxu0
      %v8188 = vadd.f32 %v8014, %v8187
      %v8189 = vpop.f32.mrb[0].mxu0
      %v8190 = vpop.f32.mrb[0].mxu0
      %v8191 = vadd.f32 %v8014, %v8190
      %v8192 = vpop.f32.mrb[0].mxu0
      %8193 = vmatprep.mubr.bf16.mxu0 0
      %8194 = vmatmul.mubr.bf16.gmra.mrb[0].mxu0 %v8061
      %v8195 = vpop.f32.mrb[0].mxu0
      %v8196 = vadd.f32 %v8014, %v8195
      %v8197 = vpop.f32.mrb[0].mxu0
      %v8198 = vpop.f32.mrb[0].mxu0
      %v8199 = vadd.f32 %v8014, %v8198
      %v8200 = vpop.f32.mrb[0].mxu0
      %8201 = vmatprep.mubr.bf16.mxu0 0
      %8202 = vmatmul.mubr.bf16.gmra.mrb[0].mxu0 %v8064
      %v8203 = vpop.f32.mrb[0].mxu0
      %v8204 = vadd.f32 %v8014, %v8203
      %v8205 = vpop.f32.mrb[0].mxu0
      %v8206 = vpop.f32.mrb[0].mxu0
      %v8207 = vadd.f32 %v8014, %v8206
      %v8208 = vpop.f32.mrb[0].mxu0
      %8209 = vmatprep.mubr.bf16.mxu0 0
      %8210 = vmatmul.mubr.bf16.gmra.mrb[0].mxu0 %v8067
      %v8211 = vpop.f32.mrb[0].mxu0
      %v8212 = vadd.f32 %v8014, %v8211
      %v8213 = vpop.f32.mrb[0].mxu0
      %v8214 = vpop.f32.mrb[0].mxu0
      %v8215 = vadd.f32 %v8014, %v8214
      %v8216 = vpop.f32.mrb[0].mxu0
      %8217 = vmatprep.mubr.bf16.mxu0 0
      %8218 = vmatmul.mubr.bf16.gmra.mrb[0].mxu0 %v8070
      %v8219 = vpop.f32.mrb[0].mxu0
      %v8220 = vadd.f32 %v8014, %v8219
      %v8221 = vpop.f32.mrb[0].mxu0
      %v8222 = vpop.f32.mrb[0].mxu0
      %v8223 = vadd.f32 %v8014, %v8222
      %v8224 = vpop.f32.mrb[0].mxu0
      %8225 = vmatprep.mubr.bf16.mxu0 0
      %8226 = vmatmul.mubr.bf16.gmra.mrb[0].mxu0 %v8073
      %v8227 = vpop.f32.mrb[0].mxu0
      %v8228 = vadd.f32 %v8014, %v8227
      %v8229 = vpop.f32.mrb[0].mxu0
      %v8230 = vpop.f32.mrb[0].mxu0
      %v8231 = vadd.f32 %v8014, %v8230
      %v8232 = vpop.f32.mrb[0].mxu0
      %8233 = vmatprep.mubr.bf16.mxu0 0
      %8234 = vmatmul.mubr.bf16.gmra.mrb[0].mxu0 %v8076
      %v8235 = vpop.f32.mrb[0].mxu0
      %v8236 = vadd.f32 %v8014, %v8235
      %v8237 = vpop.f32.mrb[0].mxu0
      %v8238 = vpop.f32.mrb[0].mxu0
      %v8239 = vadd.f32 %v8014, %v8238
      %v8240 = vpop.f32.mrb[0].mxu0
      %8241 = vdwg.mxu0
      %v8242 = vld [vmem:[%s351] sm:$0xff]
      %v8243 = vld [vmem:[%s351 + $0x8] sm:$0xff]
      %v8244 = vld [vmem:[%s351 + $0x10] sm:$0xff]
      %v8245 = vld [vmem:[%s351 + $0x18] sm:$0xff]
      %v8246 = vld [vmem:[%s351 + $0x20] sm:$0xff]
      %v8247 = vld [vmem:[%s351 + $0x28] sm:$0xff]
      %v8248 = vld [vmem:[%s351 + $0x30] sm:$0xff]
      %v8249 = vld [vmem:[%s351 + $0x38] sm:$0xff]
      %v8250 = vld [vmem:[%s351 + $0x40] sm:$0xff]
      %v8251 = vld [vmem:[%s351 + $0x48] sm:$0xff]
      %v8252 = vld [vmem:[%s351 + $0x50] sm:$0xff]
      %v8253 = vld [vmem:[%s351 + $0x58] sm:$0xff]
      %v8254 = vld [vmem:[%s351 + $0x60] sm:$0xff]
      %v8255 = vld [vmem:[%s351 + $0x68] sm:$0xff]
      %v8256 = vld [vmem:[%s351 + $0x70] sm:$0xff]
      %v8257 = vld [vmem:[%s351 + $0x78] sm:$0xff]
      %v8258 = vld [vmem:[%s351 + $0x80] sm:$0xff]
      %v8259 = vld [vmem:[%s351 + $0x88] sm:$0xff]
      %v8260 = vld [vmem:[%s351 + $0x90] sm:$0xff]
      %v8261 = vld [vmem:[%s351 + $0x98] sm:$0xff]
      %v8262 = vld [vmem:[%s351 + $0xa0] sm:$0xff]
      %v8263 = vld [vmem:[%s351 + $0xa8] sm:$0xff]
      %v8264 = vld [vmem:[%s351 + $0xb0] sm:$0xff]
      %v8265 = vld [vmem:[%s351 + $0xb8] sm:$0xff]
      %v8266 = vld [vmem:[%s351 + $0xc0] sm:$0xff]
      %v8267 = vld [vmem:[%s351 + $0xc8] sm:$0xff]
      %v8268 = vld [vmem:[%s351 + $0xd0] sm:$0xff]
      %v8269 = vld [vmem:[%s351 + $0xd8] sm:$0xff]
      %v8270 = vld [vmem:[%s351 + $0xe0] sm:$0xff]
      %v8271 = vld [vmem:[%s351 + $0xe8] sm:$0xff]
      %v8272 = vld [vmem:[%s351 + $0xf0] sm:$0xff]
      %v8273 = vld [vmem:[%s351 + $0xf8] sm:$0xff]
      %v8274 = vadd.f32 %v8116, %v8242
      %v8275 = vadd.f32 %v8119, %v8243
      %v8276 = vadd.f32 %v8124, %v8244
      %v8277 = vadd.f32 %v8127, %v8245
      %v8278 = vadd.f32 %v8132, %v8246
      %v8279 = vadd.f32 %v8135, %v8247
      %v8280 = vadd.f32 %v8140, %v8248
      %v8281 = vadd.f32 %v8143, %v8249
      %v8282 = vadd.f32 %v8148, %v8250
      %v8283 = vadd.f32 %v8151, %v8251
      %v8284 = vadd.f32 %v8156, %v8252
      %v8285 = vadd.f32 %v8159, %v8253
      %v8286 = vadd.f32 %v8164, %v8254
      %v8287 = vadd.f32 %v8167, %v8255
      %v8288 = vadd.f32 %v8172, %v8256
      %v8289 = vadd.f32 %v8175, %v8257
      %v8290 = vadd.f32 %v8180, %v8258
      %v8291 = vadd.f32 %v8183, %v8259
      %v8292 = vadd.f32 %v8188, %v8260
      %v8293 = vadd.f32 %v8191, %v8261
      %v8294 = vadd.f32 %v8196, %v8262
      %v8295 = vadd.f32 %v8199, %v8263
      %v8296 = vadd.f32 %v8204, %v8264
      %v8297 = vadd.f32 %v8207, %v8265
      %v8298 = vadd.f32 %v8212, %v8266
      %v8299 = vadd.f32 %v8215, %v8267
      %v8300 = vadd.f32 %v8220, %v8268
      %v8301 = vadd.f32 %v8223, %v8269
      %v8302 = vadd.f32 %v8228, %v8270
      %v8303 = vadd.f32 %v8231, %v8271
      %v8304 = vadd.f32 %v8236, %v8272
      %v8305 = vadd.f32 %v8239, %v8273
      %v8306 = vmax.f32 %v8274, 0.0
      %v8307 = vmax.f32 %v8275, 0.0
      %v8308 = vmax.f32 %v8276, 0.0
      %v8309 = vmax.f32 %v8277, 0.0
      %v8310 = vmax.f32 %v8278, 0.0
      %v8311 = vmax.f32 %v8279, 0.0
      %v8312 = vmax.f32 %v8280, 0.0
      %v8313 = vmax.f32 %v8281, 0.0
      %v8314 = vmax.f32 %v8282, 0.0
      %v8315 = vmax.f32 %v8283, 0.0
      %v8316 = vmax.f32 %v8284, 0.0
      %v8317 = vmax.f32 %v8285, 0.0
      %v8318 = vmax.f32 %v8286, 0.0
      %v8319 = vmax.f32 %v8287, 0.0
      %v8320 = vmax.f32 %v8288, 0.0
      %v8321 = vmax.f32 %v8289, 0.0
      %v8322 = vmax.f32 %v8290, 0.0
      %v8323 = vmax.f32 %v8291, 0.0
      %v8324 = vmax.f32 %v8292, 0.0
      %v8325 = vmax.f32 %v8293, 0.0
      %v8326 = vmax.f32 %v8294, 0.0
      %v8327 = vmax.f32 %v8295, 0.0
      %v8328 = vmax.f32 %v8296, 0.0
      %v8329 = vmax.f32 %v8297, 0.0
      %v8330 = vmax.f32 %v8298, 0.0
      %v8331 = vmax.f32 %v8299, 0.0
      %v8332 = vmax.f32 %v8300, 0.0
      %v8333 = vmax.f32 %v8301, 0.0
      %v8334 = vmax.f32 %v8302, 0.0
      %v8335 = vmax.f32 %v8303, 0.0
      %v8336 = vmax.f32 %v8304, 0.0
      %v8337 = vmax.f32 %v8305, 0.0
      %8338 = vst.msk [vmem:[%s221] sm:$0xff] %vm1257, %v8306
      %8339 = vst.msk [vmem:[%s221 + $0x8] sm:$0xff] %vm1257, %v8307
      %8340 = vst.msk [vmem:[%s221 + $0x10] sm:$0xff] %vm1257, %v8308
      %8341 = vst.msk [vmem:[%s221 + $0x18] sm:$0xff] %vm1257, %v8309
      %8342 = vst.msk [vmem:[%s221 + $0x20] sm:$0xff] %vm1257, %v8310
      %8343 = vst.msk [vmem:[%s221 + $0x28] sm:$0xff] %vm1257, %v8311
      %8344 = vst.msk [vmem:[%s221 + $0x30] sm:$0xff] %vm1257, %v8312
      %8345 = vst.msk [vmem:[%s221 + $0x38] sm:$0xff] %vm1257, %v8313
      %8346 = vst.msk [vmem:[%s221 + $0x40] sm:$0xff] %vm1257, %v8314
      %8347 = vst.msk [vmem:[%s221 + $0x48] sm:$0xff] %vm1257, %v8315
      %8348 = vst.msk [vmem:[%s221 + $0x50] sm:$0xff] %vm1257, %v8316
      %8349 = vst.msk [vmem:[%s221 + $0x58] sm:$0xff] %vm1257, %v8317
      %8350 = vst.msk [vmem:[%s221 + $0x60] sm:$0xff] %vm1257, %v8318
      %8351 = vst.msk [vmem:[%s221 + $0x68] sm:$0xff] %vm1257, %v8319
      %8352 = vst.msk [vmem:[%s221 + $0x70] sm:$0xff] %vm1257, %v8320
      %8353 = vst.msk [vmem:[%s221 + $0x78] sm:$0xff] %vm1257, %v8321
      %8354 = vst.msk [vmem:[%s221 + $0x80] sm:$0xff] %vm1257, %v8322
      %8355 = vst.msk [vmem:[%s221 + $0x88] sm:$0xff] %vm1257, %v8323
      %8356 = vst.msk [vmem:[%s221 + $0x90] sm:$0xff] %vm1257, %v8324
      %8357 = vst.msk [vmem:[%s221 + $0x98] sm:$0xff] %vm1257, %v8325
      %8358 = vst.msk [vmem:[%s221 + $0xa0] sm:$0xff] %vm1257, %v8326
      %8359 = vst.msk [vmem:[%s221 + $0xa8] sm:$0xff] %vm1257, %v8327
      %8360 = vst.msk [vmem:[%s221 + $0xb0] sm:$0xff] %vm1257, %v8328
      %8361 = vst.msk [vmem:[%s221 + $0xb8] sm:$0xff] %vm1257, %v8329
      %8362 = vst.msk [vmem:[%s221 + $0xc0] sm:$0xff] %vm1257, %v8330
      %8363 = vst.msk [vmem:[%s221 + $0xc8] sm:$0xff] %vm1257, %v8331
      %8364 = vst.msk [vmem:[%s221 + $0xd0] sm:$0xff] %vm1257, %v8332
      %8365 = vst.msk [vmem:[%s221 + $0xd8] sm:$0xff] %vm1257, %v8333
      %8366 = vst.msk [vmem:[%s221 + $0xe0] sm:$0xff] %vm1257, %v8334
      %8367 = vst.msk [vmem:[%s221 + $0xe8] sm:$0xff] %vm1257, %v8335
      %8368 = vst.msk [vmem:[%s221 + $0xf0] sm:$0xff] %vm1257, %v8336
      %8369 = vst.msk [vmem:[%s221 + $0xf8] sm:$0xff] %vm1257, %v8337
      %s8370 = smul.u32 16, %s20
      %p8371 = scmp.lt.s32.totalorder %s19, 1
      %s8372 = scalar_select %p8371, %s19, 1
      %p8373 = scmp.lt.s32.totalorder %s8370, 15
      %s8374 = scalar_select %p8373, %s8370, 15
      %s8375 = smul.addr %s8374, 2
      %s8376 = smul.addr %s8372, 32
      %s8377 = sadd.s32 %s8375, %s8376
      %s8378 = smul.addr %s8377, 8
      %s8379 = scalar_lea.vmem %s4, %s8378
      // Predicated region
      $region57: #{tpu_custom_call.1} parent=35 // pred_check
        %p8380 = pneg %p136
      $region58: #{tpu_custom_call.1} parent=35 // pred_check_branch
        %8382 = sbr.rel (%p8380) target = $region60
      $region59: #{tpu_custom_call.1} parent=35 // pred_region
        %s8383 = smul.u32 16, %s20
      $region60: #{tpu_custom_call.1} parent=35 // pred_fallthru
        _
    $region36: #{tpu_custom_call.1} parent=5 // pred_fallthru
      _
    %p8384 = scmp.le.s32.totalorder 2, %s10
    // Predicated region
    $region61: #{tpu_custom_call.1} parent=5 // pred_check
      %p8385 = pneg %p8384
    $region62: #{tpu_custom_call.1} parent=5 // pred_check_branch
      %8387 = sbr.rel (%p8385) target = $region64
    $region63: #{tpu_custom_call.1} parent=5 // pred_region
      %s8388 = ssub.s32 %s10, 2
      // Predicated region
      $region65: #{tpu_custom_call.1} parent=63 // pred_check
        %p8389 = pneg %p142
      $region66: #{tpu_custom_call.1} parent=63 // pred_check_branch
        %8391 = sbr.rel (%p8389) target = $region68
      $region67: #{tpu_custom_call.1} parent=63 // pred_region
        %s8392 = smul.u32 16, %s22
        %p8393 = scmp.lt.s32.totalorder %s21, 1
        %s8394 = scalar_select %p8393, %s21, 1
        %p8395 = scmp.lt.s32.totalorder %s8392, 15
        %s8396 = scalar_select %p8395, %s8392, 15
        %s8397 = smul.addr %s8396, 2
        %s8398 = smul.addr %s8394, 32
        %s8399 = sadd.s32 %s8397, %s8398
        %s8400 = smul.addr %s8399, 8
        %s8401 = scalar_lea.vmem %s4, %s8400
      $region68: #{tpu_custom_call.1} parent=63 // pred_fallthru
        _
    $region64: #{tpu_custom_call.1} parent=5 // pred_fallthru
      _
  $region6: #{tpu_custom_call.1} parent=0 // loop_footer
    %s14 = sadd.s32 1, %s10
  $region7: #{tpu_custom_call.1} parent=0 // loop_footer_branch
    %9 = sbr.rel target = $region3
  $region8: #{tpu_custom_call.1} parent=0 // loop_exit
    _

</llo_original>
